<compile_context>
chip_gen: v7x
topology: tpu7x:2x2x1
jax: 0.10.0
libtpu: 0.0.40
codegen_flags: <defaults>
</compile_context>

<pallas_src>
import functools
import numpy as np
import jax
import jax.numpy as jnp
from jax.experimental import pallas as pl
from jax.experimental.pallas import tpu as pltpu


# ------------------------------ chip-aware knobs ----------------------------- #

@functools.lru_cache(maxsize=1)
def _vmem_limit_bytes():
    """Scoped-VMEM limit per generation: ~96 MiB on 128-MiB parts (v5e/v6e),
    <=48 MiB on v7x (64 MiB physical)."""
    try:
        cap = int(pltpu.get_tpu_info().vmem_capacity_bytes)
    except Exception:
        cap = 64 * 1024 * 1024          # conservative fallback
    if cap >= 128 * 1024 * 1024:
        return 96 * 1024 * 1024
    return int(min(48 * 1024 * 1024, (cap * 3) // 4))


def _conv_compiler_params():
    return pltpu.CompilerParams(
        dimension_semantics=("parallel", "parallel"),
        vmem_limit_bytes=_vmem_limit_bytes())


def _pick_h_tile(H, W):
    """Largest H tile whose stage-1 footprint (~18 live copies of a 256-ch
    bf16 row: double-buffered in/out tiles, the 3C bands, the f32 accumulator
    and temporaries) fits comfortably inside the scoped VMEM limit."""
    budget = int(_vmem_limit_bytes() * 0.6) - 4 * 1024 * 1024   # weights headroom
    per_row = 18 * W * 512
    th_cap = int(max(8, min(128, budget // per_row)))
    if H <= th_cap:
        return H
    for t in range(th_cap, 7, -1):      # prefer a divisor of H (no padding)
        if H % t == 0:
            return t
    return th_cap                        # wrapper zero-pads H up to a multiple


# ------------------------------ kernel helpers ------------------------------ #

def _band3(x):
    """(R, W, C) -> (R, W, 3C): horizontal (dx = -1, 0, +1) neighbours
    concatenated on the lane axis, with zero columns as the W padding.
    Built ONCE per tile; the per-dy matmul operand is a leading-row slice."""
    R, W, C = x.shape
    zcol = jnp.zeros((R, 1, C), x.dtype)
    left = jnp.concatenate([zcol, x[:, :W - 1, :]], axis=1)    # col w <- x[w-1]
    right = jnp.concatenate([x[:, 1:, :], zcol], axis=1)       # col w <- x[w+1]
    return jnp.concatenate([left, x, right], axis=-1)


def _conv3x3_acc(band, w_ref, acc, TH, W):
    """3x3 conv as 3 matmuls with K = 3*C over the pre-built band.
    band:  (TH+2, W, 3C) bf16,  w_ref: (3, 3C, Cout),  acc: f32 or None."""
    K = band.shape[-1]
    for dy in range(3):
        d = jnp.dot(band[dy:dy + TH].reshape(TH * W, K), w_ref[dy],
                    preferred_element_type=jnp.float32)
        acc = d if acc is None else acc + d
    return acc


# ----------------------------- Pallas kernels ------------------------------ #

def _make_stage1_kernel(TH, W, h_valid, h_total):
    """Fused:  low48 = relu(conv1x1(low) + shift1)               (BN1 folded)
               y     = relu(conv3x3([x_up ; low48]) + shift2)    (BN2 folded)
    The 304-ch concat never materializes: the 3x3 weight is split along Cin."""
    pad_rows = (h_valid != h_total)      # H was padded to a tile multiple

    def kernel(xt_ref, xtp_ref, xbt_ref, lt_ref, ltp_ref, lbt_ref,
               w1_ref, s1_ref, w2x_ref, w2l_ref, s2_ref, o_ref):
        i = pl.program_id(1)
        n_i = pl.num_programs(1)
        Cl = lt_ref.shape[-1]
        C48 = w1_ref.shape[-1]
        Cout = o_ref.shape[-1]

        top_keep = (i > 0)
        bot_keep = jnp.logical_and(i < n_i - 1, i * TH + TH < h_valid)

        # ---- x branch: mid rows + 1-row halos; only the halo rows are masked
        #      (out-of-image halo rows act as the conv's zero padding).
        xtop = xtp_ref[...] * top_keep.astype(jnp.bfloat16)
        xbot = xbt_ref[...] * bot_keep.astype(jnp.bfloat16)
        xin = jnp.concatenate([xtop, xt_ref[...], xbot], axis=0)   # (TH+2,W,256)

        # ---- low branch: 1x1 conv (+ folded BN + ReLU) per row group; zero
        #      padding applies to the *post-ReLU* tensor, so mask the results.
        def conv1x1_relu(v):
            r = v.shape[0]
            y = jnp.dot(v.reshape(r * W, Cl), w1_ref[...],
                        preferred_element_type=jnp.float32)
            y = jnp.maximum(y + s1_ref[...], 0.0)
            return y.reshape(r, W, C48).astype(jnp.bfloat16)

        l_mid = conv1x1_relu(lt_ref[...])
        l_top = conv1x1_relu(ltp_ref[...]) * top_keep.astype(jnp.bfloat16)
        l_bot = conv1x1_relu(lbt_ref[...]) * bot_keep.astype(jnp.bfloat16)

        if pad_rows:     # rows >= h_valid inside this tile are image padding
            g = i * TH + jax.lax.broadcasted_iota(jnp.int32, (TH, 1, 1), 0)
            row_keep = (g < h_valid)
            l_mid = l_mid * row_keep.astype(jnp.bfloat16)

        l48 = jnp.concatenate([l_top, l_mid, l_bot], axis=0)        # (TH+2,W,48)

        # ---- 3x3 conv over [x ; low48]: bands built once per tile.
        band_x = _band3(xin)                                        # (TH+2,W,768)
        band_l = _band3(l48)                                        # (TH+2,W,144)
        acc = _conv3x3_acc(band_x, w2x_ref, None, TH, W)
        acc = _conv3x3_acc(band_l, w2l_ref, acc, TH, W)

        y = jnp.maximum(acc + s2_ref[...], 0.0).reshape(TH, W, Cout)
        if pad_rows:     # keep padded rows exactly zero for the next 3x3 conv
            y = y * row_keep.astype(jnp.float32)
        o_ref[...] = y.astype(jnp.bfloat16)

    return kernel


def _make_stage2_kernel(TH, W, h_valid):
    """Fused:  z      = relu(conv3x3(y1) + shift3)                (BN3 folded)
               logits = conv1x1(z) + bias     (lane-dense 128-wide class slab)
    """
    def kernel(yt_ref, ytp_ref, ybt_ref, w3_ref, s3_ref, w4_ref, b4_ref, o_ref):
        i = pl.program_id(1)
        n_i = pl.num_programs(1)
        Cp = o_ref.shape[-1]

        top_keep = (i > 0)
        bot_keep = jnp.logical_and(i < n_i - 1, i * TH + TH < h_valid)
        # (rows >= h_valid of the stage-1 output are already exactly zero)

        ytop = ytp_ref[...] * top_keep.astype(jnp.bfloat16)
        ybot = ybt_ref[...] * bot_keep.astype(jnp.bfloat16)
        yin = jnp.concatenate([ytop, yt_ref[...], ybot], axis=0)    # (TH+2,W,256)

        band = _band3(yin)                                          # (TH+2,W,768)
        acc = _conv3x3_acc(band, w3_ref, None, TH, W)
        z = jnp.maximum(acc + s3_ref[...], 0.0).astype(jnp.bfloat16)  # (TH*W,256)

        # fused final 1x1 conv + bias, lane-dense padded class slab
        logits = jnp.dot(z, w4_ref[...], preferred_element_type=jnp.float32)
        o_ref[...] = (logits + b4_ref[...]).reshape(TH, W, Cp)

    return kernel


# ------------------------------ kernel wrappers ----------------------------- #

def fused_stage1(x_up, low, w1, s1, w2x, w2l, s2, TH, h_valid):
    N, H, W, Cx = x_up.shape
    Cl = low.shape[-1]
    Cout = w2x.shape[-1]
    nH = H // TH

    tile_idx = lambda n, i: (n, i, 0, 0)
    top_idx = lambda n, i: (n, jnp.maximum(i * TH - 1, 0), 0, 0)    # masked at i==0
    bot_idx = lambda n, i: (n, jnp.minimum(i * TH + TH, H - 1), 0, 0)  # masked at end

    return pl.pallas_call(
        _make_stage1_kernel(TH, W, h_valid, H),
        out_shape=jax.ShapeDtypeStruct((N, H, W, Cout), jnp.bfloat16),
        grid=(N, nH),
        in_specs=[
            pl.BlockSpec((None, TH, W, Cx), tile_idx),
            pl.BlockSpec((None, 1, W, Cx), top_idx),
            pl.BlockSpec((None, 1, W, Cx), bot_idx),
            pl.BlockSpec((None, TH, W, Cl), tile_idx),
            pl.BlockSpec((None, 1, W, Cl), top_idx),
            pl.BlockSpec((None, 1, W, Cl), bot_idx),
            pl.BlockSpec(w1.shape, lambda n, i: (0, 0)),
            pl.BlockSpec(s1.shape, lambda n, i: (0, 0)),
            pl.BlockSpec(w2x.shape, lambda n, i: (0, 0, 0)),
            pl.BlockSpec(w2l.shape, lambda n, i: (0, 0, 0)),
            pl.BlockSpec(s2.shape, lambda n, i: (0, 0)),
        ],
        out_specs=pl.BlockSpec((None, TH, W, Cout), tile_idx),
        compiler_params=_conv_compiler_params(),
    )(x_up, x_up, x_up, low, low, low, w1, s1, w2x, w2l, s2)


def fused_stage2(y1, w3, s3, w4p, b4p, TH, h_valid):
    N, H, W, C = y1.shape
    Cp = w4p.shape[-1]
    nH = H // TH

    tile_idx = lambda n, i: (n, i, 0, 0)
    top_idx = lambda n, i: (n, jnp.maximum(i * TH - 1, 0), 0, 0)
    bot_idx = lambda n, i: (n, jnp.minimum(i * TH + TH, H - 1), 0, 0)

    return pl.pallas_call(
        _make_stage2_kernel(TH, W, h_valid),
        out_shape=jax.ShapeDtypeStruct((N, H, W, Cp), jnp.float32),
        grid=(N, nH),
        in_specs=[
            pl.BlockSpec((None, TH, W, C), tile_idx),
            pl.BlockSpec((None, 1, W, C), top_idx),
            pl.BlockSpec((None, 1, W, C), bot_idx),
            pl.BlockSpec(w3.shape, lambda n, i: (0, 0, 0)),
            pl.BlockSpec(s3.shape, lambda n, i: (0, 0)),
            pl.BlockSpec(w4p.shape, lambda n, i: (0, 0)),
            pl.BlockSpec(b4p.shape, lambda n, i: (0, 0)),
        ],
        out_specs=pl.BlockSpec((None, TH, W, Cp), tile_idx),
        compiler_params=_conv_compiler_params(),
    )(y1, y1, y1, w3, s3, w4p, b4p)


# -------------------------- bilinear resize (exact) ------------------------- #

def _bilinear_matrix(out_size, in_size):
    """Row-stochastic [out, in] matrix matching F.interpolate(mode='bilinear',
    align_corners=False)."""
    i = np.arange(out_size, dtype=np.float64)
    src = (i + 0.5) * (in_size / out_size) - 0.5
    src = np.maximum(src, 0.0)
    x0 = np.minimum(np.floor(src).astype(np.int64), in_size - 1)
    x1 = np.minimum(x0 + 1, in_size - 1)
    lam = src - x0
    R = np.zeros((out_size, in_size), dtype=np.float64)
    R[np.arange(out_size), x0] += (1.0 - lam)
    R[np.arange(out_size), x1] += lam
    return jnp.asarray(R, dtype=jnp.float32)


# ------------------------------- forward pass ------------------------------- #

def decoder_forward(params, x_nchw, low_nchw):
    # NCHW -> NHWC
    x = jnp.transpose(x_nchw, (0, 2, 3, 1)).astype(jnp.float32)
    low = jnp.transpose(low_nchw, (0, 2, 3, 1)).astype(jnp.float32)
    N, Hin, Win, _ = x.shape
    Hl, Wl = low.shape[1], low.shape[2]

    # bilinear upsample x to low's spatial size (align_corners=False).
    Rh = _bilinear_matrix(Hl, Hin)
    Rw = _bilinear_matrix(Wl, Win)
    x_up = jnp.einsum('ph,nhwc->npwc', Rh, x, precision=jax.lax.Precision.HIGHEST)
    x_up = jnp.einsum('qw,nhwc->nhqc', Rw, x_up,
                      precision=jax.lax.Precision.HIGHEST).astype(jnp.bfloat16)
    low_b = low.astype(jnp.bfloat16)

    # tile the H axis; zero-pad H to a tile multiple when it does not divide
    # (in-kernel row masking keeps the padded rows numerically inert).
    TH = _pick_h_tile(Hl, Wl)
    H_pad = ((Hl + TH - 1) // TH) * TH
    if H_pad != Hl:
        pad = ((0, 0), (0, H_pad - Hl), (0, 0), (0, 0))
        x_up = jnp.pad(x_up, pad)
        low_b = jnp.pad(low_b, pad)

    # stage 1 (fused): conv1x1(low)+BN+ReLU, channel concat (weight split),
    # conv3x3(304->256)+BN+ReLU.              Dropout(0.5) = identity (eval).
    y1 = fused_stage1(x_up, low_b, params['w_conv1'], params['bn1_shift'],
                      params['w_conv2_x'], params['w_conv2_low'],
                      params['bn2_shift'], TH, Hl)

    # stage 2 (fused): conv3x3(256->256)+BN+ReLU (Dropout(0.1) = identity) and
    # the final 1x1 conv + bias into a lane-dense 128-wide class slab.
    nc = params['w_conv4'].shape[1]
    cp = max(128, ((nc + 127) // 128) * 128)
    w4p = jnp.pad(params['w_conv4'], ((0, 0), (0, cp - nc)))
    b4p = jnp.pad(params['b_conv4'], ((0, 0), (0, cp - nc)))
    out = fused_stage2(y1, params['w_conv3'], params['bn3_shift'],
                       w4p, b4p, TH, Hl)

    out = out[:, :Hl, :, :nc]
    # NHWC -> NCHW
    return jnp.transpose(out, (0, 3, 1, 2))


# ------------------------------- param init --------------------------------- #

def init_params(key, num_classes):
    """Parameters with inference-mode BN (fresh statistics) folded into the
    conv weights; weights pre-cast to bf16 in the kernels' matmul layouts."""
    ks = jax.random.split(key, 5)

    def kaiming(k, shape, fan_in):
        std = float(np.sqrt(2.0 / fan_in))       # kaiming_normal_, fan_in, relu
        return std * jax.random.normal(k, shape, dtype=jnp.float32)

    eps = 1e-5

    def bn_fold(c):
        gamma = jnp.ones((c,), jnp.float32)
        beta = jnp.zeros((c,), jnp.float32)
        mean = jnp.zeros((c,), jnp.float32)
        var = jnp.ones((c,), jnp.float32)
        scale = gamma / jnp.sqrt(var + eps)
        shift = (beta - mean * scale).reshape(1, c)
        return scale, shift

    p = {}
    scale1, shift1 = bn_fold(48)
    scale2, shift2 = bn_fold(256)
    scale3, shift3 = bn_fold(256)

    # conv1: 1x1, 256->48, BN1 scale folded along Cout.
    w1 = kaiming(ks[0], (256, 48), 256 * 1 * 1)
    p['w_conv1'] = (w1 * scale1).astype(jnp.bfloat16)
    p['bn1_shift'] = shift1

    # conv2: 3x3, 304->256, BN2 folded.  Stored split along Cin (x / low48
    # parts) and reshaped to (kh, kw*Cin, Cout) for 3 large-K matmuls.
    w2 = kaiming(ks[1], (3, 3, 304, 256), 304 * 3 * 3) * scale2
    p['w_conv2_x'] = w2[:, :, :256, :].reshape(3, 3 * 256, 256).astype(jnp.bfloat16)
    p['w_conv2_low'] = w2[:, :, 256:, :].reshape(3, 3 * 48, 256).astype(jnp.bfloat16)
    p['bn2_shift'] = shift2

    # conv3: 3x3, 256->256, BN3 folded.
    w3 = kaiming(ks[2], (3, 3, 256, 256), 256 * 3 * 3) * scale3
    p['w_conv3'] = w3.reshape(3, 3 * 256, 256).astype(jnp.bfloat16)
    p['bn3_shift'] = shift3

    # conv4: 1x1, 256->num_classes, with bias (default nn.Conv2d bias init).
    p['w_conv4'] = kaiming(ks[3], (256, num_classes), 256 * 1 * 1).astype(jnp.bfloat16)
    bound = 1.0 / float(np.sqrt(256.0))
    p['b_conv4'] = jax.random.uniform(ks[4], (1, num_classes), jnp.float32,
                                      minval=-bound, maxval=bound)
    return p


# ----------------------------------- main ------------------------------------ #

if __name__ == "__main__":
    key = jax.random.PRNGKey(0)
    k_x, k_low, k_p = jax.random.split(key, 3)

    num_classes = 8
    # x: ASPP output (NCHW, 256 ch, small spatial); low-level features (256 ch).
    x = jax.random.normal(k_x, (2, 256, 4, 4), dtype=jnp.float32)
    low_level_feat = jax.random.normal(k_low, (2, 256, 8, 8), dtype=jnp.float32)

    params = init_params(k_p, num_classes)

    fwd = jax.jit(decoder_forward)
    out = jax.block_until_ready(fwd(params, x, low_level_feat))

    assert out.shape == (2, num_classes, 8, 8), out.shape
    assert out.dtype == jnp.float32
    print("KERNEL_OK")
</pallas_src>

<mosaic_0001>
module attributes {stable_mosaic.version = 11 : i64} {
  func.func @kernel(%arg0: i32, %arg1: i32, %arg2: memref<1x8x8x256xbf16, #tpu.memory_space<vmem>>, %arg3: memref<1x1x8x256xbf16, #tpu.memory_space<vmem>>, %arg4: memref<1x1x8x256xbf16, #tpu.memory_space<vmem>>, %arg5: memref<1x8x8x256xbf16, #tpu.memory_space<vmem>>, %arg6: memref<1x1x8x256xbf16, #tpu.memory_space<vmem>>, %arg7: memref<1x1x8x256xbf16, #tpu.memory_space<vmem>>, %arg8: memref<256x48xbf16, #tpu.memory_space<vmem>>, %arg9: memref<1x48xf32, #tpu.memory_space<vmem>>, %arg10: memref<3x768x256xbf16, #tpu.memory_space<vmem>>, %arg11: memref<3x144x256xbf16, #tpu.memory_space<vmem>>, %arg12: memref<1x256xf32, #tpu.memory_space<vmem>>, %arg13: memref<1x8x8x256xbf16, #tpu.memory_space<vmem>>) attributes {dimension_semantics = [#tpu.dimension_semantics<parallel>, #tpu.dimension_semantics<parallel>], iteration_bounds = array<i64: 2, 1>, scalar_prefetch = 0 : i64, scratch_operands = 0 : i64, tpu.core_type = #tpu.core_type<tc>, window_params = [{transform_indices = @transform_0, window_bounds = array<i64: 1, 8, 8, 256>}, {transform_indices = @transform_1, window_bounds = array<i64: 1, 1, 8, 256>}, {transform_indices = @transform_2, window_bounds = array<i64: 1, 1, 8, 256>}, {transform_indices = @transform_3, window_bounds = array<i64: 1, 8, 8, 256>}, {transform_indices = @transform_4, window_bounds = array<i64: 1, 1, 8, 256>}, {transform_indices = @transform_5, window_bounds = array<i64: 1, 1, 8, 256>}, {pipeline_mode = #tpu.pipeline_mode<synchronous>, transform_indices = @transform_6, window_bounds = array<i64: 256, 48>}, {pipeline_mode = #tpu.pipeline_mode<synchronous>, transform_indices = @transform_7, window_bounds = array<i64: 1, 48>}, {pipeline_mode = #tpu.pipeline_mode<synchronous>, transform_indices = @transform_8, window_bounds = array<i64: 3, 768, 256>}, {pipeline_mode = #tpu.pipeline_mode<synchronous>, transform_indices = @transform_9, window_bounds = array<i64: 3, 144, 256>}, {pipeline_mode = #tpu.pipeline_mode<synchronous>, transform_indices = @transform_10, window_bounds = array<i64: 1, 256>}, {transform_indices = @transform_11, window_bounds = array<i64: 1, 8, 8, 256>}]} {
    %c0_i32 = arith.constant 0 : i32
    %0 = arith.cmpi sgt, %arg1, %c0_i32 : i32
    %c0_i32_0 = arith.constant 0 : i32
    %1 = arith.cmpi slt, %arg1, %c0_i32_0 : i32
    %c8_i32 = arith.constant 8 : i32
    %2 = arith.muli %arg1, %c8_i32 : i32
    %c8_i32_1 = arith.constant 8 : i32
    %3 = arith.addi %2, %c8_i32_1 : i32
    %c8_i32_2 = arith.constant 8 : i32
    %4 = arith.cmpi slt, %3, %c8_i32_2 : i32
    %5 = arith.andi %1, %4 : i1
    %c0 = arith.constant 0 : index
    %c0_3 = arith.constant 0 : index
    %c0_4 = arith.constant 0 : index
    %c0_5 = arith.constant 0 : index
    %6 = vector.load %arg3[%c0, %c0_3, %c0_4, %c0_5] : memref<1x1x8x256xbf16, #tpu.memory_space<vmem>>, vector<1x1x8x256xbf16>
    %7 = vector.shape_cast %6 : vector<1x1x8x256xbf16> to vector<1x8x256xbf16>
    %8 = arith.extui %0 : i1 to i32
    %9 = arith.sitofp %8 : i32 to f32
    %10 = arith.truncf %9 : f32 to bf16
    %11 = vector.broadcast %10 : bf16 to vector<1x8x256xbf16>
    %12 = arith.mulf %7, %11 : vector<1x8x256xbf16>
    %c0_6 = arith.constant 0 : index
    %c0_7 = arith.constant 0 : index
    %c0_8 = arith.constant 0 : index
    %c0_9 = arith.constant 0 : index
    %13 = vector.load %arg4[%c0_6, %c0_7, %c0_8, %c0_9] : memref<1x1x8x256xbf16, #tpu.memory_space<vmem>>, vector<1x1x8x256xbf16>
    %14 = vector.shape_cast %13 : vector<1x1x8x256xbf16> to vector<1x8x256xbf16>
    %15 = arith.extui %5 : i1 to i32
    %16 = arith.sitofp %15 : i32 to f32
    %17 = arith.truncf %16 : f32 to bf16
    %18 = vector.broadcast %17 : bf16 to vector<1x8x256xbf16>
    %19 = arith.mulf %14, %18 : vector<1x8x256xbf16>
    %c0_10 = arith.constant 0 : index
    %c0_11 = arith.constant 0 : index
    %c0_12 = arith.constant 0 : index
    %c0_13 = arith.constant 0 : index
    %20 = vector.load %arg2[%c0_10, %c0_11, %c0_12, %c0_13] : memref<1x8x8x256xbf16, #tpu.memory_space<vmem>>, vector<1x8x8x256xbf16>
    %21 = vector.shape_cast %20 : vector<1x8x8x256xbf16> to vector<8x8x256xbf16>
    %22 = tpu.concatenate %12, %21, %19 in 0 : vector<1x8x256xbf16>, vector<8x8x256xbf16>, vector<1x8x256xbf16> -> vector<10x8x256xbf16>
    %c0_14 = arith.constant 0 : index
    %c0_15 = arith.constant 0 : index
    %c0_16 = arith.constant 0 : index
    %c0_17 = arith.constant 0 : index
    %23 = vector.load %arg5[%c0_14, %c0_15, %c0_16, %c0_17] : memref<1x8x8x256xbf16, #tpu.memory_space<vmem>>, vector<1x8x8x256xbf16>
    %24 = vector.shape_cast %23 : vector<1x8x8x256xbf16> to vector<8x8x256xbf16>
    %25 = vector.shape_cast %24 : vector<8x8x256xbf16> to vector<64x256xbf16>
    %c0_18 = arith.constant 0 : index
    %c0_19 = arith.constant 0 : index
    %26 = vector.load %arg8[%c0_18, %c0_19] : memref<256x48xbf16, #tpu.memory_space<vmem>>, vector<256x48xbf16>
    %cst = arith.constant dense<0.000000e+00> : vector<64x48xf32>
    %27 = tpu.matmul %25, %26, %cst {dimension_numbers = #tpu.dot_dimension_numbers<[1], [0], [0], [1], [0, 0, 1, 1], [], []>} : vector<64x256xbf16>, vector<256x48xbf16>, vector<64x48xf32> -> vector<64x48xf32>
    %c0_20 = arith.constant 0 : index
    %c0_21 = arith.constant 0 : index
    %28 = vector.load %arg9[%c0_20, %c0_21] : memref<1x48xf32, #tpu.memory_space<vmem>>, vector<1x48xf32>
    %29 = vector.broadcast %28 : vector<1x48xf32> to vector<64x48xf32>
    %30 = arith.addf %27, %29 : vector<64x48xf32>
    %cst_22 = arith.constant 0.000000e+00 : f32
    %31 = vector.broadcast %cst_22 : f32 to vector<64x48xf32>
    %32 = arith.maximumf %30, %31 : vector<64x48xf32>
    %33 = vector.shape_cast %32 : vector<64x48xf32> to vector<8x8x48xf32>
    %34 = arith.truncf %33 : vector<8x8x48xf32> to vector<8x8x48xbf16>
    %c0_23 = arith.constant 0 : index
    %c0_24 = arith.constant 0 : index
    %c0_25 = arith.constant 0 : index
    %c0_26 = arith.constant 0 : index
    %35 = vector.load %arg6[%c0_23, %c0_24, %c0_25, %c0_26] : memref<1x1x8x256xbf16, #tpu.memory_space<vmem>>, vector<1x1x8x256xbf16>
    %36 = vector.shape_cast %35 : vector<1x1x8x256xbf16> to vector<1x8x256xbf16>
    %37 = vector.shape_cast %36 : vector<1x8x256xbf16> to vector<8x256xbf16>
    %c0_27 = arith.constant 0 : index
    %c0_28 = arith.constant 0 : index
    %38 = vector.load %arg8[%c0_27, %c0_28] : memref<256x48xbf16, #tpu.memory_space<vmem>>, vector<256x48xbf16>
    %cst_29 = arith.constant dense<0.000000e+00> : vector<8x48xf32>
    %39 = tpu.matmul %37, %38, %cst_29 {dimension_numbers = #tpu.dot_dimension_numbers<[1], [0], [0], [1], [0, 0, 1, 1], [], []>} : vector<8x256xbf16>, vector<256x48xbf16>, vector<8x48xf32> -> vector<8x48xf32>
    %c0_30 = arith.constant 0 : index
    %c0_31 = arith.constant 0 : index
    %40 = vector.load %arg9[%c0_30, %c0_31] : memref<1x48xf32, #tpu.memory_space<vmem>>, vector<1x48xf32>
    %41 = vector.broadcast %40 : vector<1x48xf32> to vector<8x48xf32>
    %42 = arith.addf %39, %41 : vector<8x48xf32>
    %cst_32 = arith.constant 0.000000e+00 : f32
    %43 = vector.broadcast %cst_32 : f32 to vector<8x48xf32>
    %44 = arith.maximumf %42, %43 : vector<8x48xf32>
    %45 = vector.shape_cast %44 : vector<8x48xf32> to vector<1x8x48xf32>
    %46 = arith.truncf %45 : vector<1x8x48xf32> to vector<1x8x48xbf16>
    %47 = arith.extui %0 : i1 to i32
    %48 = arith.sitofp %47 : i32 to f32
    %49 = arith.truncf %48 : f32 to bf16
    %50 = vector.broadcast %49 : bf16 to vector<1x8x48xbf16>
    %51 = arith.mulf %46, %50 : vector<1x8x48xbf16>
    %c0_33 = arith.constant 0 : index
    %c0_34 = arith.constant 0 : index
    %c0_35 = arith.constant 0 : index
    %c0_36 = arith.constant 0 : index
    %52 = vector.load %arg7[%c0_33, %c0_34, %c0_35, %c0_36] : memref<1x1x8x256xbf16, #tpu.memory_space<vmem>>, vector<1x1x8x256xbf16>
    %53 = vector.shape_cast %52 : vector<1x1x8x256xbf16> to vector<1x8x256xbf16>
    %54 = vector.shape_cast %53 : vector<1x8x256xbf16> to vector<8x256xbf16>
    %c0_37 = arith.constant 0 : index
    %c0_38 = arith.constant 0 : index
    %55 = vector.load %arg8[%c0_37, %c0_38] : memref<256x48xbf16, #tpu.memory_space<vmem>>, vector<256x48xbf16>
    %cst_39 = arith.constant dense<0.000000e+00> : vector<8x48xf32>
    %56 = tpu.matmul %54, %55, %cst_39 {dimension_numbers = #tpu.dot_dimension_numbers<[1], [0], [0], [1], [0, 0, 1, 1], [], []>} : vector<8x256xbf16>, vector<256x48xbf16>, vector<8x48xf32> -> vector<8x48xf32>
    %c0_40 = arith.constant 0 : index
    %c0_41 = arith.constant 0 : index
    %57 = vector.load %arg9[%c0_40, %c0_41] : memref<1x48xf32, #tpu.memory_space<vmem>>, vector<1x48xf32>
    %58 = vector.broadcast %57 : vector<1x48xf32> to vector<8x48xf32>
    %59 = arith.addf %56, %58 : vector<8x48xf32>
    %cst_42 = arith.constant 0.000000e+00 : f32
    %60 = vector.broadcast %cst_42 : f32 to vector<8x48xf32>
    %61 = arith.maximumf %59, %60 : vector<8x48xf32>
    %62 = vector.shape_cast %61 : vector<8x48xf32> to vector<1x8x48xf32>
    %63 = arith.truncf %62 : vector<1x8x48xf32> to vector<1x8x48xbf16>
    %64 = arith.extui %5 : i1 to i32
    %65 = arith.sitofp %64 : i32 to f32
    %66 = arith.truncf %65 : f32 to bf16
    %67 = vector.broadcast %66 : bf16 to vector<1x8x48xbf16>
    %68 = arith.mulf %63, %67 : vector<1x8x48xbf16>
    %69 = tpu.concatenate %51, %34, %68 in 0 : vector<1x8x48xbf16>, vector<8x8x48xbf16>, vector<1x8x48xbf16> -> vector<10x8x48xbf16>
    %cst_43 = arith.constant 0.000000e+00 : bf16
    %70 = vector.broadcast %cst_43 : bf16 to vector<10x1x256xbf16>
    %71 = vector.extract_strided_slice %22 {offsets = [0, 0, 0], sizes = [10, 7, 256], strides = [1, 1, 1]} : vector<10x8x256xbf16> to vector<10x7x256xbf16>
    %72 = tpu.concatenate %70, %71 in 1 : vector<10x1x256xbf16>, vector<10x7x256xbf16> -> vector<10x8x256xbf16>
    %73 = vector.extract_strided_slice %22 {offsets = [0, 1, 0], sizes = [10, 7, 256], strides = [1, 1, 1]} : vector<10x8x256xbf16> to vector<10x7x256xbf16>
    %74 = tpu.concatenate %73, %70 in 1 : vector<10x7x256xbf16>, vector<10x1x256xbf16> -> vector<10x8x256xbf16>
    %75 = tpu.concatenate %72, %22, %74 in 2 : vector<10x8x256xbf16>, vector<10x8x256xbf16>, vector<10x8x256xbf16> -> vector<10x8x768xbf16>
    %cst_44 = arith.constant 0.000000e+00 : bf16
    %76 = vector.broadcast %cst_44 : bf16 to vector<10x1x48xbf16>
    %77 = vector.extract_strided_slice %69 {offsets = [0, 0, 0], sizes = [10, 7, 48], strides = [1, 1, 1]} : vector<10x8x48xbf16> to vector<10x7x48xbf16>
    %78 = tpu.concatenate %76, %77 in 1 : vector<10x1x48xbf16>, vector<10x7x48xbf16> -> vector<10x8x48xbf16>
    %79 = vector.extract_strided_slice %69 {offsets = [0, 1, 0], sizes = [10, 7, 48], strides = [1, 1, 1]} : vector<10x8x48xbf16> to vector<10x7x48xbf16>
    %80 = tpu.concatenate %79, %76 in 1 : vector<10x7x48xbf16>, vector<10x1x48xbf16> -> vector<10x8x48xbf16>
    %81 = tpu.concatenate %78, %69, %80 in 2 : vector<10x8x48xbf16>, vector<10x8x48xbf16>, vector<10x8x48xbf16> -> vector<10x8x144xbf16>
    %82 = vector.extract_strided_slice %75 {offsets = [0, 0, 0], sizes = [8, 8, 768], strides = [1, 1, 1]} : vector<10x8x768xbf16> to vector<8x8x768xbf16>
    %83 = vector.shape_cast %82 : vector<8x8x768xbf16> to vector<64x768xbf16>
    %c0_45 = arith.constant 0 : index
    %c0_46 = arith.constant 0 : index
    %c0_47 = arith.constant 0 : index
    %84 = vector.load %arg10[%c0_45, %c0_46, %c0_47] : memref<3x768x256xbf16, #tpu.memory_space<vmem>>, vector<1x768x256xbf16>
    %85 = vector.shape_cast %84 : vector<1x768x256xbf16> to vector<768x256xbf16>
    %cst_48 = arith.constant dense<0.000000e+00> : vector<64x256xf32>
    %86 = tpu.matmul %83, %85, %cst_48 {dimension_numbers = #tpu.dot_dimension_numbers<[1], [0], [0], [1], [0, 0, 1, 1], [], []>} : vector<64x768xbf16>, vector<768x256xbf16>, vector<64x256xf32> -> vector<64x256xf32>
    %87 = vector.extract_strided_slice %75 {offsets = [1, 0, 0], sizes = [8, 8, 768], strides = [1, 1, 1]} : vector<10x8x768xbf16> to vector<8x8x768xbf16>
    %88 = vector.shape_cast %87 : vector<8x8x768xbf16> to vector<64x768xbf16>
    %c1 = arith.constant 1 : index
    %c0_49 = arith.constant 0 : index
    %c0_50 = arith.constant 0 : index
    %89 = vector.load %arg10[%c1, %c0_49, %c0_50] : memref<3x768x256xbf16, #tpu.memory_space<vmem>>, vector<1x768x256xbf16>
    %90 = vector.shape_cast %89 : vector<1x768x256xbf16> to vector<768x256xbf16>
    %cst_51 = arith.constant dense<0.000000e+00> : vector<64x256xf32>
    %91 = tpu.matmul %88, %90, %cst_51 {dimension_numbers = #tpu.dot_dimension_numbers<[1], [0], [0], [1], [0, 0, 1, 1], [], []>} : vector<64x768xbf16>, vector<768x256xbf16>, vector<64x256xf32> -> vector<64x256xf32>
    %92 = arith.addf %86, %91 : vector<64x256xf32>
    %93 = vector.extract_strided_slice %75 {offsets = [2, 0, 0], sizes = [8, 8, 768], strides = [1, 1, 1]} : vector<10x8x768xbf16> to vector<8x8x768xbf16>
    %94 = vector.shape_cast %93 : vector<8x8x768xbf16> to vector<64x768xbf16>
    %c2 = arith.constant 2 : index
    %c0_52 = arith.constant 0 : index
    %c0_53 = arith.constant 0 : index
    %95 = vector.load %arg10[%c2, %c0_52, %c0_53] : memref<3x768x256xbf16, #tpu.memory_space<vmem>>, vector<1x768x256xbf16>
    %96 = vector.shape_cast %95 : vector<1x768x256xbf16> to vector<768x256xbf16>
    %cst_54 = arith.constant dense<0.000000e+00> : vector<64x256xf32>
    %97 = tpu.matmul %94, %96, %cst_54 {dimension_numbers = #tpu.dot_dimension_numbers<[1], [0], [0], [1], [0, 0, 1, 1], [], []>} : vector<64x768xbf16>, vector<768x256xbf16>, vector<64x256xf32> -> vector<64x256xf32>
    %98 = arith.addf %92, %97 : vector<64x256xf32>
    %99 = vector.extract_strided_slice %81 {offsets = [0, 0, 0], sizes = [8, 8, 144], strides = [1, 1, 1]} : vector<10x8x144xbf16> to vector<8x8x144xbf16>
    %100 = vector.shape_cast %99 : vector<8x8x144xbf16> to vector<64x144xbf16>
    %c0_55 = arith.constant 0 : index
    %c0_56 = arith.constant 0 : index
    %c0_57 = arith.constant 0 : index
    %101 = vector.load %arg11[%c0_55, %c0_56, %c0_57] : memref<3x144x256xbf16, #tpu.memory_space<vmem>>, vector<1x144x256xbf16>
    %102 = vector.shape_cast %101 : vector<1x144x256xbf16> to vector<144x256xbf16>
    %cst_58 = arith.constant dense<0.000000e+00> : vector<64x256xf32>
    %103 = tpu.matmul %100, %102, %cst_58 {dimension_numbers = #tpu.dot_dimension_numbers<[1], [0], [0], [1], [0, 0, 1, 1], [], []>} : vector<64x144xbf16>, vector<144x256xbf16>, vector<64x256xf32> -> vector<64x256xf32>
    %104 = arith.addf %98, %103 : vector<64x256xf32>
    %105 = vector.extract_strided_slice %81 {offsets = [1, 0, 0], sizes = [8, 8, 144], strides = [1, 1, 1]} : vector<10x8x144xbf16> to vector<8x8x144xbf16>
    %106 = vector.shape_cast %105 : vector<8x8x144xbf16> to vector<64x144xbf16>
    %c1_59 = arith.constant 1 : index
    %c0_60 = arith.constant 0 : index
    %c0_61 = arith.constant 0 : index
    %107 = vector.load %arg11[%c1_59, %c0_60, %c0_61] : memref<3x144x256xbf16, #tpu.memory_space<vmem>>, vector<1x144x256xbf16>
    %108 = vector.shape_cast %107 : vector<1x144x256xbf16> to vector<144x256xbf16>
    %cst_62 = arith.constant dense<0.000000e+00> : vector<64x256xf32>
    %109 = tpu.matmul %106, %108, %cst_62 {dimension_numbers = #tpu.dot_dimension_numbers<[1], [0], [0], [1], [0, 0, 1, 1], [], []>} : vector<64x144xbf16>, vector<144x256xbf16>, vector<64x256xf32> -> vector<64x256xf32>
    %110 = arith.addf %104, %109 : vector<64x256xf32>
    %111 = vector.extract_strided_slice %81 {offsets = [2, 0, 0], sizes = [8, 8, 144], strides = [1, 1, 1]} : vector<10x8x144xbf16> to vector<8x8x144xbf16>
    %112 = vector.shape_cast %111 : vector<8x8x144xbf16> to vector<64x144xbf16>
    %c2_63 = arith.constant 2 : index
    %c0_64 = arith.constant 0 : index
    %c0_65 = arith.constant 0 : index
    %113 = vector.load %arg11[%c2_63, %c0_64, %c0_65] : memref<3x144x256xbf16, #tpu.memory_space<vmem>>, vector<1x144x256xbf16>
    %114 = vector.shape_cast %113 : vector<1x144x256xbf16> to vector<144x256xbf16>
    %cst_66 = arith.constant dense<0.000000e+00> : vector<64x256xf32>
    %115 = tpu.matmul %112, %114, %cst_66 {dimension_numbers = #tpu.dot_dimension_numbers<[1], [0], [0], [1], [0, 0, 1, 1], [], []>} : vector<64x144xbf16>, vector<144x256xbf16>, vector<64x256xf32> -> vector<64x256xf32>
    %116 = arith.addf %110, %115 : vector<64x256xf32>
    %c0_67 = arith.constant 0 : index
    %c0_68 = arith.constant 0 : index
    %117 = vector.load %arg12[%c0_67, %c0_68] : memref<1x256xf32, #tpu.memory_space<vmem>>, vector<1x256xf32>
    %118 = vector.broadcast %117 : vector<1x256xf32> to vector<64x256xf32>
    %119 = arith.addf %116, %118 : vector<64x256xf32>
    %cst_69 = arith.constant 0.000000e+00 : f32
    %120 = vector.broadcast %cst_69 : f32 to vector<64x256xf32>
    %121 = arith.maximumf %119, %120 : vector<64x256xf32>
    %122 = vector.shape_cast %121 : vector<64x256xf32> to vector<8x8x256xf32>
    %123 = arith.truncf %122 : vector<8x8x256xf32> to vector<8x8x256xbf16>
    %c0_70 = arith.constant 0 : index
    %c0_71 = arith.constant 0 : index
    %c0_72 = arith.constant 0 : index
    %c0_73 = arith.constant 0 : index
    %124 = vector.load %arg13[%c0_70, %c0_71, %c0_72, %c0_73] : memref<1x8x8x256xbf16, #tpu.memory_space<vmem>>, vector<1x8x8x256xbf16>
    %125 = vector.shape_cast %124 : vector<1x8x8x256xbf16> to vector<8x8x256xbf16>
    %126 = vector.shape_cast %123 : vector<8x8x256xbf16> to vector<1x8x8x256xbf16>
    tpu.vector_store %arg13[%c0_70, %c0_71, %c0_72, %c0_73], %126 {strides = array<i32>} : memref<1x8x8x256xbf16, #tpu.memory_space<vmem>>, vector<1x8x8x256xbf16>,
    return
  }
  func.func @transform_0(%arg0: i32, %arg1: i32) -> (i32, i32, i32, i32) {
    %c0_i32 = arith.constant 0 : i32
    %c0_i32_0 = arith.constant 0 : i32
    %c0_i32_1 = arith.constant 0 : i32
    return %arg0, %arg1, %c0_i32, %c0_i32_0 : i32, i32, i32, i32
  }
  func.func @transform_1(%arg0: i32, %arg1: i32) -> (i32, i32, i32, i32) {
    %c8_i32 = arith.constant 8 : i32
    %0 = arith.muli %arg1, %c8_i32 : i32
    %c1_i32 = arith.constant 1 : i32
    %1 = arith.subi %0, %c1_i32 : i32
    %c0_i32 = arith.constant 0 : i32
    %2 = arith.maxsi %1, %c0_i32 : i32
    %c0_i32_0 = arith.constant 0 : i32
    %c0_i32_1 = arith.constant 0 : i32
    %c0_i32_2 = arith.constant 0 : i32
    return %arg0, %2, %c0_i32_0, %c0_i32_1 : i32, i32, i32, i32
  }
  func.func @transform_2(%arg0: i32, %arg1: i32) -> (i32, i32, i32, i32) {
    %c8_i32 = arith.constant 8 : i32
    %0 = arith.muli %arg1, %c8_i32 : i32
    %c8_i32_0 = arith.constant 8 : i32
    %1 = arith.addi %0, %c8_i32_0 : i32
    %c7_i32 = arith.constant 7 : i32
    %2 = arith.minsi %1, %c7_i32 : i32
    %c0_i32 = arith.constant 0 : i32
    %c0_i32_1 = arith.constant 0 : i32
    %c0_i32_2 = arith.constant 0 : i32
    return %arg0, %2, %c0_i32, %c0_i32_1 : i32, i32, i32, i32
  }
  func.func @transform_3(%arg0: i32, %arg1: i32) -> (i32, i32, i32, i32) {
    %c0_i32 = arith.constant 0 : i32
    %c0_i32_0 = arith.constant 0 : i32
    %c0_i32_1 = arith.constant 0 : i32
    return %arg0, %arg1, %c0_i32, %c0_i32_0 : i32, i32, i32, i32
  }
  func.func @transform_4(%arg0: i32, %arg1: i32) -> (i32, i32, i32, i32) {
    %c8_i32 = arith.constant 8 : i32
    %0 = arith.muli %arg1, %c8_i32 : i32
    %c1_i32 = arith.constant 1 : i32
    %1 = arith.subi %0, %c1_i32 : i32
    %c0_i32 = arith.constant 0 : i32
    %2 = arith.maxsi %1, %c0_i32 : i32
    %c0_i32_0 = arith.constant 0 : i32
    %c0_i32_1 = arith.constant 0 : i32
    %c0_i32_2 = arith.constant 0 : i32
    return %arg0, %2, %c0_i32_0, %c0_i32_1 : i32, i32, i32, i32
  }
  func.func @transform_5(%arg0: i32, %arg1: i32) -> (i32, i32, i32, i32) {
    %c8_i32 = arith.constant 8 : i32
    %0 = arith.muli %arg1, %c8_i32 : i32
    %c8_i32_0 = arith.constant 8 : i32
    %1 = arith.addi %0, %c8_i32_0 : i32
    %c7_i32 = arith.constant 7 : i32
    %2 = arith.minsi %1, %c7_i32 : i32
    %c0_i32 = arith.constant 0 : i32
    %c0_i32_1 = arith.constant 0 : i32
    %c0_i32_2 = arith.constant 0 : i32
    return %arg0, %2, %c0_i32, %c0_i32_1 : i32, i32, i32, i32
  }
  func.func @transform_6(%arg0: i32, %arg1: i32) -> (i32, i32) {
    %c0_i32 = arith.constant 0 : i32
    %c0_i32_0 = arith.constant 0 : i32
    %c0_i32_1 = arith.constant 0 : i32
    return %c0_i32, %c0_i32_0 : i32, i32
  }
  func.func @transform_7(%arg0: i32, %arg1: i32) -> (i32, i32) {
    %c0_i32 = arith.constant 0 : i32
    %c0_i32_0 = arith.constant 0 : i32
    %c0_i32_1 = arith.constant 0 : i32
    return %c0_i32, %c0_i32_0 : i32, i32
  }
  func.func @transform_8(%arg0: i32, %arg1: i32) -> (i32, i32, i32) {
    %c0_i32 = arith.constant 0 : i32
    %c0_i32_0 = arith.constant 0 : i32
    %c0_i32_1 = arith.constant 0 : i32
    %c0_i32_2 = arith.constant 0 : i32
    return %c0_i32, %c0_i32_0, %c0_i32_1 : i32, i32, i32
  }
  func.func @transform_9(%arg0: i32, %arg1: i32) -> (i32, i32, i32) {
    %c0_i32 = arith.constant 0 : i32
    %c0_i32_0 = arith.constant 0 : i32
    %c0_i32_1 = arith.constant 0 : i32
    %c0_i32_2 = arith.constant 0 : i32
    return %c0_i32, %c0_i32_0, %c0_i32_1 : i32, i32, i32
  }
  func.func @transform_10(%arg0: i32, %arg1: i32) -> (i32, i32) {
    %c0_i32 = arith.constant 0 : i32
    %c0_i32_0 = arith.constant 0 : i32
    %c0_i32_1 = arith.constant 0 : i32
    return %c0_i32, %c0_i32_0 : i32, i32
  }
  func.func @transform_11(%arg0: i32, %arg1: i32) -> (i32, i32, i32, i32) {
    %c0_i32 = arith.constant 0 : i32
    %c0_i32_0 = arith.constant 0 : i32
    %c0_i32_1 = arith.constant 0 : i32
    return %arg0, %arg1, %c0_i32, %c0_i32_0 : i32, i32, i32, i32
  }
}

module attributes {stable_mosaic.version = 11 : i64} {
  func.func @kernel(%arg0: i32, %arg1: i32, %arg2: memref<1x8x8x256xbf16, #tpu.memory_space<vmem>>, %arg3: memref<1x1x8x256xbf16, #tpu.memory_space<vmem>>, %arg4: memref<1x1x8x256xbf16, #tpu.memory_space<vmem>>, %arg5: memref<3x768x256xbf16, #tpu.memory_space<vmem>>, %arg6: memref<1x256xf32, #tpu.memory_space<vmem>>, %arg7: memref<256x128xbf16, #tpu.memory_space<vmem>>, %arg8: memref<1x128xf32, #tpu.memory_space<vmem>>, %arg9: memref<1x8x8x128xf32, #tpu.memory_space<vmem>>) attributes {dimension_semantics = [#tpu.dimension_semantics<parallel>, #tpu.dimension_semantics<parallel>], iteration_bounds = array<i64: 2, 1>, scalar_prefetch = 0 : i64, scratch_operands = 0 : i64, tpu.core_type = #tpu.core_type<tc>, window_params = [{transform_indices = @transform_0, window_bounds = array<i64: 1, 8, 8, 256>}, {transform_indices = @transform_1, window_bounds = array<i64: 1, 1, 8, 256>}, {transform_indices = @transform_2, window_bounds = array<i64: 1, 1, 8, 256>}, {pipeline_mode = #tpu.pipeline_mode<synchronous>, transform_indices = @transform_3, window_bounds = array<i64: 3, 768, 256>}, {pipeline_mode = #tpu.pipeline_mode<synchronous>, transform_indices = @transform_4, window_bounds = array<i64: 1, 256>}, {pipeline_mode = #tpu.pipeline_mode<synchronous>, transform_indices = @transform_5, window_bounds = array<i64: 256, 128>}, {pipeline_mode = #tpu.pipeline_mode<synchronous>, transform_indices = @transform_6, window_bounds = array<i64: 1, 128>}, {transform_indices = @transform_7, window_bounds = array<i64: 1, 8, 8, 128>}]} {
    %c0_i32 = arith.constant 0 : i32
    %0 = arith.cmpi sgt, %arg1, %c0_i32 : i32
    %c0_i32_0 = arith.constant 0 : i32
    %1 = arith.cmpi slt, %arg1, %c0_i32_0 : i32
    %c8_i32 = arith.constant 8 : i32
    %2 = arith.muli %arg1, %c8_i32 : i32
    %c8_i32_1 = arith.constant 8 : i32
    %3 = arith.addi %2, %c8_i32_1 : i32
    %c8_i32_2 = arith.constant 8 : i32
    %4 = arith.cmpi slt, %3, %c8_i32_2 : i32
    %5 = arith.andi %1, %4 : i1
    %c0 = arith.constant 0 : index
    %c0_3 = arith.constant 0 : index
    %c0_4 = arith.constant 0 : index
    %c0_5 = arith.constant 0 : index
    %6 = vector.load %arg3[%c0, %c0_3, %c0_4, %c0_5] : memref<1x1x8x256xbf16, #tpu.memory_space<vmem>>, vector<1x1x8x256xbf16>
    %7 = vector.shape_cast %6 : vector<1x1x8x256xbf16> to vector<1x8x256xbf16>
    %8 = arith.extui %0 : i1 to i32
    %9 = arith.sitofp %8 : i32 to f32
    %10 = arith.truncf %9 : f32 to bf16
    %11 = vector.broadcast %10 : bf16 to vector<1x8x256xbf16>
    %12 = arith.mulf %7, %11 : vector<1x8x256xbf16>
    %c0_6 = arith.constant 0 : index
    %c0_7 = arith.constant 0 : index
    %c0_8 = arith.constant 0 : index
    %c0_9 = arith.constant 0 : index
    %13 = vector.load %arg4[%c0_6, %c0_7, %c0_8, %c0_9] : memref<1x1x8x256xbf16, #tpu.memory_space<vmem>>, vector<1x1x8x256xbf16>
    %14 = vector.shape_cast %13 : vector<1x1x8x256xbf16> to vector<1x8x256xbf16>
    %15 = arith.extui %5 : i1 to i32
    %16 = arith.sitofp %15 : i32 to f32
    %17 = arith.truncf %16 : f32 to bf16
    %18 = vector.broadcast %17 : bf16 to vector<1x8x256xbf16>
    %19 = arith.mulf %14, %18 : vector<1x8x256xbf16>
    %c0_10 = arith.constant 0 : index
    %c0_11 = arith.constant 0 : index
    %c0_12 = arith.constant 0 : index
    %c0_13 = arith.constant 0 : index
    %20 = vector.load %arg2[%c0_10, %c0_11, %c0_12, %c0_13] : memref<1x8x8x256xbf16, #tpu.memory_space<vmem>>, vector<1x8x8x256xbf16>
    %21 = vector.shape_cast %20 : vector<1x8x8x256xbf16> to vector<8x8x256xbf16>
    %22 = tpu.concatenate %12, %21, %19 in 0 : vector<1x8x256xbf16>, vector<8x8x256xbf16>, vector<1x8x256xbf16> -> vector<10x8x256xbf16>
    %cst = arith.constant 0.000000e+00 : bf16
    %23 = vector.broadcast %cst : bf16 to vector<10x1x256xbf16>
    %24 = vector.extract_strided_slice %22 {offsets = [0, 0, 0], sizes = [10, 7, 256], strides = [1, 1, 1]} : vector<10x8x256xbf16> to vector<10x7x256xbf16>
    %25 = tpu.concatenate %23, %24 in 1 : vector<10x1x256xbf16>, vector<10x7x256xbf16> -> vector<10x8x256xbf16>
    %26 = vector.extract_strided_slice %22 {offsets = [0, 1, 0], sizes = [10, 7, 256], strides = [1, 1, 1]} : vector<10x8x256xbf16> to vector<10x7x256xbf16>
    %27 = tpu.concatenate %26, %23 in 1 : vector<10x7x256xbf16>, vector<10x1x256xbf16> -> vector<10x8x256xbf16>
    %28 = tpu.concatenate %25, %22, %27 in 2 : vector<10x8x256xbf16>, vector<10x8x256xbf16>, vector<10x8x256xbf16> -> vector<10x8x768xbf16>
    %29 = vector.extract_strided_slice %28 {offsets = [0, 0, 0], sizes = [8, 8, 768], strides = [1, 1, 1]} : vector<10x8x768xbf16> to vector<8x8x768xbf16>
    %30 = vector.shape_cast %29 : vector<8x8x768xbf16> to vector<64x768xbf16>
    %c0_14 = arith.constant 0 : index
    %c0_15 = arith.constant 0 : index
    %c0_16 = arith.constant 0 : index
    %31 = vector.load %arg5[%c0_14, %c0_15, %c0_16] : memref<3x768x256xbf16, #tpu.memory_space<vmem>>, vector<1x768x256xbf16>
    %32 = vector.shape_cast %31 : vector<1x768x256xbf16> to vector<768x256xbf16>
    %cst_17 = arith.constant dense<0.000000e+00> : vector<64x256xf32>
    %33 = tpu.matmul %30, %32, %cst_17 {dimension_numbers = #tpu.dot_dimension_numbers<[1], [0], [0], [1], [0, 0, 1, 1], [], []>} : vector<64x768xbf16>, vector<768x256xbf16>, vector<64x256xf32> -> vector<64x256xf32>
    %34 = vector.extract_strided_slice %28 {offsets = [1, 0, 0], sizes = [8, 8, 768], strides = [1, 1, 1]} : vector<10x8x768xbf16> to vector<8x8x768xbf16>
    %35 = vector.shape_cast %34 : vector<8x8x768xbf16> to vector<64x768xbf16>
    %c1 = arith.constant 1 : index
    %c0_18 = arith.constant 0 : index
    %c0_19 = arith.constant 0 : index
    %36 = vector.load %arg5[%c1, %c0_18, %c0_19] : memref<3x768x256xbf16, #tpu.memory_space<vmem>>, vector<1x768x256xbf16>
    %37 = vector.shape_cast %36 : vector<1x768x256xbf16> to vector<768x256xbf16>
    %cst_20 = arith.constant dense<0.000000e+00> : vector<64x256xf32>
    %38 = tpu.matmul %35, %37, %cst_20 {dimension_numbers = #tpu.dot_dimension_numbers<[1], [0], [0], [1], [0, 0, 1, 1], [], []>} : vector<64x768xbf16>, vector<768x256xbf16>, vector<64x256xf32> -> vector<64x256xf32>
    %39 = arith.addf %33, %38 : vector<64x256xf32>
    %40 = vector.extract_strided_slice %28 {offsets = [2, 0, 0], sizes = [8, 8, 768], strides = [1, 1, 1]} : vector<10x8x768xbf16> to vector<8x8x768xbf16>
    %41 = vector.shape_cast %40 : vector<8x8x768xbf16> to vector<64x768xbf16>
    %c2 = arith.constant 2 : index
    %c0_21 = arith.constant 0 : index
    %c0_22 = arith.constant 0 : index
    %42 = vector.load %arg5[%c2, %c0_21, %c0_22] : memref<3x768x256xbf16, #tpu.memory_space<vmem>>, vector<1x768x256xbf16>
    %43 = vector.shape_cast %42 : vector<1x768x256xbf16> to vector<768x256xbf16>
    %cst_23 = arith.constant dense<0.000000e+00> : vector<64x256xf32>
    %44 = tpu.matmul %41, %43, %cst_23 {dimension_numbers = #tpu.dot_dimension_numbers<[1], [0], [0], [1], [0, 0, 1, 1], [], []>} : vector<64x768xbf16>, vector<768x256xbf16>, vector<64x256xf32> -> vector<64x256xf32>
    %45 = arith.addf %39, %44 : vector<64x256xf32>
    %c0_24 = arith.constant 0 : index
    %c0_25 = arith.constant 0 : index
    %46 = vector.load %arg6[%c0_24, %c0_25] : memref<1x256xf32, #tpu.memory_space<vmem>>, vector<1x256xf32>
    %47 = vector.broadcast %46 : vector<1x256xf32> to vector<64x256xf32>
    %48 = arith.addf %45, %47 : vector<64x256xf32>
    %cst_26 = arith.constant 0.000000e+00 : f32
    %49 = vector.broadcast %cst_26 : f32 to vector<64x256xf32>
    %50 = arith.maximumf %48, %49 : vector<64x256xf32>
    %51 = arith.truncf %50 : vector<64x256xf32> to vector<64x256xbf16>
    %c0_27 = arith.constant 0 : index
    %c0_28 = arith.constant 0 : index
    %52 = vector.load %arg7[%c0_27, %c0_28] : memref<256x128xbf16, #tpu.memory_space<vmem>>, vector<256x128xbf16>
    %cst_29 = arith.constant dense<0.000000e+00> : vector<64x128xf32>
    %53 = tpu.matmul %51, %52, %cst_29 {dimension_numbers = #tpu.dot_dimension_numbers<[1], [0], [0], [1], [0, 0, 1, 1], [], []>} : vector<64x256xbf16>, vector<256x128xbf16>, vector<64x128xf32> -> vector<64x128xf32>
    %c0_30 = arith.constant 0 : index
    %c0_31 = arith.constant 0 : index
    %54 = vector.load %arg8[%c0_30, %c0_31] : memref<1x128xf32, #tpu.memory_space<vmem>>, vector<1x128xf32>
    %55 = vector.broadcast %54 : vector<1x128xf32> to vector<64x128xf32>
    %56 = arith.addf %53, %55 : vector<64x128xf32>
    %57 = vector.shape_cast %56 : vector<64x128xf32> to vector<8x8x128xf32>
    %c0_32 = arith.constant 0 : index
    %c0_33 = arith.constant 0 : index
    %c0_34 = arith.constant 0 : index
    %c0_35 = arith.constant 0 : index
    %58 = vector.load %arg9[%c0_32, %c0_33, %c0_34, %c0_35] : memref<1x8x8x128xf32, #tpu.memory_space<vmem>>, vector<1x8x8x128xf32>
    %59 = vector.shape_cast %58 : vector<1x8x8x128xf32> to vector<8x8x128xf32>
    %60 = vector.shape_cast %57 : vector<8x8x128xf32> to vector<1x8x8x128xf32>
    tpu.vector_store %arg9[%c0_32, %c0_33, %c0_34, %c0_35], %60 {strides = array<i32>} : memref<1x8x8x128xf32, #tpu.memory_space<vmem>>, vector<1x8x8x128xf32>,
    return
  }
  func.func @transform_0(%arg0: i32, %arg1: i32) -> (i32, i32, i32, i32) {
    %c0_i32 = arith.constant 0 : i32
    %c0_i32_0 = arith.constant 0 : i32
    %c0_i32_1 = arith.constant 0 : i32
    return %arg0, %arg1, %c0_i32, %c0_i32_0 : i32, i32, i32, i32
  }
  func.func @transform_1(%arg0: i32, %arg1: i32) -> (i32, i32, i32, i32) {
    %c8_i32 = arith.constant 8 : i32
    %0 = arith.muli %arg1, %c8_i32 : i32
    %c1_i32 = arith.constant 1 : i32
    %1 = arith.subi %0, %c1_i32 : i32
    %c0_i32 = arith.constant 0 : i32
    %2 = arith.maxsi %1, %c0_i32 : i32
    %c0_i32_0 = arith.constant 0 : i32
    %c0_i32_1 = arith.constant 0 : i32
    %c0_i32_2 = arith.constant 0 : i32
    return %arg0, %2, %c0_i32_0, %c0_i32_1 : i32, i32, i32, i32
  }
  func.func @transform_2(%arg0: i32, %arg1: i32) -> (i32, i32, i32, i32) {
    %c8_i32 = arith.constant 8 : i32
    %0 = arith.muli %arg1, %c8_i32 : i32
    %c8_i32_0 = arith.constant 8 : i32
    %1 = arith.addi %0, %c8_i32_0 : i32
    %c7_i32 = arith.constant 7 : i32
    %2 = arith.minsi %1, %c7_i32 : i32
    %c0_i32 = arith.constant 0 : i32
    %c0_i32_1 = arith.constant 0 : i32
    %c0_i32_2 = arith.constant 0 : i32
    return %arg0, %2, %c0_i32, %c0_i32_1 : i32, i32, i32, i32
  }
  func.func @transform_3(%arg0: i32, %arg1: i32) -> (i32, i32, i32) {
    %c0_i32 = arith.constant 0 : i32
    %c0_i32_0 = arith.constant 0 : i32
    %c0_i32_1 = arith.constant 0 : i32
    %c0_i32_2 = arith.constant 0 : i32
    return %c0_i32, %c0_i32_0, %c0_i32_1 : i32, i32, i32
  }
  func.func @transform_4(%arg0: i32, %arg1: i32) -> (i32, i32) {
    %c0_i32 = arith.constant 0 : i32
    %c0_i32_0 = arith.constant 0 : i32
    %c0_i32_1 = arith.constant 0 : i32
    return %c0_i32, %c0_i32_0 : i32, i32
  }
  func.func @transform_5(%arg0: i32, %arg1: i32) -> (i32, i32) {
    %c0_i32 = arith.constant 0 : i32
    %c0_i32_0 = arith.constant 0 : i32
    %c0_i32_1 = arith.constant 0 : i32
    return %c0_i32, %c0_i32_0 : i32, i32
  }
  func.func @transform_6(%arg0: i32, %arg1: i32) -> (i32, i32) {
    %c0_i32 = arith.constant 0 : i32
    %c0_i32_0 = arith.constant 0 : i32
    %c0_i32_1 = arith.constant 0 : i32
    return %c0_i32, %c0_i32_0 : i32, i32
  }
  func.func @transform_7(%arg0: i32, %arg1: i32) -> (i32, i32, i32, i32) {
    %c0_i32 = arith.constant 0 : i32
    %c0_i32_0 = arith.constant 0 : i32
    %c0_i32_1 = arith.constant 0 : i32
    return %arg0, %arg1, %c0_i32, %c0_i32_0 : i32, i32, i32, i32
  }
}

</mosaic_0001>

<llo_original>
// kernel: decoder_forward.3
$region0: #{decoder_forward.3}
  #allocation0 [shape = 'u32[]', space=smem, size = 0x4, offset = 0x4, fixed_abs, tag = 'smem constant byte address 0x4 - core index']
  #allocation1 [shape = 'u32[144,128]{1,0:T(1,128)}', space=vmem, size = 0x12000, scoped, tag = 'internal scratch']
  %s0 = inlined_call_operand.vmem [shape: bf16[2,8,8,256], index: 0, kind: input, shape index: {}, may-alias: {0,1,2}]
  %s1 = inlined_call_operand.vmem [shape: bf16[2,8,8,256], index: 1, kind: input, shape index: {}, may-alias: {0,1,2}]
  %s2 = inlined_call_operand.vmem [shape: bf16[2,8,8,256], index: 2, kind: input, shape index: {}, may-alias: {0,1,2}]
  %s3 = inlined_call_operand.vmem [shape: bf16[3,768,256], index: 3, kind: input, shape index: {}]
  %s4 = inlined_call_operand.vmem [shape: f32[1,256], index: 4, kind: input, shape index: {}]
  %s5 = inlined_call_operand.vmem [shape: bf16[256,128], index: 5, kind: input, shape index: {}]
  %s6 = inlined_call_operand.vmem [shape: f32[1,128], index: 6, kind: input, shape index: {}]
  %s7 = inlined_call_operand.vmem [shape: f32[2,8,8,128], index: 7, kind: output, shape index: {}]
  %s8 = sld [smem:[#allocation0]]
  $region61: #{decoder_forward.3} parent=0
    _
  %s10 = ssub.s32 1, %s8
  %s11 = scalar_select 0, %s10, %s8
  loop: start=0, step=1, limit=4
  $region2: #{decoder_forward.3} parent=0 // loop_pre_header
    _
  $region3: #{decoder_forward.3} parent=0 // loop_header
    %s13 = sphi 0, %s17
    %p14 = scmp.ge.s32.totalorder %s13, 4
    %s20 = sphi 0, %s32
    %s21 = sphi 0, %s28
    %s22 = sphi 0, %s20
    %s23 = sphi 0, %s21
    %s24 = sphi 0, %s22
    %s25 = sphi 0, %s23
    %s37 = sphi 0, %s39
    %s40 = sphi 0, %s37
    %s41 = sphi 0, %s40
    %s57 = sphi 0, %s41
    %s73 = sphi 0, %s75
    %s76 = sphi 0, %s73
    %s77 = sphi 0, %s76
    %s93 = sphi 0, %s77
    %s109 = sphi 0, %s111
    %s112 = sphi 0, %s109
    %s113 = sphi 0, %s112
    %s129 = sphi 0, %s113
    %s133 = sphi 0, %s133
    %s135 = sphi 0, %s133
    %s136 = sphi 0, %s135
    %s150 = sphi 0, %s136
    %s154 = sphi 0, %s154
    %s156 = sphi 0, %s154
    %s157 = sphi 0, %s156
    %s171 = sphi 0, %s157
    %s175 = sphi 0, %s175
    %s177 = sphi 0, %s175
    %s178 = sphi 0, %s177
    %s192 = sphi 0, %s178
    %s196 = sphi 0, %s196
    %s198 = sphi 0, %s196
    %s199 = sphi 0, %s198
    %s213 = sphi 0, %s199
    %s221 = sphi 0, %s223
    %s224 = sphi 0, %s221
    %s225 = sphi 0, %s224
    %s241 = sphi 0, %s225
  $region4: #{decoder_forward.3} parent=0 // loop_header_branch
    %16 = sbr.rel (%p14) target = $region8
  $region5: #{decoder_forward.3} parent=0 // loop_body
    %s18 = ssub.s32 %s13, 1
    %s19 = ssub.s32 %s13, 2
    %s26 = sadd.s32 1, %s21
    %p27 = scmp.ge.s32.totalorder %s26, 1
    %s28 = scalar_select %p27, 0, %s26
    %s29 = sadd.s32 1, %s20
    %s30 = scalar_select %p27, %s29, %s20
    %p31 = scmp.ge.s32.totalorder %s30, 2
    %s32 = scalar_select %p31, 0, %s30
    %s33 = ssub.s32 %s20, %s32
    %s34 = ssub.s32 %s21, %s28
    %s35 = sor.u32 %s33, %s34
    %p36 = scmp.eq.s32.totalorder %s35, 0
    %s38 = sadd.s32 %s37, 1
    %s39 = scalar_select %p36, %s37, %s38
    %p42 = pneg %p36
    %p43 = scmp.eq.s32.totalorder %s13, 1
    %p44 = por %p42, %p43
    %p45 = scmp.ne.s32.totalorder %s37, %s40
    %p46 = scmp.eq.s32.totalorder %s13, 0
    %p47 = por %p45, %p46
    %p48 = scmp.ne.s32.totalorder %s37, %s40
    %p49 = scmp.eq.s32.totalorder %s18, 1
    %p50 = por %p48, %p49
    %p51 = scmp.ne.s32.totalorder %s40, %s41
    %p52 = scmp.eq.s32.totalorder %s18, 0
    %p53 = por %p51, %p52
    %p54 = scmp.ne.s32.totalorder %s40, %s41
    %p55 = scmp.eq.s32.totalorder %s19, 1
    %p56 = por %p54, %p55
    %p58 = scmp.ne.s32.totalorder %s41, %s57
    %p59 = scmp.eq.s32.totalorder %s19, 0
    %p60 = por %p58, %p59
    %s61 = smul.u32 %s21, 8
    %s62 = ssub.s32 %s61, 1
    %p63 = scmp.gt.s32.totalorder %s62, 0
    %s64 = scalar_select %p63, %s62, 0
    %s65 = smul.u32 %s28, 8
    %s66 = ssub.s32 %s65, 1
    %p67 = scmp.gt.s32.totalorder %s66, 0
    %s68 = scalar_select %p67, %s66, 0
    %s69 = ssub.s32 %s20, %s32
    %s70 = ssub.s32 %s64, %s68
    %s71 = sor.u32 %s69, %s70
    %p72 = scmp.eq.s32.totalorder %s71, 0
    %s74 = sadd.s32 %s73, 1
    %s75 = scalar_select %p72, %s73, %s74
    %p78 = pneg %p72
    %p79 = scmp.eq.s32.totalorder %s13, 1
    %p80 = por %p78, %p79
    %p81 = scmp.ne.s32.totalorder %s73, %s76
    %p82 = scmp.eq.s32.totalorder %s13, 0
    %p83 = por %p81, %p82
    %p84 = scmp.ne.s32.totalorder %s73, %s76
    %p85 = scmp.eq.s32.totalorder %s18, 1
    %p86 = por %p84, %p85
    %p87 = scmp.ne.s32.totalorder %s76, %s77
    %p88 = scmp.eq.s32.totalorder %s18, 0
    %p89 = por %p87, %p88
    %p90 = scmp.ne.s32.totalorder %s76, %s77
    %p91 = scmp.eq.s32.totalorder %s19, 1
    %p92 = por %p90, %p91
    %p94 = scmp.ne.s32.totalorder %s77, %s93
    %p95 = scmp.eq.s32.totalorder %s19, 0
    %p96 = por %p94, %p95
    %s97 = smul.u32 %s21, 8
    %s98 = sadd.s32 %s97, 8
    %p99 = scmp.lt.s32.totalorder %s98, 7
    %s100 = scalar_select %p99, %s98, 7
    %s101 = smul.u32 %s28, 8
    %s102 = sadd.s32 %s101, 8
    %p103 = scmp.lt.s32.totalorder %s102, 7
    %s104 = scalar_select %p103, %s102, 7
    %s105 = ssub.s32 %s20, %s32
    %s106 = ssub.s32 %s100, %s104
    %s107 = sor.u32 %s105, %s106
    %p108 = scmp.eq.s32.totalorder %s107, 0
    %s110 = sadd.s32 %s109, 1
    %s111 = scalar_select %p108, %s109, %s110
    %p114 = pneg %p108
    %p115 = scmp.eq.s32.totalorder %s13, 1
    %p116 = por %p114, %p115
    %p117 = scmp.ne.s32.totalorder %s109, %s112
    %p118 = scmp.eq.s32.totalorder %s13, 0
    %p119 = por %p117, %p118
    %p120 = scmp.ne.s32.totalorder %s109, %s112
    %p121 = scmp.eq.s32.totalorder %s18, 1
    %p122 = por %p120, %p121
    %p123 = scmp.ne.s32.totalorder %s112, %s113
    %p124 = scmp.eq.s32.totalorder %s18, 0
    %p125 = por %p123, %p124
    %p126 = scmp.ne.s32.totalorder %s112, %s113
    %p127 = scmp.eq.s32.totalorder %s19, 1
    %p128 = por %p126, %p127
    %p130 = scmp.ne.s32.totalorder %s113, %s129
    %p131 = scmp.eq.s32.totalorder %s19, 0
    %p132 = por %p130, %p131
    %s134 = sadd.s32 %s133, 1
    %p137 = scmp.eq.s32.totalorder %s13, 1
    %p138 = scmp.ne.s32.totalorder %s133, %s135
    %p139 = scmp.eq.s32.totalorder %s13, 0
    %p140 = por %p138, %p139
    %p141 = scmp.ne.s32.totalorder %s133, %s135
    %p142 = scmp.eq.s32.totalorder %s18, 1
    %p143 = por %p141, %p142
    %p144 = scmp.ne.s32.totalorder %s135, %s136
    %p145 = scmp.eq.s32.totalorder %s18, 0
    %p146 = por %p144, %p145
    %p147 = scmp.ne.s32.totalorder %s135, %s136
    %p148 = scmp.eq.s32.totalorder %s19, 1
    %p149 = por %p147, %p148
    %p151 = scmp.ne.s32.totalorder %s136, %s150
    %p152 = scmp.eq.s32.totalorder %s19, 0
    %p153 = por %p151, %p152
    %s155 = sadd.s32 %s154, 1
    %p158 = scmp.eq.s32.totalorder %s13, 1
    %p159 = scmp.ne.s32.totalorder %s154, %s156
    %p160 = scmp.eq.s32.totalorder %s13, 0
    %p161 = por %p159, %p160
    %p162 = scmp.ne.s32.totalorder %s154, %s156
    %p163 = scmp.eq.s32.totalorder %s18, 1
    %p164 = por %p162, %p163
    %p165 = scmp.ne.s32.totalorder %s156, %s157
    %p166 = scmp.eq.s32.totalorder %s18, 0
    %p167 = por %p165, %p166
    %p168 = scmp.ne.s32.totalorder %s156, %s157
    %p169 = scmp.eq.s32.totalorder %s19, 1
    %p170 = por %p168, %p169
    %p172 = scmp.ne.s32.totalorder %s157, %s171
    %p173 = scmp.eq.s32.totalorder %s19, 0
    %p174 = por %p172, %p173
    %s176 = sadd.s32 %s175, 1
    %p179 = scmp.eq.s32.totalorder %s13, 1
    %p180 = scmp.ne.s32.totalorder %s175, %s177
    %p181 = scmp.eq.s32.totalorder %s13, 0
    %p182 = por %p180, %p181
    %p183 = scmp.ne.s32.totalorder %s175, %s177
    %p184 = scmp.eq.s32.totalorder %s18, 1
    %p185 = por %p183, %p184
    %p186 = scmp.ne.s32.totalorder %s177, %s178
    %p187 = scmp.eq.s32.totalorder %s18, 0
    %p188 = por %p186, %p187
    %p189 = scmp.ne.s32.totalorder %s177, %s178
    %p190 = scmp.eq.s32.totalorder %s19, 1
    %p191 = por %p189, %p190
    %p193 = scmp.ne.s32.totalorder %s178, %s192
    %p194 = scmp.eq.s32.totalorder %s19, 0
    %p195 = por %p193, %p194
    %s197 = sadd.s32 %s196, 1
    %p200 = scmp.eq.s32.totalorder %s13, 1
    %p201 = scmp.ne.s32.totalorder %s196, %s198
    %p202 = scmp.eq.s32.totalorder %s13, 0
    %p203 = por %p201, %p202
    %p204 = scmp.ne.s32.totalorder %s196, %s198
    %p205 = scmp.eq.s32.totalorder %s18, 1
    %p206 = por %p204, %p205
    %p207 = scmp.ne.s32.totalorder %s198, %s199
    %p208 = scmp.eq.s32.totalorder %s18, 0
    %p209 = por %p207, %p208
    %p210 = scmp.ne.s32.totalorder %s198, %s199
    %p211 = scmp.eq.s32.totalorder %s19, 1
    %p212 = por %p210, %p211
    %p214 = scmp.ne.s32.totalorder %s199, %s213
    %p215 = scmp.eq.s32.totalorder %s19, 0
    %p216 = por %p214, %p215
    %s217 = ssub.s32 %s20, %s32
    %s218 = ssub.s32 %s21, %s28
    %s219 = sor.u32 %s217, %s218
    %p220 = scmp.eq.s32.totalorder %s219, 0
    %s222 = sadd.s32 %s221, 1
    %s223 = scalar_select %p220, %s221, %s222
    %p226 = pneg %p220
    %p227 = scmp.eq.s32.totalorder %s13, 1
    %p228 = por %p226, %p227
    %p229 = scmp.ne.s32.totalorder %s221, %s224
    %p230 = scmp.eq.s32.totalorder %s13, 0
    %p231 = por %p229, %p230
    %p232 = scmp.ne.s32.totalorder %s221, %s224
    %p233 = scmp.eq.s32.totalorder %s18, 1
    %p234 = por %p232, %p233
    %p235 = scmp.ne.s32.totalorder %s224, %s225
    %p236 = scmp.eq.s32.totalorder %s18, 0
    %p237 = por %p235, %p236
    %p238 = scmp.ne.s32.totalorder %s224, %s225
    %p239 = scmp.eq.s32.totalorder %s19, 1
    %p240 = por %p238, %p239
    %p242 = scmp.ne.s32.totalorder %s225, %s241
    %p243 = scmp.eq.s32.totalorder %s19, 0
    %p244 = por %p242, %p243
    %p245 = scmp.le.s32.totalorder 1, %s13
    %p246 = scmp.lt.s32.totalorder %s13, 3
    %p247 = pnand %p245, %p246
    %p248 = pneg %p247
    // Predicated region
    $region9: #{decoder_forward.3} parent=5 // pred_check
      _
    $region10: #{decoder_forward.3} parent=5 // pred_check_branch
      %250 = sbr.rel (%p247) target = $region12
    $region11: #{decoder_forward.3} parent=5 // pred_region
      %s251 = ssub.s32 %s13, 1
      // Predicated region
      $region13: #{decoder_forward.3} parent=11 // pred_check
        %p252 = pneg %p146
      $region14: #{decoder_forward.3} parent=11 // pred_check_branch
        %254 = sbr.rel (%p252) target = $region16
      $region15: #{decoder_forward.3} parent=11 // pred_region
        _
      $region16: #{decoder_forward.3} parent=11 // pred_fallthru
        _
      // Predicated region
      $region17: #{decoder_forward.3} parent=11 // pred_check
        %p255 = pneg %p167
      $region18: #{decoder_forward.3} parent=11 // pred_check_branch
        %257 = sbr.rel (%p255) target = $region20
      $region19: #{decoder_forward.3} parent=11 // pred_region
        _
      $region20: #{decoder_forward.3} parent=11 // pred_fallthru
        _
      // Predicated region
      $region21: #{decoder_forward.3} parent=11 // pred_check
        %p258 = pneg %p188
      $region22: #{decoder_forward.3} parent=11 // pred_check_branch
        %260 = sbr.rel (%p258) target = $region24
      $region23: #{decoder_forward.3} parent=11 // pred_region
        _
      $region24: #{decoder_forward.3} parent=11 // pred_fallthru
        _
      // Predicated region
      $region25: #{decoder_forward.3} parent=11 // pred_check
        %p261 = pneg %p209
      $region26: #{decoder_forward.3} parent=11 // pred_check_branch
        %263 = sbr.rel (%p261) target = $region28
      $region27: #{decoder_forward.3} parent=11 // pred_region
        _
      $region28: #{decoder_forward.3} parent=11 // pred_fallthru
        _
    $region12: #{decoder_forward.3} parent=5 // pred_fallthru
      _
    %p264 = scmp.lt.s32.totalorder %s13, 2
    // Predicated region
    $region29: #{decoder_forward.3} parent=5 // pred_check
      %p265 = pneg %p264
    $region30: #{decoder_forward.3} parent=5 // pred_check_branch
      %267 = sbr.rel (%p265) target = $region32
    $region31: #{decoder_forward.3} parent=5 // pred_region
      // Predicated region
      $region33: #{decoder_forward.3} parent=31 // pred_check
        %p268 = pneg %p47
      $region34: #{decoder_forward.3} parent=31 // pred_check_branch
        %270 = sbr.rel (%p268) target = $region36
      $region35: #{decoder_forward.3} parent=31 // pred_region
        %s271 = smul.u32 8, %s21
        %p272 = scmp.lt.s32.totalorder %s20, 1
        %s273 = scalar_select %p272, %s20, 1
        %p274 = scmp.lt.s32.totalorder %s271, 7
        %s275 = scalar_select %p274, %s271, 7
        %s276 = smul.addr %s275, 2
        %s277 = smul.addr %s273, 16
        %s278 = sadd.s32 %s276, %s277
        %s279 = smul.addr %s278, 4
        %s280 = scalar_lea.vmem %s0, %s279
        %s281 = smul.u32 8, %s21
      $region36: #{decoder_forward.3} parent=31 // pred_fallthru
        _
      // Predicated region
      $region37: #{decoder_forward.3} parent=31 // pred_check
        %p282 = pneg %p83
      $region38: #{decoder_forward.3} parent=31 // pred_check_branch
        %284 = sbr.rel (%p282) target = $region40
      $region39: #{decoder_forward.3} parent=31 // pred_region
        %s285 = smul.u32 %s21, 8
        %s286 = ssub.s32 %s285, 1
        %p287 = scmp.gt.s32.totalorder %s286, 0
        %s288 = scalar_select %p287, %s286, 0
        %p289 = scmp.lt.s32.totalorder %s20, 1
        %s290 = scalar_select %p289, %s20, 1
        %p291 = scmp.lt.s32.totalorder %s288, 7
        %s292 = scalar_select %p291, %s288, 7
        %s293 = smul.addr %s292, 2
        %s294 = smul.addr %s290, 16
        %s295 = sadd.s32 %s293, %s294
        %s296 = smul.addr %s295, 4
        %s297 = scalar_lea.vmem %s1, %s296
        %s298 = smul.u32 %s21, 8
        %s299 = ssub.s32 %s298, 1
        %p300 = scmp.gt.s32.totalorder %s299, 0
        %s301 = scalar_select %p300, %s299, 0
      $region40: #{decoder_forward.3} parent=31 // pred_fallthru
        _
      // Predicated region
      $region41: #{decoder_forward.3} parent=31 // pred_check
        %p302 = pneg %p119
      $region42: #{decoder_forward.3} parent=31 // pred_check_branch
        %304 = sbr.rel (%p302) target = $region44
      $region43: #{decoder_forward.3} parent=31 // pred_region
        %s305 = smul.u32 %s21, 8
        %s306 = sadd.s32 %s305, 8
        %p307 = scmp.lt.s32.totalorder %s306, 7
        %s308 = scalar_select %p307, %s306, 7
        %p309 = scmp.lt.s32.totalorder %s20, 1
        %s310 = scalar_select %p309, %s20, 1
        %p311 = scmp.lt.s32.totalorder %s308, 7
        %s312 = scalar_select %p311, %s308, 7
        %s313 = smul.addr %s312, 2
        %s314 = smul.addr %s310, 16
        %s315 = sadd.s32 %s313, %s314
        %s316 = smul.addr %s315, 4
        %s317 = scalar_lea.vmem %s2, %s316
        %s318 = smul.u32 %s21, 8
        %s319 = sadd.s32 %s318, 8
        %p320 = scmp.lt.s32.totalorder %s319, 7
        %s321 = scalar_select %p320, %s319, 7
      $region44: #{decoder_forward.3} parent=31 // pred_fallthru
        _
    $region32: #{decoder_forward.3} parent=5 // pred_fallthru
      _
    %p322 = scmp.le.s32.totalorder 1, %s13
    %p323 = scmp.lt.s32.totalorder %s13, 3
    %p324 = pnand %p322, %p323
    %p325 = pneg %p324
    // Predicated region
    $region45: #{decoder_forward.3} parent=5 // pred_check
      _
    $region46: #{decoder_forward.3} parent=5 // pred_check_branch
      %327 = sbr.rel (%p324) target = $region48
    $region47: #{decoder_forward.3} parent=5 // pred_region
      %s328 = ssub.s32 %s13, 1
      %s329 = smul.u32 8, %s23
      %p330 = scmp.lt.s32.totalorder %s22, 1
      %s331 = scalar_select %p330, %s22, 1
      %p332 = scmp.lt.s32.totalorder %s329, 7
      %s333 = scalar_select %p332, %s329, 7
      %s334 = smul.addr %s333, 2
      %s335 = smul.addr %s331, 16
      %s336 = sadd.s32 %s334, %s335
      %s337 = smul.addr %s336, 4
      %s338 = scalar_lea.vmem %s0, %s337
      %p339 = pneg %p53
      %p340 = pneg %p50
      %s341 = smul.u32 %s23, 8
      %s342 = ssub.s32 %s341, 1
      %p343 = scmp.gt.s32.totalorder %s342, 0
      %s344 = scalar_select %p343, %s342, 0
      %p345 = scmp.lt.s32.totalorder %s22, 1
      %s346 = scalar_select %p345, %s22, 1
      %p347 = scmp.lt.s32.totalorder %s344, 7
      %s348 = scalar_select %p347, %s344, 7
      %s349 = smul.addr %s348, 2
      %s350 = smul.addr %s346, 16
      %s351 = sadd.s32 %s349, %s350
      %s352 = smul.addr %s351, 4
      %s353 = scalar_lea.vmem %s1, %s352
      %p354 = pneg %p89
      %p355 = pneg %p86
      %s356 = smul.u32 %s23, 8
      %s357 = sadd.s32 %s356, 8
      %p358 = scmp.lt.s32.totalorder %s357, 7
      %s359 = scalar_select %p358, %s357, 7
      %p360 = scmp.lt.s32.totalorder %s22, 1
      %s361 = scalar_select %p360, %s22, 1
      %p362 = scmp.lt.s32.totalorder %s359, 7
      %s363 = scalar_select %p362, %s359, 7
      %s364 = smul.addr %s363, 2
      %s365 = smul.addr %s361, 16
      %s366 = sadd.s32 %s364, %s365
      %s367 = smul.addr %s366, 4
      %s368 = scalar_lea.vmem %s2, %s367
      %p369 = pneg %p125
      %p370 = pneg %p122
      %p371 = pneg %p146
      %p372 = pneg %p143
      %p373 = pneg %p167
      %p374 = pneg %p164
      %p375 = pneg %p188
      %p376 = pneg %p185
      %p377 = pneg %p209
      %p378 = pneg %p206
      %p379 = pneg %p237
      %p380 = pneg %p234
      %s381 = smul.u32 8, %s23
      %p382 = scmp.lt.s32.totalorder %s22, 1
      %s383 = scalar_select %p382, %s22, 1
      %p384 = scmp.lt.s32.totalorder %s381, 7
      %s385 = scalar_select %p384, %s381, 7
      %s386 = smul.addr %s383, 8
      %s387 = sadd.s32 %s385, %s386
      %s388 = smul.addr %s387, 8
      %s389 = scalar_lea.vmem %s7, %s388
      %s390 = smul.u32 8, %s23
      %p391 = scmp.lt.s32.totalorder %s22, 1
      %s392 = scalar_select %p391, %s22, 1
      %p393 = scmp.lt.s32.totalorder %s390, 7
      %s394 = scalar_select %p393, %s390, 7
      %s395 = smul.addr %s394, 2
      %s396 = smul.addr %s392, 16
      %s397 = sadd.s32 %s395, %s396
      %s398 = smul.addr %s397, 4
      %s399 = scalar_lea.vmem %s0, %s398
      %s400 = smul.u32 8, %s23
      %s401 = smul.u32 %s23, 8
      %s402 = ssub.s32 %s401, 1
      %p403 = scmp.gt.s32.totalorder %s402, 0
      %s404 = scalar_select %p403, %s402, 0
      %p405 = scmp.lt.s32.totalorder %s22, 1
      %s406 = scalar_select %p405, %s22, 1
      %p407 = scmp.lt.s32.totalorder %s404, 7
      %s408 = scalar_select %p407, %s404, 7
      %s409 = smul.addr %s408, 2
      %s410 = smul.addr %s406, 16
      %s411 = sadd.s32 %s409, %s410
      %s412 = smul.addr %s411, 4
      %s413 = scalar_lea.vmem %s1, %s412
      %s414 = smul.u32 %s23, 8
      %s415 = ssub.s32 %s414, 1
      %p416 = scmp.gt.s32.totalorder %s415, 0
      %s417 = scalar_select %p416, %s415, 0
      %s418 = smul.u32 %s23, 8
      %s419 = sadd.s32 %s418, 8
      %p420 = scmp.lt.s32.totalorder %s419, 7
      %s421 = scalar_select %p420, %s419, 7
      %p422 = scmp.lt.s32.totalorder %s22, 1
      %s423 = scalar_select %p422, %s22, 1
      %p424 = scmp.lt.s32.totalorder %s421, 7
      %s425 = scalar_select %p424, %s421, 7
      %s426 = smul.addr %s425, 2
      %s427 = smul.addr %s423, 16
      %s428 = sadd.s32 %s426, %s427
      %s429 = smul.addr %s428, 4
      %s430 = scalar_lea.vmem %s2, %s429
      %s431 = smul.u32 %s23, 8
      %s432 = sadd.s32 %s431, 8
      %p433 = scmp.lt.s32.totalorder %s432, 7
      %s434 = scalar_select %p433, %s432, 7
      %s435 = smul.u32 8, %s23
      %p436 = scmp.lt.s32.totalorder %s22, 1
      %s437 = scalar_select %p436, %s22, 1
      %p438 = scmp.lt.s32.totalorder %s435, 7
      %s439 = scalar_select %p438, %s435, 7
      %s440 = smul.addr %s437, 8
      %s441 = sadd.s32 %s439, %s440
      %s442 = smul.addr %s441, 8
      %s443 = scalar_lea.vmem %s7, %s442
      %s444 = smul.u32 8, %s23
      %p446 = scmp.gt.s32.totalorder %s23, 0
      %p447 = scmp.lt.s32.totalorder %s23, 0
      %s448 = smul.u32 %s23, 8
      %s449 = sadd.s32 %s448, 8
      %p450 = scmp.lt.s32.totalorder %s449, 8
      %p451 = pnand %p447, %p450
      %p452 = pneg %p451
      %v453 = vld [vmem:[%s413] sm:$0xff]
      %s454 = scalar_select %p446, 1, 0
      %s455 = scvt.s32.f32 %s454
      %p457 = scmp.ne.f32.partialorder %s455, %s455
      %s458 = sshrl.u32 %s455, 16
      %s459 = sand.u32 %s458, 1
      %s460 = sadd.s32 32767, %s459
      %s461 = sadd.s32 %s455, %s460
      %s462 = sand.u32 %s461, 4294901760
      %s463 = scalar_select %p457, 2143289344, %s462
      %s465 = sshrl.u32 %s463, 16
      %s466 = sshll.u32 %s465, 16
      %s467 = sor.u32 %s465, %s466
      %v468 = vstv %s467
      %v470 = vmul.bf16 %v453, %v468
      %v471 = vld [vmem:[%s430] sm:$0xff]
      %s472 = scalar_select %p452, 1, 0
      %s473 = scvt.s32.f32 %s472
      %p475 = scmp.ne.f32.partialorder %s473, %s473
      %s476 = sshrl.u32 %s473, 16
      %s477 = sand.u32 %s476, 1
      %s478 = sadd.s32 32767, %s477
      %s479 = sadd.s32 %s473, %s478
      %s480 = sand.u32 %s479, 4294901760
      %s481 = scalar_select %p475, 2143289344, %s480
      %s483 = sshrl.u32 %s481, 16
      %s484 = sshll.u32 %s483, 16
      %s485 = sor.u32 %s483, %s484
      %v486 = vstv %s485
      %v488 = vmul.bf16 %v471, %v486
      %v489 = vld [vmem:[%s399] sm:$0xff]
      %v490 = vld [vmem:[%s399 + $0x8] sm:$0xff]
      %v491 = vld [vmem:[%s399 + $0x10] sm:$0xff]
      %v492 = vld [vmem:[%s399 + $0x18] sm:$0xff]
      %v493 = vld [vmem:[%s399 + $0x20] sm:$0xff]
      %v494 = vld [vmem:[%s399 + $0x28] sm:$0xff]
      %v495 = vld [vmem:[%s399 + $0x30] sm:$0xff]
      %v496 = vld [vmem:[%s399 + $0x38] sm:$0xff]
      %v507 = vunpack.c.l.b16 %v470
      %v508 = vunpack.c.h.b16 %v470
      %v509 = vunpack.c.l.b16 %v489
      %v510 = vunpack.c.h.b16 %v489
      %v511 = vunpack.c.l.b16 %v490
      %v512 = vunpack.c.h.b16 %v490
      %v513 = vunpack.c.l.b16 %v491
      %v514 = vunpack.c.h.b16 %v491
      %v515 = vunpack.c.l.b16 %v492
      %v516 = vunpack.c.h.b16 %v492
      %v517 = vunpack.c.l.b16 %v493
      %v518 = vunpack.c.h.b16 %v493
      %v519 = vunpack.c.l.b16 %v494
      %v520 = vunpack.c.h.b16 %v494
      %v521 = vunpack.c.l.b16 %v495
      %v522 = vunpack.c.h.b16 %v495
      %v523 = vunpack.c.l.b16 %v496
      %v524 = vunpack.c.h.b16 %v496
      %v525 = vunpack.c.l.b16 %v488
      %v526 = vunpack.c.h.b16 %v488
      %v527 = vpack.c.b16 %v507, %v507
      %v528 = vpack.c.b16 %v508, %v508
      %v529 = vpack.c.b16 %v509, %v509
      %v530 = vpack.c.b16 %v510, %v510
      %v531 = vpack.c.b16 %v511, %v511
      %v532 = vpack.c.b16 %v512, %v512
      %v533 = vpack.c.b16 %v513, %v513
      %v534 = vpack.c.b16 %v514, %v514
      %v535 = vpack.c.b16 %v515, %v515
      %v536 = vpack.c.b16 %v516, %v516
      %v537 = vpack.c.b16 %v517, %v517
      %v538 = vpack.c.b16 %v518, %v518
      %v539 = vpack.c.b16 %v519, %v519
      %v540 = vpack.c.b16 %v520, %v520
      %v541 = vpack.c.b16 %v521, %v521
      %v542 = vpack.c.b16 %v522, %v522
      %v543 = vpack.c.b16 %v523, %v523
      %v544 = vpack.c.b16 %v524, %v524
      %v545 = vpack.c.b16 %v525, %v525
      %v546 = vpack.c.b16 %v526, %v526
      %v548 = vshrl.u32 %v527, 16
      %v550 = vrot.slane %v548, 7
      %v551 = vshll.u32 %v527, 16
      %v553 = vor.u32 %v550, %v551
      %v555 = vshrl.u32 %v528, 16
      %v557 = vrot.slane %v555, 7
      %v558 = vshll.u32 %v528, 16
      %v560 = vor.u32 %v557, %v558
      %v562 = vshrl.u32 %v529, 16
      %v564 = vrot.slane %v562, 7
      %v565 = vshll.u32 %v529, 16
      %v567 = vor.u32 %v564, %v565
      %v569 = vshrl.u32 %v530, 16
      %v571 = vrot.slane %v569, 7
      %v572 = vshll.u32 %v530, 16
      %v574 = vor.u32 %v571, %v572
      %v576 = vshrl.u32 %v531, 16
      %v578 = vrot.slane %v576, 7
      %v579 = vshll.u32 %v531, 16
      %v581 = vor.u32 %v578, %v579
      %v583 = vshrl.u32 %v532, 16
      %v585 = vrot.slane %v583, 7
      %v586 = vshll.u32 %v532, 16
      %v588 = vor.u32 %v585, %v586
      %v590 = vshrl.u32 %v533, 16
      %v592 = vrot.slane %v590, 7
      %v593 = vshll.u32 %v533, 16
      %v595 = vor.u32 %v592, %v593
      %v597 = vshrl.u32 %v534, 16
      %v599 = vrot.slane %v597, 7
      %v600 = vshll.u32 %v534, 16
      %v602 = vor.u32 %v599, %v600
      %v604 = vshrl.u32 %v535, 16
      %v606 = vrot.slane %v604, 7
      %v607 = vshll.u32 %v535, 16
      %v609 = vor.u32 %v606, %v607
      %v611 = vshrl.u32 %v536, 16
      %v613 = vrot.slane %v611, 7
      %v614 = vshll.u32 %v536, 16
      %v616 = vor.u32 %v613, %v614
      %v618 = vshrl.u32 %v537, 16
      %v620 = vrot.slane %v618, 7
      %v621 = vshll.u32 %v537, 16
      %v623 = vor.u32 %v620, %v621
      %v625 = vshrl.u32 %v538, 16
      %v627 = vrot.slane %v625, 7
      %v628 = vshll.u32 %v538, 16
      %v630 = vor.u32 %v627, %v628
      %v632 = vshrl.u32 %v539, 16
      %v634 = vrot.slane %v632, 7
      %v635 = vshll.u32 %v539, 16
      %v637 = vor.u32 %v634, %v635
      %v639 = vshrl.u32 %v540, 16
      %v641 = vrot.slane %v639, 7
      %v642 = vshll.u32 %v540, 16
      %v644 = vor.u32 %v641, %v642
      %v646 = vshrl.u32 %v541, 16
      %v648 = vrot.slane %v646, 7
      %v649 = vshll.u32 %v541, 16
      %v651 = vor.u32 %v648, %v649
      %v653 = vshrl.u32 %v542, 16
      %v655 = vrot.slane %v653, 7
      %v656 = vshll.u32 %v542, 16
      %v658 = vor.u32 %v655, %v656
      %v660 = vshrl.u32 %v543, 16
      %v662 = vrot.slane %v660, 7
      %v663 = vshll.u32 %v543, 16
      %v665 = vor.u32 %v662, %v663
      %v667 = vshrl.u32 %v544, 16
      %v669 = vrot.slane %v667, 7
      %v670 = vshll.u32 %v544, 16
      %v672 = vor.u32 %v669, %v670
      %v674 = vshrl.u32 %v545, 16
      %v676 = vrot.slane %v674, 7
      %v677 = vshll.u32 %v545, 16
      %v679 = vor.u32 %v676, %v677
      %v681 = vshrl.u32 %v546, 16
      %v683 = vrot.slane %v681, 7
      %v684 = vshll.u32 %v546, 16
      %v686 = vor.u32 %v683, %v684
      %vm707 = vcmask 1040384
      %vm708 = vsmask.f32 256
      %vm709 = vmand %vm707, %vm708
      %v710 = vsel %vm709, 0, %v553
      %v711 = vsel %vm709, 0, %v560
      %v712 = vsel %vm709, 0, %v567
      %v713 = vsel %vm709, 0, %v574
      %v714 = vsel %vm709, 0, %v581
      %v715 = vsel %vm709, 0, %v588
      %v716 = vsel %vm709, 0, %v595
      %v717 = vsel %vm709, 0, %v602
      %v718 = vsel %vm709, 0, %v609
      %v719 = vsel %vm709, 0, %v616
      %v720 = vsel %vm709, 0, %v623
      %v721 = vsel %vm709, 0, %v630
      %v722 = vsel %vm709, 0, %v637
      %v723 = vsel %vm709, 0, %v644
      %v724 = vsel %vm709, 0, %v651
      %v725 = vsel %vm709, 0, %v658
      %v726 = vsel %vm709, 0, %v665
      %v727 = vsel %vm709, 0, %v672
      %v728 = vsel %vm709, 0, %v679
      %v729 = vsel %vm709, 0, %v686
      %v730 = vrot.slane %v551, 1
      %v731 = vor.u32 %v548, %v730
      %v732 = vrot.slane %v558, 1
      %v733 = vor.u32 %v555, %v732
      %v734 = vrot.slane %v565, 1
      %v735 = vor.u32 %v562, %v734
      %v736 = vrot.slane %v572, 1
      %v737 = vor.u32 %v569, %v736
      %v738 = vrot.slane %v579, 1
      %v739 = vor.u32 %v576, %v738
      %v740 = vrot.slane %v586, 1
      %v741 = vor.u32 %v583, %v740
      %v742 = vrot.slane %v593, 1
      %v743 = vor.u32 %v590, %v742
      %v744 = vrot.slane %v600, 1
      %v745 = vor.u32 %v597, %v744
      %v746 = vrot.slane %v607, 1
      %v747 = vor.u32 %v604, %v746
      %v748 = vrot.slane %v614, 1
      %v749 = vor.u32 %v611, %v748
      %v750 = vrot.slane %v621, 1
      %v751 = vor.u32 %v618, %v750
      %v752 = vrot.slane %v628, 1
      %v753 = vor.u32 %v625, %v752
      %v754 = vrot.slane %v635, 1
      %v755 = vor.u32 %v632, %v754
      %v756 = vrot.slane %v642, 1
      %v757 = vor.u32 %v639, %v756
      %v758 = vrot.slane %v649, 1
      %v759 = vor.u32 %v646, %v758
      %v760 = vrot.slane %v656, 1
      %v761 = vor.u32 %v653, %v760
      %v762 = vrot.slane %v663, 1
      %v763 = vor.u32 %v660, %v762
      %v764 = vrot.slane %v670, 1
      %v765 = vor.u32 %v667, %v764
      %v766 = vrot.slane %v677, 1
      %v767 = vor.u32 %v674, %v766
      %v768 = vrot.slane %v684, 1
      %v769 = vor.u32 %v681, %v768
      %vm790 = vcmask 1043456
      %vm791 = vsmask.f32 3328
      %vm792 = vmand %vm790, %vm791
      %v793 = vsel %vm792, %v731, 0
      %v794 = vsel %vm792, %v733, 0
      %v795 = vsel %vm792, %v735, 0
      %v796 = vsel %vm792, %v737, 0
      %v797 = vsel %vm792, %v739, 0
      %v798 = vsel %vm792, %v741, 0
      %v799 = vsel %vm792, %v743, 0
      %v800 = vsel %vm792, %v745, 0
      %v801 = vsel %vm792, %v747, 0
      %v802 = vsel %vm792, %v749, 0
      %v803 = vsel %vm792, %v751, 0
      %v804 = vsel %vm792, %v753, 0
      %v805 = vsel %vm792, %v755, 0
      %v806 = vsel %vm792, %v757, 0
      %v807 = vsel %vm792, %v759, 0
      %v808 = vsel %vm792, %v761, 0
      %v809 = vsel %vm792, %v763, 0
      %v810 = vsel %vm792, %v765, 0
      %v811 = vsel %vm792, %v767, 0
      %v812 = vsel %vm792, %v769, 0
      %v845 = vunpack.c.l.b16 %v710
      %v846 = vunpack.c.l.b16 %v711
      %v847 = vunpack.c.l.b16 %v793
      %v848 = vunpack.c.l.b16 %v794
      %v849 = vunpack.c.l.b16 %v712
      %v850 = vunpack.c.l.b16 %v713
      %v851 = vunpack.c.l.b16 %v795
      %v852 = vunpack.c.l.b16 %v796
      %v853 = vunpack.c.l.b16 %v714
      %v854 = vunpack.c.l.b16 %v715
      %v855 = vunpack.c.l.b16 %v797
      %v856 = vunpack.c.l.b16 %v798
      %v857 = vunpack.c.l.b16 %v716
      %v858 = vunpack.c.l.b16 %v717
      %v859 = vunpack.c.l.b16 %v799
      %v860 = vunpack.c.l.b16 %v800
      %v861 = vunpack.c.l.b16 %v718
      %v862 = vunpack.c.l.b16 %v719
      %v863 = vunpack.c.l.b16 %v801
      %v864 = vunpack.c.l.b16 %v802
      %v865 = vunpack.c.l.b16 %v720
      %v866 = vunpack.c.l.b16 %v721
      %v867 = vunpack.c.l.b16 %v803
      %v868 = vunpack.c.l.b16 %v804
      %v869 = vunpack.c.l.b16 %v722
      %v870 = vunpack.c.l.b16 %v723
      %v871 = vunpack.c.l.b16 %v805
      %v872 = vunpack.c.l.b16 %v806
      %v873 = vunpack.c.l.b16 %v724
      %v874 = vunpack.c.l.b16 %v725
      %v875 = vunpack.c.l.b16 %v807
      %v876 = vunpack.c.l.b16 %v808
      %v877 = vld [vmem:[%s3] sm:$0xff]
      %v878 = vld [vmem:[%s3 + $0x8] sm:$0xff]
      %v879 = vld [vmem:[%s3 + $0x10] sm:$0xff]
      %v880 = vld [vmem:[%s3 + $0x18] sm:$0xff]
      %v881 = vld [vmem:[%s3 + $0x20] sm:$0xff]
      %v882 = vld [vmem:[%s3 + $0x28] sm:$0xff]
      %v883 = vld [vmem:[%s3 + $0x30] sm:$0xff]
      %v884 = vld [vmem:[%s3 + $0x38] sm:$0xff]
      %v885 = vld [vmem:[%s3 + $0x40] sm:$0xff]
      %v886 = vld [vmem:[%s3 + $0x48] sm:$0xff]
      %v887 = vld [vmem:[%s3 + $0x50] sm:$0xff]
      %v888 = vld [vmem:[%s3 + $0x58] sm:$0xff]
      %v889 = vld [vmem:[%s3 + $0x60] sm:$0xff]
      %v890 = vld [vmem:[%s3 + $0x68] sm:$0xff]
      %v891 = vld [vmem:[%s3 + $0x70] sm:$0xff]
      %v892 = vld [vmem:[%s3 + $0x78] sm:$0xff]
      %v893 = vld [vmem:[%s3 + $0x80] sm:$0xff]
      %v894 = vld [vmem:[%s3 + $0x88] sm:$0xff]
      %v895 = vld [vmem:[%s3 + $0x90] sm:$0xff]
      %v896 = vld [vmem:[%s3 + $0x98] sm:$0xff]
      %v897 = vld [vmem:[%s3 + $0xa0] sm:$0xff]
      %v898 = vld [vmem:[%s3 + $0xa8] sm:$0xff]
      %v899 = vld [vmem:[%s3 + $0xb0] sm:$0xff]
      %v900 = vld [vmem:[%s3 + $0xb8] sm:$0xff]
      %v901 = vld [vmem:[%s3 + $0xc0] sm:$0xff]
      %v902 = vld [vmem:[%s3 + $0xc8] sm:$0xff]
      %v903 = vld [vmem:[%s3 + $0xd0] sm:$0xff]
      %v904 = vld [vmem:[%s3 + $0xd8] sm:$0xff]
      %v905 = vld [vmem:[%s3 + $0xe0] sm:$0xff]
      %v906 = vld [vmem:[%s3 + $0xe8] sm:$0xff]
      %v907 = vld [vmem:[%s3 + $0xf0] sm:$0xff]
      %v908 = vld [vmem:[%s3 + $0xf8] sm:$0xff]
      %v909 = vld [vmem:[%s3 + $0x100] sm:$0xff]
      %v910 = vld [vmem:[%s3 + $0x108] sm:$0xff]
      %v911 = vld [vmem:[%s3 + $0x110] sm:$0xff]
      %v912 = vld [vmem:[%s3 + $0x118] sm:$0xff]
      %v913 = vld [vmem:[%s3 + $0x120] sm:$0xff]
      %v914 = vld [vmem:[%s3 + $0x128] sm:$0xff]
      %v915 = vld [vmem:[%s3 + $0x130] sm:$0xff]
      %v916 = vld [vmem:[%s3 + $0x138] sm:$0xff]
      %v917 = vld [vmem:[%s3 + $0x140] sm:$0xff]
      %v918 = vld [vmem:[%s3 + $0x148] sm:$0xff]
      %v919 = vld [vmem:[%s3 + $0x150] sm:$0xff]
      %v920 = vld [vmem:[%s3 + $0x158] sm:$0xff]
      %v921 = vld [vmem:[%s3 + $0x160] sm:$0xff]
      %v922 = vld [vmem:[%s3 + $0x168] sm:$0xff]
      %v923 = vld [vmem:[%s3 + $0x170] sm:$0xff]
      %v924 = vld [vmem:[%s3 + $0x178] sm:$0xff]
      %v925 = vld [vmem:[%s3 + $0x180] sm:$0xff]
      %v926 = vld [vmem:[%s3 + $0x188] sm:$0xff]
      %v927 = vld [vmem:[%s3 + $0x190] sm:$0xff]
      %v928 = vld [vmem:[%s3 + $0x198] sm:$0xff]
      %v929 = vld [vmem:[%s3 + $0x1a0] sm:$0xff]
      %v930 = vld [vmem:[%s3 + $0x1a8] sm:$0xff]
      %v931 = vld [vmem:[%s3 + $0x1b0] sm:$0xff]
      %v932 = vld [vmem:[%s3 + $0x1b8] sm:$0xff]
      %v933 = vld [vmem:[%s3 + $0x1c0] sm:$0xff]
      %v934 = vld [vmem:[%s3 + $0x1c8] sm:$0xff]
      %v935 = vld [vmem:[%s3 + $0x1d0] sm:$0xff]
      %v936 = vld [vmem:[%s3 + $0x1d8] sm:$0xff]
      %v937 = vld [vmem:[%s3 + $0x1e0] sm:$0xff]
      %v938 = vld [vmem:[%s3 + $0x1e8] sm:$0xff]
      %v939 = vld [vmem:[%s3 + $0x1f0] sm:$0xff]
      %v940 = vld [vmem:[%s3 + $0x1f8] sm:$0xff]
      %v941 = vld [vmem:[%s3 + $0x200] sm:$0xff]
      %v942 = vld [vmem:[%s3 + $0x208] sm:$0xff]
      %v943 = vld [vmem:[%s3 + $0x210] sm:$0xff]
      %v944 = vld [vmem:[%s3 + $0x218] sm:$0xff]
      %v945 = vld [vmem:[%s3 + $0x220] sm:$0xff]
      %v946 = vld [vmem:[%s3 + $0x228] sm:$0xff]
      %v947 = vld [vmem:[%s3 + $0x230] sm:$0xff]
      %v948 = vld [vmem:[%s3 + $0x238] sm:$0xff]
      %v949 = vld [vmem:[%s3 + $0x240] sm:$0xff]
      %v950 = vld [vmem:[%s3 + $0x248] sm:$0xff]
      %v951 = vld [vmem:[%s3 + $0x250] sm:$0xff]
      %v952 = vld [vmem:[%s3 + $0x258] sm:$0xff]
      %v953 = vld [vmem:[%s3 + $0x260] sm:$0xff]
      %v954 = vld [vmem:[%s3 + $0x268] sm:$0xff]
      %v955 = vld [vmem:[%s3 + $0x270] sm:$0xff]
      %v956 = vld [vmem:[%s3 + $0x278] sm:$0xff]
      %v957 = vld [vmem:[%s3 + $0x280] sm:$0xff]
      %v958 = vld [vmem:[%s3 + $0x288] sm:$0xff]
      %v959 = vld [vmem:[%s3 + $0x290] sm:$0xff]
      %v960 = vld [vmem:[%s3 + $0x298] sm:$0xff]
      %v961 = vld [vmem:[%s3 + $0x2a0] sm:$0xff]
      %v962 = vld [vmem:[%s3 + $0x2a8] sm:$0xff]
      %v963 = vld [vmem:[%s3 + $0x2b0] sm:$0xff]
      %v964 = vld [vmem:[%s3 + $0x2b8] sm:$0xff]
      %v965 = vld [vmem:[%s3 + $0x2c0] sm:$0xff]
      %v966 = vld [vmem:[%s3 + $0x2c8] sm:$0xff]
      %v967 = vld [vmem:[%s3 + $0x2d0] sm:$0xff]
      %v968 = vld [vmem:[%s3 + $0x2d8] sm:$0xff]
      %v969 = vld [vmem:[%s3 + $0x2e0] sm:$0xff]
      %v970 = vld [vmem:[%s3 + $0x2e8] sm:$0xff]
      %v971 = vld [vmem:[%s3 + $0x2f0] sm:$0xff]
      %v972 = vld [vmem:[%s3 + $0x2f8] sm:$0xff]
      %v977 = vunpack.c.l.b16 %v726
      %v978 = vunpack.c.l.b16 %v727
      %v979 = vunpack.c.l.b16 %v809
      %v980 = vunpack.c.l.b16 %v810
      %s981 = scalar_lea.vmem %s3, 768
      %v982 = vld [vmem:[%s981] sm:$0xff]
      %v983 = vld [vmem:[%s981 + $0x8] sm:$0xff]
      %v984 = vld [vmem:[%s981 + $0x10] sm:$0xff]
      %v985 = vld [vmem:[%s981 + $0x18] sm:$0xff]
      %v986 = vld [vmem:[%s981 + $0x20] sm:$0xff]
      %v987 = vld [vmem:[%s981 + $0x28] sm:$0xff]
      %v988 = vld [vmem:[%s981 + $0x30] sm:$0xff]
      %v989 = vld [vmem:[%s981 + $0x38] sm:$0xff]
      %v990 = vld [vmem:[%s981 + $0x40] sm:$0xff]
      %v991 = vld [vmem:[%s981 + $0x48] sm:$0xff]
      %v992 = vld [vmem:[%s981 + $0x50] sm:$0xff]
      %v993 = vld [vmem:[%s981 + $0x58] sm:$0xff]
      %v994 = vld [vmem:[%s981 + $0x60] sm:$0xff]
      %v995 = vld [vmem:[%s981 + $0x68] sm:$0xff]
      %v996 = vld [vmem:[%s981 + $0x70] sm:$0xff]
      %v997 = vld [vmem:[%s981 + $0x78] sm:$0xff]
      %v998 = vld [vmem:[%s981 + $0x80] sm:$0xff]
      %v999 = vld [vmem:[%s981 + $0x88] sm:$0xff]
      %v1000 = vld [vmem:[%s981 + $0x90] sm:$0xff]
      %v1001 = vld [vmem:[%s981 + $0x98] sm:$0xff]
      %v1002 = vld [vmem:[%s981 + $0xa0] sm:$0xff]
      %v1003 = vld [vmem:[%s981 + $0xa8] sm:$0xff]
      %v1004 = vld [vmem:[%s981 + $0xb0] sm:$0xff]
      %v1005 = vld [vmem:[%s981 + $0xb8] sm:$0xff]
      %v1006 = vld [vmem:[%s981 + $0xc0] sm:$0xff]
      %v1007 = vld [vmem:[%s981 + $0xc8] sm:$0xff]
      %v1008 = vld [vmem:[%s981 + $0xd0] sm:$0xff]
      %v1009 = vld [vmem:[%s981 + $0xd8] sm:$0xff]
      %v1010 = vld [vmem:[%s981 + $0xe0] sm:$0xff]
      %v1011 = vld [vmem:[%s981 + $0xe8] sm:$0xff]
      %v1012 = vld [vmem:[%s981 + $0xf0] sm:$0xff]
      %v1013 = vld [vmem:[%s981 + $0xf8] sm:$0xff]
      %v1014 = vld [vmem:[%s981 + $0x100] sm:$0xff]
      %v1015 = vld [vmem:[%s981 + $0x108] sm:$0xff]
      %v1016 = vld [vmem:[%s981 + $0x110] sm:$0xff]
      %v1017 = vld [vmem:[%s981 + $0x118] sm:$0xff]
      %v1018 = vld [vmem:[%s981 + $0x120] sm:$0xff]
      %v1019 = vld [vmem:[%s981 + $0x128] sm:$0xff]
      %v1020 = vld [vmem:[%s981 + $0x130] sm:$0xff]
      %v1021 = vld [vmem:[%s981 + $0x138] sm:$0xff]
      %v1022 = vld [vmem:[%s981 + $0x140] sm:$0xff]
      %v1023 = vld [vmem:[%s981 + $0x148] sm:$0xff]
      %v1024 = vld [vmem:[%s981 + $0x150] sm:$0xff]
      %v1025 = vld [vmem:[%s981 + $0x158] sm:$0xff]
      %v1026 = vld [vmem:[%s981 + $0x160] sm:$0xff]
      %v1027 = vld [vmem:[%s981 + $0x168] sm:$0xff]
      %v1028 = vld [vmem:[%s981 + $0x170] sm:$0xff]
      %v1029 = vld [vmem:[%s981 + $0x178] sm:$0xff]
      %v1030 = vld [vmem:[%s981 + $0x180] sm:$0xff]
      %v1031 = vld [vmem:[%s981 + $0x188] sm:$0xff]
      %v1032 = vld [vmem:[%s981 + $0x190] sm:$0xff]
      %v1033 = vld [vmem:[%s981 + $0x198] sm:$0xff]
      %v1034 = vld [vmem:[%s981 + $0x1a0] sm:$0xff]
      %v1035 = vld [vmem:[%s981 + $0x1a8] sm:$0xff]
      %v1036 = vld [vmem:[%s981 + $0x1b0] sm:$0xff]
      %v1037 = vld [vmem:[%s981 + $0x1b8] sm:$0xff]
      %v1038 = vld [vmem:[%s981 + $0x1c0] sm:$0xff]
      %v1039 = vld [vmem:[%s981 + $0x1c8] sm:$0xff]
      %v1040 = vld [vmem:[%s981 + $0x1d0] sm:$0xff]
      %v1041 = vld [vmem:[%s981 + $0x1d8] sm:$0xff]
      %v1042 = vld [vmem:[%s981 + $0x1e0] sm:$0xff]
      %v1043 = vld [vmem:[%s981 + $0x1e8] sm:$0xff]
      %v1044 = vld [vmem:[%s981 + $0x1f0] sm:$0xff]
      %v1045 = vld [vmem:[%s981 + $0x1f8] sm:$0xff]
      %v1046 = vld [vmem:[%s981 + $0x200] sm:$0xff]
      %v1047 = vld [vmem:[%s981 + $0x208] sm:$0xff]
      %v1048 = vld [vmem:[%s981 + $0x210] sm:$0xff]
      %v1049 = vld [vmem:[%s981 + $0x218] sm:$0xff]
      %v1050 = vld [vmem:[%s981 + $0x220] sm:$0xff]
      %v1051 = vld [vmem:[%s981 + $0x228] sm:$0xff]
      %v1052 = vld [vmem:[%s981 + $0x230] sm:$0xff]
      %v1053 = vld [vmem:[%s981 + $0x238] sm:$0xff]
      %v1054 = vld [vmem:[%s981 + $0x240] sm:$0xff]
      %v1055 = vld [vmem:[%s981 + $0x248] sm:$0xff]
      %v1056 = vld [vmem:[%s981 + $0x250] sm:$0xff]
      %v1057 = vld [vmem:[%s981 + $0x258] sm:$0xff]
      %v1058 = vld [vmem:[%s981 + $0x260] sm:$0xff]
      %v1059 = vld [vmem:[%s981 + $0x268] sm:$0xff]
      %v1060 = vld [vmem:[%s981 + $0x270] sm:$0xff]
      %v1061 = vld [vmem:[%s981 + $0x278] sm:$0xff]
      %v1062 = vld [vmem:[%s981 + $0x280] sm:$0xff]
      %v1063 = vld [vmem:[%s981 + $0x288] sm:$0xff]
      %v1064 = vld [vmem:[%s981 + $0x290] sm:$0xff]
      %v1065 = vld [vmem:[%s981 + $0x298] sm:$0xff]
      %v1066 = vld [vmem:[%s981 + $0x2a0] sm:$0xff]
      %v1067 = vld [vmem:[%s981 + $0x2a8] sm:$0xff]
      %v1068 = vld [vmem:[%s981 + $0x2b0] sm:$0xff]
      %v1069 = vld [vmem:[%s981 + $0x2b8] sm:$0xff]
      %v1070 = vld [vmem:[%s981 + $0x2c0] sm:$0xff]
      %v1071 = vld [vmem:[%s981 + $0x2c8] sm:$0xff]
      %v1072 = vld [vmem:[%s981 + $0x2d0] sm:$0xff]
      %v1073 = vld [vmem:[%s981 + $0x2d8] sm:$0xff]
      %v1074 = vld [vmem:[%s981 + $0x2e0] sm:$0xff]
      %v1075 = vld [vmem:[%s981 + $0x2e8] sm:$0xff]
      %v1076 = vld [vmem:[%s981 + $0x2f0] sm:$0xff]
      %v1077 = vld [vmem:[%s981 + $0x2f8] sm:$0xff]
      %v1078 = vpack.c.b16 %v853, %v849
      %v1079 = vpack.c.b16 %v854, %v850
      %v1080 = vpack.c.b16 %v511, %v509
      %v1081 = vpack.c.b16 %v512, %v510
      %v1082 = vpack.c.b16 %v855, %v851
      %v1083 = vpack.c.b16 %v856, %v852
      %v1084 = vpack.c.b16 %v861, %v857
      %v1085 = vpack.c.b16 %v862, %v858
      %v1086 = vpack.c.b16 %v515, %v513
      %v1087 = vpack.c.b16 %v516, %v514
      %v1088 = vpack.c.b16 %v863, %v859
      %v1089 = vpack.c.b16 %v864, %v860
      %v1090 = vpack.c.b16 %v869, %v865
      %v1091 = vpack.c.b16 %v870, %v866
      %v1092 = vpack.c.b16 %v519, %v517
      %v1093 = vpack.c.b16 %v520, %v518
      %v1094 = vpack.c.b16 %v871, %v867
      %v1095 = vpack.c.b16 %v872, %v868
      %v1096 = vpack.c.b16 %v977, %v873
      %v1097 = vpack.c.b16 %v978, %v874
      %v1098 = vpack.c.b16 %v523, %v521
      %v1099 = vpack.c.b16 %v524, %v522
      %v1100 = vpack.c.b16 %v979, %v875
      %v1101 = vpack.c.b16 %v980, %v876
      %v1222 = vunpack.c.l.b16 %v982
      %v1223 = vunpack.c.h.b16 %v982
      %v1224 = vunpack.c.l.b16 %v983
      %v1225 = vunpack.c.h.b16 %v983
      %v1226 = vunpack.c.l.b16 %v984
      %v1227 = vunpack.c.h.b16 %v984
      %v1228 = vunpack.c.l.b16 %v985
      %v1229 = vunpack.c.h.b16 %v985
      %v1230 = vunpack.c.l.b16 %v986
      %v1231 = vunpack.c.h.b16 %v986
      %v1232 = vunpack.c.l.b16 %v987
      %v1233 = vunpack.c.h.b16 %v987
      %v1234 = vunpack.c.l.b16 %v988
      %v1235 = vunpack.c.h.b16 %v988
      %v1236 = vunpack.c.l.b16 %v989
      %v1237 = vunpack.c.h.b16 %v989
      %v1238 = vunpack.c.l.b16 %v990
      %v1239 = vunpack.c.h.b16 %v990
      %v1240 = vunpack.c.l.b16 %v991
      %v1241 = vunpack.c.h.b16 %v991
      %v1242 = vunpack.c.l.b16 %v992
      %v1243 = vunpack.c.h.b16 %v992
      %v1244 = vunpack.c.l.b16 %v993
      %v1245 = vunpack.c.h.b16 %v993
      %v1246 = vunpack.c.l.b16 %v994
      %v1247 = vunpack.c.h.b16 %v994
      %v1248 = vunpack.c.l.b16 %v995
      %v1249 = vunpack.c.h.b16 %v995
      %v1250 = vunpack.c.l.b16 %v996
      %v1251 = vunpack.c.h.b16 %v996
      %v1252 = vunpack.c.l.b16 %v997
      %v1253 = vunpack.c.h.b16 %v997
      %v1254 = vunpack.c.l.b16 %v998
      %v1255 = vunpack.c.h.b16 %v998
      %v1256 = vunpack.c.l.b16 %v999
      %v1257 = vunpack.c.h.b16 %v999
      %v1258 = vunpack.c.l.b16 %v1000
      %v1259 = vunpack.c.h.b16 %v1000
      %v1260 = vunpack.c.l.b16 %v1001
      %v1261 = vunpack.c.h.b16 %v1001
      %v1262 = vunpack.c.l.b16 %v1002
      %v1263 = vunpack.c.h.b16 %v1002
      %v1264 = vunpack.c.l.b16 %v1003
      %v1265 = vunpack.c.h.b16 %v1003
      %v1266 = vunpack.c.l.b16 %v1004
      %v1267 = vunpack.c.h.b16 %v1004
      %v1268 = vunpack.c.l.b16 %v1005
      %v1269 = vunpack.c.h.b16 %v1005
      %v1270 = vunpack.c.l.b16 %v1006
      %v1271 = vunpack.c.h.b16 %v1006
      %v1272 = vunpack.c.l.b16 %v1007
      %v1273 = vunpack.c.h.b16 %v1007
      %v1274 = vunpack.c.l.b16 %v1008
      %v1275 = vunpack.c.h.b16 %v1008
      %v1276 = vunpack.c.l.b16 %v1009
      %v1277 = vunpack.c.h.b16 %v1009
      %v1278 = vunpack.c.l.b16 %v1010
      %v1279 = vunpack.c.h.b16 %v1010
      %v1280 = vunpack.c.l.b16 %v1011
      %v1281 = vunpack.c.h.b16 %v1011
      %v1282 = vunpack.c.l.b16 %v1012
      %v1283 = vunpack.c.h.b16 %v1012
      %v1284 = vunpack.c.l.b16 %v1013
      %v1285 = vunpack.c.h.b16 %v1013
      %v1286 = vunpack.c.l.b16 %v1014
      %v1287 = vunpack.c.h.b16 %v1014
      %v1288 = vunpack.c.l.b16 %v1015
      %v1289 = vunpack.c.h.b16 %v1015
      %v1290 = vunpack.c.l.b16 %v1016
      %v1291 = vunpack.c.h.b16 %v1016
      %v1292 = vunpack.c.l.b16 %v1017
      %v1293 = vunpack.c.h.b16 %v1017
      %v1294 = vunpack.c.l.b16 %v1018
      %v1295 = vunpack.c.h.b16 %v1018
      %v1296 = vunpack.c.l.b16 %v1019
      %v1297 = vunpack.c.h.b16 %v1019
      %v1298 = vunpack.c.l.b16 %v1020
      %v1299 = vunpack.c.h.b16 %v1020
      %v1300 = vunpack.c.l.b16 %v1021
      %v1301 = vunpack.c.h.b16 %v1021
      %v1302 = vunpack.c.l.b16 %v1022
      %v1303 = vunpack.c.h.b16 %v1022
      %v1304 = vunpack.c.l.b16 %v1023
      %v1305 = vunpack.c.h.b16 %v1023
      %v1306 = vunpack.c.l.b16 %v1024
      %v1307 = vunpack.c.h.b16 %v1024
      %v1308 = vunpack.c.l.b16 %v1025
      %v1309 = vunpack.c.h.b16 %v1025
      %v1310 = vunpack.c.l.b16 %v1026
      %v1311 = vunpack.c.h.b16 %v1026
      %v1312 = vunpack.c.l.b16 %v1027
      %v1313 = vunpack.c.h.b16 %v1027
      %v1314 = vunpack.c.l.b16 %v1028
      %v1315 = vunpack.c.h.b16 %v1028
      %v1316 = vunpack.c.l.b16 %v1029
      %v1317 = vunpack.c.h.b16 %v1029
      %v1318 = vunpack.c.l.b16 %v1030
      %v1319 = vunpack.c.h.b16 %v1030
      %v1320 = vunpack.c.l.b16 %v1031
      %v1321 = vunpack.c.h.b16 %v1031
      %v1322 = vunpack.c.l.b16 %v1032
      %v1323 = vunpack.c.h.b16 %v1032
      %v1324 = vunpack.c.l.b16 %v1033
      %v1325 = vunpack.c.h.b16 %v1033
      %v1326 = vunpack.c.l.b16 %v1034
      %v1327 = vunpack.c.h.b16 %v1034
      %v1328 = vunpack.c.l.b16 %v1035
      %v1329 = vunpack.c.h.b16 %v1035
      %v1330 = vunpack.c.l.b16 %v1036
      %v1331 = vunpack.c.h.b16 %v1036
      %v1332 = vunpack.c.l.b16 %v1037
      %v1333 = vunpack.c.h.b16 %v1037
      %v1334 = vunpack.c.l.b16 %v1038
      %v1335 = vunpack.c.h.b16 %v1038
      %v1336 = vunpack.c.l.b16 %v1039
      %v1337 = vunpack.c.h.b16 %v1039
      %v1338 = vunpack.c.l.b16 %v1040
      %v1339 = vunpack.c.h.b16 %v1040
      %v1340 = vunpack.c.l.b16 %v1041
      %v1341 = vunpack.c.h.b16 %v1041
      %v1342 = vunpack.c.l.b16 %v1042
      %v1343 = vunpack.c.h.b16 %v1042
      %v1344 = vunpack.c.l.b16 %v1043
      %v1345 = vunpack.c.h.b16 %v1043
      %v1346 = vunpack.c.l.b16 %v1044
      %v1347 = vunpack.c.h.b16 %v1044
      %v1348 = vunpack.c.l.b16 %v1045
      %v1349 = vunpack.c.h.b16 %v1045
      %v1350 = vunpack.c.l.b16 %v1046
      %v1351 = vunpack.c.h.b16 %v1046
      %v1352 = vunpack.c.l.b16 %v1047
      %v1353 = vunpack.c.h.b16 %v1047
      %v1354 = vunpack.c.l.b16 %v1048
      %v1355 = vunpack.c.h.b16 %v1048
      %v1356 = vunpack.c.l.b16 %v1049
      %v1357 = vunpack.c.h.b16 %v1049
      %v1358 = vunpack.c.l.b16 %v1050
      %v1359 = vunpack.c.h.b16 %v1050
      %v1360 = vunpack.c.l.b16 %v1051
      %v1361 = vunpack.c.h.b16 %v1051
      %v1362 = vunpack.c.l.b16 %v1052
      %v1363 = vunpack.c.h.b16 %v1052
      %v1364 = vunpack.c.l.b16 %v1053
      %v1365 = vunpack.c.h.b16 %v1053
      %v1366 = vunpack.c.l.b16 %v1054
      %v1367 = vunpack.c.h.b16 %v1054
      %v1368 = vunpack.c.l.b16 %v1055
      %v1369 = vunpack.c.h.b16 %v1055
      %v1370 = vunpack.c.l.b16 %v1056
      %v1371 = vunpack.c.h.b16 %v1056
      %v1372 = vunpack.c.l.b16 %v1057
      %v1373 = vunpack.c.h.b16 %v1057
      %v1374 = vunpack.c.l.b16 %v1058
      %v1375 = vunpack.c.h.b16 %v1058
      %v1376 = vunpack.c.l.b16 %v1059
      %v1377 = vunpack.c.h.b16 %v1059
      %v1378 = vunpack.c.l.b16 %v1060
      %v1379 = vunpack.c.h.b16 %v1060
      %v1380 = vunpack.c.l.b16 %v1061
      %v1381 = vunpack.c.h.b16 %v1061
      %v1382 = vunpack.c.l.b16 %v1062
      %v1383 = vunpack.c.h.b16 %v1062
      %v1384 = vunpack.c.l.b16 %v1063
      %v1385 = vunpack.c.h.b16 %v1063
      %v1386 = vunpack.c.l.b16 %v1064
      %v1387 = vunpack.c.h.b16 %v1064
      %v1388 = vunpack.c.l.b16 %v1065
      %v1389 = vunpack.c.h.b16 %v1065
      %v1390 = vunpack.c.l.b16 %v1066
      %v1391 = vunpack.c.h.b16 %v1066
      %v1392 = vunpack.c.l.b16 %v1067
      %v1393 = vunpack.c.h.b16 %v1067
      %v1394 = vunpack.c.l.b16 %v1068
      %v1395 = vunpack.c.h.b16 %v1068
      %v1396 = vunpack.c.l.b16 %v1069
      %v1397 = vunpack.c.h.b16 %v1069
      %v1398 = vunpack.c.l.b16 %v1070
      %v1399 = vunpack.c.h.b16 %v1070
      %v1400 = vunpack.c.l.b16 %v1071
      %v1401 = vunpack.c.h.b16 %v1071
      %v1402 = vunpack.c.l.b16 %v1072
      %v1403 = vunpack.c.h.b16 %v1072
      %v1404 = vunpack.c.l.b16 %v1073
      %v1405 = vunpack.c.h.b16 %v1073
      %v1406 = vunpack.c.l.b16 %v1074
      %v1407 = vunpack.c.h.b16 %v1074
      %v1408 = vunpack.c.l.b16 %v1075
      %v1409 = vunpack.c.h.b16 %v1075
      %v1410 = vunpack.c.l.b16 %v1076
      %v1411 = vunpack.c.h.b16 %v1076
      %v1412 = vunpack.c.l.b16 %v1077
      %v1413 = vunpack.c.h.b16 %v1077
      %v1414 = vpack.c.b16 %v1224, %v1222
      %v1415 = vpack.c.b16 %v1225, %v1223
      %v1416 = vpack.c.b16 %v1228, %v1226
      %v1417 = vpack.c.b16 %v1229, %v1227
      %v1418 = vpack.c.b16 %v1232, %v1230
      %v1419 = vpack.c.b16 %v1233, %v1231
      %v1420 = vpack.c.b16 %v1236, %v1234
      %v1421 = vpack.c.b16 %v1237, %v1235
      %v1422 = vpack.c.b16 %v1240, %v1238
      %v1423 = vpack.c.b16 %v1241, %v1239
      %v1424 = vpack.c.b16 %v1244, %v1242
      %v1425 = vpack.c.b16 %v1245, %v1243
      %v1426 = vpack.c.b16 %v1248, %v1246
      %v1427 = vpack.c.b16 %v1249, %v1247
      %v1428 = vpack.c.b16 %v1252, %v1250
      %v1429 = vpack.c.b16 %v1253, %v1251
      %v1430 = vpack.c.b16 %v1256, %v1254
      %v1431 = vpack.c.b16 %v1257, %v1255
      %v1432 = vpack.c.b16 %v1260, %v1258
      %v1433 = vpack.c.b16 %v1261, %v1259
      %v1434 = vpack.c.b16 %v1264, %v1262
      %v1435 = vpack.c.b16 %v1265, %v1263
      %v1436 = vpack.c.b16 %v1268, %v1266
      %v1437 = vpack.c.b16 %v1269, %v1267
      %v1438 = vpack.c.b16 %v1272, %v1270
      %v1439 = vpack.c.b16 %v1273, %v1271
      %v1440 = vpack.c.b16 %v1276, %v1274
      %v1441 = vpack.c.b16 %v1277, %v1275
      %v1442 = vpack.c.b16 %v1280, %v1278
      %v1443 = vpack.c.b16 %v1281, %v1279
      %v1444 = vpack.c.b16 %v1284, %v1282
      %v1445 = vpack.c.b16 %v1285, %v1283
      %v1446 = vpack.c.b16 %v1288, %v1286
      %v1447 = vpack.c.b16 %v1289, %v1287
      %v1448 = vpack.c.b16 %v1292, %v1290
      %v1449 = vpack.c.b16 %v1293, %v1291
      %v1450 = vpack.c.b16 %v1296, %v1294
      %v1451 = vpack.c.b16 %v1297, %v1295
      %v1452 = vpack.c.b16 %v1300, %v1298
      %v1453 = vpack.c.b16 %v1301, %v1299
      %v1454 = vpack.c.b16 %v1304, %v1302
      %v1455 = vpack.c.b16 %v1305, %v1303
      %v1456 = vpack.c.b16 %v1308, %v1306
      %v1457 = vpack.c.b16 %v1309, %v1307
      %v1458 = vpack.c.b16 %v1312, %v1310
      %v1459 = vpack.c.b16 %v1313, %v1311
      %v1460 = vpack.c.b16 %v1316, %v1314
      %v1461 = vpack.c.b16 %v1317, %v1315
      %v1462 = vpack.c.b16 %v1320, %v1318
      %v1463 = vpack.c.b16 %v1321, %v1319
      %v1464 = vpack.c.b16 %v1324, %v1322
      %v1465 = vpack.c.b16 %v1325, %v1323
      %v1466 = vpack.c.b16 %v1328, %v1326
      %v1467 = vpack.c.b16 %v1329, %v1327
      %v1468 = vpack.c.b16 %v1332, %v1330
      %v1469 = vpack.c.b16 %v1333, %v1331
      %v1470 = vpack.c.b16 %v1336, %v1334
      %v1471 = vpack.c.b16 %v1337, %v1335
      %v1472 = vpack.c.b16 %v1340, %v1338
      %v1473 = vpack.c.b16 %v1341, %v1339
      %v1474 = vpack.c.b16 %v1344, %v1342
      %v1475 = vpack.c.b16 %v1345, %v1343
      %v1476 = vpack.c.b16 %v1348, %v1346
      %v1477 = vpack.c.b16 %v1349, %v1347
      %v1478 = vpack.c.b16 %v1352, %v1350
      %v1479 = vpack.c.b16 %v1353, %v1351
      %v1480 = vpack.c.b16 %v1356, %v1354
      %v1481 = vpack.c.b16 %v1357, %v1355
      %v1482 = vpack.c.b16 %v1360, %v1358
      %v1483 = vpack.c.b16 %v1361, %v1359
      %v1484 = vpack.c.b16 %v1364, %v1362
      %v1485 = vpack.c.b16 %v1365, %v1363
      %v1486 = vpack.c.b16 %v1368, %v1366
      %v1487 = vpack.c.b16 %v1369, %v1367
      %v1488 = vpack.c.b16 %v1372, %v1370
      %v1489 = vpack.c.b16 %v1373, %v1371
      %v1490 = vpack.c.b16 %v1376, %v1374
      %v1491 = vpack.c.b16 %v1377, %v1375
      %v1492 = vpack.c.b16 %v1380, %v1378
      %v1493 = vpack.c.b16 %v1381, %v1379
      %v1494 = vpack.c.b16 %v1384, %v1382
      %v1495 = vpack.c.b16 %v1385, %v1383
      %v1496 = vpack.c.b16 %v1388, %v1386
      %v1497 = vpack.c.b16 %v1389, %v1387
      %v1498 = vpack.c.b16 %v1392, %v1390
      %v1499 = vpack.c.b16 %v1393, %v1391
      %v1500 = vpack.c.b16 %v1396, %v1394
      %v1501 = vpack.c.b16 %v1397, %v1395
      %v1502 = vpack.c.b16 %v1400, %v1398
      %v1503 = vpack.c.b16 %v1401, %v1399
      %v1504 = vpack.c.b16 %v1404, %v1402
      %v1505 = vpack.c.b16 %v1405, %v1403
      %v1506 = vpack.c.b16 %v1408, %v1406
      %v1507 = vpack.c.b16 %v1409, %v1407
      %v1508 = vpack.c.b16 %v1412, %v1410
      %v1509 = vpack.c.b16 %v1413, %v1411
      %1606 = vmatprep.subr.bf16.mxu0 %v1415
      %1607 = vmatpush1.bf16.msra.mxu0 %v1414
      %1608 = vmatprep.subr.bf16.mxu0 %v1417
      %1609 = vmatpush1.bf16.msra.mxu0 %v1416
      %1610 = vmatprep.subr.bf16.mxu0 %v1419
      %1611 = vmatpush1.bf16.msra.mxu0 %v1418
      %1612 = vmatprep.subr.bf16.mxu0 %v1421
      %1613 = vmatpush1.bf16.msra.mxu0 %v1420
      %1614 = vmatprep.subr.bf16.mxu0 %v1423
      %1615 = vmatpush1.bf16.msra.mxu0 %v1422
      %1616 = vmatprep.subr.bf16.mxu0 %v1425
      %1617 = vmatpush1.bf16.msra.mxu0 %v1424
      %1618 = vmatprep.subr.bf16.mxu0 %v1427
      %1619 = vmatpush1.bf16.msra.mxu0 %v1426
      %1620 = vmatprep.subr.bf16.mxu0 %v1429
      %1621 = vmatpush1.bf16.msra.mxu0 %v1428
      %1622 = vmatprep.subr.bf16.mxu0 %v1431
      %1623 = vmatpush1.bf16.msra.mxu0 %v1430
      %1624 = vmatprep.subr.bf16.mxu0 %v1433
      %1625 = vmatpush1.bf16.msra.mxu0 %v1432
      %1626 = vmatprep.subr.bf16.mxu0 %v1435
      %1627 = vmatpush1.bf16.msra.mxu0 %v1434
      %1628 = vmatprep.subr.bf16.mxu0 %v1437
      %1629 = vmatpush1.bf16.msra.mxu0 %v1436
      %1630 = vmatprep.subr.bf16.mxu0 %v1439
      %1631 = vmatpush1.bf16.msra.mxu0 %v1438
      %1632 = vmatprep.subr.bf16.mxu0 %v1441
      %1633 = vmatpush1.bf16.msra.mxu0 %v1440
      %1634 = vmatprep.subr.bf16.mxu0 %v1443
      %1635 = vmatpush1.bf16.msra.mxu0 %v1442
      %1636 = vmatprep.subr.bf16.mxu0 %v1445
      %1637 = vmatpush1.bf16.msra.mxu0 %v1444
      %1638 = vmatprep.mubr.bf16.mxu0 %v1079
      %1639 = vmatmul.mubr.bf16.gmra.mrb[0].mxu0 %v1078
      %v1640 = vpop.f32.mrb[0].mxu0
      %v1641 = vadd.f32 0.0, %v1640
      %v1642 = vpop.f32.mrb[0].mxu0
      %v1643 = vadd.f32 0.0, %v1642
      %v1644 = vpop.f32.mrb[0].mxu0
      %v1645 = vadd.f32 0.0, %v1644
      %v1646 = vpop.f32.mrb[0].mxu0
      %v1647 = vadd.f32 0.0, %v1646
      %1648 = vmatprep.mubr.bf16.mxu0 %v1085
      %1649 = vmatmul.mubr.bf16.gmra.mrb[0].mxu0 %v1084
      %v1650 = vpop.f32.mrb[0].mxu0
      %v1651 = vadd.f32 0.0, %v1650
      %v1652 = vpop.f32.mrb[0].mxu0
      %v1653 = vadd.f32 0.0, %v1652
      %v1654 = vpop.f32.mrb[0].mxu0
      %v1655 = vadd.f32 0.0, %v1654
      %v1656 = vpop.f32.mrb[0].mxu0
      %v1657 = vadd.f32 0.0, %v1656
      %1658 = vmatprep.mubr.bf16.mxu0 %v1091
      %1659 = vmatmul.mubr.bf16.gmra.mrb[0].mxu0 %v1090
      %v1660 = vpop.f32.mrb[0].mxu0
      %v1661 = vadd.f32 0.0, %v1660
      %v1662 = vpop.f32.mrb[0].mxu0
      %v1663 = vadd.f32 0.0, %v1662
      %v1664 = vpop.f32.mrb[0].mxu0
      %v1665 = vadd.f32 0.0, %v1664
      %v1666 = vpop.f32.mrb[0].mxu0
      %v1667 = vadd.f32 0.0, %v1666
      %1668 = vmatprep.mubr.bf16.mxu0 %v1097
      %1669 = vmatmul.mubr.bf16.gmra.mrb[0].mxu0 %v1096
      %v1670 = vpop.f32.mrb[0].mxu0
      %v1671 = vadd.f32 0.0, %v1670
      %v1672 = vpop.f32.mrb[0].mxu0
      %v1673 = vadd.f32 0.0, %v1672
      %v1674 = vpop.f32.mrb[0].mxu0
      %v1675 = vadd.f32 0.0, %v1674
      %v1676 = vpop.f32.mrb[0].mxu0
      %v1677 = vadd.f32 0.0, %v1676
      %1678 = vdwg.mxu0
      %1679 = vmatprep.subr.bf16.mxu0 %v1447
      %1680 = vmatpush1.bf16.msra.mxu0 %v1446
      %1681 = vmatprep.subr.bf16.mxu0 %v1449
      %1682 = vmatpush1.bf16.msra.mxu0 %v1448
      %1683 = vmatprep.subr.bf16.mxu0 %v1451
      %1684 = vmatpush1.bf16.msra.mxu0 %v1450
      %1685 = vmatprep.subr.bf16.mxu0 %v1453
      %1686 = vmatpush1.bf16.msra.mxu0 %v1452
      %1687 = vmatprep.subr.bf16.mxu0 %v1455
      %1688 = vmatpush1.bf16.msra.mxu0 %v1454
      %1689 = vmatprep.subr.bf16.mxu0 %v1457
      %1690 = vmatpush1.bf16.msra.mxu0 %v1456
      %1691 = vmatprep.subr.bf16.mxu0 %v1459
      %1692 = vmatpush1.bf16.msra.mxu0 %v1458
      %1693 = vmatprep.subr.bf16.mxu0 %v1461
      %1694 = vmatpush1.bf16.msra.mxu0 %v1460
      %1695 = vmatprep.subr.bf16.mxu0 %v1463
      %1696 = vmatpush1.bf16.msra.mxu0 %v1462
      %1697 = vmatprep.subr.bf16.mxu0 %v1465
      %1698 = vmatpush1.bf16.msra.mxu0 %v1464
      %1699 = vmatprep.subr.bf16.mxu0 %v1467
      %1700 = vmatpush1.bf16.msra.mxu0 %v1466
      %1701 = vmatprep.subr.bf16.mxu0 %v1469
      %1702 = vmatpush1.bf16.msra.mxu0 %v1468
      %1703 = vmatprep.subr.bf16.mxu0 %v1471
      %1704 = vmatpush1.bf16.msra.mxu0 %v1470
      %1705 = vmatprep.subr.bf16.mxu0 %v1473
      %1706 = vmatpush1.bf16.msra.mxu0 %v1472
      %1707 = vmatprep.subr.bf16.mxu0 %v1475
      %1708 = vmatpush1.bf16.msra.mxu0 %v1474
      %1709 = vmatprep.subr.bf16.mxu0 %v1477
      %1710 = vmatpush1.bf16.msra.mxu0 %v1476
      %1711 = vmatprep.mubr.bf16.mxu0 %v1081
      %1712 = vmatmul.mubr.bf16.gmra.mrb[0].mxu0 %v1080
      %v1713 = vpop.f32.mrb[0].mxu0
      %v1714 = vadd.f32 %v1641, %v1713
      %v1715 = vpop.f32.mrb[0].mxu0
      %v1716 = vadd.f32 %v1643, %v1715
      %v1717 = vpop.f32.mrb[0].mxu0
      %v1718 = vadd.f32 %v1645, %v1717
      %v1719 = vpop.f32.mrb[0].mxu0
      %v1720 = vadd.f32 %v1647, %v1719
      %1721 = vmatprep.mubr.bf16.mxu0 %v1087
      %1722 = vmatmul.mubr.bf16.gmra.mrb[0].mxu0 %v1086
      %v1723 = vpop.f32.mrb[0].mxu0
      %v1724 = vadd.f32 %v1651, %v1723
      %v1725 = vpop.f32.mrb[0].mxu0
      %v1726 = vadd.f32 %v1653, %v1725
      %v1727 = vpop.f32.mrb[0].mxu0
      %v1728 = vadd.f32 %v1655, %v1727
      %v1729 = vpop.f32.mrb[0].mxu0
      %v1730 = vadd.f32 %v1657, %v1729
      %1731 = vmatprep.mubr.bf16.mxu0 %v1093
      %1732 = vmatmul.mubr.bf16.gmra.mrb[0].mxu0 %v1092
      %v1733 = vpop.f32.mrb[0].mxu0
      %v1734 = vadd.f32 %v1661, %v1733
      %v1735 = vpop.f32.mrb[0].mxu0
      %v1736 = vadd.f32 %v1663, %v1735
      %v1737 = vpop.f32.mrb[0].mxu0
      %v1738 = vadd.f32 %v1665, %v1737
      %v1739 = vpop.f32.mrb[0].mxu0
      %v1740 = vadd.f32 %v1667, %v1739
      %1741 = vmatprep.mubr.bf16.mxu0 %v1099
      %1742 = vmatmul.mubr.bf16.gmra.mrb[0].mxu0 %v1098
      %v1743 = vpop.f32.mrb[0].mxu0
      %v1744 = vadd.f32 %v1671, %v1743
      %v1745 = vpop.f32.mrb[0].mxu0
      %v1746 = vadd.f32 %v1673, %v1745
      %v1747 = vpop.f32.mrb[0].mxu0
      %v1748 = vadd.f32 %v1675, %v1747
      %v1749 = vpop.f32.mrb[0].mxu0
      %v1750 = vadd.f32 %v1677, %v1749
      %1751 = vdwg.mxu0
      %1752 = vmatprep.subr.bf16.mxu0 %v1479
      %1753 = vmatpush1.bf16.msra.mxu0 %v1478
      %1754 = vmatprep.subr.bf16.mxu0 %v1481
      %1755 = vmatpush1.bf16.msra.mxu0 %v1480
      %1756 = vmatprep.subr.bf16.mxu0 %v1483
      %1757 = vmatpush1.bf16.msra.mxu0 %v1482
      %1758 = vmatprep.subr.bf16.mxu0 %v1485
      %1759 = vmatpush1.bf16.msra.mxu0 %v1484
      %1760 = vmatprep.subr.bf16.mxu0 %v1487
      %1761 = vmatpush1.bf16.msra.mxu0 %v1486
      %1762 = vmatprep.subr.bf16.mxu0 %v1489
      %1763 = vmatpush1.bf16.msra.mxu0 %v1488
      %1764 = vmatprep.subr.bf16.mxu0 %v1491
      %1765 = vmatpush1.bf16.msra.mxu0 %v1490
      %1766 = vmatprep.subr.bf16.mxu0 %v1493
      %1767 = vmatpush1.bf16.msra.mxu0 %v1492
      %1768 = vmatprep.subr.bf16.mxu0 %v1495
      %1769 = vmatpush1.bf16.msra.mxu0 %v1494
      %1770 = vmatprep.subr.bf16.mxu0 %v1497
      %1771 = vmatpush1.bf16.msra.mxu0 %v1496
      %1772 = vmatprep.subr.bf16.mxu0 %v1499
      %1773 = vmatpush1.bf16.msra.mxu0 %v1498
      %1774 = vmatprep.subr.bf16.mxu0 %v1501
      %1775 = vmatpush1.bf16.msra.mxu0 %v1500
      %1776 = vmatprep.subr.bf16.mxu0 %v1503
      %1777 = vmatpush1.bf16.msra.mxu0 %v1502
      %1778 = vmatprep.subr.bf16.mxu0 %v1505
      %1779 = vmatpush1.bf16.msra.mxu0 %v1504
      %1780 = vmatprep.subr.bf16.mxu0 %v1507
      %1781 = vmatpush1.bf16.msra.mxu0 %v1506
      %1782 = vmatprep.subr.bf16.mxu0 %v1509
      %1783 = vmatpush1.bf16.msra.mxu0 %v1508
      %1784 = vmatprep.mubr.bf16.mxu0 %v1083
      %1785 = vmatmul.mubr.bf16.gmra.mrb[0].mxu0 %v1082
      %v1786 = vpop.f32.mrb[0].mxu0
      %v1787 = vadd.f32 %v1714, %v1786
      %v1788 = vpop.f32.mrb[0].mxu0
      %v1789 = vadd.f32 %v1716, %v1788
      %v1790 = vpop.f32.mrb[0].mxu0
      %v1791 = vadd.f32 %v1718, %v1790
      %v1792 = vpop.f32.mrb[0].mxu0
      %v1793 = vadd.f32 %v1720, %v1792
      %1794 = vmatprep.mubr.bf16.mxu0 %v1089
      %1795 = vmatmul.mubr.bf16.gmra.mrb[0].mxu0 %v1088
      %v1796 = vpop.f32.mrb[0].mxu0
      %v1797 = vadd.f32 %v1724, %v1796
      %v1798 = vpop.f32.mrb[0].mxu0
      %v1799 = vadd.f32 %v1726, %v1798
      %v1800 = vpop.f32.mrb[0].mxu0
      %v1801 = vadd.f32 %v1728, %v1800
      %v1802 = vpop.f32.mrb[0].mxu0
      %v1803 = vadd.f32 %v1730, %v1802
      %1804 = vmatprep.mubr.bf16.mxu0 %v1095
      %1805 = vmatmul.mubr.bf16.gmra.mrb[0].mxu0 %v1094
      %v1806 = vpop.f32.mrb[0].mxu0
      %v1807 = vadd.f32 %v1734, %v1806
      %v1808 = vpop.f32.mrb[0].mxu0
      %v1809 = vadd.f32 %v1736, %v1808
      %v1810 = vpop.f32.mrb[0].mxu0
      %v1811 = vadd.f32 %v1738, %v1810
      %v1812 = vpop.f32.mrb[0].mxu0
      %v1813 = vadd.f32 %v1740, %v1812
      %1814 = vmatprep.mubr.bf16.mxu0 %v1101
      %1815 = vmatmul.mubr.bf16.gmra.mrb[0].mxu0 %v1100
      %v1816 = vpop.f32.mrb[0].mxu0
      %v1817 = vadd.f32 %v1744, %v1816
      %v1818 = vpop.f32.mrb[0].mxu0
      %v1819 = vadd.f32 %v1746, %v1818
      %v1820 = vpop.f32.mrb[0].mxu0
      %v1821 = vadd.f32 %v1748, %v1820
      %v1822 = vpop.f32.mrb[0].mxu0
      %v1823 = vadd.f32 %v1750, %v1822
      %1824 = vdwg.mxu0
      %v1825 = vpack.c.b16 %v849, %v845
      %v1826 = vpack.c.b16 %v850, %v846
      %v1827 = vpack.c.b16 %v509, %v507
      %v1828 = vpack.c.b16 %v510, %v508
      %v1829 = vpack.c.b16 %v851, %v847
      %v1830 = vpack.c.b16 %v852, %v848
      %v1831 = vpack.c.b16 %v857, %v853
      %v1832 = vpack.c.b16 %v858, %v854
      %v1833 = vpack.c.b16 %v513, %v511
      %v1834 = vpack.c.b16 %v514, %v512
      %v1835 = vpack.c.b16 %v859, %v855
      %v1836 = vpack.c.b16 %v860, %v856
      %v1837 = vpack.c.b16 %v865, %v861
      %v1838 = vpack.c.b16 %v866, %v862
      %v1839 = vpack.c.b16 %v517, %v515
      %v1840 = vpack.c.b16 %v518, %v516
      %v1841 = vpack.c.b16 %v867, %v863
      %v1842 = vpack.c.b16 %v868, %v864
      %v1843 = vpack.c.b16 %v873, %v869
      %v1844 = vpack.c.b16 %v874, %v870
      %v1845 = vpack.c.b16 %v521, %v519
      %v1846 = vpack.c.b16 %v522, %v520
      %v1847 = vpack.c.b16 %v875, %v871
      %v1848 = vpack.c.b16 %v876, %v872
      %v1969 = vunpack.c.l.b16 %v877
      %v1970 = vunpack.c.h.b16 %v877
      %v1971 = vunpack.c.l.b16 %v878
      %v1972 = vunpack.c.h.b16 %v878
      %v1973 = vunpack.c.l.b16 %v879
      %v1974 = vunpack.c.h.b16 %v879
      %v1975 = vunpack.c.l.b16 %v880
      %v1976 = vunpack.c.h.b16 %v880
      %v1977 = vunpack.c.l.b16 %v881
      %v1978 = vunpack.c.h.b16 %v881
      %v1979 = vunpack.c.l.b16 %v882
      %v1980 = vunpack.c.h.b16 %v882
      %v1981 = vunpack.c.l.b16 %v883
      %v1982 = vunpack.c.h.b16 %v883
      %v1983 = vunpack.c.l.b16 %v884
      %v1984 = vunpack.c.h.b16 %v884
      %v1985 = vunpack.c.l.b16 %v885
      %v1986 = vunpack.c.h.b16 %v885
      %v1987 = vunpack.c.l.b16 %v886
      %v1988 = vunpack.c.h.b16 %v886
      %v1989 = vunpack.c.l.b16 %v887
      %v1990 = vunpack.c.h.b16 %v887
      %v1991 = vunpack.c.l.b16 %v888
      %v1992 = vunpack.c.h.b16 %v888
      %v1993 = vunpack.c.l.b16 %v889
      %v1994 = vunpack.c.h.b16 %v889
      %v1995 = vunpack.c.l.b16 %v890
      %v1996 = vunpack.c.h.b16 %v890
      %v1997 = vunpack.c.l.b16 %v891
      %v1998 = vunpack.c.h.b16 %v891
      %v1999 = vunpack.c.l.b16 %v892
      %v2000 = vunpack.c.h.b16 %v892
      %v2001 = vunpack.c.l.b16 %v893
      %v2002 = vunpack.c.h.b16 %v893
      %v2003 = vunpack.c.l.b16 %v894
      %v2004 = vunpack.c.h.b16 %v894
      %v2005 = vunpack.c.l.b16 %v895
      %v2006 = vunpack.c.h.b16 %v895
      %v2007 = vunpack.c.l.b16 %v896
      %v2008 = vunpack.c.h.b16 %v896
      %v2009 = vunpack.c.l.b16 %v897
      %v2010 = vunpack.c.h.b16 %v897
      %v2011 = vunpack.c.l.b16 %v898
      %v2012 = vunpack.c.h.b16 %v898
      %v2013 = vunpack.c.l.b16 %v899
      %v2014 = vunpack.c.h.b16 %v899
      %v2015 = vunpack.c.l.b16 %v900
      %v2016 = vunpack.c.h.b16 %v900
      %v2017 = vunpack.c.l.b16 %v901
      %v2018 = vunpack.c.h.b16 %v901
      %v2019 = vunpack.c.l.b16 %v902
      %v2020 = vunpack.c.h.b16 %v902
      %v2021 = vunpack.c.l.b16 %v903
      %v2022 = vunpack.c.h.b16 %v903
      %v2023 = vunpack.c.l.b16 %v904
      %v2024 = vunpack.c.h.b16 %v904
      %v2025 = vunpack.c.l.b16 %v905
      %v2026 = vunpack.c.h.b16 %v905
      %v2027 = vunpack.c.l.b16 %v906
      %v2028 = vunpack.c.h.b16 %v906
      %v2029 = vunpack.c.l.b16 %v907
      %v2030 = vunpack.c.h.b16 %v907
      %v2031 = vunpack.c.l.b16 %v908
      %v2032 = vunpack.c.h.b16 %v908
      %v2033 = vunpack.c.l.b16 %v909
      %v2034 = vunpack.c.h.b16 %v909
      %v2035 = vunpack.c.l.b16 %v910
      %v2036 = vunpack.c.h.b16 %v910
      %v2037 = vunpack.c.l.b16 %v911
      %v2038 = vunpack.c.h.b16 %v911
      %v2039 = vunpack.c.l.b16 %v912
      %v2040 = vunpack.c.h.b16 %v912
      %v2041 = vunpack.c.l.b16 %v913
      %v2042 = vunpack.c.h.b16 %v913
      %v2043 = vunpack.c.l.b16 %v914
      %v2044 = vunpack.c.h.b16 %v914
      %v2045 = vunpack.c.l.b16 %v915
      %v2046 = vunpack.c.h.b16 %v915
      %v2047 = vunpack.c.l.b16 %v916
      %v2048 = vunpack.c.h.b16 %v916
      %v2049 = vunpack.c.l.b16 %v917
      %v2050 = vunpack.c.h.b16 %v917
      %v2051 = vunpack.c.l.b16 %v918
      %v2052 = vunpack.c.h.b16 %v918
      %v2053 = vunpack.c.l.b16 %v919
      %v2054 = vunpack.c.h.b16 %v919
      %v2055 = vunpack.c.l.b16 %v920
      %v2056 = vunpack.c.h.b16 %v920
      %v2057 = vunpack.c.l.b16 %v921
      %v2058 = vunpack.c.h.b16 %v921
      %v2059 = vunpack.c.l.b16 %v922
      %v2060 = vunpack.c.h.b16 %v922
      %v2061 = vunpack.c.l.b16 %v923
      %v2062 = vunpack.c.h.b16 %v923
      %v2063 = vunpack.c.l.b16 %v924
      %v2064 = vunpack.c.h.b16 %v924
      %v2065 = vunpack.c.l.b16 %v925
      %v2066 = vunpack.c.h.b16 %v925
      %v2067 = vunpack.c.l.b16 %v926
      %v2068 = vunpack.c.h.b16 %v926
      %v2069 = vunpack.c.l.b16 %v927
      %v2070 = vunpack.c.h.b16 %v927
      %v2071 = vunpack.c.l.b16 %v928
      %v2072 = vunpack.c.h.b16 %v928
      %v2073 = vunpack.c.l.b16 %v929
      %v2074 = vunpack.c.h.b16 %v929
      %v2075 = vunpack.c.l.b16 %v930
      %v2076 = vunpack.c.h.b16 %v930
      %v2077 = vunpack.c.l.b16 %v931
      %v2078 = vunpack.c.h.b16 %v931
      %v2079 = vunpack.c.l.b16 %v932
      %v2080 = vunpack.c.h.b16 %v932
      %v2081 = vunpack.c.l.b16 %v933
      %v2082 = vunpack.c.h.b16 %v933
      %v2083 = vunpack.c.l.b16 %v934
      %v2084 = vunpack.c.h.b16 %v934
      %v2085 = vunpack.c.l.b16 %v935
      %v2086 = vunpack.c.h.b16 %v935
      %v2087 = vunpack.c.l.b16 %v936
      %v2088 = vunpack.c.h.b16 %v936
      %v2089 = vunpack.c.l.b16 %v937
      %v2090 = vunpack.c.h.b16 %v937
      %v2091 = vunpack.c.l.b16 %v938
      %v2092 = vunpack.c.h.b16 %v938
      %v2093 = vunpack.c.l.b16 %v939
      %v2094 = vunpack.c.h.b16 %v939
      %v2095 = vunpack.c.l.b16 %v940
      %v2096 = vunpack.c.h.b16 %v940
      %v2097 = vunpack.c.l.b16 %v941
      %v2098 = vunpack.c.h.b16 %v941
      %v2099 = vunpack.c.l.b16 %v942
      %v2100 = vunpack.c.h.b16 %v942
      %v2101 = vunpack.c.l.b16 %v943
      %v2102 = vunpack.c.h.b16 %v943
      %v2103 = vunpack.c.l.b16 %v944
      %v2104 = vunpack.c.h.b16 %v944
      %v2105 = vunpack.c.l.b16 %v945
      %v2106 = vunpack.c.h.b16 %v945
      %v2107 = vunpack.c.l.b16 %v946
      %v2108 = vunpack.c.h.b16 %v946
      %v2109 = vunpack.c.l.b16 %v947
      %v2110 = vunpack.c.h.b16 %v947
      %v2111 = vunpack.c.l.b16 %v948
      %v2112 = vunpack.c.h.b16 %v948
      %v2113 = vunpack.c.l.b16 %v949
      %v2114 = vunpack.c.h.b16 %v949
      %v2115 = vunpack.c.l.b16 %v950
      %v2116 = vunpack.c.h.b16 %v950
      %v2117 = vunpack.c.l.b16 %v951
      %v2118 = vunpack.c.h.b16 %v951
      %v2119 = vunpack.c.l.b16 %v952
      %v2120 = vunpack.c.h.b16 %v952
      %v2121 = vunpack.c.l.b16 %v953
      %v2122 = vunpack.c.h.b16 %v953
      %v2123 = vunpack.c.l.b16 %v954
      %v2124 = vunpack.c.h.b16 %v954
      %v2125 = vunpack.c.l.b16 %v955
      %v2126 = vunpack.c.h.b16 %v955
      %v2127 = vunpack.c.l.b16 %v956
      %v2128 = vunpack.c.h.b16 %v956
      %v2129 = vunpack.c.l.b16 %v957
      %v2130 = vunpack.c.h.b16 %v957
      %v2131 = vunpack.c.l.b16 %v958
      %v2132 = vunpack.c.h.b16 %v958
      %v2133 = vunpack.c.l.b16 %v959
      %v2134 = vunpack.c.h.b16 %v959
      %v2135 = vunpack.c.l.b16 %v960
      %v2136 = vunpack.c.h.b16 %v960
      %v2137 = vunpack.c.l.b16 %v961
      %v2138 = vunpack.c.h.b16 %v961
      %v2139 = vunpack.c.l.b16 %v962
      %v2140 = vunpack.c.h.b16 %v962
      %v2141 = vunpack.c.l.b16 %v963
      %v2142 = vunpack.c.h.b16 %v963
      %v2143 = vunpack.c.l.b16 %v964
      %v2144 = vunpack.c.h.b16 %v964
      %v2145 = vunpack.c.l.b16 %v965
      %v2146 = vunpack.c.h.b16 %v965
      %v2147 = vunpack.c.l.b16 %v966
      %v2148 = vunpack.c.h.b16 %v966
      %v2149 = vunpack.c.l.b16 %v967
      %v2150 = vunpack.c.h.b16 %v967
      %v2151 = vunpack.c.l.b16 %v968
      %v2152 = vunpack.c.h.b16 %v968
      %v2153 = vunpack.c.l.b16 %v969
      %v2154 = vunpack.c.h.b16 %v969
      %v2155 = vunpack.c.l.b16 %v970
      %v2156 = vunpack.c.h.b16 %v970
      %v2157 = vunpack.c.l.b16 %v971
      %v2158 = vunpack.c.h.b16 %v971
      %v2159 = vunpack.c.l.b16 %v972
      %v2160 = vunpack.c.h.b16 %v972
      %v2161 = vpack.c.b16 %v1971, %v1969
      %v2162 = vpack.c.b16 %v1972, %v1970
      %v2163 = vpack.c.b16 %v1975, %v1973
      %v2164 = vpack.c.b16 %v1976, %v1974
      %v2165 = vpack.c.b16 %v1979, %v1977
      %v2166 = vpack.c.b16 %v1980, %v1978
      %v2167 = vpack.c.b16 %v1983, %v1981
      %v2168 = vpack.c.b16 %v1984, %v1982
      %v2169 = vpack.c.b16 %v1987, %v1985
      %v2170 = vpack.c.b16 %v1988, %v1986
      %v2171 = vpack.c.b16 %v1991, %v1989
      %v2172 = vpack.c.b16 %v1992, %v1990
      %v2173 = vpack.c.b16 %v1995, %v1993
      %v2174 = vpack.c.b16 %v1996, %v1994
      %v2175 = vpack.c.b16 %v1999, %v1997
      %v2176 = vpack.c.b16 %v2000, %v1998
      %v2177 = vpack.c.b16 %v2003, %v2001
      %v2178 = vpack.c.b16 %v2004, %v2002
      %v2179 = vpack.c.b16 %v2007, %v2005
      %v2180 = vpack.c.b16 %v2008, %v2006
      %v2181 = vpack.c.b16 %v2011, %v2009
      %v2182 = vpack.c.b16 %v2012, %v2010
      %v2183 = vpack.c.b16 %v2015, %v2013
      %v2184 = vpack.c.b16 %v2016, %v2014
      %v2185 = vpack.c.b16 %v2019, %v2017
      %v2186 = vpack.c.b16 %v2020, %v2018
      %v2187 = vpack.c.b16 %v2023, %v2021
      %v2188 = vpack.c.b16 %v2024, %v2022
      %v2189 = vpack.c.b16 %v2027, %v2025
      %v2190 = vpack.c.b16 %v2028, %v2026
      %v2191 = vpack.c.b16 %v2031, %v2029
      %v2192 = vpack.c.b16 %v2032, %v2030
      %v2193 = vpack.c.b16 %v2035, %v2033
      %v2194 = vpack.c.b16 %v2036, %v2034
      %v2195 = vpack.c.b16 %v2039, %v2037
      %v2196 = vpack.c.b16 %v2040, %v2038
      %v2197 = vpack.c.b16 %v2043, %v2041
      %v2198 = vpack.c.b16 %v2044, %v2042
      %v2199 = vpack.c.b16 %v2047, %v2045
      %v2200 = vpack.c.b16 %v2048, %v2046
      %v2201 = vpack.c.b16 %v2051, %v2049
      %v2202 = vpack.c.b16 %v2052, %v2050
      %v2203 = vpack.c.b16 %v2055, %v2053
      %v2204 = vpack.c.b16 %v2056, %v2054
      %v2205 = vpack.c.b16 %v2059, %v2057
      %v2206 = vpack.c.b16 %v2060, %v2058
      %v2207 = vpack.c.b16 %v2063, %v2061
      %v2208 = vpack.c.b16 %v2064, %v2062
      %v2209 = vpack.c.b16 %v2067, %v2065
      %v2210 = vpack.c.b16 %v2068, %v2066
      %v2211 = vpack.c.b16 %v2071, %v2069
      %v2212 = vpack.c.b16 %v2072, %v2070
      %v2213 = vpack.c.b16 %v2075, %v2073
      %v2214 = vpack.c.b16 %v2076, %v2074
      %v2215 = vpack.c.b16 %v2079, %v2077
      %v2216 = vpack.c.b16 %v2080, %v2078
      %v2217 = vpack.c.b16 %v2083, %v2081
      %v2218 = vpack.c.b16 %v2084, %v2082
      %v2219 = vpack.c.b16 %v2087, %v2085
      %v2220 = vpack.c.b16 %v2088, %v2086
      %v2221 = vpack.c.b16 %v2091, %v2089
      %v2222 = vpack.c.b16 %v2092, %v2090
      %v2223 = vpack.c.b16 %v2095, %v2093
      %v2224 = vpack.c.b16 %v2096, %v2094
      %v2225 = vpack.c.b16 %v2099, %v2097
      %v2226 = vpack.c.b16 %v2100, %v2098
      %v2227 = vpack.c.b16 %v2103, %v2101
      %v2228 = vpack.c.b16 %v2104, %v2102
      %v2229 = vpack.c.b16 %v2107, %v2105
      %v2230 = vpack.c.b16 %v2108, %v2106
      %v2231 = vpack.c.b16 %v2111, %v2109
      %v2232 = vpack.c.b16 %v2112, %v2110
      %v2233 = vpack.c.b16 %v2115, %v2113
      %v2234 = vpack.c.b16 %v2116, %v2114
      %v2235 = vpack.c.b16 %v2119, %v2117
      %v2236 = vpack.c.b16 %v2120, %v2118
      %v2237 = vpack.c.b16 %v2123, %v2121
      %v2238 = vpack.c.b16 %v2124, %v2122
      %v2239 = vpack.c.b16 %v2127, %v2125
      %v2240 = vpack.c.b16 %v2128, %v2126
      %v2241 = vpack.c.b16 %v2131, %v2129
      %v2242 = vpack.c.b16 %v2132, %v2130
      %v2243 = vpack.c.b16 %v2135, %v2133
      %v2244 = vpack.c.b16 %v2136, %v2134
      %v2245 = vpack.c.b16 %v2139, %v2137
      %v2246 = vpack.c.b16 %v2140, %v2138
      %v2247 = vpack.c.b16 %v2143, %v2141
      %v2248 = vpack.c.b16 %v2144, %v2142
      %v2249 = vpack.c.b16 %v2147, %v2145
      %v2250 = vpack.c.b16 %v2148, %v2146
      %v2251 = vpack.c.b16 %v2151, %v2149
      %v2252 = vpack.c.b16 %v2152, %v2150
      %v2253 = vpack.c.b16 %v2155, %v2153
      %v2254 = vpack.c.b16 %v2156, %v2154
      %v2255 = vpack.c.b16 %v2159, %v2157
      %v2256 = vpack.c.b16 %v2160, %v2158
      %2353 = vmatprep.subr.bf16.mxu0 %v2162
      %2354 = vmatpush1.bf16.msra.mxu0 %v2161
      %2355 = vmatprep.subr.bf16.mxu0 %v2164
      %2356 = vmatpush1.bf16.msra.mxu0 %v2163
      %2357 = vmatprep.subr.bf16.mxu0 %v2166
      %2358 = vmatpush1.bf16.msra.mxu0 %v2165
      %2359 = vmatprep.subr.bf16.mxu0 %v2168
      %2360 = vmatpush1.bf16.msra.mxu0 %v2167
      %2361 = vmatprep.subr.bf16.mxu0 %v2170
      %2362 = vmatpush1.bf16.msra.mxu0 %v2169
      %2363 = vmatprep.subr.bf16.mxu0 %v2172
      %2364 = vmatpush1.bf16.msra.mxu0 %v2171
      %2365 = vmatprep.subr.bf16.mxu0 %v2174
      %2366 = vmatpush1.bf16.msra.mxu0 %v2173
      %2367 = vmatprep.subr.bf16.mxu0 %v2176
      %2368 = vmatpush1.bf16.msra.mxu0 %v2175
      %2369 = vmatprep.subr.bf16.mxu0 %v2178
      %2370 = vmatpush1.bf16.msra.mxu0 %v2177
      %2371 = vmatprep.subr.bf16.mxu0 %v2180
      %2372 = vmatpush1.bf16.msra.mxu0 %v2179
      %2373 = vmatprep.subr.bf16.mxu0 %v2182
      %2374 = vmatpush1.bf16.msra.mxu0 %v2181
      %2375 = vmatprep.subr.bf16.mxu0 %v2184
      %2376 = vmatpush1.bf16.msra.mxu0 %v2183
      %2377 = vmatprep.subr.bf16.mxu0 %v2186
      %2378 = vmatpush1.bf16.msra.mxu0 %v2185
      %2379 = vmatprep.subr.bf16.mxu0 %v2188
      %2380 = vmatpush1.bf16.msra.mxu0 %v2187
      %2381 = vmatprep.subr.bf16.mxu0 %v2190
      %2382 = vmatpush1.bf16.msra.mxu0 %v2189
      %2383 = vmatprep.subr.bf16.mxu0 %v2192
      %2384 = vmatpush1.bf16.msra.mxu0 %v2191
      %2385 = vmatprep.mubr.bf16.mxu0 %v1826
      %2386 = vmatmul.mubr.bf16.gmra.mrb[0].mxu0 %v1825
      %v2387 = vpop.f32.mrb[0].mxu0
      %v2388 = vadd.f32 %v1787, %v2387
      %v2389 = vpop.f32.mrb[0].mxu0
      %v2390 = vadd.f32 %v1789, %v2389
      %v2391 = vpop.f32.mrb[0].mxu0
      %v2392 = vadd.f32 %v1791, %v2391
      %v2393 = vpop.f32.mrb[0].mxu0
      %v2394 = vadd.f32 %v1793, %v2393
      %2395 = vmatprep.mubr.bf16.mxu0 %v1832
      %2396 = vmatmul.mubr.bf16.gmra.mrb[0].mxu0 %v1831
      %v2397 = vpop.f32.mrb[0].mxu0
      %v2398 = vadd.f32 %v1797, %v2397
      %v2399 = vpop.f32.mrb[0].mxu0
      %v2400 = vadd.f32 %v1799, %v2399
      %v2401 = vpop.f32.mrb[0].mxu0
      %v2402 = vadd.f32 %v1801, %v2401
      %v2403 = vpop.f32.mrb[0].mxu0
      %v2404 = vadd.f32 %v1803, %v2403
      %2405 = vmatprep.mubr.bf16.mxu0 %v1838
      %2406 = vmatmul.mubr.bf16.gmra.mrb[0].mxu0 %v1837
      %v2407 = vpop.f32.mrb[0].mxu0
      %v2408 = vadd.f32 %v1807, %v2407
      %v2409 = vpop.f32.mrb[0].mxu0
      %v2410 = vadd.f32 %v1809, %v2409
      %v2411 = vpop.f32.mrb[0].mxu0
      %v2412 = vadd.f32 %v1811, %v2411
      %v2413 = vpop.f32.mrb[0].mxu0
      %v2414 = vadd.f32 %v1813, %v2413
      %2415 = vmatprep.mubr.bf16.mxu0 %v1844
      %2416 = vmatmul.mubr.bf16.gmra.mrb[0].mxu0 %v1843
      %v2417 = vpop.f32.mrb[0].mxu0
      %v2418 = vadd.f32 %v1817, %v2417
      %v2419 = vpop.f32.mrb[0].mxu0
      %v2420 = vadd.f32 %v1819, %v2419
      %v2421 = vpop.f32.mrb[0].mxu0
      %v2422 = vadd.f32 %v1821, %v2421
      %v2423 = vpop.f32.mrb[0].mxu0
      %v2424 = vadd.f32 %v1823, %v2423
      %2425 = vdwg.mxu0
      %2426 = vmatprep.subr.bf16.mxu0 %v2194
      %2427 = vmatpush1.bf16.msra.mxu0 %v2193
      %2428 = vmatprep.subr.bf16.mxu0 %v2196
      %2429 = vmatpush1.bf16.msra.mxu0 %v2195
      %2430 = vmatprep.subr.bf16.mxu0 %v2198
      %2431 = vmatpush1.bf16.msra.mxu0 %v2197
      %2432 = vmatprep.subr.bf16.mxu0 %v2200
      %2433 = vmatpush1.bf16.msra.mxu0 %v2199
      %2434 = vmatprep.subr.bf16.mxu0 %v2202
      %2435 = vmatpush1.bf16.msra.mxu0 %v2201
      %2436 = vmatprep.subr.bf16.mxu0 %v2204
      %2437 = vmatpush1.bf16.msra.mxu0 %v2203
      %2438 = vmatprep.subr.bf16.mxu0 %v2206
      %2439 = vmatpush1.bf16.msra.mxu0 %v2205
      %2440 = vmatprep.subr.bf16.mxu0 %v2208
      %2441 = vmatpush1.bf16.msra.mxu0 %v2207
      %2442 = vmatprep.subr.bf16.mxu0 %v2210
      %2443 = vmatpush1.bf16.msra.mxu0 %v2209
      %2444 = vmatprep.subr.bf16.mxu0 %v2212
      %2445 = vmatpush1.bf16.msra.mxu0 %v2211
      %2446 = vmatprep.subr.bf16.mxu0 %v2214
      %2447 = vmatpush1.bf16.msra.mxu0 %v2213
      %2448 = vmatprep.subr.bf16.mxu0 %v2216
      %2449 = vmatpush1.bf16.msra.mxu0 %v2215
      %2450 = vmatprep.subr.bf16.mxu0 %v2218
      %2451 = vmatpush1.bf16.msra.mxu0 %v2217
      %2452 = vmatprep.subr.bf16.mxu0 %v2220
      %2453 = vmatpush1.bf16.msra.mxu0 %v2219
      %2454 = vmatprep.subr.bf16.mxu0 %v2222
      %2455 = vmatpush1.bf16.msra.mxu0 %v2221
      %2456 = vmatprep.subr.bf16.mxu0 %v2224
      %2457 = vmatpush1.bf16.msra.mxu0 %v2223
      %2458 = vmatprep.mubr.bf16.mxu0 %v1828
      %2459 = vmatmul.mubr.bf16.gmra.mrb[0].mxu0 %v1827
      %v2460 = vpop.f32.mrb[0].mxu0
      %v2461 = vadd.f32 %v2388, %v2460
      %v2462 = vpop.f32.mrb[0].mxu0
      %v2463 = vadd.f32 %v2390, %v2462
      %v2464 = vpop.f32.mrb[0].mxu0
      %v2465 = vadd.f32 %v2392, %v2464
      %v2466 = vpop.f32.mrb[0].mxu0
      %v2467 = vadd.f32 %v2394, %v2466
      %2468 = vmatprep.mubr.bf16.mxu0 %v1834
      %2469 = vmatmul.mubr.bf16.gmra.mrb[0].mxu0 %v1833
      %v2470 = vpop.f32.mrb[0].mxu0
      %v2471 = vadd.f32 %v2398, %v2470
      %v2472 = vpop.f32.mrb[0].mxu0
      %v2473 = vadd.f32 %v2400, %v2472
      %v2474 = vpop.f32.mrb[0].mxu0
      %v2475 = vadd.f32 %v2402, %v2474
      %v2476 = vpop.f32.mrb[0].mxu0
      %v2477 = vadd.f32 %v2404, %v2476
      %2478 = vmatprep.mubr.bf16.mxu0 %v1840
      %2479 = vmatmul.mubr.bf16.gmra.mrb[0].mxu0 %v1839
      %v2480 = vpop.f32.mrb[0].mxu0
      %v2481 = vadd.f32 %v2408, %v2480
      %v2482 = vpop.f32.mrb[0].mxu0
      %v2483 = vadd.f32 %v2410, %v2482
      %v2484 = vpop.f32.mrb[0].mxu0
      %v2485 = vadd.f32 %v2412, %v2484
      %v2486 = vpop.f32.mrb[0].mxu0
      %v2487 = vadd.f32 %v2414, %v2486
      %2488 = vmatprep.mubr.bf16.mxu0 %v1846
      %2489 = vmatmul.mubr.bf16.gmra.mrb[0].mxu0 %v1845
      %v2490 = vpop.f32.mrb[0].mxu0
      %v2491 = vadd.f32 %v2418, %v2490
      %v2492 = vpop.f32.mrb[0].mxu0
      %v2493 = vadd.f32 %v2420, %v2492
      %v2494 = vpop.f32.mrb[0].mxu0
      %v2495 = vadd.f32 %v2422, %v2494
      %v2496 = vpop.f32.mrb[0].mxu0
      %v2497 = vadd.f32 %v2424, %v2496
      %2498 = vdwg.mxu0
      %2499 = vmatprep.subr.bf16.mxu0 %v2226
      %2500 = vmatpush1.bf16.msra.mxu0 %v2225
      %2501 = vmatprep.subr.bf16.mxu0 %v2228
      %2502 = vmatpush1.bf16.msra.mxu0 %v2227
      %2503 = vmatprep.subr.bf16.mxu0 %v2230
      %2504 = vmatpush1.bf16.msra.mxu0 %v2229
      %2505 = vmatprep.subr.bf16.mxu0 %v2232
      %2506 = vmatpush1.bf16.msra.mxu0 %v2231
      %2507 = vmatprep.subr.bf16.mxu0 %v2234
      %2508 = vmatpush1.bf16.msra.mxu0 %v2233
      %2509 = vmatprep.subr.bf16.mxu0 %v2236
      %2510 = vmatpush1.bf16.msra.mxu0 %v2235
      %2511 = vmatprep.subr.bf16.mxu0 %v2238
      %2512 = vmatpush1.bf16.msra.mxu0 %v2237
      %2513 = vmatprep.subr.bf16.mxu0 %v2240
      %2514 = vmatpush1.bf16.msra.mxu0 %v2239
      %2515 = vmatprep.subr.bf16.mxu0 %v2242
      %2516 = vmatpush1.bf16.msra.mxu0 %v2241
      %2517 = vmatprep.subr.bf16.mxu0 %v2244
      %2518 = vmatpush1.bf16.msra.mxu0 %v2243
      %2519 = vmatprep.subr.bf16.mxu0 %v2246
      %2520 = vmatpush1.bf16.msra.mxu0 %v2245
      %2521 = vmatprep.subr.bf16.mxu0 %v2248
      %2522 = vmatpush1.bf16.msra.mxu0 %v2247
      %2523 = vmatprep.subr.bf16.mxu0 %v2250
      %2524 = vmatpush1.bf16.msra.mxu0 %v2249
      %2525 = vmatprep.subr.bf16.mxu0 %v2252
      %2526 = vmatpush1.bf16.msra.mxu0 %v2251
      %2527 = vmatprep.subr.bf16.mxu0 %v2254
      %2528 = vmatpush1.bf16.msra.mxu0 %v2253
      %2529 = vmatprep.subr.bf16.mxu0 %v2256
      %2530 = vmatpush1.bf16.msra.mxu0 %v2255
      %2531 = vmatprep.mubr.bf16.mxu0 %v1830
      %2532 = vmatmul.mubr.bf16.gmra.mrb[0].mxu0 %v1829
      %v2533 = vpop.f32.mrb[0].mxu0
      %v2534 = vadd.f32 %v2461, %v2533
      %v2535 = vpop.f32.mrb[0].mxu0
      %v2536 = vadd.f32 %v2463, %v2535
      %v2537 = vpop.f32.mrb[0].mxu0
      %v2538 = vadd.f32 %v2465, %v2537
      %v2539 = vpop.f32.mrb[0].mxu0
      %v2540 = vadd.f32 %v2467, %v2539
      %2541 = vmatprep.mubr.bf16.mxu0 %v1836
      %2542 = vmatmul.mubr.bf16.gmra.mrb[0].mxu0 %v1835
      %v2543 = vpop.f32.mrb[0].mxu0
      %v2544 = vadd.f32 %v2471, %v2543
      %v2545 = vpop.f32.mrb[0].mxu0
      %v2546 = vadd.f32 %v2473, %v2545
      %v2547 = vpop.f32.mrb[0].mxu0
      %v2548 = vadd.f32 %v2475, %v2547
      %v2549 = vpop.f32.mrb[0].mxu0
      %v2550 = vadd.f32 %v2477, %v2549
      %2551 = vmatprep.mubr.bf16.mxu0 %v1842
      %2552 = vmatmul.mubr.bf16.gmra.mrb[0].mxu0 %v1841
      %v2553 = vpop.f32.mrb[0].mxu0
      %v2554 = vadd.f32 %v2481, %v2553
      %v2555 = vpop.f32.mrb[0].mxu0
      %v2556 = vadd.f32 %v2483, %v2555
      %v2557 = vpop.f32.mrb[0].mxu0
      %v2558 = vadd.f32 %v2485, %v2557
      %v2559 = vpop.f32.mrb[0].mxu0
      %v2560 = vadd.f32 %v2487, %v2559
      %2561 = vmatprep.mubr.bf16.mxu0 %v1848
      %2562 = vmatmul.mubr.bf16.gmra.mrb[0].mxu0 %v1847
      %v2563 = vpop.f32.mrb[0].mxu0
      %v2564 = vadd.f32 %v2491, %v2563
      %v2565 = vpop.f32.mrb[0].mxu0
      %v2566 = vadd.f32 %v2493, %v2565
      %v2567 = vpop.f32.mrb[0].mxu0
      %v2568 = vadd.f32 %v2495, %v2567
      %v2569 = vpop.f32.mrb[0].mxu0
      %v2570 = vadd.f32 %v2497, %v2569
      %2571 = vdwg.mxu0
      %v2576 = vunpack.c.l.b16 %v728
      %v2577 = vunpack.c.l.b16 %v729
      %v2578 = vunpack.c.l.b16 %v811
      %v2579 = vunpack.c.l.b16 %v812
      %s2580 = scalar_lea.vmem %s3, 1536
      %v2581 = vld [vmem:[%s2580] sm:$0xff]
      %v2582 = vld [vmem:[%s2580 + $0x8] sm:$0xff]
      %v2583 = vld [vmem:[%s2580 + $0x10] sm:$0xff]
      %v2584 = vld [vmem:[%s2580 + $0x18] sm:$0xff]
      %v2585 = vld [vmem:[%s2580 + $0x20] sm:$0xff]
      %v2586 = vld [vmem:[%s2580 + $0x28] sm:$0xff]
      %v2587 = vld [vmem:[%s2580 + $0x30] sm:$0xff]
      %v2588 = vld [vmem:[%s2580 + $0x38] sm:$0xff]
      %v2589 = vld [vmem:[%s2580 + $0x40] sm:$0xff]
      %v2590 = vld [vmem:[%s2580 + $0x48] sm:$0xff]
      %v2591 = vld [vmem:[%s2580 + $0x50] sm:$0xff]
      %v2592 = vld [vmem:[%s2580 + $0x58] sm:$0xff]
      %v2593 = vld [vmem:[%s2580 + $0x60] sm:$0xff]
      %v2594 = vld [vmem:[%s2580 + $0x68] sm:$0xff]
      %v2595 = vld [vmem:[%s2580 + $0x70] sm:$0xff]
      %v2596 = vld [vmem:[%s2580 + $0x78] sm:$0xff]
      %v2597 = vld [vmem:[%s2580 + $0x80] sm:$0xff]
      %v2598 = vld [vmem:[%s2580 + $0x88] sm:$0xff]
      %v2599 = vld [vmem:[%s2580 + $0x90] sm:$0xff]
      %v2600 = vld [vmem:[%s2580 + $0x98] sm:$0xff]
      %v2601 = vld [vmem:[%s2580 + $0xa0] sm:$0xff]
      %v2602 = vld [vmem:[%s2580 + $0xa8] sm:$0xff]
      %v2603 = vld [vmem:[%s2580 + $0xb0] sm:$0xff]
      %v2604 = vld [vmem:[%s2580 + $0xb8] sm:$0xff]
      %v2605 = vld [vmem:[%s2580 + $0xc0] sm:$0xff]
      %v2606 = vld [vmem:[%s2580 + $0xc8] sm:$0xff]
      %v2607 = vld [vmem:[%s2580 + $0xd0] sm:$0xff]
      %v2608 = vld [vmem:[%s2580 + $0xd8] sm:$0xff]
      %v2609 = vld [vmem:[%s2580 + $0xe0] sm:$0xff]
      %v2610 = vld [vmem:[%s2580 + $0xe8] sm:$0xff]
      %v2611 = vld [vmem:[%s2580 + $0xf0] sm:$0xff]
      %v2612 = vld [vmem:[%s2580 + $0xf8] sm:$0xff]
      %v2613 = vld [vmem:[%s2580 + $0x100] sm:$0xff]
      %v2614 = vld [vmem:[%s2580 + $0x108] sm:$0xff]
      %v2615 = vld [vmem:[%s2580 + $0x110] sm:$0xff]
      %v2616 = vld [vmem:[%s2580 + $0x118] sm:$0xff]
      %v2617 = vld [vmem:[%s2580 + $0x120] sm:$0xff]
      %v2618 = vld [vmem:[%s2580 + $0x128] sm:$0xff]
      %v2619 = vld [vmem:[%s2580 + $0x130] sm:$0xff]
      %v2620 = vld [vmem:[%s2580 + $0x138] sm:$0xff]
      %v2621 = vld [vmem:[%s2580 + $0x140] sm:$0xff]
      %v2622 = vld [vmem:[%s2580 + $0x148] sm:$0xff]
      %v2623 = vld [vmem:[%s2580 + $0x150] sm:$0xff]
      %v2624 = vld [vmem:[%s2580 + $0x158] sm:$0xff]
      %v2625 = vld [vmem:[%s2580 + $0x160] sm:$0xff]
      %v2626 = vld [vmem:[%s2580 + $0x168] sm:$0xff]
      %v2627 = vld [vmem:[%s2580 + $0x170] sm:$0xff]
      %v2628 = vld [vmem:[%s2580 + $0x178] sm:$0xff]
      %v2629 = vld [vmem:[%s2580 + $0x180] sm:$0xff]
      %v2630 = vld [vmem:[%s2580 + $0x188] sm:$0xff]
      %v2631 = vld [vmem:[%s2580 + $0x190] sm:$0xff]
      %v2632 = vld [vmem:[%s2580 + $0x198] sm:$0xff]
      %v2633 = vld [vmem:[%s2580 + $0x1a0] sm:$0xff]
      %v2634 = vld [vmem:[%s2580 + $0x1a8] sm:$0xff]
      %v2635 = vld [vmem:[%s2580 + $0x1b0] sm:$0xff]
      %v2636 = vld [vmem:[%s2580 + $0x1b8] sm:$0xff]
      %v2637 = vld [vmem:[%s2580 + $0x1c0] sm:$0xff]
      %v2638 = vld [vmem:[%s2580 + $0x1c8] sm:$0xff]
      %v2639 = vld [vmem:[%s2580 + $0x1d0] sm:$0xff]
      %v2640 = vld [vmem:[%s2580 + $0x1d8] sm:$0xff]
      %v2641 = vld [vmem:[%s2580 + $0x1e0] sm:$0xff]
      %v2642 = vld [vmem:[%s2580 + $0x1e8] sm:$0xff]
      %v2643 = vld [vmem:[%s2580 + $0x1f0] sm:$0xff]
      %v2644 = vld [vmem:[%s2580 + $0x1f8] sm:$0xff]
      %v2645 = vld [vmem:[%s2580 + $0x200] sm:$0xff]
      %v2646 = vld [vmem:[%s2580 + $0x208] sm:$0xff]
      %v2647 = vld [vmem:[%s2580 + $0x210] sm:$0xff]
      %v2648 = vld [vmem:[%s2580 + $0x218] sm:$0xff]
      %v2649 = vld [vmem:[%s2580 + $0x220] sm:$0xff]
      %v2650 = vld [vmem:[%s2580 + $0x228] sm:$0xff]
      %v2651 = vld [vmem:[%s2580 + $0x230] sm:$0xff]
      %v2652 = vld [vmem:[%s2580 + $0x238] sm:$0xff]
      %v2653 = vld [vmem:[%s2580 + $0x240] sm:$0xff]
      %v2654 = vld [vmem:[%s2580 + $0x248] sm:$0xff]
      %v2655 = vld [vmem:[%s2580 + $0x250] sm:$0xff]
      %v2656 = vld [vmem:[%s2580 + $0x258] sm:$0xff]
      %v2657 = vld [vmem:[%s2580 + $0x260] sm:$0xff]
      %v2658 = vld [vmem:[%s2580 + $0x268] sm:$0xff]
      %v2659 = vld [vmem:[%s2580 + $0x270] sm:$0xff]
      %v2660 = vld [vmem:[%s2580 + $0x278] sm:$0xff]
      %v2661 = vld [vmem:[%s2580 + $0x280] sm:$0xff]
      %v2662 = vld [vmem:[%s2580 + $0x288] sm:$0xff]
      %v2663 = vld [vmem:[%s2580 + $0x290] sm:$0xff]
      %v2664 = vld [vmem:[%s2580 + $0x298] sm:$0xff]
      %v2665 = vld [vmem:[%s2580 + $0x2a0] sm:$0xff]
      %v2666 = vld [vmem:[%s2580 + $0x2a8] sm:$0xff]
      %v2667 = vld [vmem:[%s2580 + $0x2b0] sm:$0xff]
      %v2668 = vld [vmem:[%s2580 + $0x2b8] sm:$0xff]
      %v2669 = vld [vmem:[%s2580 + $0x2c0] sm:$0xff]
      %v2670 = vld [vmem:[%s2580 + $0x2c8] sm:$0xff]
      %v2671 = vld [vmem:[%s2580 + $0x2d0] sm:$0xff]
      %v2672 = vld [vmem:[%s2580 + $0x2d8] sm:$0xff]
      %v2673 = vld [vmem:[%s2580 + $0x2e0] sm:$0xff]
      %v2674 = vld [vmem:[%s2580 + $0x2e8] sm:$0xff]
      %v2675 = vld [vmem:[%s2580 + $0x2f0] sm:$0xff]
      %v2676 = vld [vmem:[%s2580 + $0x2f8] sm:$0xff]
      %v2677 = vpack.c.b16 %v2576, %v977
      %v2678 = vpack.c.b16 %v2577, %v978
      %v2679 = vpack.c.b16 %v525, %v523
      %v2680 = vpack.c.b16 %v526, %v524
      %v2681 = vpack.c.b16 %v2578, %v979
      %v2682 = vpack.c.b16 %v2579, %v980
      %v2785 = vunpack.c.l.b16 %v2581
      %v2786 = vunpack.c.h.b16 %v2581
      %v2787 = vunpack.c.l.b16 %v2582
      %v2788 = vunpack.c.h.b16 %v2582
      %v2789 = vunpack.c.l.b16 %v2583
      %v2790 = vunpack.c.h.b16 %v2583
      %v2791 = vunpack.c.l.b16 %v2584
      %v2792 = vunpack.c.h.b16 %v2584
      %v2793 = vunpack.c.l.b16 %v2585
      %v2794 = vunpack.c.h.b16 %v2585
      %v2795 = vunpack.c.l.b16 %v2586
      %v2796 = vunpack.c.h.b16 %v2586
      %v2797 = vunpack.c.l.b16 %v2587
      %v2798 = vunpack.c.h.b16 %v2587
      %v2799 = vunpack.c.l.b16 %v2588
      %v2800 = vunpack.c.h.b16 %v2588
      %v2801 = vunpack.c.l.b16 %v2589
      %v2802 = vunpack.c.h.b16 %v2589
      %v2803 = vunpack.c.l.b16 %v2590
      %v2804 = vunpack.c.h.b16 %v2590
      %v2805 = vunpack.c.l.b16 %v2591
      %v2806 = vunpack.c.h.b16 %v2591
      %v2807 = vunpack.c.l.b16 %v2592
      %v2808 = vunpack.c.h.b16 %v2592
      %v2809 = vunpack.c.l.b16 %v2593
      %v2810 = vunpack.c.h.b16 %v2593
      %v2811 = vunpack.c.l.b16 %v2594
      %v2812 = vunpack.c.h.b16 %v2594
      %v2813 = vunpack.c.l.b16 %v2595
      %v2814 = vunpack.c.h.b16 %v2595
      %v2815 = vunpack.c.l.b16 %v2596
      %v2816 = vunpack.c.h.b16 %v2596
      %v2817 = vunpack.c.l.b16 %v2597
      %v2818 = vunpack.c.h.b16 %v2597
      %v2819 = vunpack.c.l.b16 %v2598
      %v2820 = vunpack.c.h.b16 %v2598
      %v2821 = vunpack.c.l.b16 %v2599
      %v2822 = vunpack.c.h.b16 %v2599
      %v2823 = vunpack.c.l.b16 %v2600
      %v2824 = vunpack.c.h.b16 %v2600
      %v2825 = vunpack.c.l.b16 %v2601
      %v2826 = vunpack.c.h.b16 %v2601
      %v2827 = vunpack.c.l.b16 %v2602
      %v2828 = vunpack.c.h.b16 %v2602
      %v2829 = vunpack.c.l.b16 %v2603
      %v2830 = vunpack.c.h.b16 %v2603
      %v2831 = vunpack.c.l.b16 %v2604
      %v2832 = vunpack.c.h.b16 %v2604
      %v2833 = vunpack.c.l.b16 %v2605
      %v2834 = vunpack.c.h.b16 %v2605
      %v2835 = vunpack.c.l.b16 %v2606
      %v2836 = vunpack.c.h.b16 %v2606
      %v2837 = vunpack.c.l.b16 %v2607
      %v2838 = vunpack.c.h.b16 %v2607
      %v2839 = vunpack.c.l.b16 %v2608
      %v2840 = vunpack.c.h.b16 %v2608
      %v2841 = vunpack.c.l.b16 %v2609
      %v2842 = vunpack.c.h.b16 %v2609
      %v2843 = vunpack.c.l.b16 %v2610
      %v2844 = vunpack.c.h.b16 %v2610
      %v2845 = vunpack.c.l.b16 %v2611
      %v2846 = vunpack.c.h.b16 %v2611
      %v2847 = vunpack.c.l.b16 %v2612
      %v2848 = vunpack.c.h.b16 %v2612
      %v2849 = vunpack.c.l.b16 %v2613
      %v2850 = vunpack.c.h.b16 %v2613
      %v2851 = vunpack.c.l.b16 %v2614
      %v2852 = vunpack.c.h.b16 %v2614
      %v2853 = vunpack.c.l.b16 %v2615
      %v2854 = vunpack.c.h.b16 %v2615
      %v2855 = vunpack.c.l.b16 %v2616
      %v2856 = vunpack.c.h.b16 %v2616
      %v2857 = vunpack.c.l.b16 %v2617
      %v2858 = vunpack.c.h.b16 %v2617
      %v2859 = vunpack.c.l.b16 %v2618
      %v2860 = vunpack.c.h.b16 %v2618
      %v2861 = vunpack.c.l.b16 %v2619
      %v2862 = vunpack.c.h.b16 %v2619
      %v2863 = vunpack.c.l.b16 %v2620
      %v2864 = vunpack.c.h.b16 %v2620
      %v2865 = vunpack.c.l.b16 %v2621
      %v2866 = vunpack.c.h.b16 %v2621
      %v2867 = vunpack.c.l.b16 %v2622
      %v2868 = vunpack.c.h.b16 %v2622
      %v2869 = vunpack.c.l.b16 %v2623
      %v2870 = vunpack.c.h.b16 %v2623
      %v2871 = vunpack.c.l.b16 %v2624
      %v2872 = vunpack.c.h.b16 %v2624
      %v2873 = vunpack.c.l.b16 %v2625
      %v2874 = vunpack.c.h.b16 %v2625
      %v2875 = vunpack.c.l.b16 %v2626
      %v2876 = vunpack.c.h.b16 %v2626
      %v2877 = vunpack.c.l.b16 %v2627
      %v2878 = vunpack.c.h.b16 %v2627
      %v2879 = vunpack.c.l.b16 %v2628
      %v2880 = vunpack.c.h.b16 %v2628
      %v2881 = vunpack.c.l.b16 %v2629
      %v2882 = vunpack.c.h.b16 %v2629
      %v2883 = vunpack.c.l.b16 %v2630
      %v2884 = vunpack.c.h.b16 %v2630
      %v2885 = vunpack.c.l.b16 %v2631
      %v2886 = vunpack.c.h.b16 %v2631
      %v2887 = vunpack.c.l.b16 %v2632
      %v2888 = vunpack.c.h.b16 %v2632
      %v2889 = vunpack.c.l.b16 %v2633
      %v2890 = vunpack.c.h.b16 %v2633
      %v2891 = vunpack.c.l.b16 %v2634
      %v2892 = vunpack.c.h.b16 %v2634
      %v2893 = vunpack.c.l.b16 %v2635
      %v2894 = vunpack.c.h.b16 %v2635
      %v2895 = vunpack.c.l.b16 %v2636
      %v2896 = vunpack.c.h.b16 %v2636
      %v2897 = vunpack.c.l.b16 %v2637
      %v2898 = vunpack.c.h.b16 %v2637
      %v2899 = vunpack.c.l.b16 %v2638
      %v2900 = vunpack.c.h.b16 %v2638
      %v2901 = vunpack.c.l.b16 %v2639
      %v2902 = vunpack.c.h.b16 %v2639
      %v2903 = vunpack.c.l.b16 %v2640
      %v2904 = vunpack.c.h.b16 %v2640
      %v2905 = vunpack.c.l.b16 %v2641
      %v2906 = vunpack.c.h.b16 %v2641
      %v2907 = vunpack.c.l.b16 %v2642
      %v2908 = vunpack.c.h.b16 %v2642
      %v2909 = vunpack.c.l.b16 %v2643
      %v2910 = vunpack.c.h.b16 %v2643
      %v2911 = vunpack.c.l.b16 %v2644
      %v2912 = vunpack.c.h.b16 %v2644
      %v2913 = vunpack.c.l.b16 %v2645
      %v2914 = vunpack.c.h.b16 %v2645
      %v2915 = vunpack.c.l.b16 %v2646
      %v2916 = vunpack.c.h.b16 %v2646
      %v2917 = vunpack.c.l.b16 %v2647
      %v2918 = vunpack.c.h.b16 %v2647
      %v2919 = vunpack.c.l.b16 %v2648
      %v2920 = vunpack.c.h.b16 %v2648
      %v2921 = vunpack.c.l.b16 %v2649
      %v2922 = vunpack.c.h.b16 %v2649
      %v2923 = vunpack.c.l.b16 %v2650
      %v2924 = vunpack.c.h.b16 %v2650
      %v2925 = vunpack.c.l.b16 %v2651
      %v2926 = vunpack.c.h.b16 %v2651
      %v2927 = vunpack.c.l.b16 %v2652
      %v2928 = vunpack.c.h.b16 %v2652
      %v2929 = vunpack.c.l.b16 %v2653
      %v2930 = vunpack.c.h.b16 %v2653
      %v2931 = vunpack.c.l.b16 %v2654
      %v2932 = vunpack.c.h.b16 %v2654
      %v2933 = vunpack.c.l.b16 %v2655
      %v2934 = vunpack.c.h.b16 %v2655
      %v2935 = vunpack.c.l.b16 %v2656
      %v2936 = vunpack.c.h.b16 %v2656
      %v2937 = vunpack.c.l.b16 %v2657
      %v2938 = vunpack.c.h.b16 %v2657
      %v2939 = vunpack.c.l.b16 %v2658
      %v2940 = vunpack.c.h.b16 %v2658
      %v2941 = vunpack.c.l.b16 %v2659
      %v2942 = vunpack.c.h.b16 %v2659
      %v2943 = vunpack.c.l.b16 %v2660
      %v2944 = vunpack.c.h.b16 %v2660
      %v2945 = vunpack.c.l.b16 %v2661
      %v2946 = vunpack.c.h.b16 %v2661
      %v2947 = vunpack.c.l.b16 %v2662
      %v2948 = vunpack.c.h.b16 %v2662
      %v2949 = vunpack.c.l.b16 %v2663
      %v2950 = vunpack.c.h.b16 %v2663
      %v2951 = vunpack.c.l.b16 %v2664
      %v2952 = vunpack.c.h.b16 %v2664
      %v2953 = vunpack.c.l.b16 %v2665
      %v2954 = vunpack.c.h.b16 %v2665
      %v2955 = vunpack.c.l.b16 %v2666
      %v2956 = vunpack.c.h.b16 %v2666
      %v2957 = vunpack.c.l.b16 %v2667
      %v2958 = vunpack.c.h.b16 %v2667
      %v2959 = vunpack.c.l.b16 %v2668
      %v2960 = vunpack.c.h.b16 %v2668
      %v2961 = vunpack.c.l.b16 %v2669
      %v2962 = vunpack.c.h.b16 %v2669
      %v2963 = vunpack.c.l.b16 %v2670
      %v2964 = vunpack.c.h.b16 %v2670
      %v2965 = vunpack.c.l.b16 %v2671
      %v2966 = vunpack.c.h.b16 %v2671
      %v2967 = vunpack.c.l.b16 %v2672
      %v2968 = vunpack.c.h.b16 %v2672
      %v2969 = vunpack.c.l.b16 %v2673
      %v2970 = vunpack.c.h.b16 %v2673
      %v2971 = vunpack.c.l.b16 %v2674
      %v2972 = vunpack.c.h.b16 %v2674
      %v2973 = vunpack.c.l.b16 %v2675
      %v2974 = vunpack.c.h.b16 %v2675
      %v2975 = vunpack.c.l.b16 %v2676
      %v2976 = vunpack.c.h.b16 %v2676
      %v2977 = vpack.c.b16 %v2787, %v2785
      %v2978 = vpack.c.b16 %v2788, %v2786
      %v2979 = vpack.c.b16 %v2791, %v2789
      %v2980 = vpack.c.b16 %v2792, %v2790
      %v2981 = vpack.c.b16 %v2795, %v2793
      %v2982 = vpack.c.b16 %v2796, %v2794
      %v2983 = vpack.c.b16 %v2799, %v2797
      %v2984 = vpack.c.b16 %v2800, %v2798
      %v2985 = vpack.c.b16 %v2803, %v2801
      %v2986 = vpack.c.b16 %v2804, %v2802
      %v2987 = vpack.c.b16 %v2807, %v2805
      %v2988 = vpack.c.b16 %v2808, %v2806
      %v2989 = vpack.c.b16 %v2811, %v2809
      %v2990 = vpack.c.b16 %v2812, %v2810
      %v2991 = vpack.c.b16 %v2815, %v2813
      %v2992 = vpack.c.b16 %v2816, %v2814
      %v2993 = vpack.c.b16 %v2819, %v2817
      %v2994 = vpack.c.b16 %v2820, %v2818
      %v2995 = vpack.c.b16 %v2823, %v2821
      %v2996 = vpack.c.b16 %v2824, %v2822
      %v2997 = vpack.c.b16 %v2827, %v2825
      %v2998 = vpack.c.b16 %v2828, %v2826
      %v2999 = vpack.c.b16 %v2831, %v2829
      %v3000 = vpack.c.b16 %v2832, %v2830
      %v3001 = vpack.c.b16 %v2835, %v2833
      %v3002 = vpack.c.b16 %v2836, %v2834
      %v3003 = vpack.c.b16 %v2839, %v2837
      %v3004 = vpack.c.b16 %v2840, %v2838
      %v3005 = vpack.c.b16 %v2843, %v2841
      %v3006 = vpack.c.b16 %v2844, %v2842
      %v3007 = vpack.c.b16 %v2847, %v2845
      %v3008 = vpack.c.b16 %v2848, %v2846
      %v3009 = vpack.c.b16 %v2851, %v2849
      %v3010 = vpack.c.b16 %v2852, %v2850
      %v3011 = vpack.c.b16 %v2855, %v2853
      %v3012 = vpack.c.b16 %v2856, %v2854
      %v3013 = vpack.c.b16 %v2859, %v2857
      %v3014 = vpack.c.b16 %v2860, %v2858
      %v3015 = vpack.c.b16 %v2863, %v2861
      %v3016 = vpack.c.b16 %v2864, %v2862
      %v3017 = vpack.c.b16 %v2867, %v2865
      %v3018 = vpack.c.b16 %v2868, %v2866
      %v3019 = vpack.c.b16 %v2871, %v2869
      %v3020 = vpack.c.b16 %v2872, %v2870
      %v3021 = vpack.c.b16 %v2875, %v2873
      %v3022 = vpack.c.b16 %v2876, %v2874
      %v3023 = vpack.c.b16 %v2879, %v2877
      %v3024 = vpack.c.b16 %v2880, %v2878
      %v3025 = vpack.c.b16 %v2883, %v2881
      %v3026 = vpack.c.b16 %v2884, %v2882
      %v3027 = vpack.c.b16 %v2887, %v2885
      %v3028 = vpack.c.b16 %v2888, %v2886
      %v3029 = vpack.c.b16 %v2891, %v2889
      %v3030 = vpack.c.b16 %v2892, %v2890
      %v3031 = vpack.c.b16 %v2895, %v2893
      %v3032 = vpack.c.b16 %v2896, %v2894
      %v3033 = vpack.c.b16 %v2899, %v2897
      %v3034 = vpack.c.b16 %v2900, %v2898
      %v3035 = vpack.c.b16 %v2903, %v2901
      %v3036 = vpack.c.b16 %v2904, %v2902
      %v3037 = vpack.c.b16 %v2907, %v2905
      %v3038 = vpack.c.b16 %v2908, %v2906
      %v3039 = vpack.c.b16 %v2911, %v2909
      %v3040 = vpack.c.b16 %v2912, %v2910
      %v3041 = vpack.c.b16 %v2915, %v2913
      %v3042 = vpack.c.b16 %v2916, %v2914
      %v3043 = vpack.c.b16 %v2919, %v2917
      %v3044 = vpack.c.b16 %v2920, %v2918
      %v3045 = vpack.c.b16 %v2923, %v2921
      %v3046 = vpack.c.b16 %v2924, %v2922
      %v3047 = vpack.c.b16 %v2927, %v2925
      %v3048 = vpack.c.b16 %v2928, %v2926
      %v3049 = vpack.c.b16 %v2931, %v2929
      %v3050 = vpack.c.b16 %v2932, %v2930
      %v3051 = vpack.c.b16 %v2935, %v2933
      %v3052 = vpack.c.b16 %v2936, %v2934
      %v3053 = vpack.c.b16 %v2939, %v2937
      %v3054 = vpack.c.b16 %v2940, %v2938
      %v3055 = vpack.c.b16 %v2943, %v2941
      %v3056 = vpack.c.b16 %v2944, %v2942
      %v3057 = vpack.c.b16 %v2947, %v2945
      %v3058 = vpack.c.b16 %v2948, %v2946
      %v3059 = vpack.c.b16 %v2951, %v2949
      %v3060 = vpack.c.b16 %v2952, %v2950
      %v3061 = vpack.c.b16 %v2955, %v2953
      %v3062 = vpack.c.b16 %v2956, %v2954
      %v3063 = vpack.c.b16 %v2959, %v2957
      %v3064 = vpack.c.b16 %v2960, %v2958
      %v3065 = vpack.c.b16 %v2963, %v2961
      %v3066 = vpack.c.b16 %v2964, %v2962
      %v3067 = vpack.c.b16 %v2967, %v2965
      %v3068 = vpack.c.b16 %v2968, %v2966
      %v3069 = vpack.c.b16 %v2971, %v2969
      %v3070 = vpack.c.b16 %v2972, %v2970
      %v3071 = vpack.c.b16 %v2975, %v2973
      %v3072 = vpack.c.b16 %v2976, %v2974
      %3169 = vmatprep.subr.bf16.mxu0 %v2978
      %3170 = vmatpush1.bf16.msra.mxu0 %v2977
      %3171 = vmatprep.subr.bf16.mxu0 %v2980
      %3172 = vmatpush1.bf16.msra.mxu0 %v2979
      %3173 = vmatprep.subr.bf16.mxu0 %v2982
      %3174 = vmatpush1.bf16.msra.mxu0 %v2981
      %3175 = vmatprep.subr.bf16.mxu0 %v2984
      %3176 = vmatpush1.bf16.msra.mxu0 %v2983
      %3177 = vmatprep.subr.bf16.mxu0 %v2986
      %3178 = vmatpush1.bf16.msra.mxu0 %v2985
      %3179 = vmatprep.subr.bf16.mxu0 %v2988
      %3180 = vmatpush1.bf16.msra.mxu0 %v2987
      %3181 = vmatprep.subr.bf16.mxu0 %v2990
      %3182 = vmatpush1.bf16.msra.mxu0 %v2989
      %3183 = vmatprep.subr.bf16.mxu0 %v2992
      %3184 = vmatpush1.bf16.msra.mxu0 %v2991
      %3185 = vmatprep.subr.bf16.mxu0 %v2994
      %3186 = vmatpush1.bf16.msra.mxu0 %v2993
      %3187 = vmatprep.subr.bf16.mxu0 %v2996
      %3188 = vmatpush1.bf16.msra.mxu0 %v2995
      %3189 = vmatprep.subr.bf16.mxu0 %v2998
      %3190 = vmatpush1.bf16.msra.mxu0 %v2997
      %3191 = vmatprep.subr.bf16.mxu0 %v3000
      %3192 = vmatpush1.bf16.msra.mxu0 %v2999
      %3193 = vmatprep.subr.bf16.mxu0 %v3002
      %3194 = vmatpush1.bf16.msra.mxu0 %v3001
      %3195 = vmatprep.subr.bf16.mxu0 %v3004
      %3196 = vmatpush1.bf16.msra.mxu0 %v3003
      %3197 = vmatprep.subr.bf16.mxu0 %v3006
      %3198 = vmatpush1.bf16.msra.mxu0 %v3005
      %3199 = vmatprep.subr.bf16.mxu0 %v3008
      %3200 = vmatpush1.bf16.msra.mxu0 %v3007
      %3201 = vmatprep.mubr.bf16.mxu0 %v1832
      %3202 = vmatmul.mubr.bf16.gmra.mrb[0].mxu0 %v1831
      %v3203 = vpop.f32.mrb[0].mxu0
      %v3204 = vadd.f32 0.0, %v3203
      %v3205 = vpop.f32.mrb[0].mxu0
      %v3206 = vadd.f32 0.0, %v3205
      %v3207 = vpop.f32.mrb[0].mxu0
      %v3208 = vadd.f32 0.0, %v3207
      %v3209 = vpop.f32.mrb[0].mxu0
      %v3210 = vadd.f32 0.0, %v3209
      %3211 = vmatprep.mubr.bf16.mxu0 %v1838
      %3212 = vmatmul.mubr.bf16.gmra.mrb[0].mxu0 %v1837
      %v3213 = vpop.f32.mrb[0].mxu0
      %v3214 = vadd.f32 0.0, %v3213
      %v3215 = vpop.f32.mrb[0].mxu0
      %v3216 = vadd.f32 0.0, %v3215
      %v3217 = vpop.f32.mrb[0].mxu0
      %v3218 = vadd.f32 0.0, %v3217
      %v3219 = vpop.f32.mrb[0].mxu0
      %v3220 = vadd.f32 0.0, %v3219
      %3221 = vmatprep.mubr.bf16.mxu0 %v1844
      %3222 = vmatmul.mubr.bf16.gmra.mrb[0].mxu0 %v1843
      %v3223 = vpop.f32.mrb[0].mxu0
      %v3224 = vadd.f32 0.0, %v3223
      %v3225 = vpop.f32.mrb[0].mxu0
      %v3226 = vadd.f32 0.0, %v3225
      %v3227 = vpop.f32.mrb[0].mxu0
      %v3228 = vadd.f32 0.0, %v3227
      %v3229 = vpop.f32.mrb[0].mxu0
      %v3230 = vadd.f32 0.0, %v3229
      %3231 = vmatprep.mubr.bf16.mxu0 %v2678
      %3232 = vmatmul.mubr.bf16.gmra.mrb[0].mxu0 %v2677
      %v3233 = vpop.f32.mrb[0].mxu0
      %v3234 = vadd.f32 0.0, %v3233
      %v3235 = vpop.f32.mrb[0].mxu0
      %v3236 = vadd.f32 0.0, %v3235
      %v3237 = vpop.f32.mrb[0].mxu0
      %v3238 = vadd.f32 0.0, %v3237
      %v3239 = vpop.f32.mrb[0].mxu0
      %v3240 = vadd.f32 0.0, %v3239
      %3241 = vdwg.mxu0
      %3242 = vmatprep.subr.bf16.mxu0 %v3010
      %3243 = vmatpush1.bf16.msra.mxu0 %v3009
      %3244 = vmatprep.subr.bf16.mxu0 %v3012
      %3245 = vmatpush1.bf16.msra.mxu0 %v3011
      %3246 = vmatprep.subr.bf16.mxu0 %v3014
      %3247 = vmatpush1.bf16.msra.mxu0 %v3013
      %3248 = vmatprep.subr.bf16.mxu0 %v3016
      %3249 = vmatpush1.bf16.msra.mxu0 %v3015
      %3250 = vmatprep.subr.bf16.mxu0 %v3018
      %3251 = vmatpush1.bf16.msra.mxu0 %v3017
      %3252 = vmatprep.subr.bf16.mxu0 %v3020
      %3253 = vmatpush1.bf16.msra.mxu0 %v3019
      %3254 = vmatprep.subr.bf16.mxu0 %v3022
      %3255 = vmatpush1.bf16.msra.mxu0 %v3021
      %3256 = vmatprep.subr.bf16.mxu0 %v3024
      %3257 = vmatpush1.bf16.msra.mxu0 %v3023
      %3258 = vmatprep.subr.bf16.mxu0 %v3026
      %3259 = vmatpush1.bf16.msra.mxu0 %v3025
      %3260 = vmatprep.subr.bf16.mxu0 %v3028
      %3261 = vmatpush1.bf16.msra.mxu0 %v3027
      %3262 = vmatprep.subr.bf16.mxu0 %v3030
      %3263 = vmatpush1.bf16.msra.mxu0 %v3029
      %3264 = vmatprep.subr.bf16.mxu0 %v3032
      %3265 = vmatpush1.bf16.msra.mxu0 %v3031
      %3266 = vmatprep.subr.bf16.mxu0 %v3034
      %3267 = vmatpush1.bf16.msra.mxu0 %v3033
      %3268 = vmatprep.subr.bf16.mxu0 %v3036
      %3269 = vmatpush1.bf16.msra.mxu0 %v3035
      %3270 = vmatprep.subr.bf16.mxu0 %v3038
      %3271 = vmatpush1.bf16.msra.mxu0 %v3037
      %3272 = vmatprep.subr.bf16.mxu0 %v3040
      %3273 = vmatpush1.bf16.msra.mxu0 %v3039
      %3274 = vmatprep.mubr.bf16.mxu0 %v1834
      %3275 = vmatmul.mubr.bf16.gmra.mrb[0].mxu0 %v1833
      %v3276 = vpop.f32.mrb[0].mxu0
      %v3277 = vadd.f32 %v3204, %v3276
      %v3278 = vpop.f32.mrb[0].mxu0
      %v3279 = vadd.f32 %v3206, %v3278
      %v3280 = vpop.f32.mrb[0].mxu0
      %v3281 = vadd.f32 %v3208, %v3280
      %v3282 = vpop.f32.mrb[0].mxu0
      %v3283 = vadd.f32 %v3210, %v3282
      %3284 = vmatprep.mubr.bf16.mxu0 %v1840
      %3285 = vmatmul.mubr.bf16.gmra.mrb[0].mxu0 %v1839
      %v3286 = vpop.f32.mrb[0].mxu0
      %v3287 = vadd.f32 %v3214, %v3286
      %v3288 = vpop.f32.mrb[0].mxu0
      %v3289 = vadd.f32 %v3216, %v3288
      %v3290 = vpop.f32.mrb[0].mxu0
      %v3291 = vadd.f32 %v3218, %v3290
      %v3292 = vpop.f32.mrb[0].mxu0
      %v3293 = vadd.f32 %v3220, %v3292
      %3294 = vmatprep.mubr.bf16.mxu0 %v1846
      %3295 = vmatmul.mubr.bf16.gmra.mrb[0].mxu0 %v1845
      %v3296 = vpop.f32.mrb[0].mxu0
      %v3297 = vadd.f32 %v3224, %v3296
      %v3298 = vpop.f32.mrb[0].mxu0
      %v3299 = vadd.f32 %v3226, %v3298
      %v3300 = vpop.f32.mrb[0].mxu0
      %v3301 = vadd.f32 %v3228, %v3300
      %v3302 = vpop.f32.mrb[0].mxu0
      %v3303 = vadd.f32 %v3230, %v3302
      %3304 = vmatprep.mubr.bf16.mxu0 %v2680
      %3305 = vmatmul.mubr.bf16.gmra.mrb[0].mxu0 %v2679
      %v3306 = vpop.f32.mrb[0].mxu0
      %v3307 = vadd.f32 %v3234, %v3306
      %v3308 = vpop.f32.mrb[0].mxu0
      %v3309 = vadd.f32 %v3236, %v3308
      %v3310 = vpop.f32.mrb[0].mxu0
      %v3311 = vadd.f32 %v3238, %v3310
      %v3312 = vpop.f32.mrb[0].mxu0
      %v3313 = vadd.f32 %v3240, %v3312
      %3314 = vdwg.mxu0
      %3315 = vmatprep.subr.bf16.mxu0 %v3042
      %3316 = vmatpush1.bf16.msra.mxu0 %v3041
      %3317 = vmatprep.subr.bf16.mxu0 %v3044
      %3318 = vmatpush1.bf16.msra.mxu0 %v3043
      %3319 = vmatprep.subr.bf16.mxu0 %v3046
      %3320 = vmatpush1.bf16.msra.mxu0 %v3045
      %3321 = vmatprep.subr.bf16.mxu0 %v3048
      %3322 = vmatpush1.bf16.msra.mxu0 %v3047
      %3323 = vmatprep.subr.bf16.mxu0 %v3050
      %3324 = vmatpush1.bf16.msra.mxu0 %v3049
      %3325 = vmatprep.subr.bf16.mxu0 %v3052
      %3326 = vmatpush1.bf16.msra.mxu0 %v3051
      %3327 = vmatprep.subr.bf16.mxu0 %v3054
      %3328 = vmatpush1.bf16.msra.mxu0 %v3053
      %3329 = vmatprep.subr.bf16.mxu0 %v3056
      %3330 = vmatpush1.bf16.msra.mxu0 %v3055
      %3331 = vmatprep.subr.bf16.mxu0 %v3058
      %3332 = vmatpush1.bf16.msra.mxu0 %v3057
      %3333 = vmatprep.subr.bf16.mxu0 %v3060
      %3334 = vmatpush1.bf16.msra.mxu0 %v3059
      %3335 = vmatprep.subr.bf16.mxu0 %v3062
      %3336 = vmatpush1.bf16.msra.mxu0 %v3061
      %3337 = vmatprep.subr.bf16.mxu0 %v3064
      %3338 = vmatpush1.bf16.msra.mxu0 %v3063
      %3339 = vmatprep.subr.bf16.mxu0 %v3066
      %3340 = vmatpush1.bf16.msra.mxu0 %v3065
      %3341 = vmatprep.subr.bf16.mxu0 %v3068
      %3342 = vmatpush1.bf16.msra.mxu0 %v3067
      %3343 = vmatprep.subr.bf16.mxu0 %v3070
      %3344 = vmatpush1.bf16.msra.mxu0 %v3069
      %3345 = vmatprep.subr.bf16.mxu0 %v3072
      %3346 = vmatpush1.bf16.msra.mxu0 %v3071
      %3347 = vmatprep.mubr.bf16.mxu0 %v1836
      %3348 = vmatmul.mubr.bf16.gmra.mrb[0].mxu0 %v1835
      %v3349 = vpop.f32.mrb[0].mxu0
      %v3350 = vadd.f32 %v3277, %v3349
      %v3351 = vpop.f32.mrb[0].mxu0
      %v3352 = vadd.f32 %v3279, %v3351
      %v3353 = vpop.f32.mrb[0].mxu0
      %v3354 = vadd.f32 %v3281, %v3353
      %v3355 = vpop.f32.mrb[0].mxu0
      %v3356 = vadd.f32 %v3283, %v3355
      %3357 = vmatprep.mubr.bf16.mxu0 %v1842
      %3358 = vmatmul.mubr.bf16.gmra.mrb[0].mxu0 %v1841
      %v3359 = vpop.f32.mrb[0].mxu0
      %v3360 = vadd.f32 %v3287, %v3359
      %v3361 = vpop.f32.mrb[0].mxu0
      %v3362 = vadd.f32 %v3289, %v3361
      %v3363 = vpop.f32.mrb[0].mxu0
      %v3364 = vadd.f32 %v3291, %v3363
      %v3365 = vpop.f32.mrb[0].mxu0
      %v3366 = vadd.f32 %v3293, %v3365
      %3367 = vmatprep.mubr.bf16.mxu0 %v1848
      %3368 = vmatmul.mubr.bf16.gmra.mrb[0].mxu0 %v1847
      %v3369 = vpop.f32.mrb[0].mxu0
      %v3370 = vadd.f32 %v3297, %v3369
      %v3371 = vpop.f32.mrb[0].mxu0
      %v3372 = vadd.f32 %v3299, %v3371
      %v3373 = vpop.f32.mrb[0].mxu0
      %v3374 = vadd.f32 %v3301, %v3373
      %v3375 = vpop.f32.mrb[0].mxu0
      %v3376 = vadd.f32 %v3303, %v3375
      %3377 = vmatprep.mubr.bf16.mxu0 %v2682
      %3378 = vmatmul.mubr.bf16.gmra.mrb[0].mxu0 %v2681
      %v3379 = vpop.f32.mrb[0].mxu0
      %v3380 = vadd.f32 %v3307, %v3379
      %v3381 = vpop.f32.mrb[0].mxu0
      %v3382 = vadd.f32 %v3309, %v3381
      %v3383 = vpop.f32.mrb[0].mxu0
      %v3384 = vadd.f32 %v3311, %v3383
      %v3385 = vpop.f32.mrb[0].mxu0
      %v3386 = vadd.f32 %v3313, %v3385
      %3387 = vdwg.mxu0
      %v3388 = vadd.f32 %v2534, %v3350
      %v3389 = vadd.f32 %v2536, %v3352
      %v3390 = vadd.f32 %v2538, %v3354
      %v3391 = vadd.f32 %v2540, %v3356
      %v3392 = vadd.f32 %v2544, %v3360
      %v3393 = vadd.f32 %v2546, %v3362
      %v3394 = vadd.f32 %v2548, %v3364
      %v3395 = vadd.f32 %v2550, %v3366
      %v3396 = vadd.f32 %v2554, %v3370
      %v3397 = vadd.f32 %v2556, %v3372
      %v3398 = vadd.f32 %v2558, %v3374
      %v3399 = vadd.f32 %v2560, %v3376
      %v3400 = vadd.f32 %v2564, %v3380
      %v3401 = vadd.f32 %v2566, %v3382
      %v3402 = vadd.f32 %v2568, %v3384
      %v3403 = vadd.f32 %v2570, %v3386
      %v3404 = vld [vmem:[%s4] sm:$0x3]
      %v3406 = vlaneseq
      %v3407 = vshrl.u32 %v3406, 7
      %v3408 = vsub.s32 0, %v3407
      %v3409 = vrot.slane %v3404, %v3408
      %v3410 = vlaneseq
      %v3411 = vshrl.u32 %v3410, 7
      %v3412 = vsub.s32 1, %v3411
      %v3413 = vrot.slane %v3404, %v3412
      %v3416 = vadd.f32 %v3388, %v3409
      %v3417 = vadd.f32 %v3389, %v3413
      %v3418 = vadd.f32 %v3390, %v3409
      %v3419 = vadd.f32 %v3391, %v3413
      %v3420 = vadd.f32 %v3392, %v3409
      %v3421 = vadd.f32 %v3393, %v3413
      %v3422 = vadd.f32 %v3394, %v3409
      %v3423 = vadd.f32 %v3395, %v3413
      %v3424 = vadd.f32 %v3396, %v3409
      %v3425 = vadd.f32 %v3397, %v3413
      %v3426 = vadd.f32 %v3398, %v3409
      %v3427 = vadd.f32 %v3399, %v3413
      %v3428 = vadd.f32 %v3400, %v3409
      %v3429 = vadd.f32 %v3401, %v3413
      %v3430 = vadd.f32 %v3402, %v3409
      %v3431 = vadd.f32 %v3403, %v3413
      %v3432 = vmax.f32 %v3416, 0.0
      %v3433 = vmax.f32 %v3417, 0.0
      %v3434 = vmax.f32 %v3418, 0.0
      %v3435 = vmax.f32 %v3419, 0.0
      %v3436 = vmax.f32 %v3420, 0.0
      %v3437 = vmax.f32 %v3421, 0.0
      %v3438 = vmax.f32 %v3422, 0.0
      %v3439 = vmax.f32 %v3423, 0.0
      %v3440 = vmax.f32 %v3424, 0.0
      %v3441 = vmax.f32 %v3425, 0.0
      %v3442 = vmax.f32 %v3426, 0.0
      %v3443 = vmax.f32 %v3427, 0.0
      %v3444 = vmax.f32 %v3428, 0.0
      %v3445 = vmax.f32 %v3429, 0.0
      %v3446 = vmax.f32 %v3430, 0.0
      %v3447 = vmax.f32 %v3431, 0.0
      %v3448 = vpack.c.bf16 %v3434, %v3432
      %v3449 = vpack.c.bf16 %v3435, %v3433
      %v3450 = vpack.c.bf16 %v3438, %v3436
      %v3451 = vpack.c.bf16 %v3439, %v3437
      %v3452 = vpack.c.bf16 %v3442, %v3440
      %v3453 = vpack.c.bf16 %v3443, %v3441
      %v3454 = vpack.c.bf16 %v3446, %v3444
      %v3455 = vpack.c.bf16 %v3447, %v3445
      %v3456 = vld [vmem:[%s5] sm:$0xf]
      %v3457 = vld [vmem:[%s5 + $0x4] sm:$0xf]
      %v3458 = vld [vmem:[%s5 + $0x8] sm:$0xf]
      %v3459 = vld [vmem:[%s5 + $0xc] sm:$0xf]
      %v3460 = vld [vmem:[%s5 + $0x10] sm:$0xf]
      %v3461 = vld [vmem:[%s5 + $0x14] sm:$0xf]
      %v3462 = vld [vmem:[%s5 + $0x18] sm:$0xf]
      %v3463 = vld [vmem:[%s5 + $0x1c] sm:$0xf]
      %v3464 = vld [vmem:[%s5 + $0x20] sm:$0xf]
      %v3465 = vld [vmem:[%s5 + $0x24] sm:$0xf]
      %v3466 = vld [vmem:[%s5 + $0x28] sm:$0xf]
      %v3467 = vld [vmem:[%s5 + $0x2c] sm:$0xf]
      %v3468 = vld [vmem:[%s5 + $0x30] sm:$0xf]
      %v3469 = vld [vmem:[%s5 + $0x34] sm:$0xf]
      %v3470 = vld [vmem:[%s5 + $0x38] sm:$0xf]
      %v3471 = vld [vmem:[%s5 + $0x3c] sm:$0xf]
      %v3472 = vld [vmem:[%s5 + $0x40] sm:$0xf]
      %v3473 = vld [vmem:[%s5 + $0x44] sm:$0xf]
      %v3474 = vld [vmem:[%s5 + $0x48] sm:$0xf]
      %v3475 = vld [vmem:[%s5 + $0x4c] sm:$0xf]
      %v3476 = vld [vmem:[%s5 + $0x50] sm:$0xf]
      %v3477 = vld [vmem:[%s5 + $0x54] sm:$0xf]
      %v3478 = vld [vmem:[%s5 + $0x58] sm:$0xf]
      %v3479 = vld [vmem:[%s5 + $0x5c] sm:$0xf]
      %v3480 = vld [vmem:[%s5 + $0x60] sm:$0xf]
      %v3481 = vld [vmem:[%s5 + $0x64] sm:$0xf]
      %v3482 = vld [vmem:[%s5 + $0x68] sm:$0xf]
      %v3483 = vld [vmem:[%s5 + $0x6c] sm:$0xf]
      %v3484 = vld [vmem:[%s5 + $0x70] sm:$0xf]
      %v3485 = vld [vmem:[%s5 + $0x74] sm:$0xf]
      %v3486 = vld [vmem:[%s5 + $0x78] sm:$0xf]
      %v3487 = vld [vmem:[%s5 + $0x7c] sm:$0xf]
      %v3488 = vld [vmem:[%s6] sm:$0x1]
      %v3490 = vlaneseq
      %v3491 = vshrl.u32 %v3490, 7
      %v3492 = vsub.s32 0, %v3491
      %v3493 = vrot.slane %v3488, %v3492
      %v3527 = vunpack.c.l.b16 %v3456
      %v3528 = vunpack.c.l.b16 %v3457
      %v3529 = vunpack.c.l.b16 %v3458
      %v3530 = vunpack.c.l.b16 %v3459
      %v3531 = vunpack.c.l.b16 %v3460
      %v3532 = vunpack.c.l.b16 %v3461
      %v3533 = vunpack.c.l.b16 %v3462
      %v3534 = vunpack.c.l.b16 %v3463
      %v3535 = vunpack.c.l.b16 %v3464
      %v3536 = vunpack.c.l.b16 %v3465
      %v3537 = vunpack.c.l.b16 %v3466
      %v3538 = vunpack.c.l.b16 %v3467
      %v3539 = vunpack.c.l.b16 %v3468
      %v3540 = vunpack.c.l.b16 %v3469
      %v3541 = vunpack.c.l.b16 %v3470
      %v3542 = vunpack.c.l.b16 %v3471
      %v3543 = vunpack.c.l.b16 %v3472
      %v3544 = vunpack.c.l.b16 %v3473
      %v3545 = vunpack.c.l.b16 %v3474
      %v3546 = vunpack.c.l.b16 %v3475
      %v3547 = vunpack.c.l.b16 %v3476
      %v3548 = vunpack.c.l.b16 %v3477
      %v3549 = vunpack.c.l.b16 %v3478
      %v3550 = vunpack.c.l.b16 %v3479
      %v3551 = vunpack.c.l.b16 %v3480
      %v3552 = vunpack.c.l.b16 %v3481
      %v3553 = vunpack.c.l.b16 %v3482
      %v3554 = vunpack.c.l.b16 %v3483
      %v3555 = vunpack.c.l.b16 %v3484
      %v3556 = vunpack.c.l.b16 %v3485
      %v3557 = vunpack.c.l.b16 %v3486
      %v3558 = vunpack.c.l.b16 %v3487
      %v3559 = vpack.c.b16 %v3528, %v3527
      %v3560 = vpack.c.b16 %v3530, %v3529
      %v3561 = vpack.c.b16 %v3532, %v3531
      %v3562 = vpack.c.b16 %v3534, %v3533
      %v3563 = vpack.c.b16 %v3536, %v3535
      %v3564 = vpack.c.b16 %v3538, %v3537
      %v3565 = vpack.c.b16 %v3540, %v3539
      %v3566 = vpack.c.b16 %v3542, %v3541
      %v3567 = vpack.c.b16 %v3544, %v3543
      %v3568 = vpack.c.b16 %v3546, %v3545
      %v3569 = vpack.c.b16 %v3548, %v3547
      %v3570 = vpack.c.b16 %v3550, %v3549
      %v3571 = vpack.c.b16 %v3552, %v3551
      %v3572 = vpack.c.b16 %v3554, %v3553
      %v3573 = vpack.c.b16 %v3556, %v3555
      %v3574 = vpack.c.b16 %v3558, %v3557
      %3591 = vmatprep.subr.bf16.mxu0 0
      %3592 = vmatpush1.bf16.msra.mxu0 %v3559
      %3593 = vmatprep.subr.bf16.mxu0 0
      %3594 = vmatpush1.bf16.msra.mxu0 %v3560
      %3595 = vmatprep.subr.bf16.mxu0 0
      %3596 = vmatpush1.bf16.msra.mxu0 %v3561
      %3597 = vmatprep.subr.bf16.mxu0 0
      %3598 = vmatpush1.bf16.msra.mxu0 %v3562
      %3599 = vmatprep.subr.bf16.mxu0 0
      %3600 = vmatpush1.bf16.msra.mxu0 %v3563
      %3601 = vmatprep.subr.bf16.mxu0 0
      %3602 = vmatpush1.bf16.msra.mxu0 %v3564
      %3603 = vmatprep.subr.bf16.mxu0 0
      %3604 = vmatpush1.bf16.msra.mxu0 %v3565
      %3605 = vmatprep.subr.bf16.mxu0 0
      %3606 = vmatpush1.bf16.msra.mxu0 %v3566
      %3607 = vmatprep.subr.bf16.mxu0 0
      %3608 = vmatpush1.bf16.msra.mxu0 %v3567
      %3609 = vmatprep.subr.bf16.mxu0 0
      %3610 = vmatpush1.bf16.msra.mxu0 %v3568
      %3611 = vmatprep.subr.bf16.mxu0 0
      %3612 = vmatpush1.bf16.msra.mxu0 %v3569
      %3613 = vmatprep.subr.bf16.mxu0 0
      %3614 = vmatpush1.bf16.msra.mxu0 %v3570
      %3615 = vmatprep.subr.bf16.mxu0 0
      %3616 = vmatpush1.bf16.msra.mxu0 %v3571
      %3617 = vmatprep.subr.bf16.mxu0 0
      %3618 = vmatpush1.bf16.msra.mxu0 %v3572
      %3619 = vmatprep.subr.bf16.mxu0 0
      %3620 = vmatpush1.bf16.msra.mxu0 %v3573
      %3621 = vmatprep.subr.bf16.mxu0 0
      %3622 = vmatpush1.bf16.msra.mxu0 %v3574
      %3623 = vmatprep.mubr.bf16.mxu0 %v3449
      %3624 = vmatmul.mubr.bf16.gmra.mrb[0].mxu0 %v3448
      %v3625 = vpop.f32.mrb[0].mxu0
      %v3626 = vadd.f32 %v3493, %v3625
      %v3627 = vpop.f32.mrb[0].mxu0
      %v3628 = vpop.f32.mrb[0].mxu0
      %v3629 = vadd.f32 %v3493, %v3628
      %v3630 = vpop.f32.mrb[0].mxu0
      %3631 = vmatprep.mubr.bf16.mxu0 %v3451
      %3632 = vmatmul.mubr.bf16.gmra.mrb[0].mxu0 %v3450
      %v3633 = vpop.f32.mrb[0].mxu0
      %v3634 = vadd.f32 %v3493, %v3633
      %v3635 = vpop.f32.mrb[0].mxu0
      %v3636 = vpop.f32.mrb[0].mxu0
      %v3637 = vadd.f32 %v3493, %v3636
      %v3638 = vpop.f32.mrb[0].mxu0
      %3639 = vmatprep.mubr.bf16.mxu0 %v3453
      %3640 = vmatmul.mubr.bf16.gmra.mrb[0].mxu0 %v3452
      %v3641 = vpop.f32.mrb[0].mxu0
      %v3642 = vadd.f32 %v3493, %v3641
      %v3643 = vpop.f32.mrb[0].mxu0
      %v3644 = vpop.f32.mrb[0].mxu0
      %v3645 = vadd.f32 %v3493, %v3644
      %v3646 = vpop.f32.mrb[0].mxu0
      %3647 = vmatprep.mubr.bf16.mxu0 %v3455
      %3648 = vmatmul.mubr.bf16.gmra.mrb[0].mxu0 %v3454
      %v3649 = vpop.f32.mrb[0].mxu0
      %v3650 = vadd.f32 %v3493, %v3649
      %v3651 = vpop.f32.mrb[0].mxu0
      %v3652 = vpop.f32.mrb[0].mxu0
      %v3653 = vadd.f32 %v3493, %v3652
      %v3654 = vpop.f32.mrb[0].mxu0
      %3655 = vdwg.mxu0
      %3656 = vst [vmem:[%s443] sm:$0xff] %v3626
      %3657 = vst [vmem:[%s443 + $0x8] sm:$0xff] %v3629
      %3658 = vst [vmem:[%s443 + $0x10] sm:$0xff] %v3634
      %3659 = vst [vmem:[%s443 + $0x18] sm:$0xff] %v3637
      %3660 = vst [vmem:[%s443 + $0x20] sm:$0xff] %v3642
      %3661 = vst [vmem:[%s443 + $0x28] sm:$0xff] %v3645
      %3662 = vst [vmem:[%s443 + $0x30] sm:$0xff] %v3650
      %3663 = vst [vmem:[%s443 + $0x38] sm:$0xff] %v3653
      %s3664 = smul.u32 8, %s23
      %p3665 = scmp.lt.s32.totalorder %s22, 1
      %s3666 = scalar_select %p3665, %s22, 1
      %p3667 = scmp.lt.s32.totalorder %s3664, 7
      %s3668 = scalar_select %p3667, %s3664, 7
      %s3669 = smul.addr %s3666, 8
      %s3670 = sadd.s32 %s3668, %s3669
      %s3671 = smul.addr %s3670, 8
      %s3672 = scalar_lea.vmem %s7, %s3671
      // Predicated region
      $region49: #{decoder_forward.3} parent=47 // pred_check
        %p3673 = pneg %p234
      $region50: #{decoder_forward.3} parent=47 // pred_check_branch
        %3675 = sbr.rel (%p3673) target = $region52
      $region51: #{decoder_forward.3} parent=47 // pred_region
        %s3676 = smul.u32 8, %s23
      $region52: #{decoder_forward.3} parent=47 // pred_fallthru
        _
    $region48: #{decoder_forward.3} parent=5 // pred_fallthru
      _
    %p3677 = scmp.le.s32.totalorder 2, %s13
    // Predicated region
    $region53: #{decoder_forward.3} parent=5 // pred_check
      %p3678 = pneg %p3677
    $region54: #{decoder_forward.3} parent=5 // pred_check_branch
      %3680 = sbr.rel (%p3678) target = $region56
    $region55: #{decoder_forward.3} parent=5 // pred_region
      %s3681 = ssub.s32 %s13, 2
      // Predicated region
      $region57: #{decoder_forward.3} parent=55 // pred_check
        %p3682 = pneg %p240
      $region58: #{decoder_forward.3} parent=55 // pred_check_branch
        %3684 = sbr.rel (%p3682) target = $region60
      $region59: #{decoder_forward.3} parent=55 // pred_region
        %s3685 = smul.u32 8, %s25
        %p3686 = scmp.lt.s32.totalorder %s24, 1
        %s3687 = scalar_select %p3686, %s24, 1
        %p3688 = scmp.lt.s32.totalorder %s3685, 7
        %s3689 = scalar_select %p3688, %s3685, 7
        %s3690 = smul.addr %s3687, 8
        %s3691 = sadd.s32 %s3689, %s3690
        %s3692 = smul.addr %s3691, 8
        %s3693 = scalar_lea.vmem %s7, %s3692
      $region60: #{decoder_forward.3} parent=55 // pred_fallthru
        _
    $region56: #{decoder_forward.3} parent=5 // pred_fallthru
      _
  $region6: #{decoder_forward.3} parent=0 // loop_footer
    %s17 = sadd.s32 1, %s13
  $region7: #{decoder_forward.3} parent=0 // loop_footer_branch
    %12 = sbr.rel target = $region3
  $region8: #{decoder_forward.3} parent=0 // loop_exit
    _

// kernel: decoder_forward.2
$region0: #{decoder_forward.2}
  #allocation0 [shape = 'u32[]', space=smem, size = 0x4, offset = 0x4, fixed_abs, tag = 'smem constant byte address 0x4 - core index']
  #allocation1 [shape = 'u32[144,128]{1,0:T(1,128)}', space=vmem, size = 0x12000, scoped, tag = 'internal scratch']
  %s0 = inlined_call_operand.vmem [shape: bf16[2,8,8,256], index: 0, kind: input, shape index: {}, may-alias: {0,1,2}]
  %s1 = inlined_call_operand.vmem [shape: bf16[2,8,8,256], index: 1, kind: input, shape index: {}, may-alias: {0,1,2}]
  %s2 = inlined_call_operand.vmem [shape: bf16[2,8,8,256], index: 2, kind: input, shape index: {}, may-alias: {0,1,2}]
  %s3 = inlined_call_operand.vmem [shape: bf16[2,8,8,256], index: 3, kind: input, shape index: {}, may-alias: {3,4,5}]
  %s4 = inlined_call_operand.vmem [shape: bf16[2,8,8,256], index: 4, kind: input, shape index: {}, may-alias: {3,4,5}]
  %s5 = inlined_call_operand.vmem [shape: bf16[2,8,8,256], index: 5, kind: input, shape index: {}, may-alias: {3,4,5}]
  %s6 = inlined_call_operand.vmem [shape: bf16[256,48], index: 6, kind: input, shape index: {}]
  %s7 = inlined_call_operand.hbm [shape: f32[1,48], index: 7, kind: input, shape index: {}]
  %s8 = inlined_call_operand.hbm [shape: bf16[3,768,256], index: 8, kind: input, shape index: {}]
  %s9 = inlined_call_operand.hbm [shape: bf16[3,144,256], index: 9, kind: input, shape index: {}]
  %s10 = inlined_call_operand.hbm [shape: f32[1,256], index: 10, kind: input, shape index: {}]
  %s11 = inlined_call_operand.vmem [shape: bf16[2,8,8,256], index: 11, kind: output, shape index: {}]
  %s12 = sld [smem:[#allocation0]]
  $region93: #{decoder_forward.2} parent=0
    _
  %s14 = ssub.s32 1, %s12
  %s15 = scalar_select 0, %s14, %s12
  $region1: #{decoder_forward.2} parent=0
    #allocation2 [shape = 'u8[512]{0}', space=vmem, size = 0x400, scoped, tag = 'input window, operand 7, single buffered']
    #allocation3 [shape = 's32[2]{0}', space=sflag, size = 0x8, scoped, tag = 'scoped memory for decoder_forward.2']
    #allocation4 [shape = 'u8[1179648]{0}', space=vmem, size = 0x120000, scoped, tag = 'input window, operand 8, single buffered']
    #allocation5 [shape = 's32[1]{0}', space=sflag, size = 0x4, scoped, tag = 'scoped memory for decoder_forward.2']
    #allocation6 [shape = 'u8[221184]{0}', space=vmem, size = 0x36000, scoped, tag = 'input window, operand 9, single buffered']
    #allocation7 [shape = 'u8[1024]{0}', space=vmem, size = 0x400, scoped, tag = 'input window, operand 10, single buffered']
    #allocation8 [shape = 's32[1]{0}', space=sflag, size = 0x4, scoped, tag = 'scoped memory for decoder_forward.2']
    %16 = vsyncpa [#allocation3], 0
    %17 = vsyncpa [#allocation5], 0
    %18 = vsyncpa [#allocation8], 0
    loop: start=0, step=1, limit=4
    $region2: #{decoder_forward.2} parent=1 // loop_pre_header
      _
    $region3: #{decoder_forward.2} parent=1 // loop_header
      %s20 = sphi 0, %s24
      %p21 = scmp.ge.s32.totalorder %s20, 4
      %s27 = sphi 0, %s39
      %s28 = sphi 0, %s35
      %s29 = sphi 0, %s27
      %s30 = sphi 0, %s28
      %s31 = sphi 0, %s29
      %s32 = sphi 0, %s30
      %s44 = sphi 0, %s46
      %s47 = sphi 0, %s44
      %s48 = sphi 0, %s47
      %s64 = sphi 0, %s48
      %s80 = sphi 0, %s82
      %s83 = sphi 0, %s80
      %s84 = sphi 0, %s83
      %s100 = sphi 0, %s84
      %s116 = sphi 0, %s118
      %s119 = sphi 0, %s116
      %s120 = sphi 0, %s119
      %s136 = sphi 0, %s120
      %s144 = sphi 0, %s146
      %s147 = sphi 0, %s144
      %s148 = sphi 0, %s147
      %s164 = sphi 0, %s148
      %s180 = sphi 0, %s182
      %s183 = sphi 0, %s180
      %s184 = sphi 0, %s183
      %s200 = sphi 0, %s184
      %s216 = sphi 0, %s218
      %s219 = sphi 0, %s216
      %s220 = sphi 0, %s219
      %s236 = sphi 0, %s220
      %s240 = sphi 0, %s240
      %s242 = sphi 0, %s240
      %s243 = sphi 0, %s242
      %s257 = sphi 0, %s243
      %s261 = sphi 0, %s261
      %s263 = sphi 0, %s261
      %s264 = sphi 0, %s263
      %s278 = sphi 0, %s264
      %s282 = sphi 0, %s282
      %s284 = sphi 0, %s282
      %s285 = sphi 0, %s284
      %s299 = sphi 0, %s285
      %s303 = sphi 0, %s303
      %s305 = sphi 0, %s303
      %s306 = sphi 0, %s305
      %s320 = sphi 0, %s306
      %s324 = sphi 0, %s324
      %s326 = sphi 0, %s324
      %s327 = sphi 0, %s326
      %s341 = sphi 0, %s327
      %s349 = sphi 0, %s351
      %s352 = sphi 0, %s349
      %s353 = sphi 0, %s352
      %s369 = sphi 0, %s353
    $region4: #{decoder_forward.2} parent=1 // loop_header_branch
      %23 = sbr.rel (%p21) target = $region8
    $region5: #{decoder_forward.2} parent=1 // loop_body
      %s25 = ssub.s32 %s20, 1
      %s26 = ssub.s32 %s20, 2
      %s33 = sadd.s32 1, %s28
      %p34 = scmp.ge.s32.totalorder %s33, 1
      %s35 = scalar_select %p34, 0, %s33
      %s36 = sadd.s32 1, %s27
      %s37 = scalar_select %p34, %s36, %s27
      %p38 = scmp.ge.s32.totalorder %s37, 2
      %s39 = scalar_select %p38, 0, %s37
      %s40 = ssub.s32 %s27, %s39
      %s41 = ssub.s32 %s28, %s35
      %s42 = sor.u32 %s40, %s41
      %p43 = scmp.eq.s32.totalorder %s42, 0
      %s45 = sadd.s32 %s44, 1
      %s46 = scalar_select %p43, %s44, %s45
      %p49 = pneg %p43
      %p50 = scmp.eq.s32.totalorder %s20, 1
      %p51 = por %p49, %p50
      %p52 = scmp.ne.s32.totalorder %s44, %s47
      %p53 = scmp.eq.s32.totalorder %s20, 0
      %p54 = por %p52, %p53
      %p55 = scmp.ne.s32.totalorder %s44, %s47
      %p56 = scmp.eq.s32.totalorder %s25, 1
      %p57 = por %p55, %p56
      %p58 = scmp.ne.s32.totalorder %s47, %s48
      %p59 = scmp.eq.s32.totalorder %s25, 0
      %p60 = por %p58, %p59
      %p61 = scmp.ne.s32.totalorder %s47, %s48
      %p62 = scmp.eq.s32.totalorder %s26, 1
      %p63 = por %p61, %p62
      %p65 = scmp.ne.s32.totalorder %s48, %s64
      %p66 = scmp.eq.s32.totalorder %s26, 0
      %p67 = por %p65, %p66
      %s68 = smul.u32 %s28, 8
      %s69 = ssub.s32 %s68, 1
      %p70 = scmp.gt.s32.totalorder %s69, 0
      %s71 = scalar_select %p70, %s69, 0
      %s72 = smul.u32 %s35, 8
      %s73 = ssub.s32 %s72, 1
      %p74 = scmp.gt.s32.totalorder %s73, 0
      %s75 = scalar_select %p74, %s73, 0
      %s76 = ssub.s32 %s27, %s39
      %s77 = ssub.s32 %s71, %s75
      %s78 = sor.u32 %s76, %s77
      %p79 = scmp.eq.s32.totalorder %s78, 0
      %s81 = sadd.s32 %s80, 1
      %s82 = scalar_select %p79, %s80, %s81
      %p85 = pneg %p79
      %p86 = scmp.eq.s32.totalorder %s20, 1
      %p87 = por %p85, %p86
      %p88 = scmp.ne.s32.totalorder %s80, %s83
      %p89 = scmp.eq.s32.totalorder %s20, 0
      %p90 = por %p88, %p89
      %p91 = scmp.ne.s32.totalorder %s80, %s83
      %p92 = scmp.eq.s32.totalorder %s25, 1
      %p93 = por %p91, %p92
      %p94 = scmp.ne.s32.totalorder %s83, %s84
      %p95 = scmp.eq.s32.totalorder %s25, 0
      %p96 = por %p94, %p95
      %p97 = scmp.ne.s32.totalorder %s83, %s84
      %p98 = scmp.eq.s32.totalorder %s26, 1
      %p99 = por %p97, %p98
      %p101 = scmp.ne.s32.totalorder %s84, %s100
      %p102 = scmp.eq.s32.totalorder %s26, 0
      %p103 = por %p101, %p102
      %s104 = smul.u32 %s28, 8
      %s105 = sadd.s32 %s104, 8
      %p106 = scmp.lt.s32.totalorder %s105, 7
      %s107 = scalar_select %p106, %s105, 7
      %s108 = smul.u32 %s35, 8
      %s109 = sadd.s32 %s108, 8
      %p110 = scmp.lt.s32.totalorder %s109, 7
      %s111 = scalar_select %p110, %s109, 7
      %s112 = ssub.s32 %s27, %s39
      %s113 = ssub.s32 %s107, %s111
      %s114 = sor.u32 %s112, %s113
      %p115 = scmp.eq.s32.totalorder %s114, 0
      %s117 = sadd.s32 %s116, 1
      %s118 = scalar_select %p115, %s116, %s117
      %p121 = pneg %p115
      %p122 = scmp.eq.s32.totalorder %s20, 1
      %p123 = por %p121, %p122
      %p124 = scmp.ne.s32.totalorder %s116, %s119
      %p125 = scmp.eq.s32.totalorder %s20, 0
      %p126 = por %p124, %p125
      %p127 = scmp.ne.s32.totalorder %s116, %s119
      %p128 = scmp.eq.s32.totalorder %s25, 1
      %p129 = por %p127, %p128
      %p130 = scmp.ne.s32.totalorder %s119, %s120
      %p131 = scmp.eq.s32.totalorder %s25, 0
      %p132 = por %p130, %p131
      %p133 = scmp.ne.s32.totalorder %s119, %s120
      %p134 = scmp.eq.s32.totalorder %s26, 1
      %p135 = por %p133, %p134
      %p137 = scmp.ne.s32.totalorder %s120, %s136
      %p138 = scmp.eq.s32.totalorder %s26, 0
      %p139 = por %p137, %p138
      %s140 = ssub.s32 %s27, %s39
      %s141 = ssub.s32 %s28, %s35
      %s142 = sor.u32 %s140, %s141
      %p143 = scmp.eq.s32.totalorder %s142, 0
      %s145 = sadd.s32 %s144, 1
      %s146 = scalar_select %p143, %s144, %s145
      %p149 = pneg %p143
      %p150 = scmp.eq.s32.totalorder %s20, 1
      %p151 = por %p149, %p150
      %p152 = scmp.ne.s32.totalorder %s144, %s147
      %p153 = scmp.eq.s32.totalorder %s20, 0
      %p154 = por %p152, %p153
      %p155 = scmp.ne.s32.totalorder %s144, %s147
      %p156 = scmp.eq.s32.totalorder %s25, 1
      %p157 = por %p155, %p156
      %p158 = scmp.ne.s32.totalorder %s147, %s148
      %p159 = scmp.eq.s32.totalorder %s25, 0
      %p160 = por %p158, %p159
      %p161 = scmp.ne.s32.totalorder %s147, %s148
      %p162 = scmp.eq.s32.totalorder %s26, 1
      %p163 = por %p161, %p162
      %p165 = scmp.ne.s32.totalorder %s148, %s164
      %p166 = scmp.eq.s32.totalorder %s26, 0
      %p167 = por %p165, %p166
      %s168 = smul.u32 %s28, 8
      %s169 = ssub.s32 %s168, 1
      %p170 = scmp.gt.s32.totalorder %s169, 0
      %s171 = scalar_select %p170, %s169, 0
      %s172 = smul.u32 %s35, 8
      %s173 = ssub.s32 %s172, 1
      %p174 = scmp.gt.s32.totalorder %s173, 0
      %s175 = scalar_select %p174, %s173, 0
      %s176 = ssub.s32 %s27, %s39
      %s177 = ssub.s32 %s171, %s175
      %s178 = sor.u32 %s176, %s177
      %p179 = scmp.eq.s32.totalorder %s178, 0
      %s181 = sadd.s32 %s180, 1
      %s182 = scalar_select %p179, %s180, %s181
      %p185 = pneg %p179
      %p186 = scmp.eq.s32.totalorder %s20, 1
      %p187 = por %p185, %p186
      %p188 = scmp.ne.s32.totalorder %s180, %s183
      %p189 = scmp.eq.s32.totalorder %s20, 0
      %p190 = por %p188, %p189
      %p191 = scmp.ne.s32.totalorder %s180, %s183
      %p192 = scmp.eq.s32.totalorder %s25, 1
      %p193 = por %p191, %p192
      %p194 = scmp.ne.s32.totalorder %s183, %s184
      %p195 = scmp.eq.s32.totalorder %s25, 0
      %p196 = por %p194, %p195
      %p197 = scmp.ne.s32.totalorder %s183, %s184
      %p198 = scmp.eq.s32.totalorder %s26, 1
      %p199 = por %p197, %p198
      %p201 = scmp.ne.s32.totalorder %s184, %s200
      %p202 = scmp.eq.s32.totalorder %s26, 0
      %p203 = por %p201, %p202
      %s204 = smul.u32 %s28, 8
      %s205 = sadd.s32 %s204, 8
      %p206 = scmp.lt.s32.totalorder %s205, 7
      %s207 = scalar_select %p206, %s205, 7
      %s208 = smul.u32 %s35, 8
      %s209 = sadd.s32 %s208, 8
      %p210 = scmp.lt.s32.totalorder %s209, 7
      %s211 = scalar_select %p210, %s209, 7
      %s212 = ssub.s32 %s27, %s39
      %s213 = ssub.s32 %s207, %s211
      %s214 = sor.u32 %s212, %s213
      %p215 = scmp.eq.s32.totalorder %s214, 0
      %s217 = sadd.s32 %s216, 1
      %s218 = scalar_select %p215, %s216, %s217
      %p221 = pneg %p215
      %p222 = scmp.eq.s32.totalorder %s20, 1
      %p223 = por %p221, %p222
      %p224 = scmp.ne.s32.totalorder %s216, %s219
      %p225 = scmp.eq.s32.totalorder %s20, 0
      %p226 = por %p224, %p225
      %p227 = scmp.ne.s32.totalorder %s216, %s219
      %p228 = scmp.eq.s32.totalorder %s25, 1
      %p229 = por %p227, %p228
      %p230 = scmp.ne.s32.totalorder %s219, %s220
      %p231 = scmp.eq.s32.totalorder %s25, 0
      %p232 = por %p230, %p231
      %p233 = scmp.ne.s32.totalorder %s219, %s220
      %p234 = scmp.eq.s32.totalorder %s26, 1
      %p235 = por %p233, %p234
      %p237 = scmp.ne.s32.totalorder %s220, %s236
      %p238 = scmp.eq.s32.totalorder %s26, 0
      %p239 = por %p237, %p238
      %s241 = sadd.s32 %s240, 1
      %p244 = scmp.eq.s32.totalorder %s20, 1
      %p245 = scmp.ne.s32.totalorder %s240, %s242
      %p246 = scmp.eq.s32.totalorder %s20, 0
      %p247 = por %p245, %p246
      %p248 = scmp.ne.s32.totalorder %s240, %s242
      %p249 = scmp.eq.s32.totalorder %s25, 1
      %p250 = por %p248, %p249
      %p251 = scmp.ne.s32.totalorder %s242, %s243
      %p252 = scmp.eq.s32.totalorder %s25, 0
      %p253 = por %p251, %p252
      %p254 = scmp.ne.s32.totalorder %s242, %s243
      %p255 = scmp.eq.s32.totalorder %s26, 1
      %p256 = por %p254, %p255
      %p258 = scmp.ne.s32.totalorder %s243, %s257
      %p259 = scmp.eq.s32.totalorder %s26, 0
      %p260 = por %p258, %p259
      %s262 = sadd.s32 %s261, 1
      %p265 = scmp.eq.s32.totalorder %s20, 1
      %p266 = scmp.ne.s32.totalorder %s261, %s263
      %p267 = scmp.eq.s32.totalorder %s20, 0
      %p268 = por %p266, %p267
      %p269 = scmp.ne.s32.totalorder %s261, %s263
      %p270 = scmp.eq.s32.totalorder %s25, 1
      %p271 = por %p269, %p270
      %p272 = scmp.ne.s32.totalorder %s263, %s264
      %p273 = scmp.eq.s32.totalorder %s25, 0
      %p274 = por %p272, %p273
      %p275 = scmp.ne.s32.totalorder %s263, %s264
      %p276 = scmp.eq.s32.totalorder %s26, 1
      %p277 = por %p275, %p276
      %p279 = scmp.ne.s32.totalorder %s264, %s278
      %p280 = scmp.eq.s32.totalorder %s26, 0
      %p281 = por %p279, %p280
      %s283 = sadd.s32 %s282, 1
      %p286 = scmp.eq.s32.totalorder %s20, 1
      %p287 = scmp.ne.s32.totalorder %s282, %s284
      %p288 = scmp.eq.s32.totalorder %s20, 0
      %p289 = por %p287, %p288
      %p290 = scmp.ne.s32.totalorder %s282, %s284
      %p291 = scmp.eq.s32.totalorder %s25, 1
      %p292 = por %p290, %p291
      %p293 = scmp.ne.s32.totalorder %s284, %s285
      %p294 = scmp.eq.s32.totalorder %s25, 0
      %p295 = por %p293, %p294
      %p296 = scmp.ne.s32.totalorder %s284, %s285
      %p297 = scmp.eq.s32.totalorder %s26, 1
      %p298 = por %p296, %p297
      %p300 = scmp.ne.s32.totalorder %s285, %s299
      %p301 = scmp.eq.s32.totalorder %s26, 0
      %p302 = por %p300, %p301
      %s304 = sadd.s32 %s303, 1
      %p307 = scmp.eq.s32.totalorder %s20, 1
      %p308 = scmp.ne.s32.totalorder %s303, %s305
      %p309 = scmp.eq.s32.totalorder %s20, 0
      %p310 = por %p308, %p309
      %p311 = scmp.ne.s32.totalorder %s303, %s305
      %p312 = scmp.eq.s32.totalorder %s25, 1
      %p313 = por %p311, %p312
      %p314 = scmp.ne.s32.totalorder %s305, %s306
      %p315 = scmp.eq.s32.totalorder %s25, 0
      %p316 = por %p314, %p315
      %p317 = scmp.ne.s32.totalorder %s305, %s306
      %p318 = scmp.eq.s32.totalorder %s26, 1
      %p319 = por %p317, %p318
      %p321 = scmp.ne.s32.totalorder %s306, %s320
      %p322 = scmp.eq.s32.totalorder %s26, 0
      %p323 = por %p321, %p322
      %s325 = sadd.s32 %s324, 1
      %p328 = scmp.eq.s32.totalorder %s20, 1
      %p329 = scmp.ne.s32.totalorder %s324, %s326
      %p330 = scmp.eq.s32.totalorder %s20, 0
      %p331 = por %p329, %p330
      %p332 = scmp.ne.s32.totalorder %s324, %s326
      %p333 = scmp.eq.s32.totalorder %s25, 1
      %p334 = por %p332, %p333
      %p335 = scmp.ne.s32.totalorder %s326, %s327
      %p336 = scmp.eq.s32.totalorder %s25, 0
      %p337 = por %p335, %p336
      %p338 = scmp.ne.s32.totalorder %s326, %s327
      %p339 = scmp.eq.s32.totalorder %s26, 1
      %p340 = por %p338, %p339
      %p342 = scmp.ne.s32.totalorder %s327, %s341
      %p343 = scmp.eq.s32.totalorder %s26, 0
      %p344 = por %p342, %p343
      %s345 = ssub.s32 %s27, %s39
      %s346 = ssub.s32 %s28, %s35
      %s347 = sor.u32 %s345, %s346
      %p348 = scmp.eq.s32.totalorder %s347, 0
      %s350 = sadd.s32 %s349, 1
      %s351 = scalar_select %p348, %s349, %s350
      %p354 = pneg %p348
      %p355 = scmp.eq.s32.totalorder %s20, 1
      %p356 = por %p354, %p355
      %p357 = scmp.ne.s32.totalorder %s349, %s352
      %p358 = scmp.eq.s32.totalorder %s20, 0
      %p359 = por %p357, %p358
      %p360 = scmp.ne.s32.totalorder %s349, %s352
      %p361 = scmp.eq.s32.totalorder %s25, 1
      %p362 = por %p360, %p361
      %p363 = scmp.ne.s32.totalorder %s352, %s353
      %p364 = scmp.eq.s32.totalorder %s25, 0
      %p365 = por %p363, %p364
      %p366 = scmp.ne.s32.totalorder %s352, %s353
      %p367 = scmp.eq.s32.totalorder %s26, 1
      %p368 = por %p366, %p367
      %p370 = scmp.ne.s32.totalorder %s353, %s369
      %p371 = scmp.eq.s32.totalorder %s26, 0
      %p372 = por %p370, %p371
      %p373 = scmp.le.s32.totalorder 1, %s20
      %p374 = scmp.lt.s32.totalorder %s20, 3
      %p375 = pnand %p373, %p374
      %p376 = pneg %p375
      // Predicated region
      $region9: #{decoder_forward.2} parent=5 // pred_check
        _
      $region10: #{decoder_forward.2} parent=5 // pred_check_branch
        %378 = sbr.rel (%p375) target = $region12
      $region11: #{decoder_forward.2} parent=5 // pred_region
        %s379 = ssub.s32 %s20, 1
        // Predicated region
        $region13: #{decoder_forward.2} parent=11 // pred_check
          %p380 = pneg %p253
        $region14: #{decoder_forward.2} parent=11 // pred_check_branch
          %382 = sbr.rel (%p380) target = $region16
        $region15: #{decoder_forward.2} parent=11 // pred_region
          _
        $region16: #{decoder_forward.2} parent=11 // pred_fallthru
          _
        // Predicated region
        $region17: #{decoder_forward.2} parent=11 // pred_check
          %p383 = pneg %p274
        $region18: #{decoder_forward.2} parent=11 // pred_check_branch
          %385 = sbr.rel (%p383) target = $region20
        $region19: #{decoder_forward.2} parent=11 // pred_region
          %s387 = ssub.s32 16, 16
          %388 = vsyncadd [#allocation3], %s387
          %s390 = sshll.u32 [#allocation2], 4
          %s391 = int_to_ptr.vmem [resolvable:$true] %s390
          %393 = dma.hbm_to_vmem [thread:$0]  %s7, 16, %s391, [#allocation3]
        $region20: #{decoder_forward.2} parent=11 // pred_fallthru
          _
        // Predicated region
        $region21: #{decoder_forward.2} parent=11 // pred_check
          %p394 = pneg %p295
        $region22: #{decoder_forward.2} parent=11 // pred_check_branch
          %396 = sbr.rel (%p394) target = $region24
        $region23: #{decoder_forward.2} parent=11 // pred_region
          %s398 = ssub.s32 36864, 36864
          %399 = vsyncadd [#allocation5], %s398
          %s400 = sshll.u32 [#allocation4], 4
          %s401 = int_to_ptr.vmem [resolvable:$true] %s400
          %406 = dma.hbm_to_vmem [thread:$0]  %s8, 36864, %s401, [#allocation5], 128, 128, 8
        $region24: #{decoder_forward.2} parent=11 // pred_fallthru
          _
        // Predicated region
        $region25: #{decoder_forward.2} parent=11 // pred_check
          %p407 = pneg %p316
        $region26: #{decoder_forward.2} parent=11 // pred_check_branch
          %409 = sbr.rel (%p407) target = $region28
        $region27: #{decoder_forward.2} parent=11 // pred_region
          %s411 = ssub.s32 6912, 6912
          %412 = vsyncadd [#allocation5], %s411
          %s413 = sshll.u32 [#allocation6], 4
          %s414 = int_to_ptr.vmem [resolvable:$true] %s413
          %419 = dma.hbm_to_vmem [thread:$0]  %s9, 6912, %s414, [#allocation5], 128, 128, 8
        $region28: #{decoder_forward.2} parent=11 // pred_fallthru
          _
        // Predicated region
        $region29: #{decoder_forward.2} parent=11 // pred_check
          %p420 = pneg %p337
        $region30: #{decoder_forward.2} parent=11 // pred_check_branch
          %422 = sbr.rel (%p420) target = $region32
        $region31: #{decoder_forward.2} parent=11 // pred_region
          %s424 = ssub.s32 32, 32
          %425 = vsyncadd [#allocation8], %s424
          %s427 = sshll.u32 [#allocation7], 4
          %s428 = int_to_ptr.vmem [resolvable:$true] %s427
          %430 = dma.hbm_to_vmem [thread:$0]  %s10, 32, %s428, [#allocation8]
        $region32: #{decoder_forward.2} parent=11 // pred_fallthru
          _
      $region12: #{decoder_forward.2} parent=5 // pred_fallthru
        _
      %p431 = scmp.lt.s32.totalorder %s20, 2
      // Predicated region
      $region33: #{decoder_forward.2} parent=5 // pred_check
        %p432 = pneg %p431
      $region34: #{decoder_forward.2} parent=5 // pred_check_branch
        %434 = sbr.rel (%p432) target = $region36
      $region35: #{decoder_forward.2} parent=5 // pred_region
        // Predicated region
        $region37: #{decoder_forward.2} parent=35 // pred_check
          %p435 = pneg %p54
        $region38: #{decoder_forward.2} parent=35 // pred_check_branch
          %437 = sbr.rel (%p435) target = $region40
        $region39: #{decoder_forward.2} parent=35 // pred_region
          %s438 = smul.u32 8, %s28
          %p439 = scmp.lt.s32.totalorder %s27, 1
          %s440 = scalar_select %p439, %s27, 1
          %p441 = scmp.lt.s32.totalorder %s438, 7
          %s442 = scalar_select %p441, %s438, 7
          %s443 = smul.addr %s442, 2
          %s444 = smul.addr %s440, 16
          %s445 = sadd.s32 %s443, %s444
          %s446 = smul.addr %s445, 4
          %s447 = scalar_lea.vmem %s0, %s446
          %s448 = smul.u32 8, %s28
        $region40: #{decoder_forward.2} parent=35 // pred_fallthru
          _
        // Predicated region
        $region41: #{decoder_forward.2} parent=35 // pred_check
          %p449 = pneg %p90
        $region42: #{decoder_forward.2} parent=35 // pred_check_branch
          %451 = sbr.rel (%p449) target = $region44
        $region43: #{decoder_forward.2} parent=35 // pred_region
          %s452 = smul.u32 %s28, 8
          %s453 = ssub.s32 %s452, 1
          %p454 = scmp.gt.s32.totalorder %s453, 0
          %s455 = scalar_select %p454, %s453, 0
          %p456 = scmp.lt.s32.totalorder %s27, 1
          %s457 = scalar_select %p456, %s27, 1
          %p458 = scmp.lt.s32.totalorder %s455, 7
          %s459 = scalar_select %p458, %s455, 7
          %s460 = smul.addr %s459, 2
          %s461 = smul.addr %s457, 16
          %s462 = sadd.s32 %s460, %s461
          %s463 = smul.addr %s462, 4
          %s464 = scalar_lea.vmem %s1, %s463
          %s465 = smul.u32 %s28, 8
          %s466 = ssub.s32 %s465, 1
          %p467 = scmp.gt.s32.totalorder %s466, 0
          %s468 = scalar_select %p467, %s466, 0
        $region44: #{decoder_forward.2} parent=35 // pred_fallthru
          _
        // Predicated region
        $region45: #{decoder_forward.2} parent=35 // pred_check
          %p469 = pneg %p126
        $region46: #{decoder_forward.2} parent=35 // pred_check_branch
          %471 = sbr.rel (%p469) target = $region48
        $region47: #{decoder_forward.2} parent=35 // pred_region
          %s472 = smul.u32 %s28, 8
          %s473 = sadd.s32 %s472, 8
          %p474 = scmp.lt.s32.totalorder %s473, 7
          %s475 = scalar_select %p474, %s473, 7
          %p476 = scmp.lt.s32.totalorder %s27, 1
          %s477 = scalar_select %p476, %s27, 1
          %p478 = scmp.lt.s32.totalorder %s475, 7
          %s479 = scalar_select %p478, %s475, 7
          %s480 = smul.addr %s479, 2
          %s481 = smul.addr %s477, 16
          %s482 = sadd.s32 %s480, %s481
          %s483 = smul.addr %s482, 4
          %s484 = scalar_lea.vmem %s2, %s483
          %s485 = smul.u32 %s28, 8
          %s486 = sadd.s32 %s485, 8
          %p487 = scmp.lt.s32.totalorder %s486, 7
          %s488 = scalar_select %p487, %s486, 7
        $region48: #{decoder_forward.2} parent=35 // pred_fallthru
          _
        // Predicated region
        $region49: #{decoder_forward.2} parent=35 // pred_check
          %p489 = pneg %p154
        $region50: #{decoder_forward.2} parent=35 // pred_check_branch
          %491 = sbr.rel (%p489) target = $region52
        $region51: #{decoder_forward.2} parent=35 // pred_region
          %s492 = smul.u32 8, %s28
          %p493 = scmp.lt.s32.totalorder %s27, 1
          %s494 = scalar_select %p493, %s27, 1
          %p495 = scmp.lt.s32.totalorder %s492, 7
          %s496 = scalar_select %p495, %s492, 7
          %s497 = smul.addr %s496, 2
          %s498 = smul.addr %s494, 16
          %s499 = sadd.s32 %s497, %s498
          %s500 = smul.addr %s499, 4
          %s501 = scalar_lea.vmem %s3, %s500
          %s502 = smul.u32 8, %s28
        $region52: #{decoder_forward.2} parent=35 // pred_fallthru
          _
        // Predicated region
        $region53: #{decoder_forward.2} parent=35 // pred_check
          %p503 = pneg %p190
        $region54: #{decoder_forward.2} parent=35 // pred_check_branch
          %505 = sbr.rel (%p503) target = $region56
        $region55: #{decoder_forward.2} parent=35 // pred_region
          %s506 = smul.u32 %s28, 8
          %s507 = ssub.s32 %s506, 1
          %p508 = scmp.gt.s32.totalorder %s507, 0
          %s509 = scalar_select %p508, %s507, 0
          %p510 = scmp.lt.s32.totalorder %s27, 1
          %s511 = scalar_select %p510, %s27, 1
          %p512 = scmp.lt.s32.totalorder %s509, 7
          %s513 = scalar_select %p512, %s509, 7
          %s514 = smul.addr %s513, 2
          %s515 = smul.addr %s511, 16
          %s516 = sadd.s32 %s514, %s515
          %s517 = smul.addr %s516, 4
          %s518 = scalar_lea.vmem %s4, %s517
          %s519 = smul.u32 %s28, 8
          %s520 = ssub.s32 %s519, 1
          %p521 = scmp.gt.s32.totalorder %s520, 0
          %s522 = scalar_select %p521, %s520, 0
        $region56: #{decoder_forward.2} parent=35 // pred_fallthru
          _
        // Predicated region
        $region57: #{decoder_forward.2} parent=35 // pred_check
          %p523 = pneg %p226
        $region58: #{decoder_forward.2} parent=35 // pred_check_branch
          %525 = sbr.rel (%p523) target = $region60
        $region59: #{decoder_forward.2} parent=35 // pred_region
          %s526 = smul.u32 %s28, 8
          %s527 = sadd.s32 %s526, 8
          %p528 = scmp.lt.s32.totalorder %s527, 7
          %s529 = scalar_select %p528, %s527, 7
          %p530 = scmp.lt.s32.totalorder %s27, 1
          %s531 = scalar_select %p530, %s27, 1
          %p532 = scmp.lt.s32.totalorder %s529, 7
          %s533 = scalar_select %p532, %s529, 7
          %s534 = smul.addr %s533, 2
          %s535 = smul.addr %s531, 16
          %s536 = sadd.s32 %s534, %s535
          %s537 = smul.addr %s536, 4
          %s538 = scalar_lea.vmem %s5, %s537
          %s539 = smul.u32 %s28, 8
          %s540 = sadd.s32 %s539, 8
          %p541 = scmp.lt.s32.totalorder %s540, 7
          %s542 = scalar_select %p541, %s540, 7
        $region60: #{decoder_forward.2} parent=35 // pred_fallthru
          _
      $region36: #{decoder_forward.2} parent=5 // pred_fallthru
        _
      %p543 = scmp.le.s32.totalorder 1, %s20
      %p544 = scmp.lt.s32.totalorder %s20, 3
      %p545 = pnand %p543, %p544
      %p546 = pneg %p545
      // Predicated region
      $region61: #{decoder_forward.2} parent=5 // pred_check
        _
      $region62: #{decoder_forward.2} parent=5 // pred_check_branch
        %548 = sbr.rel (%p545) target = $region64
      $region63: #{decoder_forward.2} parent=5 // pred_region
        %s549 = ssub.s32 %s20, 1
        // Predicated region
        $region65: #{decoder_forward.2} parent=63 // pred_check
          %p550 = pneg %p274
        $region66: #{decoder_forward.2} parent=63 // pred_check_branch
          %552 = sbr.rel (%p550) target = $region68
        $region67: #{decoder_forward.2} parent=63 // pred_region
          %553 = dma.done [#allocation3], 16
        $region68: #{decoder_forward.2} parent=63 // pred_fallthru
          _
        // Predicated region
        $region69: #{decoder_forward.2} parent=63 // pred_check
          %p554 = pneg %p295
        $region70: #{decoder_forward.2} parent=63 // pred_check_branch
          %556 = sbr.rel (%p554) target = $region72
        $region71: #{decoder_forward.2} parent=63 // pred_region
          %557 = dma.done [#allocation5], 36864
        $region72: #{decoder_forward.2} parent=63 // pred_fallthru
          _
        // Predicated region
        $region73: #{decoder_forward.2} parent=63 // pred_check
          %p558 = pneg %p316
        $region74: #{decoder_forward.2} parent=63 // pred_check_branch
          %560 = sbr.rel (%p558) target = $region76
        $region75: #{decoder_forward.2} parent=63 // pred_region
          %561 = dma.done [#allocation5], 6912
        $region76: #{decoder_forward.2} parent=63 // pred_fallthru
          _
        // Predicated region
        $region77: #{decoder_forward.2} parent=63 // pred_check
          %p562 = pneg %p337
        $region78: #{decoder_forward.2} parent=63 // pred_check_branch
          %564 = sbr.rel (%p562) target = $region80
        $region79: #{decoder_forward.2} parent=63 // pred_region
          %565 = dma.done [#allocation8], 32
        $region80: #{decoder_forward.2} parent=63 // pred_fallthru
          _
        %s566 = smul.u32 8, %s30
        %p567 = scmp.lt.s32.totalorder %s29, 1
        %s568 = scalar_select %p567, %s29, 1
        %p569 = scmp.lt.s32.totalorder %s566, 7
        %s570 = scalar_select %p569, %s566, 7
        %s571 = smul.addr %s570, 2
        %s572 = smul.addr %s568, 16
        %s573 = sadd.s32 %s571, %s572
        %s574 = smul.addr %s573, 4
        %s575 = scalar_lea.vmem %s0, %s574
        %p576 = pneg %p60
        %p577 = pneg %p57
        %s578 = smul.u32 %s30, 8
        %s579 = ssub.s32 %s578, 1
        %p580 = scmp.gt.s32.totalorder %s579, 0
        %s581 = scalar_select %p580, %s579, 0
        %p582 = scmp.lt.s32.totalorder %s29, 1
        %s583 = scalar_select %p582, %s29, 1
        %p584 = scmp.lt.s32.totalorder %s581, 7
        %s585 = scalar_select %p584, %s581, 7
        %s586 = smul.addr %s585, 2
        %s587 = smul.addr %s583, 16
        %s588 = sadd.s32 %s586, %s587
        %s589 = smul.addr %s588, 4
        %s590 = scalar_lea.vmem %s1, %s589
        %p591 = pneg %p96
        %p592 = pneg %p93
        %s593 = smul.u32 %s30, 8
        %s594 = sadd.s32 %s593, 8
        %p595 = scmp.lt.s32.totalorder %s594, 7
        %s596 = scalar_select %p595, %s594, 7
        %p597 = scmp.lt.s32.totalorder %s29, 1
        %s598 = scalar_select %p597, %s29, 1
        %p599 = scmp.lt.s32.totalorder %s596, 7
        %s600 = scalar_select %p599, %s596, 7
        %s601 = smul.addr %s600, 2
        %s602 = smul.addr %s598, 16
        %s603 = sadd.s32 %s601, %s602
        %s604 = smul.addr %s603, 4
        %s605 = scalar_lea.vmem %s2, %s604
        %p606 = pneg %p132
        %p607 = pneg %p129
        %s608 = smul.u32 8, %s30
        %p609 = scmp.lt.s32.totalorder %s29, 1
        %s610 = scalar_select %p609, %s29, 1
        %p611 = scmp.lt.s32.totalorder %s608, 7
        %s612 = scalar_select %p611, %s608, 7
        %s613 = smul.addr %s612, 2
        %s614 = smul.addr %s610, 16
        %s615 = sadd.s32 %s613, %s614
        %s616 = smul.addr %s615, 4
        %s617 = scalar_lea.vmem %s3, %s616
        %p618 = pneg %p160
        %p619 = pneg %p157
        %s620 = smul.u32 %s30, 8
        %s621 = ssub.s32 %s620, 1
        %p622 = scmp.gt.s32.totalorder %s621, 0
        %s623 = scalar_select %p622, %s621, 0
        %p624 = scmp.lt.s32.totalorder %s29, 1
        %s625 = scalar_select %p624, %s29, 1
        %p626 = scmp.lt.s32.totalorder %s623, 7
        %s627 = scalar_select %p626, %s623, 7
        %s628 = smul.addr %s627, 2
        %s629 = smul.addr %s625, 16
        %s630 = sadd.s32 %s628, %s629
        %s631 = smul.addr %s630, 4
        %s632 = scalar_lea.vmem %s4, %s631
        %p633 = pneg %p196
        %p634 = pneg %p193
        %s635 = smul.u32 %s30, 8
        %s636 = sadd.s32 %s635, 8
        %p637 = scmp.lt.s32.totalorder %s636, 7
        %s638 = scalar_select %p637, %s636, 7
        %p639 = scmp.lt.s32.totalorder %s29, 1
        %s640 = scalar_select %p639, %s29, 1
        %p641 = scmp.lt.s32.totalorder %s638, 7
        %s642 = scalar_select %p641, %s638, 7
        %s643 = smul.addr %s642, 2
        %s644 = smul.addr %s640, 16
        %s645 = sadd.s32 %s643, %s644
        %s646 = smul.addr %s645, 4
        %s647 = scalar_lea.vmem %s5, %s646
        %p648 = pneg %p232
        %p649 = pneg %p229
        %p650 = pneg %p253
        %p651 = pneg %p250
        %p652 = pneg %p274
        %p653 = pneg %p271
        %p654 = pneg %p295
        %p655 = pneg %p292
        %p656 = pneg %p316
        %p657 = pneg %p313
        %p658 = pneg %p337
        %p659 = pneg %p334
        %p660 = pneg %p365
        %p661 = pneg %p362
        %s662 = smul.u32 8, %s30
        %p663 = scmp.lt.s32.totalorder %s29, 1
        %s664 = scalar_select %p663, %s29, 1
        %p665 = scmp.lt.s32.totalorder %s662, 7
        %s666 = scalar_select %p665, %s662, 7
        %s667 = smul.addr %s666, 2
        %s668 = smul.addr %s664, 16
        %s669 = sadd.s32 %s667, %s668
        %s670 = smul.addr %s669, 4
        %s671 = scalar_lea.vmem %s11, %s670
        %s672 = smul.u32 8, %s30
        %p673 = scmp.lt.s32.totalorder %s29, 1
        %s674 = scalar_select %p673, %s29, 1
        %p675 = scmp.lt.s32.totalorder %s672, 7
        %s676 = scalar_select %p675, %s672, 7
        %s677 = smul.addr %s676, 2
        %s678 = smul.addr %s674, 16
        %s679 = sadd.s32 %s677, %s678
        %s680 = smul.addr %s679, 4
        %s681 = scalar_lea.vmem %s0, %s680
        %s682 = smul.u32 8, %s30
        %s683 = smul.u32 %s30, 8
        %s684 = ssub.s32 %s683, 1
        %p685 = scmp.gt.s32.totalorder %s684, 0
        %s686 = scalar_select %p685, %s684, 0
        %p687 = scmp.lt.s32.totalorder %s29, 1
        %s688 = scalar_select %p687, %s29, 1
        %p689 = scmp.lt.s32.totalorder %s686, 7
        %s690 = scalar_select %p689, %s686, 7
        %s691 = smul.addr %s690, 2
        %s692 = smul.addr %s688, 16
        %s693 = sadd.s32 %s691, %s692
        %s694 = smul.addr %s693, 4
        %s695 = scalar_lea.vmem %s1, %s694
        %s696 = smul.u32 %s30, 8
        %s697 = ssub.s32 %s696, 1
        %p698 = scmp.gt.s32.totalorder %s697, 0
        %s699 = scalar_select %p698, %s697, 0
        %s700 = smul.u32 %s30, 8
        %s701 = sadd.s32 %s700, 8
        %p702 = scmp.lt.s32.totalorder %s701, 7
        %s703 = scalar_select %p702, %s701, 7
        %p704 = scmp.lt.s32.totalorder %s29, 1
        %s705 = scalar_select %p704, %s29, 1
        %p706 = scmp.lt.s32.totalorder %s703, 7
        %s707 = scalar_select %p706, %s703, 7
        %s708 = smul.addr %s707, 2
        %s709 = smul.addr %s705, 16
        %s710 = sadd.s32 %s708, %s709
        %s711 = smul.addr %s710, 4
        %s712 = scalar_lea.vmem %s2, %s711
        %s713 = smul.u32 %s30, 8
        %s714 = sadd.s32 %s713, 8
        %p715 = scmp.lt.s32.totalorder %s714, 7
        %s716 = scalar_select %p715, %s714, 7
        %s717 = smul.u32 8, %s30
        %p718 = scmp.lt.s32.totalorder %s29, 1
        %s719 = scalar_select %p718, %s29, 1
        %p720 = scmp.lt.s32.totalorder %s717, 7
        %s721 = scalar_select %p720, %s717, 7
        %s722 = smul.addr %s721, 2
        %s723 = smul.addr %s719, 16
        %s724 = sadd.s32 %s722, %s723
        %s725 = smul.addr %s724, 4
        %s726 = scalar_lea.vmem %s3, %s725
        %s727 = smul.u32 8, %s30
        %s728 = smul.u32 %s30, 8
        %s729 = ssub.s32 %s728, 1
        %p730 = scmp.gt.s32.totalorder %s729, 0
        %s731 = scalar_select %p730, %s729, 0
        %p732 = scmp.lt.s32.totalorder %s29, 1
        %s733 = scalar_select %p732, %s29, 1
        %p734 = scmp.lt.s32.totalorder %s731, 7
        %s735 = scalar_select %p734, %s731, 7
        %s736 = smul.addr %s735, 2
        %s737 = smul.addr %s733, 16
        %s738 = sadd.s32 %s736, %s737
        %s739 = smul.addr %s738, 4
        %s740 = scalar_lea.vmem %s4, %s739
        %s741 = smul.u32 %s30, 8
        %s742 = ssub.s32 %s741, 1
        %p743 = scmp.gt.s32.totalorder %s742, 0
        %s744 = scalar_select %p743, %s742, 0
        %s745 = smul.u32 %s30, 8
        %s746 = sadd.s32 %s745, 8
        %p747 = scmp.lt.s32.totalorder %s746, 7
        %s748 = scalar_select %p747, %s746, 7
        %p749 = scmp.lt.s32.totalorder %s29, 1
        %s750 = scalar_select %p749, %s29, 1
        %p751 = scmp.lt.s32.totalorder %s748, 7
        %s752 = scalar_select %p751, %s748, 7
        %s753 = smul.addr %s752, 2
        %s754 = smul.addr %s750, 16
        %s755 = sadd.s32 %s753, %s754
        %s756 = smul.addr %s755, 4
        %s757 = scalar_lea.vmem %s5, %s756
        %s758 = smul.u32 %s30, 8
        %s759 = sadd.s32 %s758, 8
        %p760 = scmp.lt.s32.totalorder %s759, 7
        %s761 = scalar_select %p760, %s759, 7
        %s762 = smul.u32 8, %s30
        %p763 = scmp.lt.s32.totalorder %s29, 1
        %s764 = scalar_select %p763, %s29, 1
        %p765 = scmp.lt.s32.totalorder %s762, 7
        %s766 = scalar_select %p765, %s762, 7
        %s767 = smul.addr %s766, 2
        %s768 = smul.addr %s764, 16
        %s769 = sadd.s32 %s767, %s768
        %s770 = smul.addr %s769, 4
        %s771 = scalar_lea.vmem %s11, %s770
        %s772 = smul.u32 8, %s30
        %p774 = scmp.gt.s32.totalorder %s30, 0
        %p775 = scmp.lt.s32.totalorder %s30, 0
        %s776 = smul.u32 %s30, 8
        %s777 = sadd.s32 %s776, 8
        %p778 = scmp.lt.s32.totalorder %s777, 8
        %p779 = pnand %p775, %p778
        %p780 = pneg %p779
        %v781 = vld [vmem:[%s695] sm:$0xff]
        %s782 = scalar_select %p774, 1, 0
        %s783 = scvt.s32.f32 %s782
        %p785 = scmp.ne.f32.partialorder %s783, %s783
        %s786 = sshrl.u32 %s783, 16
        %s787 = sand.u32 %s786, 1
        %s788 = sadd.s32 32767, %s787
        %s789 = sadd.s32 %s783, %s788
        %s790 = sand.u32 %s789, 4294901760
        %s791 = scalar_select %p785, 2143289344, %s790
        %s793 = sshrl.u32 %s791, 16
        %s794 = sshll.u32 %s793, 16
        %s795 = sor.u32 %s793, %s794
        %v796 = vstv %s795
        %v798 = vmul.bf16 %v781, %v796
        %v799 = vld [vmem:[%s712] sm:$0xff]
        %s800 = scalar_select %p780, 1, 0
        %s801 = scvt.s32.f32 %s800
        %p803 = scmp.ne.f32.partialorder %s801, %s801
        %s804 = sshrl.u32 %s801, 16
        %s805 = sand.u32 %s804, 1
        %s806 = sadd.s32 32767, %s805
        %s807 = sadd.s32 %s801, %s806
        %s808 = sand.u32 %s807, 4294901760
        %s809 = scalar_select %p803, 2143289344, %s808
        %s811 = sshrl.u32 %s809, 16
        %s812 = sshll.u32 %s811, 16
        %s813 = sor.u32 %s811, %s812
        %v814 = vstv %s813
        %v816 = vmul.bf16 %v799, %v814
        %v817 = vld [vmem:[%s681] sm:$0xff]
        %v818 = vld [vmem:[%s681 + $0x8] sm:$0xff]
        %v819 = vld [vmem:[%s681 + $0x10] sm:$0xff]
        %v820 = vld [vmem:[%s681 + $0x18] sm:$0xff]
        %v821 = vld [vmem:[%s681 + $0x20] sm:$0xff]
        %v822 = vld [vmem:[%s681 + $0x28] sm:$0xff]
        %v823 = vld [vmem:[%s681 + $0x30] sm:$0xff]
        %v824 = vld [vmem:[%s681 + $0x38] sm:$0xff]
        %v825 = vld [vmem:[%s726] sm:$0xff]
        %v826 = vld [vmem:[%s726 + $0x8] sm:$0xff]
        %v827 = vld [vmem:[%s726 + $0x10] sm:$0xff]
        %v828 = vld [vmem:[%s726 + $0x18] sm:$0xff]
        %v829 = vld [vmem:[%s726 + $0x20] sm:$0xff]
        %v830 = vld [vmem:[%s726 + $0x28] sm:$0xff]
        %v831 = vld [vmem:[%s726 + $0x30] sm:$0xff]
        %v832 = vld [vmem:[%s726 + $0x38] sm:$0xff]
        %v833 = vld [vmem:[%s6] sm:$0xf]
        %v834 = vld [vmem:[%s6 + $0x4] sm:$0xf]
        %v835 = vld [vmem:[%s6 + $0x8] sm:$0xf]
        %v836 = vld [vmem:[%s6 + $0xc] sm:$0xf]
        %v837 = vld [vmem:[%s6 + $0x10] sm:$0xf]
        %v838 = vld [vmem:[%s6 + $0x14] sm:$0xf]
        %v839 = vld [vmem:[%s6 + $0x18] sm:$0xf]
        %v840 = vld [vmem:[%s6 + $0x1c] sm:$0xf]
        %v841 = vld [vmem:[%s6 + $0x20] sm:$0xf]
        %v842 = vld [vmem:[%s6 + $0x24] sm:$0xf]
        %v843 = vld [vmem:[%s6 + $0x28] sm:$0xf]
        %v844 = vld [vmem:[%s6 + $0x2c] sm:$0xf]
        %v845 = vld [vmem:[%s6 + $0x30] sm:$0xf]
        %v846 = vld [vmem:[%s6 + $0x34] sm:$0xf]
        %v847 = vld [vmem:[%s6 + $0x38] sm:$0xf]
        %v848 = vld [vmem:[%s6 + $0x3c] sm:$0xf]
        %v849 = vld [vmem:[%s6 + $0x40] sm:$0xf]
        %v850 = vld [vmem:[%s6 + $0x44] sm:$0xf]
        %v851 = vld [vmem:[%s6 + $0x48] sm:$0xf]
        %v852 = vld [vmem:[%s6 + $0x4c] sm:$0xf]
        %v853 = vld [vmem:[%s6 + $0x50] sm:$0xf]
        %v854 = vld [vmem:[%s6 + $0x54] sm:$0xf]
        %v855 = vld [vmem:[%s6 + $0x58] sm:$0xf]
        %v856 = vld [vmem:[%s6 + $0x5c] sm:$0xf]
        %v857 = vld [vmem:[%s6 + $0x60] sm:$0xf]
        %v858 = vld [vmem:[%s6 + $0x64] sm:$0xf]
        %v859 = vld [vmem:[%s6 + $0x68] sm:$0xf]
        %v860 = vld [vmem:[%s6 + $0x6c] sm:$0xf]
        %v861 = vld [vmem:[%s6 + $0x70] sm:$0xf]
        %v862 = vld [vmem:[%s6 + $0x74] sm:$0xf]
        %v863 = vld [vmem:[%s6 + $0x78] sm:$0xf]
        %v864 = vld [vmem:[%s6 + $0x7c] sm:$0xf]
        %v865 = vld [vmem:[#allocation2] sm:$0x1]
        %v867 = vlaneseq
        %v868 = vshrl.u32 %v867, 7
        %v869 = vsub.s32 0, %v868
        %v870 = vrot.slane %v865, %v869
        %v880 = vunpack.c.l.b16 %v825
        %v881 = vunpack.c.h.b16 %v825
        %v882 = vunpack.c.l.b16 %v826
        %v883 = vunpack.c.h.b16 %v826
        %v884 = vunpack.c.l.b16 %v827
        %v885 = vunpack.c.h.b16 %v827
        %v886 = vunpack.c.l.b16 %v828
        %v887 = vunpack.c.h.b16 %v828
        %v888 = vunpack.c.l.b16 %v829
        %v889 = vunpack.c.h.b16 %v829
        %v890 = vunpack.c.l.b16 %v830
        %v891 = vunpack.c.h.b16 %v830
        %v892 = vunpack.c.l.b16 %v831
        %v893 = vunpack.c.h.b16 %v831
        %v894 = vunpack.c.l.b16 %v832
        %v895 = vunpack.c.h.b16 %v832
        %v896 = vpack.c.b16 %v882, %v880
        %v897 = vpack.c.b16 %v883, %v881
        %v898 = vpack.c.b16 %v886, %v884
        %v899 = vpack.c.b16 %v887, %v885
        %v900 = vpack.c.b16 %v890, %v888
        %v901 = vpack.c.b16 %v891, %v889
        %v902 = vpack.c.b16 %v894, %v892
        %v903 = vpack.c.b16 %v895, %v893
        %v944 = vunpack.c.l.b16 %v833
        %v945 = vunpack.c.l.b16 %v834
        %v946 = vunpack.c.l.b16 %v835
        %v947 = vunpack.c.l.b16 %v836
        %v948 = vunpack.c.l.b16 %v837
        %v949 = vunpack.c.l.b16 %v838
        %v950 = vunpack.c.l.b16 %v839
        %v951 = vunpack.c.l.b16 %v840
        %v952 = vunpack.c.l.b16 %v841
        %v953 = vunpack.c.l.b16 %v842
        %v954 = vunpack.c.l.b16 %v843
        %v955 = vunpack.c.l.b16 %v844
        %v956 = vunpack.c.l.b16 %v845
        %v957 = vunpack.c.l.b16 %v846
        %v958 = vunpack.c.l.b16 %v847
        %v959 = vunpack.c.l.b16 %v848
        %v960 = vunpack.c.l.b16 %v849
        %v961 = vunpack.c.l.b16 %v850
        %v962 = vunpack.c.l.b16 %v851
        %v963 = vunpack.c.l.b16 %v852
        %v964 = vunpack.c.l.b16 %v853
        %v965 = vunpack.c.l.b16 %v854
        %v966 = vunpack.c.l.b16 %v855
        %v967 = vunpack.c.l.b16 %v856
        %v968 = vunpack.c.l.b16 %v857
        %v969 = vunpack.c.l.b16 %v858
        %v970 = vunpack.c.l.b16 %v859
        %v971 = vunpack.c.l.b16 %v860
        %v972 = vunpack.c.l.b16 %v861
        %v973 = vunpack.c.l.b16 %v862
        %v974 = vunpack.c.l.b16 %v863
        %v975 = vunpack.c.l.b16 %v864
        %v976 = vpack.c.b16 %v945, %v944
        %v977 = vpack.c.b16 %v947, %v946
        %v978 = vpack.c.b16 %v949, %v948
        %v979 = vpack.c.b16 %v951, %v950
        %v980 = vpack.c.b16 %v953, %v952
        %v981 = vpack.c.b16 %v955, %v954
        %v982 = vpack.c.b16 %v957, %v956
        %v983 = vpack.c.b16 %v959, %v958
        %v984 = vpack.c.b16 %v961, %v960
        %v985 = vpack.c.b16 %v963, %v962
        %v986 = vpack.c.b16 %v965, %v964
        %v987 = vpack.c.b16 %v967, %v966
        %v988 = vpack.c.b16 %v969, %v968
        %v989 = vpack.c.b16 %v971, %v970
        %v990 = vpack.c.b16 %v973, %v972
        %v991 = vpack.c.b16 %v975, %v974
        %1008 = vmatprep.subr.bf16.mxu0 0
        %1009 = vmatpush1.bf16.msra.mxu0 %v976
        %1010 = vmatprep.subr.bf16.mxu0 0
        %1011 = vmatpush1.bf16.msra.mxu0 %v977
        %1012 = vmatprep.subr.bf16.mxu0 0
        %1013 = vmatpush1.bf16.msra.mxu0 %v978
        %1014 = vmatprep.subr.bf16.mxu0 0
        %1015 = vmatpush1.bf16.msra.mxu0 %v979
        %1016 = vmatprep.subr.bf16.mxu0 0
        %1017 = vmatpush1.bf16.msra.mxu0 %v980
        %1018 = vmatprep.subr.bf16.mxu0 0
        %1019 = vmatpush1.bf16.msra.mxu0 %v981
        %1020 = vmatprep.subr.bf16.mxu0 0
        %1021 = vmatpush1.bf16.msra.mxu0 %v982
        %1022 = vmatprep.subr.bf16.mxu0 0
        %1023 = vmatpush1.bf16.msra.mxu0 %v983
        %1024 = vmatprep.subr.bf16.mxu0 0
        %1025 = vmatpush1.bf16.msra.mxu0 %v984
        %1026 = vmatprep.subr.bf16.mxu0 0
        %1027 = vmatpush1.bf16.msra.mxu0 %v985
        %1028 = vmatprep.subr.bf16.mxu0 0
        %1029 = vmatpush1.bf16.msra.mxu0 %v986
        %1030 = vmatprep.subr.bf16.mxu0 0
        %1031 = vmatpush1.bf16.msra.mxu0 %v987
        %1032 = vmatprep.subr.bf16.mxu0 0
        %1033 = vmatpush1.bf16.msra.mxu0 %v988
        %1034 = vmatprep.subr.bf16.mxu0 0
        %1035 = vmatpush1.bf16.msra.mxu0 %v989
        %1036 = vmatprep.subr.bf16.mxu0 0
        %1037 = vmatpush1.bf16.msra.mxu0 %v990
        %1038 = vmatprep.subr.bf16.mxu0 0
        %1039 = vmatpush1.bf16.msra.mxu0 %v991
        %1040 = vmatprep.mubr.bf16.mxu0 %v897
        %1041 = vmatmul.mubr.bf16.gmra.mrb[0].mxu0 %v896
        %v1042 = vpop.f32.mrb[0].mxu0
        %v1043 = vadd.f32 %v870, %v1042
        %v1044 = vpop.f32.mrb[0].mxu0
        %v1045 = vpop.f32.mrb[0].mxu0
        %v1046 = vadd.f32 %v870, %v1045
        %v1047 = vpop.f32.mrb[0].mxu0
        %1048 = vmatprep.mubr.bf16.mxu0 %v899
        %1049 = vmatmul.mubr.bf16.gmra.mrb[0].mxu0 %v898
        %v1050 = vpop.f32.mrb[0].mxu0
        %v1051 = vadd.f32 %v870, %v1050
        %v1052 = vpop.f32.mrb[0].mxu0
        %v1053 = vpop.f32.mrb[0].mxu0
        %v1054 = vadd.f32 %v870, %v1053
        %v1055 = vpop.f32.mrb[0].mxu0
        %1056 = vmatprep.mubr.bf16.mxu0 %v901
        %1057 = vmatmul.mubr.bf16.gmra.mrb[0].mxu0 %v900
        %v1058 = vpop.f32.mrb[0].mxu0
        %v1059 = vadd.f32 %v870, %v1058
        %v1060 = vpop.f32.mrb[0].mxu0
        %v1061 = vpop.f32.mrb[0].mxu0
        %v1062 = vadd.f32 %v870, %v1061
        %v1063 = vpop.f32.mrb[0].mxu0
        %1064 = vmatprep.mubr.bf16.mxu0 %v903
        %1065 = vmatmul.mubr.bf16.gmra.mrb[0].mxu0 %v902
        %v1066 = vpop.f32.mrb[0].mxu0
        %v1067 = vadd.f32 %v870, %v1066
        %v1068 = vpop.f32.mrb[0].mxu0
        %v1069 = vpop.f32.mrb[0].mxu0
        %v1070 = vadd.f32 %v870, %v1069
        %v1071 = vpop.f32.mrb[0].mxu0
        %1072 = vdwg.mxu0
        %v1073 = vmax.f32 %v1043, 0.0
        %v1074 = vmax.f32 %v1046, 0.0
        %v1075 = vmax.f32 %v1051, 0.0
        %v1076 = vmax.f32 %v1054, 0.0
        %v1077 = vmax.f32 %v1059, 0.0
        %v1078 = vmax.f32 %v1062, 0.0
        %v1079 = vmax.f32 %v1067, 0.0
        %v1080 = vmax.f32 %v1070, 0.0
        %v1081 = vpack.c.bf16 %v1073, %v1073
        %v1082 = vpack.c.bf16 %v1074, %v1074
        %v1083 = vpack.c.bf16 %v1075, %v1075
        %v1084 = vpack.c.bf16 %v1076, %v1076
        %v1085 = vpack.c.bf16 %v1077, %v1077
        %v1086 = vpack.c.bf16 %v1078, %v1078
        %v1087 = vpack.c.bf16 %v1079, %v1079
        %v1088 = vpack.c.bf16 %v1080, %v1080
        %v1089 = vld [vmem:[%s740] sm:$0xff]
        %v1091 = vunpack.c.l.b16 %v1089
        %v1092 = vunpack.c.h.b16 %v1089
        %v1093 = vpack.c.b16 %v1091, %v1091
        %v1094 = vpack.c.b16 %v1092, %v1092
        %1097 = vmatprep.subr.bf16.mxu0 0
        %1098 = vmatpush1.bf16.msra.mxu0 %v976
        %1099 = vmatprep.subr.bf16.mxu0 0
        %1100 = vmatpush1.bf16.msra.mxu0 %v977
        %1101 = vmatprep.subr.bf16.mxu0 0
        %1102 = vmatpush1.bf16.msra.mxu0 %v978
        %1103 = vmatprep.subr.bf16.mxu0 0
        %1104 = vmatpush1.bf16.msra.mxu0 %v979
        %1105 = vmatprep.subr.bf16.mxu0 0
        %1106 = vmatpush1.bf16.msra.mxu0 %v980
        %1107 = vmatprep.subr.bf16.mxu0 0
        %1108 = vmatpush1.bf16.msra.mxu0 %v981
        %1109 = vmatprep.subr.bf16.mxu0 0
        %1110 = vmatpush1.bf16.msra.mxu0 %v982
        %1111 = vmatprep.subr.bf16.mxu0 0
        %1112 = vmatpush1.bf16.msra.mxu0 %v983
        %1113 = vmatprep.subr.bf16.mxu0 0
        %1114 = vmatpush1.bf16.msra.mxu0 %v984
        %1115 = vmatprep.subr.bf16.mxu0 0
        %1116 = vmatpush1.bf16.msra.mxu0 %v985
        %1117 = vmatprep.subr.bf16.mxu0 0
        %1118 = vmatpush1.bf16.msra.mxu0 %v986
        %1119 = vmatprep.subr.bf16.mxu0 0
        %1120 = vmatpush1.bf16.msra.mxu0 %v987
        %1121 = vmatprep.subr.bf16.mxu0 0
        %1122 = vmatpush1.bf16.msra.mxu0 %v988
        %1123 = vmatprep.subr.bf16.mxu0 0
        %1124 = vmatpush1.bf16.msra.mxu0 %v989
        %1125 = vmatprep.subr.bf16.mxu0 0
        %1126 = vmatpush1.bf16.msra.mxu0 %v990
        %1127 = vmatprep.subr.bf16.mxu0 0
        %1128 = vmatpush1.bf16.msra.mxu0 %v991
        %1129 = vmatprep.mubr.bf16.mxu0 %v1094
        %1130 = vmatmul.mubr.bf16.gmra.mrb[0].mxu0 %v1093
        %v1131 = vpop.f32.mrb[0].mxu0
        %v1132 = vadd.f32 %v870, %v1131
        %v1133 = vpop.f32.mrb[0].mxu0
        %v1134 = vpop.f32.mrb[0].mxu0
        %v1135 = vpop.f32.mrb[0].mxu0
        %1136 = vdwg.mxu0
        %v1137 = vmax.f32 %v1132, 0.0
        %v1138 = vpack.c.bf16 %v1137, %v1137
        %v1139 = vmul.bf16 %v1138, %v796
        %v1140 = vld [vmem:[%s757] sm:$0xff]
        %v1142 = vunpack.c.l.b16 %v1140
        %v1143 = vunpack.c.h.b16 %v1140
        %v1144 = vpack.c.b16 %v1142, %v1142
        %v1145 = vpack.c.b16 %v1143, %v1143
        %1148 = vmatprep.subr.bf16.mxu0 0
        %1149 = vmatpush1.bf16.msra.mxu0 %v976
        %1150 = vmatprep.subr.bf16.mxu0 0
        %1151 = vmatpush1.bf16.msra.mxu0 %v977
        %1152 = vmatprep.subr.bf16.mxu0 0
        %1153 = vmatpush1.bf16.msra.mxu0 %v978
        %1154 = vmatprep.subr.bf16.mxu0 0
        %1155 = vmatpush1.bf16.msra.mxu0 %v979
        %1156 = vmatprep.subr.bf16.mxu0 0
        %1157 = vmatpush1.bf16.msra.mxu0 %v980
        %1158 = vmatprep.subr.bf16.mxu0 0
        %1159 = vmatpush1.bf16.msra.mxu0 %v981
        %1160 = vmatprep.subr.bf16.mxu0 0
        %1161 = vmatpush1.bf16.msra.mxu0 %v982
        %1162 = vmatprep.subr.bf16.mxu0 0
        %1163 = vmatpush1.bf16.msra.mxu0 %v983
        %1164 = vmatprep.subr.bf16.mxu0 0
        %1165 = vmatpush1.bf16.msra.mxu0 %v984
        %1166 = vmatprep.subr.bf16.mxu0 0
        %1167 = vmatpush1.bf16.msra.mxu0 %v985
        %1168 = vmatprep.subr.bf16.mxu0 0
        %1169 = vmatpush1.bf16.msra.mxu0 %v986
        %1170 = vmatprep.subr.bf16.mxu0 0
        %1171 = vmatpush1.bf16.msra.mxu0 %v987
        %1172 = vmatprep.subr.bf16.mxu0 0
        %1173 = vmatpush1.bf16.msra.mxu0 %v988
        %1174 = vmatprep.subr.bf16.mxu0 0
        %1175 = vmatpush1.bf16.msra.mxu0 %v989
        %1176 = vmatprep.subr.bf16.mxu0 0
        %1177 = vmatpush1.bf16.msra.mxu0 %v990
        %1178 = vmatprep.subr.bf16.mxu0 0
        %1179 = vmatpush1.bf16.msra.mxu0 %v991
        %1180 = vmatprep.mubr.bf16.mxu0 %v1145
        %1181 = vmatmul.mubr.bf16.gmra.mrb[0].mxu0 %v1144
        %v1182 = vpop.f32.mrb[0].mxu0
        %v1183 = vadd.f32 %v870, %v1182
        %v1184 = vpop.f32.mrb[0].mxu0
        %v1185 = vpop.f32.mrb[0].mxu0
        %v1186 = vpop.f32.mrb[0].mxu0
        %1187 = vdwg.mxu0
        %v1188 = vmax.f32 %v1183, 0.0
        %v1189 = vpack.c.bf16 %v1188, %v1188
        %v1190 = vmul.bf16 %v1189, %v814
        %v1201 = vunpack.c.l.b16 %v798
        %v1202 = vunpack.c.h.b16 %v798
        %v1203 = vunpack.c.l.b16 %v817
        %v1204 = vunpack.c.h.b16 %v817
        %v1205 = vunpack.c.l.b16 %v818
        %v1206 = vunpack.c.h.b16 %v818
        %v1207 = vunpack.c.l.b16 %v819
        %v1208 = vunpack.c.h.b16 %v819
        %v1209 = vunpack.c.l.b16 %v820
        %v1210 = vunpack.c.h.b16 %v820
        %v1211 = vunpack.c.l.b16 %v821
        %v1212 = vunpack.c.h.b16 %v821
        %v1213 = vunpack.c.l.b16 %v822
        %v1214 = vunpack.c.h.b16 %v822
        %v1215 = vunpack.c.l.b16 %v823
        %v1216 = vunpack.c.h.b16 %v823
        %v1217 = vunpack.c.l.b16 %v824
        %v1218 = vunpack.c.h.b16 %v824
        %v1219 = vunpack.c.l.b16 %v816
        %v1220 = vunpack.c.h.b16 %v816
        %v1221 = vpack.c.b16 %v1201, %v1201
        %v1222 = vpack.c.b16 %v1202, %v1202
        %v1223 = vpack.c.b16 %v1203, %v1203
        %v1224 = vpack.c.b16 %v1204, %v1204
        %v1225 = vpack.c.b16 %v1205, %v1205
        %v1226 = vpack.c.b16 %v1206, %v1206
        %v1227 = vpack.c.b16 %v1207, %v1207
        %v1228 = vpack.c.b16 %v1208, %v1208
        %v1229 = vpack.c.b16 %v1209, %v1209
        %v1230 = vpack.c.b16 %v1210, %v1210
        %v1231 = vpack.c.b16 %v1211, %v1211
        %v1232 = vpack.c.b16 %v1212, %v1212
        %v1233 = vpack.c.b16 %v1213, %v1213
        %v1234 = vpack.c.b16 %v1214, %v1214
        %v1235 = vpack.c.b16 %v1215, %v1215
        %v1236 = vpack.c.b16 %v1216, %v1216
        %v1237 = vpack.c.b16 %v1217, %v1217
        %v1238 = vpack.c.b16 %v1218, %v1218
        %v1239 = vpack.c.b16 %v1219, %v1219
        %v1240 = vpack.c.b16 %v1220, %v1220
        %v1242 = vshrl.u32 %v1221, 16
        %v1244 = vrot.slane %v1242, 7
        %v1245 = vshll.u32 %v1221, 16
        %v1247 = vor.u32 %v1244, %v1245
        %v1249 = vshrl.u32 %v1222, 16
        %v1251 = vrot.slane %v1249, 7
        %v1252 = vshll.u32 %v1222, 16
        %v1254 = vor.u32 %v1251, %v1252
        %v1256 = vshrl.u32 %v1223, 16
        %v1258 = vrot.slane %v1256, 7
        %v1259 = vshll.u32 %v1223, 16
        %v1261 = vor.u32 %v1258, %v1259
        %v1263 = vshrl.u32 %v1224, 16
        %v1265 = vrot.slane %v1263, 7
        %v1266 = vshll.u32 %v1224, 16
        %v1268 = vor.u32 %v1265, %v1266
        %v1270 = vshrl.u32 %v1225, 16
        %v1272 = vrot.slane %v1270, 7
        %v1273 = vshll.u32 %v1225, 16
        %v1275 = vor.u32 %v1272, %v1273
        %v1277 = vshrl.u32 %v1226, 16
        %v1279 = vrot.slane %v1277, 7
        %v1280 = vshll.u32 %v1226, 16
        %v1282 = vor.u32 %v1279, %v1280
        %v1284 = vshrl.u32 %v1227, 16
        %v1286 = vrot.slane %v1284, 7
        %v1287 = vshll.u32 %v1227, 16
        %v1289 = vor.u32 %v1286, %v1287
        %v1291 = vshrl.u32 %v1228, 16
        %v1293 = vrot.slane %v1291, 7
        %v1294 = vshll.u32 %v1228, 16
        %v1296 = vor.u32 %v1293, %v1294
        %v1298 = vshrl.u32 %v1229, 16
        %v1300 = vrot.slane %v1298, 7
        %v1301 = vshll.u32 %v1229, 16
        %v1303 = vor.u32 %v1300, %v1301
        %v1305 = vshrl.u32 %v1230, 16
        %v1307 = vrot.slane %v1305, 7
        %v1308 = vshll.u32 %v1230, 16
        %v1310 = vor.u32 %v1307, %v1308
        %v1312 = vshrl.u32 %v1231, 16
        %v1314 = vrot.slane %v1312, 7
        %v1315 = vshll.u32 %v1231, 16
        %v1317 = vor.u32 %v1314, %v1315
        %v1319 = vshrl.u32 %v1232, 16
        %v1321 = vrot.slane %v1319, 7
        %v1322 = vshll.u32 %v1232, 16
        %v1324 = vor.u32 %v1321, %v1322
        %v1326 = vshrl.u32 %v1233, 16
        %v1328 = vrot.slane %v1326, 7
        %v1329 = vshll.u32 %v1233, 16
        %v1331 = vor.u32 %v1328, %v1329
        %v1333 = vshrl.u32 %v1234, 16
        %v1335 = vrot.slane %v1333, 7
        %v1336 = vshll.u32 %v1234, 16
        %v1338 = vor.u32 %v1335, %v1336
        %v1340 = vshrl.u32 %v1235, 16
        %v1342 = vrot.slane %v1340, 7
        %v1343 = vshll.u32 %v1235, 16
        %v1345 = vor.u32 %v1342, %v1343
        %v1347 = vshrl.u32 %v1236, 16
        %v1349 = vrot.slane %v1347, 7
        %v1350 = vshll.u32 %v1236, 16
        %v1352 = vor.u32 %v1349, %v1350
        %v1354 = vshrl.u32 %v1237, 16
        %v1356 = vrot.slane %v1354, 7
        %v1357 = vshll.u32 %v1237, 16
        %v1359 = vor.u32 %v1356, %v1357
        %v1361 = vshrl.u32 %v1238, 16
        %v1363 = vrot.slane %v1361, 7
        %v1364 = vshll.u32 %v1238, 16
        %v1366 = vor.u32 %v1363, %v1364
        %v1368 = vshrl.u32 %v1239, 16
        %v1370 = vrot.slane %v1368, 7
        %v1371 = vshll.u32 %v1239, 16
        %v1373 = vor.u32 %v1370, %v1371
        %v1375 = vshrl.u32 %v1240, 16
        %v1377 = vrot.slane %v1375, 7
        %v1378 = vshll.u32 %v1240, 16
        %v1380 = vor.u32 %v1377, %v1378
        %vm1401 = vcmask 1040384
        %vm1402 = vsmask.f32 256
        %vm1403 = vmand %vm1401, %vm1402
        %v1404 = vsel %vm1403, 0, %v1247
        %v1405 = vsel %vm1403, 0, %v1254
        %v1406 = vsel %vm1403, 0, %v1261
        %v1407 = vsel %vm1403, 0, %v1268
        %v1408 = vsel %vm1403, 0, %v1275
        %v1409 = vsel %vm1403, 0, %v1282
        %v1410 = vsel %vm1403, 0, %v1289
        %v1411 = vsel %vm1403, 0, %v1296
        %v1412 = vsel %vm1403, 0, %v1303
        %v1413 = vsel %vm1403, 0, %v1310
        %v1414 = vsel %vm1403, 0, %v1317
        %v1415 = vsel %vm1403, 0, %v1324
        %v1416 = vsel %vm1403, 0, %v1331
        %v1417 = vsel %vm1403, 0, %v1338
        %v1418 = vsel %vm1403, 0, %v1345
        %v1419 = vsel %vm1403, 0, %v1352
        %v1420 = vsel %vm1403, 0, %v1359
        %v1421 = vsel %vm1403, 0, %v1366
        %v1422 = vsel %vm1403, 0, %v1373
        %v1423 = vsel %vm1403, 0, %v1380
        %v1424 = vrot.slane %v1245, 1
        %v1425 = vor.u32 %v1242, %v1424
        %v1426 = vrot.slane %v1252, 1
        %v1427 = vor.u32 %v1249, %v1426
        %v1428 = vrot.slane %v1259, 1
        %v1429 = vor.u32 %v1256, %v1428
        %v1430 = vrot.slane %v1266, 1
        %v1431 = vor.u32 %v1263, %v1430
        %v1432 = vrot.slane %v1273, 1
        %v1433 = vor.u32 %v1270, %v1432
        %v1434 = vrot.slane %v1280, 1
        %v1435 = vor.u32 %v1277, %v1434
        %v1436 = vrot.slane %v1287, 1
        %v1437 = vor.u32 %v1284, %v1436
        %v1438 = vrot.slane %v1294, 1
        %v1439 = vor.u32 %v1291, %v1438
        %v1440 = vrot.slane %v1301, 1
        %v1441 = vor.u32 %v1298, %v1440
        %v1442 = vrot.slane %v1308, 1
        %v1443 = vor.u32 %v1305, %v1442
        %v1444 = vrot.slane %v1315, 1
        %v1445 = vor.u32 %v1312, %v1444
        %v1446 = vrot.slane %v1322, 1
        %v1447 = vor.u32 %v1319, %v1446
        %v1448 = vrot.slane %v1329, 1
        %v1449 = vor.u32 %v1326, %v1448
        %v1450 = vrot.slane %v1336, 1
        %v1451 = vor.u32 %v1333, %v1450
        %v1452 = vrot.slane %v1343, 1
        %v1453 = vor.u32 %v1340, %v1452
        %v1454 = vrot.slane %v1350, 1
        %v1455 = vor.u32 %v1347, %v1454
        %v1456 = vrot.slane %v1357, 1
        %v1457 = vor.u32 %v1354, %v1456
        %v1458 = vrot.slane %v1364, 1
        %v1459 = vor.u32 %v1361, %v1458
        %v1460 = vrot.slane %v1371, 1
        %v1461 = vor.u32 %v1368, %v1460
        %v1462 = vrot.slane %v1378, 1
        %v1463 = vor.u32 %v1375, %v1462
        %vm1484 = vcmask 1043456
        %vm1485 = vsmask.f32 3328
        %vm1486 = vmand %vm1484, %vm1485
        %v1487 = vsel %vm1486, %v1425, 0
        %v1488 = vsel %vm1486, %v1427, 0
        %v1489 = vsel %vm1486, %v1429, 0
        %v1490 = vsel %vm1486, %v1431, 0
        %v1491 = vsel %vm1486, %v1433, 0
        %v1492 = vsel %vm1486, %v1435, 0
        %v1493 = vsel %vm1486, %v1437, 0
        %v1494 = vsel %vm1486, %v1439, 0
        %v1495 = vsel %vm1486, %v1441, 0
        %v1496 = vsel %vm1486, %v1443, 0
        %v1497 = vsel %vm1486, %v1445, 0
        %v1498 = vsel %vm1486, %v1447, 0
        %v1499 = vsel %vm1486, %v1449, 0
        %v1500 = vsel %vm1486, %v1451, 0
        %v1501 = vsel %vm1486, %v1453, 0
        %v1502 = vsel %vm1486, %v1455, 0
        %v1503 = vsel %vm1486, %v1457, 0
        %v1504 = vsel %vm1486, %v1459, 0
        %v1505 = vsel %vm1486, %v1461, 0
        %v1506 = vsel %vm1486, %v1463, 0
        %v1508 = vshrl.u32 %v1139, 16
        %v1510 = vrot.slane %v1508, 7
        %v1511 = vshll.u32 %v1139, 16
        %v1513 = vor.u32 %v1510, %v1511
        %v1515 = vshrl.u32 %v1081, 16
        %v1517 = vrot.slane %v1515, 7
        %v1518 = vshll.u32 %v1081, 16
        %v1520 = vor.u32 %v1517, %v1518
        %v1522 = vshrl.u32 %v1082, 16
        %v1524 = vrot.slane %v1522, 7
        %v1525 = vshll.u32 %v1082, 16
        %v1527 = vor.u32 %v1524, %v1525
        %v1529 = vshrl.u32 %v1083, 16
        %v1531 = vrot.slane %v1529, 7
        %v1532 = vshll.u32 %v1083, 16
        %v1534 = vor.u32 %v1531, %v1532
        %v1536 = vshrl.u32 %v1084, 16
        %v1538 = vrot.slane %v1536, 7
        %v1539 = vshll.u32 %v1084, 16
        %v1541 = vor.u32 %v1538, %v1539
        %v1543 = vshrl.u32 %v1085, 16
        %v1545 = vrot.slane %v1543, 7
        %v1546 = vshll.u32 %v1085, 16
        %v1548 = vor.u32 %v1545, %v1546
        %v1550 = vshrl.u32 %v1086, 16
        %v1552 = vrot.slane %v1550, 7
        %v1553 = vshll.u32 %v1086, 16
        %v1555 = vor.u32 %v1552, %v1553
        %v1557 = vshrl.u32 %v1087, 16
        %v1559 = vrot.slane %v1557, 7
        %v1560 = vshll.u32 %v1087, 16
        %v1562 = vor.u32 %v1559, %v1560
        %v1564 = vshrl.u32 %v1088, 16
        %v1566 = vrot.slane %v1564, 7
        %v1567 = vshll.u32 %v1088, 16
        %v1569 = vor.u32 %v1566, %v1567
        %v1571 = vshrl.u32 %v1190, 16
        %v1573 = vrot.slane %v1571, 7
        %v1574 = vshll.u32 %v1190, 16
        %v1576 = vor.u32 %v1573, %v1574
        %v1587 = vsel %vm1403, 0, %v1513
        %v1588 = vsel %vm1403, 0, %v1520
        %v1589 = vsel %vm1403, 0, %v1527
        %v1590 = vsel %vm1403, 0, %v1534
        %v1591 = vsel %vm1403, 0, %v1541
        %v1592 = vsel %vm1403, 0, %v1548
        %v1593 = vsel %vm1403, 0, %v1555
        %v1594 = vsel %vm1403, 0, %v1562
        %v1595 = vsel %vm1403, 0, %v1569
        %v1596 = vsel %vm1403, 0, %v1576
        %v1597 = vrot.slane %v1511, 1
        %v1598 = vor.u32 %v1508, %v1597
        %v1599 = vrot.slane %v1518, 1
        %v1600 = vor.u32 %v1515, %v1599
        %v1601 = vrot.slane %v1525, 1
        %v1602 = vor.u32 %v1522, %v1601
        %v1603 = vrot.slane %v1532, 1
        %v1604 = vor.u32 %v1529, %v1603
        %v1605 = vrot.slane %v1539, 1
        %v1606 = vor.u32 %v1536, %v1605
        %v1607 = vrot.slane %v1546, 1
        %v1608 = vor.u32 %v1543, %v1607
        %v1609 = vrot.slane %v1553, 1
        %v1610 = vor.u32 %v1550, %v1609
        %v1611 = vrot.slane %v1560, 1
        %v1612 = vor.u32 %v1557, %v1611
        %v1613 = vrot.slane %v1567, 1
        %v1614 = vor.u32 %v1564, %v1613
        %v1615 = vrot.slane %v1574, 1
        %v1616 = vor.u32 %v1571, %v1615
        %v1627 = vsel %vm1486, %v1598, 0
        %v1628 = vsel %vm1486, %v1600, 0
        %v1629 = vsel %vm1486, %v1602, 0
        %v1630 = vsel %vm1486, %v1604, 0
        %v1631 = vsel %vm1486, %v1606, 0
        %v1632 = vsel %vm1486, %v1608, 0
        %v1633 = vsel %vm1486, %v1610, 0
        %v1634 = vsel %vm1486, %v1612, 0
        %v1635 = vsel %vm1486, %v1614, 0
        %v1636 = vsel %vm1486, %v1616, 0
        %1647 = vrot.lane.b32.xlu0 %v1139, 48
        %v1648 = vpop.permute.xlu0 %1647
        %1649 = vrot.lane.b32.xlu0 %v1081, 48
        %v1650 = vpop.permute.xlu0 %1649
        %1651 = vrot.lane.b32.xlu0 %v1082, 48
        %v1652 = vpop.permute.xlu0 %1651
        %1653 = vrot.lane.b32.xlu0 %v1083, 48
        %v1654 = vpop.permute.xlu0 %1653
        %1655 = vrot.lane.b32.xlu0 %v1084, 48
        %v1656 = vpop.permute.xlu0 %1655
        %1657 = vrot.lane.b32.xlu0 %v1085, 48
        %v1658 = vpop.permute.xlu0 %1657
        %1659 = vrot.lane.b32.xlu0 %v1086, 48
        %v1660 = vpop.permute.xlu0 %1659
        %1661 = vrot.lane.b32.xlu0 %v1087, 48
        %v1662 = vpop.permute.xlu0 %1661
        %1663 = vrot.lane.b32.xlu0 %v1088, 48
        %v1664 = vpop.permute.xlu0 %1663
        %1665 = vrot.lane.b32.xlu0 %v1190, 48
        %v1666 = vpop.permute.xlu0 %1665
        %1677 = vrot.lane.b32.xlu0 %v1627, 96
        %v1678 = vpop.permute.xlu0 %1677
        %1679 = vrot.lane.b32.xlu0 %v1628, 96
        %v1680 = vpop.permute.xlu0 %1679
        %1681 = vrot.lane.b32.xlu0 %v1629, 96
        %v1682 = vpop.permute.xlu0 %1681
        %1683 = vrot.lane.b32.xlu0 %v1630, 96
        %v1684 = vpop.permute.xlu0 %1683
        %1685 = vrot.lane.b32.xlu0 %v1631, 96
        %v1686 = vpop.permute.xlu0 %1685
        %1687 = vrot.lane.b32.xlu0 %v1632, 96
        %v1688 = vpop.permute.xlu0 %1687
        %1689 = vrot.lane.b32.xlu0 %v1633, 96
        %v1690 = vpop.permute.xlu0 %1689
        %1691 = vrot.lane.b32.xlu0 %v1634, 96
        %v1692 = vpop.permute.xlu0 %1691
        %1693 = vrot.lane.b32.xlu0 %v1635, 96
        %v1694 = vpop.permute.xlu0 %1693
        %1695 = vrot.lane.b32.xlu0 %v1636, 96
        %v1696 = vpop.permute.xlu0 %1695
        %vm1697 = vcmask 392192
        %v1700 = vsel %vm1697, %v1587, %v1648
        %v1703 = vsel %vm1697, %v1588, %v1650
        %v1706 = vsel %vm1697, %v1589, %v1652
        %v1709 = vsel %vm1697, %v1590, %v1654
        %v1712 = vsel %vm1697, %v1591, %v1656
        %v1715 = vsel %vm1697, %v1592, %v1658
        %v1718 = vsel %vm1697, %v1593, %v1660
        %v1721 = vsel %vm1697, %v1594, %v1662
        %v1724 = vsel %vm1697, %v1595, %v1664
        %v1727 = vsel %vm1697, %v1596, %v1666
        %vm1728 = vcmask 785408
        %v1730 = vsel %vm1728, %v1700, %v1678
        %v1732 = vsel %vm1728, %v1703, %v1680
        %v1734 = vsel %vm1728, %v1706, %v1682
        %v1736 = vsel %vm1728, %v1709, %v1684
        %v1738 = vsel %vm1728, %v1712, %v1686
        %v1740 = vsel %vm1728, %v1715, %v1688
        %v1742 = vsel %vm1728, %v1718, %v1690
        %v1744 = vsel %vm1728, %v1721, %v1692
        %v1746 = vsel %vm1728, %v1724, %v1694
        %v1748 = vsel %vm1728, %v1727, %v1696
        %v1781 = vunpack.c.l.b16 %v1404
        %v1782 = vunpack.c.l.b16 %v1405
        %v1783 = vunpack.c.l.b16 %v1487
        %v1784 = vunpack.c.l.b16 %v1488
        %v1785 = vunpack.c.l.b16 %v1406
        %v1786 = vunpack.c.l.b16 %v1407
        %v1787 = vunpack.c.l.b16 %v1489
        %v1788 = vunpack.c.l.b16 %v1490
        %v1789 = vunpack.c.l.b16 %v1408
        %v1790 = vunpack.c.l.b16 %v1409
        %v1791 = vunpack.c.l.b16 %v1491
        %v1792 = vunpack.c.l.b16 %v1492
        %v1793 = vunpack.c.l.b16 %v1410
        %v1794 = vunpack.c.l.b16 %v1411
        %v1795 = vunpack.c.l.b16 %v1493
        %v1796 = vunpack.c.l.b16 %v1494
        %v1797 = vunpack.c.l.b16 %v1412
        %v1798 = vunpack.c.l.b16 %v1413
        %v1799 = vunpack.c.l.b16 %v1495
        %v1800 = vunpack.c.l.b16 %v1496
        %v1801 = vunpack.c.l.b16 %v1414
        %v1802 = vunpack.c.l.b16 %v1415
        %v1803 = vunpack.c.l.b16 %v1497
        %v1804 = vunpack.c.l.b16 %v1498
        %v1805 = vunpack.c.l.b16 %v1416
        %v1806 = vunpack.c.l.b16 %v1417
        %v1807 = vunpack.c.l.b16 %v1499
        %v1808 = vunpack.c.l.b16 %v1500
        %v1809 = vunpack.c.l.b16 %v1418
        %v1810 = vunpack.c.l.b16 %v1419
        %v1811 = vunpack.c.l.b16 %v1501
        %v1812 = vunpack.c.l.b16 %v1502
        %v1813 = vld [vmem:[#allocation4] sm:$0xff]
        %v1814 = vld [vmem:[#allocation4 + $0x8] sm:$0xff]
        %v1815 = vld [vmem:[#allocation4 + $0x10] sm:$0xff]
        %v1816 = vld [vmem:[#allocation4 + $0x18] sm:$0xff]
        %v1817 = vld [vmem:[#allocation4 + $0x20] sm:$0xff]
        %v1818 = vld [vmem:[#allocation4 + $0x28] sm:$0xff]
        %v1819 = vld [vmem:[#allocation4 + $0x30] sm:$0xff]
        %v1820 = vld [vmem:[#allocation4 + $0x38] sm:$0xff]
        %v1821 = vld [vmem:[#allocation4 + $0x40] sm:$0xff]
        %v1822 = vld [vmem:[#allocation4 + $0x48] sm:$0xff]
        %v1823 = vld [vmem:[#allocation4 + $0x50] sm:$0xff]
        %v1824 = vld [vmem:[#allocation4 + $0x58] sm:$0xff]
        %v1825 = vld [vmem:[#allocation4 + $0x60] sm:$0xff]
        %v1826 = vld [vmem:[#allocation4 + $0x68] sm:$0xff]
        %v1827 = vld [vmem:[#allocation4 + $0x70] sm:$0xff]
        %v1828 = vld [vmem:[#allocation4 + $0x78] sm:$0xff]
        %v1829 = vld [vmem:[#allocation4 + $0x80] sm:$0xff]
        %v1830 = vld [vmem:[#allocation4 + $0x88] sm:$0xff]
        %v1831 = vld [vmem:[#allocation4 + $0x90] sm:$0xff]
        %v1832 = vld [vmem:[#allocation4 + $0x98] sm:$0xff]
        %v1833 = vld [vmem:[#allocation4 + $0xa0] sm:$0xff]
        %v1834 = vld [vmem:[#allocation4 + $0xa8] sm:$0xff]
        %v1835 = vld [vmem:[#allocation4 + $0xb0] sm:$0xff]
        %v1836 = vld [vmem:[#allocation4 + $0xb8] sm:$0xff]
        %v1837 = vld [vmem:[#allocation4 + $0xc0] sm:$0xff]
        %v1838 = vld [vmem:[#allocation4 + $0xc8] sm:$0xff]
        %v1839 = vld [vmem:[#allocation4 + $0xd0] sm:$0xff]
        %v1840 = vld [vmem:[#allocation4 + $0xd8] sm:$0xff]
        %v1841 = vld [vmem:[#allocation4 + $0xe0] sm:$0xff]
        %v1842 = vld [vmem:[#allocation4 + $0xe8] sm:$0xff]
        %v1843 = vld [vmem:[#allocation4 + $0xf0] sm:$0xff]
        %v1844 = vld [vmem:[#allocation4 + $0xf8] sm:$0xff]
        %v1845 = vld [vmem:[#allocation4 + $0x100] sm:$0xff]
        %v1846 = vld [vmem:[#allocation4 + $0x108] sm:$0xff]
        %v1847 = vld [vmem:[#allocation4 + $0x110] sm:$0xff]
        %v1848 = vld [vmem:[#allocation4 + $0x118] sm:$0xff]
        %v1849 = vld [vmem:[#allocation4 + $0x120] sm:$0xff]
        %v1850 = vld [vmem:[#allocation4 + $0x128] sm:$0xff]
        %v1851 = vld [vmem:[#allocation4 + $0x130] sm:$0xff]
        %v1852 = vld [vmem:[#allocation4 + $0x138] sm:$0xff]
        %v1853 = vld [vmem:[#allocation4 + $0x140] sm:$0xff]
        %v1854 = vld [vmem:[#allocation4 + $0x148] sm:$0xff]
        %v1855 = vld [vmem:[#allocation4 + $0x150] sm:$0xff]
        %v1856 = vld [vmem:[#allocation4 + $0x158] sm:$0xff]
        %v1857 = vld [vmem:[#allocation4 + $0x160] sm:$0xff]
        %v1858 = vld [vmem:[#allocation4 + $0x168] sm:$0xff]
        %v1859 = vld [vmem:[#allocation4 + $0x170] sm:$0xff]
        %v1860 = vld [vmem:[#allocation4 + $0x178] sm:$0xff]
        %v1861 = vld [vmem:[#allocation4 + $0x180] sm:$0xff]
        %v1862 = vld [vmem:[#allocation4 + $0x188] sm:$0xff]
        %v1863 = vld [vmem:[#allocation4 + $0x190] sm:$0xff]
        %v1864 = vld [vmem:[#allocation4 + $0x198] sm:$0xff]
        %v1865 = vld [vmem:[#allocation4 + $0x1a0] sm:$0xff]
        %v1866 = vld [vmem:[#allocation4 + $0x1a8] sm:$0xff]
        %v1867 = vld [vmem:[#allocation4 + $0x1b0] sm:$0xff]
        %v1868 = vld [vmem:[#allocation4 + $0x1b8] sm:$0xff]
        %v1869 = vld [vmem:[#allocation4 + $0x1c0] sm:$0xff]
        %v1870 = vld [vmem:[#allocation4 + $0x1c8] sm:$0xff]
        %v1871 = vld [vmem:[#allocation4 + $0x1d0] sm:$0xff]
        %v1872 = vld [vmem:[#allocation4 + $0x1d8] sm:$0xff]
        %v1873 = vld [vmem:[#allocation4 + $0x1e0] sm:$0xff]
        %v1874 = vld [vmem:[#allocation4 + $0x1e8] sm:$0xff]
        %v1875 = vld [vmem:[#allocation4 + $0x1f0] sm:$0xff]
        %v1876 = vld [vmem:[#allocation4 + $0x1f8] sm:$0xff]
        %v1877 = vld [vmem:[#allocation4 + $0x200] sm:$0xff]
        %v1878 = vld [vmem:[#allocation4 + $0x208] sm:$0xff]
        %v1879 = vld [vmem:[#allocation4 + $0x210] sm:$0xff]
        %v1880 = vld [vmem:[#allocation4 + $0x218] sm:$0xff]
        %v1881 = vld [vmem:[#allocation4 + $0x220] sm:$0xff]
        %v1882 = vld [vmem:[#allocation4 + $0x228] sm:$0xff]
        %v1883 = vld [vmem:[#allocation4 + $0x230] sm:$0xff]
        %v1884 = vld [vmem:[#allocation4 + $0x238] sm:$0xff]
        %v1885 = vld [vmem:[#allocation4 + $0x240] sm:$0xff]
        %v1886 = vld [vmem:[#allocation4 + $0x248] sm:$0xff]
        %v1887 = vld [vmem:[#allocation4 + $0x250] sm:$0xff]
        %v1888 = vld [vmem:[#allocation4 + $0x258] sm:$0xff]
        %v1889 = vld [vmem:[#allocation4 + $0x260] sm:$0xff]
        %v1890 = vld [vmem:[#allocation4 + $0x268] sm:$0xff]
        %v1891 = vld [vmem:[#allocation4 + $0x270] sm:$0xff]
        %v1892 = vld [vmem:[#allocation4 + $0x278] sm:$0xff]
        %v1893 = vld [vmem:[#allocation4 + $0x280] sm:$0xff]
        %v1894 = vld [vmem:[#allocation4 + $0x288] sm:$0xff]
        %v1895 = vld [vmem:[#allocation4 + $0x290] sm:$0xff]
        %v1896 = vld [vmem:[#allocation4 + $0x298] sm:$0xff]
        %v1897 = vld [vmem:[#allocation4 + $0x2a0] sm:$0xff]
        %v1898 = vld [vmem:[#allocation4 + $0x2a8] sm:$0xff]
        %v1899 = vld [vmem:[#allocation4 + $0x2b0] sm:$0xff]
        %v1900 = vld [vmem:[#allocation4 + $0x2b8] sm:$0xff]
        %v1901 = vld [vmem:[#allocation4 + $0x2c0] sm:$0xff]
        %v1902 = vld [vmem:[#allocation4 + $0x2c8] sm:$0xff]
        %v1903 = vld [vmem:[#allocation4 + $0x2d0] sm:$0xff]
        %v1904 = vld [vmem:[#allocation4 + $0x2d8] sm:$0xff]
        %v1905 = vld [vmem:[#allocation4 + $0x2e0] sm:$0xff]
        %v1906 = vld [vmem:[#allocation4 + $0x2e8] sm:$0xff]
        %v1907 = vld [vmem:[#allocation4 + $0x2f0] sm:$0xff]
        %v1908 = vld [vmem:[#allocation4 + $0x2f8] sm:$0xff]
        %v1913 = vunpack.c.l.b16 %v1420
        %v1914 = vunpack.c.l.b16 %v1421
        %v1915 = vunpack.c.l.b16 %v1503
        %v1916 = vunpack.c.l.b16 %v1504
        %s1917 = scalar_lea.vmem [#allocation4], 768
        %v1918 = vld [vmem:[%s1917] sm:$0xff]
        %v1919 = vld [vmem:[%s1917 + $0x8] sm:$0xff]
        %v1920 = vld [vmem:[%s1917 + $0x10] sm:$0xff]
        %v1921 = vld [vmem:[%s1917 + $0x18] sm:$0xff]
        %v1922 = vld [vmem:[%s1917 + $0x20] sm:$0xff]
        %v1923 = vld [vmem:[%s1917 + $0x28] sm:$0xff]
        %v1924 = vld [vmem:[%s1917 + $0x30] sm:$0xff]
        %v1925 = vld [vmem:[%s1917 + $0x38] sm:$0xff]
        %v1926 = vld [vmem:[%s1917 + $0x40] sm:$0xff]
        %v1927 = vld [vmem:[%s1917 + $0x48] sm:$0xff]
        %v1928 = vld [vmem:[%s1917 + $0x50] sm:$0xff]
        %v1929 = vld [vmem:[%s1917 + $0x58] sm:$0xff]
        %v1930 = vld [vmem:[%s1917 + $0x60] sm:$0xff]
        %v1931 = vld [vmem:[%s1917 + $0x68] sm:$0xff]
        %v1932 = vld [vmem:[%s1917 + $0x70] sm:$0xff]
        %v1933 = vld [vmem:[%s1917 + $0x78] sm:$0xff]
        %v1934 = vld [vmem:[%s1917 + $0x80] sm:$0xff]
        %v1935 = vld [vmem:[%s1917 + $0x88] sm:$0xff]
        %v1936 = vld [vmem:[%s1917 + $0x90] sm:$0xff]
        %v1937 = vld [vmem:[%s1917 + $0x98] sm:$0xff]
        %v1938 = vld [vmem:[%s1917 + $0xa0] sm:$0xff]
        %v1939 = vld [vmem:[%s1917 + $0xa8] sm:$0xff]
        %v1940 = vld [vmem:[%s1917 + $0xb0] sm:$0xff]
        %v1941 = vld [vmem:[%s1917 + $0xb8] sm:$0xff]
        %v1942 = vld [vmem:[%s1917 + $0xc0] sm:$0xff]
        %v1943 = vld [vmem:[%s1917 + $0xc8] sm:$0xff]
        %v1944 = vld [vmem:[%s1917 + $0xd0] sm:$0xff]
        %v1945 = vld [vmem:[%s1917 + $0xd8] sm:$0xff]
        %v1946 = vld [vmem:[%s1917 + $0xe0] sm:$0xff]
        %v1947 = vld [vmem:[%s1917 + $0xe8] sm:$0xff]
        %v1948 = vld [vmem:[%s1917 + $0xf0] sm:$0xff]
        %v1949 = vld [vmem:[%s1917 + $0xf8] sm:$0xff]
        %v1950 = vld [vmem:[%s1917 + $0x100] sm:$0xff]
        %v1951 = vld [vmem:[%s1917 + $0x108] sm:$0xff]
        %v1952 = vld [vmem:[%s1917 + $0x110] sm:$0xff]
        %v1953 = vld [vmem:[%s1917 + $0x118] sm:$0xff]
        %v1954 = vld [vmem:[%s1917 + $0x120] sm:$0xff]
        %v1955 = vld [vmem:[%s1917 + $0x128] sm:$0xff]
        %v1956 = vld [vmem:[%s1917 + $0x130] sm:$0xff]
        %v1957 = vld [vmem:[%s1917 + $0x138] sm:$0xff]
        %v1958 = vld [vmem:[%s1917 + $0x140] sm:$0xff]
        %v1959 = vld [vmem:[%s1917 + $0x148] sm:$0xff]
        %v1960 = vld [vmem:[%s1917 + $0x150] sm:$0xff]
        %v1961 = vld [vmem:[%s1917 + $0x158] sm:$0xff]
        %v1962 = vld [vmem:[%s1917 + $0x160] sm:$0xff]
        %v1963 = vld [vmem:[%s1917 + $0x168] sm:$0xff]
        %v1964 = vld [vmem:[%s1917 + $0x170] sm:$0xff]
        %v1965 = vld [vmem:[%s1917 + $0x178] sm:$0xff]
        %v1966 = vld [vmem:[%s1917 + $0x180] sm:$0xff]
        %v1967 = vld [vmem:[%s1917 + $0x188] sm:$0xff]
        %v1968 = vld [vmem:[%s1917 + $0x190] sm:$0xff]
        %v1969 = vld [vmem:[%s1917 + $0x198] sm:$0xff]
        %v1970 = vld [vmem:[%s1917 + $0x1a0] sm:$0xff]
        %v1971 = vld [vmem:[%s1917 + $0x1a8] sm:$0xff]
        %v1972 = vld [vmem:[%s1917 + $0x1b0] sm:$0xff]
        %v1973 = vld [vmem:[%s1917 + $0x1b8] sm:$0xff]
        %v1974 = vld [vmem:[%s1917 + $0x1c0] sm:$0xff]
        %v1975 = vld [vmem:[%s1917 + $0x1c8] sm:$0xff]
        %v1976 = vld [vmem:[%s1917 + $0x1d0] sm:$0xff]
        %v1977 = vld [vmem:[%s1917 + $0x1d8] sm:$0xff]
        %v1978 = vld [vmem:[%s1917 + $0x1e0] sm:$0xff]
        %v1979 = vld [vmem:[%s1917 + $0x1e8] sm:$0xff]
        %v1980 = vld [vmem:[%s1917 + $0x1f0] sm:$0xff]
        %v1981 = vld [vmem:[%s1917 + $0x1f8] sm:$0xff]
        %v1982 = vld [vmem:[%s1917 + $0x200] sm:$0xff]
        %v1983 = vld [vmem:[%s1917 + $0x208] sm:$0xff]
        %v1984 = vld [vmem:[%s1917 + $0x210] sm:$0xff]
        %v1985 = vld [vmem:[%s1917 + $0x218] sm:$0xff]
        %v1986 = vld [vmem:[%s1917 + $0x220] sm:$0xff]
        %v1987 = vld [vmem:[%s1917 + $0x228] sm:$0xff]
        %v1988 = vld [vmem:[%s1917 + $0x230] sm:$0xff]
        %v1989 = vld [vmem:[%s1917 + $0x238] sm:$0xff]
        %v1990 = vld [vmem:[%s1917 + $0x240] sm:$0xff]
        %v1991 = vld [vmem:[%s1917 + $0x248] sm:$0xff]
        %v1992 = vld [vmem:[%s1917 + $0x250] sm:$0xff]
        %v1993 = vld [vmem:[%s1917 + $0x258] sm:$0xff]
        %v1994 = vld [vmem:[%s1917 + $0x260] sm:$0xff]
        %v1995 = vld [vmem:[%s1917 + $0x268] sm:$0xff]
        %v1996 = vld [vmem:[%s1917 + $0x270] sm:$0xff]
        %v1997 = vld [vmem:[%s1917 + $0x278] sm:$0xff]
        %v1998 = vld [vmem:[%s1917 + $0x280] sm:$0xff]
        %v1999 = vld [vmem:[%s1917 + $0x288] sm:$0xff]
        %v2000 = vld [vmem:[%s1917 + $0x290] sm:$0xff]
        %v2001 = vld [vmem:[%s1917 + $0x298] sm:$0xff]
        %v2002 = vld [vmem:[%s1917 + $0x2a0] sm:$0xff]
        %v2003 = vld [vmem:[%s1917 + $0x2a8] sm:$0xff]
        %v2004 = vld [vmem:[%s1917 + $0x2b0] sm:$0xff]
        %v2005 = vld [vmem:[%s1917 + $0x2b8] sm:$0xff]
        %v2006 = vld [vmem:[%s1917 + $0x2c0] sm:$0xff]
        %v2007 = vld [vmem:[%s1917 + $0x2c8] sm:$0xff]
        %v2008 = vld [vmem:[%s1917 + $0x2d0] sm:$0xff]
        %v2009 = vld [vmem:[%s1917 + $0x2d8] sm:$0xff]
        %v2010 = vld [vmem:[%s1917 + $0x2e0] sm:$0xff]
        %v2011 = vld [vmem:[%s1917 + $0x2e8] sm:$0xff]
        %v2012 = vld [vmem:[%s1917 + $0x2f0] sm:$0xff]
        %v2013 = vld [vmem:[%s1917 + $0x2f8] sm:$0xff]
        %v2014 = vpack.c.b16 %v1789, %v1785
        %v2015 = vpack.c.b16 %v1790, %v1786
        %v2016 = vpack.c.b16 %v1205, %v1203
        %v2017 = vpack.c.b16 %v1206, %v1204
        %v2018 = vpack.c.b16 %v1791, %v1787
        %v2019 = vpack.c.b16 %v1792, %v1788
        %v2020 = vpack.c.b16 %v1797, %v1793
        %v2021 = vpack.c.b16 %v1798, %v1794
        %v2022 = vpack.c.b16 %v1209, %v1207
        %v2023 = vpack.c.b16 %v1210, %v1208
        %v2024 = vpack.c.b16 %v1799, %v1795
        %v2025 = vpack.c.b16 %v1800, %v1796
        %v2026 = vpack.c.b16 %v1805, %v1801
        %v2027 = vpack.c.b16 %v1806, %v1802
        %v2028 = vpack.c.b16 %v1213, %v1211
        %v2029 = vpack.c.b16 %v1214, %v1212
        %v2030 = vpack.c.b16 %v1807, %v1803
        %v2031 = vpack.c.b16 %v1808, %v1804
        %v2032 = vpack.c.b16 %v1913, %v1809
        %v2033 = vpack.c.b16 %v1914, %v1810
        %v2034 = vpack.c.b16 %v1217, %v1215
        %v2035 = vpack.c.b16 %v1218, %v1216
        %v2036 = vpack.c.b16 %v1915, %v1811
        %v2037 = vpack.c.b16 %v1916, %v1812
        %v2158 = vunpack.c.l.b16 %v1918
        %v2159 = vunpack.c.h.b16 %v1918
        %v2160 = vunpack.c.l.b16 %v1919
        %v2161 = vunpack.c.h.b16 %v1919
        %v2162 = vunpack.c.l.b16 %v1920
        %v2163 = vunpack.c.h.b16 %v1920
        %v2164 = vunpack.c.l.b16 %v1921
        %v2165 = vunpack.c.h.b16 %v1921
        %v2166 = vunpack.c.l.b16 %v1922
        %v2167 = vunpack.c.h.b16 %v1922
        %v2168 = vunpack.c.l.b16 %v1923
        %v2169 = vunpack.c.h.b16 %v1923
        %v2170 = vunpack.c.l.b16 %v1924
        %v2171 = vunpack.c.h.b16 %v1924
        %v2172 = vunpack.c.l.b16 %v1925
        %v2173 = vunpack.c.h.b16 %v1925
        %v2174 = vunpack.c.l.b16 %v1926
        %v2175 = vunpack.c.h.b16 %v1926
        %v2176 = vunpack.c.l.b16 %v1927
        %v2177 = vunpack.c.h.b16 %v1927
        %v2178 = vunpack.c.l.b16 %v1928
        %v2179 = vunpack.c.h.b16 %v1928
        %v2180 = vunpack.c.l.b16 %v1929
        %v2181 = vunpack.c.h.b16 %v1929
        %v2182 = vunpack.c.l.b16 %v1930
        %v2183 = vunpack.c.h.b16 %v1930
        %v2184 = vunpack.c.l.b16 %v1931
        %v2185 = vunpack.c.h.b16 %v1931
        %v2186 = vunpack.c.l.b16 %v1932
        %v2187 = vunpack.c.h.b16 %v1932
        %v2188 = vunpack.c.l.b16 %v1933
        %v2189 = vunpack.c.h.b16 %v1933
        %v2190 = vunpack.c.l.b16 %v1934
        %v2191 = vunpack.c.h.b16 %v1934
        %v2192 = vunpack.c.l.b16 %v1935
        %v2193 = vunpack.c.h.b16 %v1935
        %v2194 = vunpack.c.l.b16 %v1936
        %v2195 = vunpack.c.h.b16 %v1936
        %v2196 = vunpack.c.l.b16 %v1937
        %v2197 = vunpack.c.h.b16 %v1937
        %v2198 = vunpack.c.l.b16 %v1938
        %v2199 = vunpack.c.h.b16 %v1938
        %v2200 = vunpack.c.l.b16 %v1939
        %v2201 = vunpack.c.h.b16 %v1939
        %v2202 = vunpack.c.l.b16 %v1940
        %v2203 = vunpack.c.h.b16 %v1940
        %v2204 = vunpack.c.l.b16 %v1941
        %v2205 = vunpack.c.h.b16 %v1941
        %v2206 = vunpack.c.l.b16 %v1942
        %v2207 = vunpack.c.h.b16 %v1942
        %v2208 = vunpack.c.l.b16 %v1943
        %v2209 = vunpack.c.h.b16 %v1943
        %v2210 = vunpack.c.l.b16 %v1944
        %v2211 = vunpack.c.h.b16 %v1944
        %v2212 = vunpack.c.l.b16 %v1945
        %v2213 = vunpack.c.h.b16 %v1945
        %v2214 = vunpack.c.l.b16 %v1946
        %v2215 = vunpack.c.h.b16 %v1946
        %v2216 = vunpack.c.l.b16 %v1947
        %v2217 = vunpack.c.h.b16 %v1947
        %v2218 = vunpack.c.l.b16 %v1948
        %v2219 = vunpack.c.h.b16 %v1948
        %v2220 = vunpack.c.l.b16 %v1949
        %v2221 = vunpack.c.h.b16 %v1949
        %v2222 = vunpack.c.l.b16 %v1950
        %v2223 = vunpack.c.h.b16 %v1950
        %v2224 = vunpack.c.l.b16 %v1951
        %v2225 = vunpack.c.h.b16 %v1951
        %v2226 = vunpack.c.l.b16 %v1952
        %v2227 = vunpack.c.h.b16 %v1952
        %v2228 = vunpack.c.l.b16 %v1953
        %v2229 = vunpack.c.h.b16 %v1953
        %v2230 = vunpack.c.l.b16 %v1954
        %v2231 = vunpack.c.h.b16 %v1954
        %v2232 = vunpack.c.l.b16 %v1955
        %v2233 = vunpack.c.h.b16 %v1955
        %v2234 = vunpack.c.l.b16 %v1956
        %v2235 = vunpack.c.h.b16 %v1956
        %v2236 = vunpack.c.l.b16 %v1957
        %v2237 = vunpack.c.h.b16 %v1957
        %v2238 = vunpack.c.l.b16 %v1958
        %v2239 = vunpack.c.h.b16 %v1958
        %v2240 = vunpack.c.l.b16 %v1959
        %v2241 = vunpack.c.h.b16 %v1959
        %v2242 = vunpack.c.l.b16 %v1960
        %v2243 = vunpack.c.h.b16 %v1960
        %v2244 = vunpack.c.l.b16 %v1961
        %v2245 = vunpack.c.h.b16 %v1961
        %v2246 = vunpack.c.l.b16 %v1962
        %v2247 = vunpack.c.h.b16 %v1962
        %v2248 = vunpack.c.l.b16 %v1963
        %v2249 = vunpack.c.h.b16 %v1963
        %v2250 = vunpack.c.l.b16 %v1964
        %v2251 = vunpack.c.h.b16 %v1964
        %v2252 = vunpack.c.l.b16 %v1965
        %v2253 = vunpack.c.h.b16 %v1965
        %v2254 = vunpack.c.l.b16 %v1966
        %v2255 = vunpack.c.h.b16 %v1966
        %v2256 = vunpack.c.l.b16 %v1967
        %v2257 = vunpack.c.h.b16 %v1967
        %v2258 = vunpack.c.l.b16 %v1968
        %v2259 = vunpack.c.h.b16 %v1968
        %v2260 = vunpack.c.l.b16 %v1969
        %v2261 = vunpack.c.h.b16 %v1969
        %v2262 = vunpack.c.l.b16 %v1970
        %v2263 = vunpack.c.h.b16 %v1970
        %v2264 = vunpack.c.l.b16 %v1971
        %v2265 = vunpack.c.h.b16 %v1971
        %v2266 = vunpack.c.l.b16 %v1972
        %v2267 = vunpack.c.h.b16 %v1972
        %v2268 = vunpack.c.l.b16 %v1973
        %v2269 = vunpack.c.h.b16 %v1973
        %v2270 = vunpack.c.l.b16 %v1974
        %v2271 = vunpack.c.h.b16 %v1974
        %v2272 = vunpack.c.l.b16 %v1975
        %v2273 = vunpack.c.h.b16 %v1975
        %v2274 = vunpack.c.l.b16 %v1976
        %v2275 = vunpack.c.h.b16 %v1976
        %v2276 = vunpack.c.l.b16 %v1977
        %v2277 = vunpack.c.h.b16 %v1977
        %v2278 = vunpack.c.l.b16 %v1978
        %v2279 = vunpack.c.h.b16 %v1978
        %v2280 = vunpack.c.l.b16 %v1979
        %v2281 = vunpack.c.h.b16 %v1979
        %v2282 = vunpack.c.l.b16 %v1980
        %v2283 = vunpack.c.h.b16 %v1980
        %v2284 = vunpack.c.l.b16 %v1981
        %v2285 = vunpack.c.h.b16 %v1981
        %v2286 = vunpack.c.l.b16 %v1982
        %v2287 = vunpack.c.h.b16 %v1982
        %v2288 = vunpack.c.l.b16 %v1983
        %v2289 = vunpack.c.h.b16 %v1983
        %v2290 = vunpack.c.l.b16 %v1984
        %v2291 = vunpack.c.h.b16 %v1984
        %v2292 = vunpack.c.l.b16 %v1985
        %v2293 = vunpack.c.h.b16 %v1985
        %v2294 = vunpack.c.l.b16 %v1986
        %v2295 = vunpack.c.h.b16 %v1986
        %v2296 = vunpack.c.l.b16 %v1987
        %v2297 = vunpack.c.h.b16 %v1987
        %v2298 = vunpack.c.l.b16 %v1988
        %v2299 = vunpack.c.h.b16 %v1988
        %v2300 = vunpack.c.l.b16 %v1989
        %v2301 = vunpack.c.h.b16 %v1989
        %v2302 = vunpack.c.l.b16 %v1990
        %v2303 = vunpack.c.h.b16 %v1990
        %v2304 = vunpack.c.l.b16 %v1991
        %v2305 = vunpack.c.h.b16 %v1991
        %v2306 = vunpack.c.l.b16 %v1992
        %v2307 = vunpack.c.h.b16 %v1992
        %v2308 = vunpack.c.l.b16 %v1993
        %v2309 = vunpack.c.h.b16 %v1993
        %v2310 = vunpack.c.l.b16 %v1994
        %v2311 = vunpack.c.h.b16 %v1994
        %v2312 = vunpack.c.l.b16 %v1995
        %v2313 = vunpack.c.h.b16 %v1995
        %v2314 = vunpack.c.l.b16 %v1996
        %v2315 = vunpack.c.h.b16 %v1996
        %v2316 = vunpack.c.l.b16 %v1997
        %v2317 = vunpack.c.h.b16 %v1997
        %v2318 = vunpack.c.l.b16 %v1998
        %v2319 = vunpack.c.h.b16 %v1998
        %v2320 = vunpack.c.l.b16 %v1999
        %v2321 = vunpack.c.h.b16 %v1999
        %v2322 = vunpack.c.l.b16 %v2000
        %v2323 = vunpack.c.h.b16 %v2000
        %v2324 = vunpack.c.l.b16 %v2001
        %v2325 = vunpack.c.h.b16 %v2001
        %v2326 = vunpack.c.l.b16 %v2002
        %v2327 = vunpack.c.h.b16 %v2002
        %v2328 = vunpack.c.l.b16 %v2003
        %v2329 = vunpack.c.h.b16 %v2003
        %v2330 = vunpack.c.l.b16 %v2004
        %v2331 = vunpack.c.h.b16 %v2004
        %v2332 = vunpack.c.l.b16 %v2005
        %v2333 = vunpack.c.h.b16 %v2005
        %v2334 = vunpack.c.l.b16 %v2006
        %v2335 = vunpack.c.h.b16 %v2006
        %v2336 = vunpack.c.l.b16 %v2007
        %v2337 = vunpack.c.h.b16 %v2007
        %v2338 = vunpack.c.l.b16 %v2008
        %v2339 = vunpack.c.h.b16 %v2008
        %v2340 = vunpack.c.l.b16 %v2009
        %v2341 = vunpack.c.h.b16 %v2009
        %v2342 = vunpack.c.l.b16 %v2010
        %v2343 = vunpack.c.h.b16 %v2010
        %v2344 = vunpack.c.l.b16 %v2011
        %v2345 = vunpack.c.h.b16 %v2011
        %v2346 = vunpack.c.l.b16 %v2012
        %v2347 = vunpack.c.h.b16 %v2012
        %v2348 = vunpack.c.l.b16 %v2013
        %v2349 = vunpack.c.h.b16 %v2013
        %v2350 = vpack.c.b16 %v2160, %v2158
        %v2351 = vpack.c.b16 %v2161, %v2159
        %v2352 = vpack.c.b16 %v2164, %v2162
        %v2353 = vpack.c.b16 %v2165, %v2163
        %v2354 = vpack.c.b16 %v2168, %v2166
        %v2355 = vpack.c.b16 %v2169, %v2167
        %v2356 = vpack.c.b16 %v2172, %v2170
        %v2357 = vpack.c.b16 %v2173, %v2171
        %v2358 = vpack.c.b16 %v2176, %v2174
        %v2359 = vpack.c.b16 %v2177, %v2175
        %v2360 = vpack.c.b16 %v2180, %v2178
        %v2361 = vpack.c.b16 %v2181, %v2179
        %v2362 = vpack.c.b16 %v2184, %v2182
        %v2363 = vpack.c.b16 %v2185, %v2183
        %v2364 = vpack.c.b16 %v2188, %v2186
        %v2365 = vpack.c.b16 %v2189, %v2187
        %v2366 = vpack.c.b16 %v2192, %v2190
        %v2367 = vpack.c.b16 %v2193, %v2191
        %v2368 = vpack.c.b16 %v2196, %v2194
        %v2369 = vpack.c.b16 %v2197, %v2195
        %v2370 = vpack.c.b16 %v2200, %v2198
        %v2371 = vpack.c.b16 %v2201, %v2199
        %v2372 = vpack.c.b16 %v2204, %v2202
        %v2373 = vpack.c.b16 %v2205, %v2203
        %v2374 = vpack.c.b16 %v2208, %v2206
        %v2375 = vpack.c.b16 %v2209, %v2207
        %v2376 = vpack.c.b16 %v2212, %v2210
        %v2377 = vpack.c.b16 %v2213, %v2211
        %v2378 = vpack.c.b16 %v2216, %v2214
        %v2379 = vpack.c.b16 %v2217, %v2215
        %v2380 = vpack.c.b16 %v2220, %v2218
        %v2381 = vpack.c.b16 %v2221, %v2219
        %v2382 = vpack.c.b16 %v2224, %v2222
        %v2383 = vpack.c.b16 %v2225, %v2223
        %v2384 = vpack.c.b16 %v2228, %v2226
        %v2385 = vpack.c.b16 %v2229, %v2227
        %v2386 = vpack.c.b16 %v2232, %v2230
        %v2387 = vpack.c.b16 %v2233, %v2231
        %v2388 = vpack.c.b16 %v2236, %v2234
        %v2389 = vpack.c.b16 %v2237, %v2235
        %v2390 = vpack.c.b16 %v2240, %v2238
        %v2391 = vpack.c.b16 %v2241, %v2239
        %v2392 = vpack.c.b16 %v2244, %v2242
        %v2393 = vpack.c.b16 %v2245, %v2243
        %v2394 = vpack.c.b16 %v2248, %v2246
        %v2395 = vpack.c.b16 %v2249, %v2247
        %v2396 = vpack.c.b16 %v2252, %v2250
        %v2397 = vpack.c.b16 %v2253, %v2251
        %v2398 = vpack.c.b16 %v2256, %v2254
        %v2399 = vpack.c.b16 %v2257, %v2255
        %v2400 = vpack.c.b16 %v2260, %v2258
        %v2401 = vpack.c.b16 %v2261, %v2259
        %v2402 = vpack.c.b16 %v2264, %v2262
        %v2403 = vpack.c.b16 %v2265, %v2263
        %v2404 = vpack.c.b16 %v2268, %v2266
        %v2405 = vpack.c.b16 %v2269, %v2267
        %v2406 = vpack.c.b16 %v2272, %v2270
        %v2407 = vpack.c.b16 %v2273, %v2271
        %v2408 = vpack.c.b16 %v2276, %v2274
        %v2409 = vpack.c.b16 %v2277, %v2275
        %v2410 = vpack.c.b16 %v2280, %v2278
        %v2411 = vpack.c.b16 %v2281, %v2279
        %v2412 = vpack.c.b16 %v2284, %v2282
        %v2413 = vpack.c.b16 %v2285, %v2283
        %v2414 = vpack.c.b16 %v2288, %v2286
        %v2415 = vpack.c.b16 %v2289, %v2287
        %v2416 = vpack.c.b16 %v2292, %v2290
        %v2417 = vpack.c.b16 %v2293, %v2291
        %v2418 = vpack.c.b16 %v2296, %v2294
        %v2419 = vpack.c.b16 %v2297, %v2295
        %v2420 = vpack.c.b16 %v2300, %v2298
        %v2421 = vpack.c.b16 %v2301, %v2299
        %v2422 = vpack.c.b16 %v2304, %v2302
        %v2423 = vpack.c.b16 %v2305, %v2303
        %v2424 = vpack.c.b16 %v2308, %v2306
        %v2425 = vpack.c.b16 %v2309, %v2307
        %v2426 = vpack.c.b16 %v2312, %v2310
        %v2427 = vpack.c.b16 %v2313, %v2311
        %v2428 = vpack.c.b16 %v2316, %v2314
        %v2429 = vpack.c.b16 %v2317, %v2315
        %v2430 = vpack.c.b16 %v2320, %v2318
        %v2431 = vpack.c.b16 %v2321, %v2319
        %v2432 = vpack.c.b16 %v2324, %v2322
        %v2433 = vpack.c.b16 %v2325, %v2323
        %v2434 = vpack.c.b16 %v2328, %v2326
        %v2435 = vpack.c.b16 %v2329, %v2327
        %v2436 = vpack.c.b16 %v2332, %v2330
        %v2437 = vpack.c.b16 %v2333, %v2331
        %v2438 = vpack.c.b16 %v2336, %v2334
        %v2439 = vpack.c.b16 %v2337, %v2335
        %v2440 = vpack.c.b16 %v2340, %v2338
        %v2441 = vpack.c.b16 %v2341, %v2339
        %v2442 = vpack.c.b16 %v2344, %v2342
        %v2443 = vpack.c.b16 %v2345, %v2343
        %v2444 = vpack.c.b16 %v2348, %v2346
        %v2445 = vpack.c.b16 %v2349, %v2347
        %2542 = vmatprep.subr.bf16.mxu0 %v2351
        %2543 = vmatpush1.bf16.msra.mxu0 %v2350
        %2544 = vmatprep.subr.bf16.mxu0 %v2353
        %2545 = vmatpush1.bf16.msra.mxu0 %v2352
        %2546 = vmatprep.subr.bf16.mxu0 %v2355
        %2547 = vmatpush1.bf16.msra.mxu0 %v2354
        %2548 = vmatprep.subr.bf16.mxu0 %v2357
        %2549 = vmatpush1.bf16.msra.mxu0 %v2356
        %2550 = vmatprep.subr.bf16.mxu0 %v2359
        %2551 = vmatpush1.bf16.msra.mxu0 %v2358
        %2552 = vmatprep.subr.bf16.mxu0 %v2361
        %2553 = vmatpush1.bf16.msra.mxu0 %v2360
        %2554 = vmatprep.subr.bf16.mxu0 %v2363
        %2555 = vmatpush1.bf16.msra.mxu0 %v2362
        %2556 = vmatprep.subr.bf16.mxu0 %v2365
        %2557 = vmatpush1.bf16.msra.mxu0 %v2364
        %2558 = vmatprep.subr.bf16.mxu0 %v2367
        %2559 = vmatpush1.bf16.msra.mxu0 %v2366
        %2560 = vmatprep.subr.bf16.mxu0 %v2369
        %2561 = vmatpush1.bf16.msra.mxu0 %v2368
        %2562 = vmatprep.subr.bf16.mxu0 %v2371
        %2563 = vmatpush1.bf16.msra.mxu0 %v2370
        %2564 = vmatprep.subr.bf16.mxu0 %v2373
        %2565 = vmatpush1.bf16.msra.mxu0 %v2372
        %2566 = vmatprep.subr.bf16.mxu0 %v2375
        %2567 = vmatpush1.bf16.msra.mxu0 %v2374
        %2568 = vmatprep.subr.bf16.mxu0 %v2377
        %2569 = vmatpush1.bf16.msra.mxu0 %v2376
        %2570 = vmatprep.subr.bf16.mxu0 %v2379
        %2571 = vmatpush1.bf16.msra.mxu0 %v2378
        %2572 = vmatprep.subr.bf16.mxu0 %v2381
        %2573 = vmatpush1.bf16.msra.mxu0 %v2380
        %2574 = vmatprep.mubr.bf16.mxu0 %v2015
        %2575 = vmatmul.mubr.bf16.gmra.mrb[0].mxu0 %v2014
        %v2576 = vpop.f32.mrb[0].mxu0
        %v2577 = vadd.f32 0.0, %v2576
        %v2578 = vpop.f32.mrb[0].mxu0
        %v2579 = vadd.f32 0.0, %v2578
        %v2580 = vpop.f32.mrb[0].mxu0
        %v2581 = vadd.f32 0.0, %v2580
        %v2582 = vpop.f32.mrb[0].mxu0
        %v2583 = vadd.f32 0.0, %v2582
        %2584 = vmatprep.mubr.bf16.mxu0 %v2021
        %2585 = vmatmul.mubr.bf16.gmra.mrb[0].mxu0 %v2020
        %v2586 = vpop.f32.mrb[0].mxu0
        %v2587 = vadd.f32 0.0, %v2586
        %v2588 = vpop.f32.mrb[0].mxu0
        %v2589 = vadd.f32 0.0, %v2588
        %v2590 = vpop.f32.mrb[0].mxu0
        %v2591 = vadd.f32 0.0, %v2590
        %v2592 = vpop.f32.mrb[0].mxu0
        %v2593 = vadd.f32 0.0, %v2592
        %2594 = vmatprep.mubr.bf16.mxu0 %v2027
        %2595 = vmatmul.mubr.bf16.gmra.mrb[0].mxu0 %v2026
        %v2596 = vpop.f32.mrb[0].mxu0
        %v2597 = vadd.f32 0.0, %v2596
        %v2598 = vpop.f32.mrb[0].mxu0
        %v2599 = vadd.f32 0.0, %v2598
        %v2600 = vpop.f32.mrb[0].mxu0
        %v2601 = vadd.f32 0.0, %v2600
        %v2602 = vpop.f32.mrb[0].mxu0
        %v2603 = vadd.f32 0.0, %v2602
        %2604 = vmatprep.mubr.bf16.mxu0 %v2033
        %2605 = vmatmul.mubr.bf16.gmra.mrb[0].mxu0 %v2032
        %v2606 = vpop.f32.mrb[0].mxu0
        %v2607 = vadd.f32 0.0, %v2606
        %v2608 = vpop.f32.mrb[0].mxu0
        %v2609 = vadd.f32 0.0, %v2608
        %v2610 = vpop.f32.mrb[0].mxu0
        %v2611 = vadd.f32 0.0, %v2610
        %v2612 = vpop.f32.mrb[0].mxu0
        %v2613 = vadd.f32 0.0, %v2612
        %2614 = vdwg.mxu0
        %2615 = vmatprep.subr.bf16.mxu0 %v2383
        %2616 = vmatpush1.bf16.msra.mxu0 %v2382
        %2617 = vmatprep.subr.bf16.mxu0 %v2385
        %2618 = vmatpush1.bf16.msra.mxu0 %v2384
        %2619 = vmatprep.subr.bf16.mxu0 %v2387
        %2620 = vmatpush1.bf16.msra.mxu0 %v2386
        %2621 = vmatprep.subr.bf16.mxu0 %v2389
        %2622 = vmatpush1.bf16.msra.mxu0 %v2388
        %2623 = vmatprep.subr.bf16.mxu0 %v2391
        %2624 = vmatpush1.bf16.msra.mxu0 %v2390
        %2625 = vmatprep.subr.bf16.mxu0 %v2393
        %2626 = vmatpush1.bf16.msra.mxu0 %v2392
        %2627 = vmatprep.subr.bf16.mxu0 %v2395
        %2628 = vmatpush1.bf16.msra.mxu0 %v2394
        %2629 = vmatprep.subr.bf16.mxu0 %v2397
        %2630 = vmatpush1.bf16.msra.mxu0 %v2396
        %2631 = vmatprep.subr.bf16.mxu0 %v2399
        %2632 = vmatpush1.bf16.msra.mxu0 %v2398
        %2633 = vmatprep.subr.bf16.mxu0 %v2401
        %2634 = vmatpush1.bf16.msra.mxu0 %v2400
        %2635 = vmatprep.subr.bf16.mxu0 %v2403
        %2636 = vmatpush1.bf16.msra.mxu0 %v2402
        %2637 = vmatprep.subr.bf16.mxu0 %v2405
        %2638 = vmatpush1.bf16.msra.mxu0 %v2404
        %2639 = vmatprep.subr.bf16.mxu0 %v2407
        %2640 = vmatpush1.bf16.msra.mxu0 %v2406
        %2641 = vmatprep.subr.bf16.mxu0 %v2409
        %2642 = vmatpush1.bf16.msra.mxu0 %v2408
        %2643 = vmatprep.subr.bf16.mxu0 %v2411
        %2644 = vmatpush1.bf16.msra.mxu0 %v2410
        %2645 = vmatprep.subr.bf16.mxu0 %v2413
        %2646 = vmatpush1.bf16.msra.mxu0 %v2412
        %2647 = vmatprep.mubr.bf16.mxu0 %v2017
        %2648 = vmatmul.mubr.bf16.gmra.mrb[0].mxu0 %v2016
        %v2649 = vpop.f32.mrb[0].mxu0
        %v2650 = vadd.f32 %v2577, %v2649
        %v2651 = vpop.f32.mrb[0].mxu0
        %v2652 = vadd.f32 %v2579, %v2651
        %v2653 = vpop.f32.mrb[0].mxu0
        %v2654 = vadd.f32 %v2581, %v2653
        %v2655 = vpop.f32.mrb[0].mxu0
        %v2656 = vadd.f32 %v2583, %v2655
        %2657 = vmatprep.mubr.bf16.mxu0 %v2023
        %2658 = vmatmul.mubr.bf16.gmra.mrb[0].mxu0 %v2022
        %v2659 = vpop.f32.mrb[0].mxu0
        %v2660 = vadd.f32 %v2587, %v2659
        %v2661 = vpop.f32.mrb[0].mxu0
        %v2662 = vadd.f32 %v2589, %v2661
        %v2663 = vpop.f32.mrb[0].mxu0
        %v2664 = vadd.f32 %v2591, %v2663
        %v2665 = vpop.f32.mrb[0].mxu0
        %v2666 = vadd.f32 %v2593, %v2665
        %2667 = vmatprep.mubr.bf16.mxu0 %v2029
        %2668 = vmatmul.mubr.bf16.gmra.mrb[0].mxu0 %v2028
        %v2669 = vpop.f32.mrb[0].mxu0
        %v2670 = vadd.f32 %v2597, %v2669
        %v2671 = vpop.f32.mrb[0].mxu0
        %v2672 = vadd.f32 %v2599, %v2671
        %v2673 = vpop.f32.mrb[0].mxu0
        %v2674 = vadd.f32 %v2601, %v2673
        %v2675 = vpop.f32.mrb[0].mxu0
        %v2676 = vadd.f32 %v2603, %v2675
        %2677 = vmatprep.mubr.bf16.mxu0 %v2035
        %2678 = vmatmul.mubr.bf16.gmra.mrb[0].mxu0 %v2034
        %v2679 = vpop.f32.mrb[0].mxu0
        %v2680 = vadd.f32 %v2607, %v2679
        %v2681 = vpop.f32.mrb[0].mxu0
        %v2682 = vadd.f32 %v2609, %v2681
        %v2683 = vpop.f32.mrb[0].mxu0
        %v2684 = vadd.f32 %v2611, %v2683
        %v2685 = vpop.f32.mrb[0].mxu0
        %v2686 = vadd.f32 %v2613, %v2685
        %2687 = vdwg.mxu0
        %2688 = vmatprep.subr.bf16.mxu0 %v2415
        %2689 = vmatpush1.bf16.msra.mxu0 %v2414
        %2690 = vmatprep.subr.bf16.mxu0 %v2417
        %2691 = vmatpush1.bf16.msra.mxu0 %v2416
        %2692 = vmatprep.subr.bf16.mxu0 %v2419
        %2693 = vmatpush1.bf16.msra.mxu0 %v2418
        %2694 = vmatprep.subr.bf16.mxu0 %v2421
        %2695 = vmatpush1.bf16.msra.mxu0 %v2420
        %2696 = vmatprep.subr.bf16.mxu0 %v2423
        %2697 = vmatpush1.bf16.msra.mxu0 %v2422
        %2698 = vmatprep.subr.bf16.mxu0 %v2425
        %2699 = vmatpush1.bf16.msra.mxu0 %v2424
        %2700 = vmatprep.subr.bf16.mxu0 %v2427
        %2701 = vmatpush1.bf16.msra.mxu0 %v2426
        %2702 = vmatprep.subr.bf16.mxu0 %v2429
        %2703 = vmatpush1.bf16.msra.mxu0 %v2428
        %2704 = vmatprep.subr.bf16.mxu0 %v2431
        %2705 = vmatpush1.bf16.msra.mxu0 %v2430
        %2706 = vmatprep.subr.bf16.mxu0 %v2433
        %2707 = vmatpush1.bf16.msra.mxu0 %v2432
        %2708 = vmatprep.subr.bf16.mxu0 %v2435
        %2709 = vmatpush1.bf16.msra.mxu0 %v2434
        %2710 = vmatprep.subr.bf16.mxu0 %v2437
        %2711 = vmatpush1.bf16.msra.mxu0 %v2436
        %2712 = vmatprep.subr.bf16.mxu0 %v2439
        %2713 = vmatpush1.bf16.msra.mxu0 %v2438
        %2714 = vmatprep.subr.bf16.mxu0 %v2441
        %2715 = vmatpush1.bf16.msra.mxu0 %v2440
        %2716 = vmatprep.subr.bf16.mxu0 %v2443
        %2717 = vmatpush1.bf16.msra.mxu0 %v2442
        %2718 = vmatprep.subr.bf16.mxu0 %v2445
        %2719 = vmatpush1.bf16.msra.mxu0 %v2444
        %2720 = vmatprep.mubr.bf16.mxu0 %v2019
        %2721 = vmatmul.mubr.bf16.gmra.mrb[0].mxu0 %v2018
        %v2722 = vpop.f32.mrb[0].mxu0
        %v2723 = vadd.f32 %v2650, %v2722
        %v2724 = vpop.f32.mrb[0].mxu0
        %v2725 = vadd.f32 %v2652, %v2724
        %v2726 = vpop.f32.mrb[0].mxu0
        %v2727 = vadd.f32 %v2654, %v2726
        %v2728 = vpop.f32.mrb[0].mxu0
        %v2729 = vadd.f32 %v2656, %v2728
        %2730 = vmatprep.mubr.bf16.mxu0 %v2025
        %2731 = vmatmul.mubr.bf16.gmra.mrb[0].mxu0 %v2024
        %v2732 = vpop.f32.mrb[0].mxu0
        %v2733 = vadd.f32 %v2660, %v2732
        %v2734 = vpop.f32.mrb[0].mxu0
        %v2735 = vadd.f32 %v2662, %v2734
        %v2736 = vpop.f32.mrb[0].mxu0
        %v2737 = vadd.f32 %v2664, %v2736
        %v2738 = vpop.f32.mrb[0].mxu0
        %v2739 = vadd.f32 %v2666, %v2738
        %2740 = vmatprep.mubr.bf16.mxu0 %v2031
        %2741 = vmatmul.mubr.bf16.gmra.mrb[0].mxu0 %v2030
        %v2742 = vpop.f32.mrb[0].mxu0
        %v2743 = vadd.f32 %v2670, %v2742
        %v2744 = vpop.f32.mrb[0].mxu0
        %v2745 = vadd.f32 %v2672, %v2744
        %v2746 = vpop.f32.mrb[0].mxu0
        %v2747 = vadd.f32 %v2674, %v2746
        %v2748 = vpop.f32.mrb[0].mxu0
        %v2749 = vadd.f32 %v2676, %v2748
        %2750 = vmatprep.mubr.bf16.mxu0 %v2037
        %2751 = vmatmul.mubr.bf16.gmra.mrb[0].mxu0 %v2036
        %v2752 = vpop.f32.mrb[0].mxu0
        %v2753 = vadd.f32 %v2680, %v2752
        %v2754 = vpop.f32.mrb[0].mxu0
        %v2755 = vadd.f32 %v2682, %v2754
        %v2756 = vpop.f32.mrb[0].mxu0
        %v2757 = vadd.f32 %v2684, %v2756
        %v2758 = vpop.f32.mrb[0].mxu0
        %v2759 = vadd.f32 %v2686, %v2758
        %2760 = vdwg.mxu0
        %v2761 = vpack.c.b16 %v1785, %v1781
        %v2762 = vpack.c.b16 %v1786, %v1782
        %v2763 = vpack.c.b16 %v1203, %v1201
        %v2764 = vpack.c.b16 %v1204, %v1202
        %v2765 = vpack.c.b16 %v1787, %v1783
        %v2766 = vpack.c.b16 %v1788, %v1784
        %v2767 = vpack.c.b16 %v1793, %v1789
        %v2768 = vpack.c.b16 %v1794, %v1790
        %v2769 = vpack.c.b16 %v1207, %v1205
        %v2770 = vpack.c.b16 %v1208, %v1206
        %v2771 = vpack.c.b16 %v1795, %v1791
        %v2772 = vpack.c.b16 %v1796, %v1792
        %v2773 = vpack.c.b16 %v1801, %v1797
        %v2774 = vpack.c.b16 %v1802, %v1798
        %v2775 = vpack.c.b16 %v1211, %v1209
        %v2776 = vpack.c.b16 %v1212, %v1210
        %v2777 = vpack.c.b16 %v1803, %v1799
        %v2778 = vpack.c.b16 %v1804, %v1800
        %v2779 = vpack.c.b16 %v1809, %v1805
        %v2780 = vpack.c.b16 %v1810, %v1806
        %v2781 = vpack.c.b16 %v1215, %v1213
        %v2782 = vpack.c.b16 %v1216, %v1214
        %v2783 = vpack.c.b16 %v1811, %v1807
        %v2784 = vpack.c.b16 %v1812, %v1808
        %v2905 = vunpack.c.l.b16 %v1813
        %v2906 = vunpack.c.h.b16 %v1813
        %v2907 = vunpack.c.l.b16 %v1814
        %v2908 = vunpack.c.h.b16 %v1814
        %v2909 = vunpack.c.l.b16 %v1815
        %v2910 = vunpack.c.h.b16 %v1815
        %v2911 = vunpack.c.l.b16 %v1816
        %v2912 = vunpack.c.h.b16 %v1816
        %v2913 = vunpack.c.l.b16 %v1817
        %v2914 = vunpack.c.h.b16 %v1817
        %v2915 = vunpack.c.l.b16 %v1818
        %v2916 = vunpack.c.h.b16 %v1818
        %v2917 = vunpack.c.l.b16 %v1819
        %v2918 = vunpack.c.h.b16 %v1819
        %v2919 = vunpack.c.l.b16 %v1820
        %v2920 = vunpack.c.h.b16 %v1820
        %v2921 = vunpack.c.l.b16 %v1821
        %v2922 = vunpack.c.h.b16 %v1821
        %v2923 = vunpack.c.l.b16 %v1822
        %v2924 = vunpack.c.h.b16 %v1822
        %v2925 = vunpack.c.l.b16 %v1823
        %v2926 = vunpack.c.h.b16 %v1823
        %v2927 = vunpack.c.l.b16 %v1824
        %v2928 = vunpack.c.h.b16 %v1824
        %v2929 = vunpack.c.l.b16 %v1825
        %v2930 = vunpack.c.h.b16 %v1825
        %v2931 = vunpack.c.l.b16 %v1826
        %v2932 = vunpack.c.h.b16 %v1826
        %v2933 = vunpack.c.l.b16 %v1827
        %v2934 = vunpack.c.h.b16 %v1827
        %v2935 = vunpack.c.l.b16 %v1828
        %v2936 = vunpack.c.h.b16 %v1828
        %v2937 = vunpack.c.l.b16 %v1829
        %v2938 = vunpack.c.h.b16 %v1829
        %v2939 = vunpack.c.l.b16 %v1830
        %v2940 = vunpack.c.h.b16 %v1830
        %v2941 = vunpack.c.l.b16 %v1831
        %v2942 = vunpack.c.h.b16 %v1831
        %v2943 = vunpack.c.l.b16 %v1832
        %v2944 = vunpack.c.h.b16 %v1832
        %v2945 = vunpack.c.l.b16 %v1833
        %v2946 = vunpack.c.h.b16 %v1833
        %v2947 = vunpack.c.l.b16 %v1834
        %v2948 = vunpack.c.h.b16 %v1834
        %v2949 = vunpack.c.l.b16 %v1835
        %v2950 = vunpack.c.h.b16 %v1835
        %v2951 = vunpack.c.l.b16 %v1836
        %v2952 = vunpack.c.h.b16 %v1836
        %v2953 = vunpack.c.l.b16 %v1837
        %v2954 = vunpack.c.h.b16 %v1837
        %v2955 = vunpack.c.l.b16 %v1838
        %v2956 = vunpack.c.h.b16 %v1838
        %v2957 = vunpack.c.l.b16 %v1839
        %v2958 = vunpack.c.h.b16 %v1839
        %v2959 = vunpack.c.l.b16 %v1840
        %v2960 = vunpack.c.h.b16 %v1840
        %v2961 = vunpack.c.l.b16 %v1841
        %v2962 = vunpack.c.h.b16 %v1841
        %v2963 = vunpack.c.l.b16 %v1842
        %v2964 = vunpack.c.h.b16 %v1842
        %v2965 = vunpack.c.l.b16 %v1843
        %v2966 = vunpack.c.h.b16 %v1843
        %v2967 = vunpack.c.l.b16 %v1844
        %v2968 = vunpack.c.h.b16 %v1844
        %v2969 = vunpack.c.l.b16 %v1845
        %v2970 = vunpack.c.h.b16 %v1845
        %v2971 = vunpack.c.l.b16 %v1846
        %v2972 = vunpack.c.h.b16 %v1846
        %v2973 = vunpack.c.l.b16 %v1847
        %v2974 = vunpack.c.h.b16 %v1847
        %v2975 = vunpack.c.l.b16 %v1848
        %v2976 = vunpack.c.h.b16 %v1848
        %v2977 = vunpack.c.l.b16 %v1849
        %v2978 = vunpack.c.h.b16 %v1849
        %v2979 = vunpack.c.l.b16 %v1850
        %v2980 = vunpack.c.h.b16 %v1850
        %v2981 = vunpack.c.l.b16 %v1851
        %v2982 = vunpack.c.h.b16 %v1851
        %v2983 = vunpack.c.l.b16 %v1852
        %v2984 = vunpack.c.h.b16 %v1852
        %v2985 = vunpack.c.l.b16 %v1853
        %v2986 = vunpack.c.h.b16 %v1853
        %v2987 = vunpack.c.l.b16 %v1854
        %v2988 = vunpack.c.h.b16 %v1854
        %v2989 = vunpack.c.l.b16 %v1855
        %v2990 = vunpack.c.h.b16 %v1855
        %v2991 = vunpack.c.l.b16 %v1856
        %v2992 = vunpack.c.h.b16 %v1856
        %v2993 = vunpack.c.l.b16 %v1857
        %v2994 = vunpack.c.h.b16 %v1857
        %v2995 = vunpack.c.l.b16 %v1858
        %v2996 = vunpack.c.h.b16 %v1858
        %v2997 = vunpack.c.l.b16 %v1859
        %v2998 = vunpack.c.h.b16 %v1859
        %v2999 = vunpack.c.l.b16 %v1860
        %v3000 = vunpack.c.h.b16 %v1860
        %v3001 = vunpack.c.l.b16 %v1861
        %v3002 = vunpack.c.h.b16 %v1861
        %v3003 = vunpack.c.l.b16 %v1862
        %v3004 = vunpack.c.h.b16 %v1862
        %v3005 = vunpack.c.l.b16 %v1863
        %v3006 = vunpack.c.h.b16 %v1863
        %v3007 = vunpack.c.l.b16 %v1864
        %v3008 = vunpack.c.h.b16 %v1864
        %v3009 = vunpack.c.l.b16 %v1865
        %v3010 = vunpack.c.h.b16 %v1865
        %v3011 = vunpack.c.l.b16 %v1866
        %v3012 = vunpack.c.h.b16 %v1866
        %v3013 = vunpack.c.l.b16 %v1867
        %v3014 = vunpack.c.h.b16 %v1867
        %v3015 = vunpack.c.l.b16 %v1868
        %v3016 = vunpack.c.h.b16 %v1868
        %v3017 = vunpack.c.l.b16 %v1869
        %v3018 = vunpack.c.h.b16 %v1869
        %v3019 = vunpack.c.l.b16 %v1870
        %v3020 = vunpack.c.h.b16 %v1870
        %v3021 = vunpack.c.l.b16 %v1871
        %v3022 = vunpack.c.h.b16 %v1871
        %v3023 = vunpack.c.l.b16 %v1872
        %v3024 = vunpack.c.h.b16 %v1872
        %v3025 = vunpack.c.l.b16 %v1873
        %v3026 = vunpack.c.h.b16 %v1873
        %v3027 = vunpack.c.l.b16 %v1874
        %v3028 = vunpack.c.h.b16 %v1874
        %v3029 = vunpack.c.l.b16 %v1875
        %v3030 = vunpack.c.h.b16 %v1875
        %v3031 = vunpack.c.l.b16 %v1876
        %v3032 = vunpack.c.h.b16 %v1876
        %v3033 = vunpack.c.l.b16 %v1877
        %v3034 = vunpack.c.h.b16 %v1877
        %v3035 = vunpack.c.l.b16 %v1878
        %v3036 = vunpack.c.h.b16 %v1878
        %v3037 = vunpack.c.l.b16 %v1879
        %v3038 = vunpack.c.h.b16 %v1879
        %v3039 = vunpack.c.l.b16 %v1880
        %v3040 = vunpack.c.h.b16 %v1880
        %v3041 = vunpack.c.l.b16 %v1881
        %v3042 = vunpack.c.h.b16 %v1881
        %v3043 = vunpack.c.l.b16 %v1882
        %v3044 = vunpack.c.h.b16 %v1882
        %v3045 = vunpack.c.l.b16 %v1883
        %v3046 = vunpack.c.h.b16 %v1883
        %v3047 = vunpack.c.l.b16 %v1884
        %v3048 = vunpack.c.h.b16 %v1884
        %v3049 = vunpack.c.l.b16 %v1885
        %v3050 = vunpack.c.h.b16 %v1885
        %v3051 = vunpack.c.l.b16 %v1886
        %v3052 = vunpack.c.h.b16 %v1886
        %v3053 = vunpack.c.l.b16 %v1887
        %v3054 = vunpack.c.h.b16 %v1887
        %v3055 = vunpack.c.l.b16 %v1888
        %v3056 = vunpack.c.h.b16 %v1888
        %v3057 = vunpack.c.l.b16 %v1889
        %v3058 = vunpack.c.h.b16 %v1889
        %v3059 = vunpack.c.l.b16 %v1890
        %v3060 = vunpack.c.h.b16 %v1890
        %v3061 = vunpack.c.l.b16 %v1891
        %v3062 = vunpack.c.h.b16 %v1891
        %v3063 = vunpack.c.l.b16 %v1892
        %v3064 = vunpack.c.h.b16 %v1892
        %v3065 = vunpack.c.l.b16 %v1893
        %v3066 = vunpack.c.h.b16 %v1893
        %v3067 = vunpack.c.l.b16 %v1894
        %v3068 = vunpack.c.h.b16 %v1894
        %v3069 = vunpack.c.l.b16 %v1895
        %v3070 = vunpack.c.h.b16 %v1895
        %v3071 = vunpack.c.l.b16 %v1896
        %v3072 = vunpack.c.h.b16 %v1896
        %v3073 = vunpack.c.l.b16 %v1897
        %v3074 = vunpack.c.h.b16 %v1897
        %v3075 = vunpack.c.l.b16 %v1898
        %v3076 = vunpack.c.h.b16 %v1898
        %v3077 = vunpack.c.l.b16 %v1899
        %v3078 = vunpack.c.h.b16 %v1899
        %v3079 = vunpack.c.l.b16 %v1900
        %v3080 = vunpack.c.h.b16 %v1900
        %v3081 = vunpack.c.l.b16 %v1901
        %v3082 = vunpack.c.h.b16 %v1901
        %v3083 = vunpack.c.l.b16 %v1902
        %v3084 = vunpack.c.h.b16 %v1902
        %v3085 = vunpack.c.l.b16 %v1903
        %v3086 = vunpack.c.h.b16 %v1903
        %v3087 = vunpack.c.l.b16 %v1904
        %v3088 = vunpack.c.h.b16 %v1904
        %v3089 = vunpack.c.l.b16 %v1905
        %v3090 = vunpack.c.h.b16 %v1905
        %v3091 = vunpack.c.l.b16 %v1906
        %v3092 = vunpack.c.h.b16 %v1906
        %v3093 = vunpack.c.l.b16 %v1907
        %v3094 = vunpack.c.h.b16 %v1907
        %v3095 = vunpack.c.l.b16 %v1908
        %v3096 = vunpack.c.h.b16 %v1908
        %v3097 = vpack.c.b16 %v2907, %v2905
        %v3098 = vpack.c.b16 %v2908, %v2906
        %v3099 = vpack.c.b16 %v2911, %v2909
        %v3100 = vpack.c.b16 %v2912, %v2910
        %v3101 = vpack.c.b16 %v2915, %v2913
        %v3102 = vpack.c.b16 %v2916, %v2914
        %v3103 = vpack.c.b16 %v2919, %v2917
        %v3104 = vpack.c.b16 %v2920, %v2918
        %v3105 = vpack.c.b16 %v2923, %v2921
        %v3106 = vpack.c.b16 %v2924, %v2922
        %v3107 = vpack.c.b16 %v2927, %v2925
        %v3108 = vpack.c.b16 %v2928, %v2926
        %v3109 = vpack.c.b16 %v2931, %v2929
        %v3110 = vpack.c.b16 %v2932, %v2930
        %v3111 = vpack.c.b16 %v2935, %v2933
        %v3112 = vpack.c.b16 %v2936, %v2934
        %v3113 = vpack.c.b16 %v2939, %v2937
        %v3114 = vpack.c.b16 %v2940, %v2938
        %v3115 = vpack.c.b16 %v2943, %v2941
        %v3116 = vpack.c.b16 %v2944, %v2942
        %v3117 = vpack.c.b16 %v2947, %v2945
        %v3118 = vpack.c.b16 %v2948, %v2946
        %v3119 = vpack.c.b16 %v2951, %v2949
        %v3120 = vpack.c.b16 %v2952, %v2950
        %v3121 = vpack.c.b16 %v2955, %v2953
        %v3122 = vpack.c.b16 %v2956, %v2954
        %v3123 = vpack.c.b16 %v2959, %v2957
        %v3124 = vpack.c.b16 %v2960, %v2958
        %v3125 = vpack.c.b16 %v2963, %v2961
        %v3126 = vpack.c.b16 %v2964, %v2962
        %v3127 = vpack.c.b16 %v2967, %v2965
        %v3128 = vpack.c.b16 %v2968, %v2966
        %v3129 = vpack.c.b16 %v2971, %v2969
        %v3130 = vpack.c.b16 %v2972, %v2970
        %v3131 = vpack.c.b16 %v2975, %v2973
        %v3132 = vpack.c.b16 %v2976, %v2974
        %v3133 = vpack.c.b16 %v2979, %v2977
        %v3134 = vpack.c.b16 %v2980, %v2978
        %v3135 = vpack.c.b16 %v2983, %v2981
        %v3136 = vpack.c.b16 %v2984, %v2982
        %v3137 = vpack.c.b16 %v2987, %v2985
        %v3138 = vpack.c.b16 %v2988, %v2986
        %v3139 = vpack.c.b16 %v2991, %v2989
        %v3140 = vpack.c.b16 %v2992, %v2990
        %v3141 = vpack.c.b16 %v2995, %v2993
        %v3142 = vpack.c.b16 %v2996, %v2994
        %v3143 = vpack.c.b16 %v2999, %v2997
        %v3144 = vpack.c.b16 %v3000, %v2998
        %v3145 = vpack.c.b16 %v3003, %v3001
        %v3146 = vpack.c.b16 %v3004, %v3002
        %v3147 = vpack.c.b16 %v3007, %v3005
        %v3148 = vpack.c.b16 %v3008, %v3006
        %v3149 = vpack.c.b16 %v3011, %v3009
        %v3150 = vpack.c.b16 %v3012, %v3010
        %v3151 = vpack.c.b16 %v3015, %v3013
        %v3152 = vpack.c.b16 %v3016, %v3014
        %v3153 = vpack.c.b16 %v3019, %v3017
        %v3154 = vpack.c.b16 %v3020, %v3018
        %v3155 = vpack.c.b16 %v3023, %v3021
        %v3156 = vpack.c.b16 %v3024, %v3022
        %v3157 = vpack.c.b16 %v3027, %v3025
        %v3158 = vpack.c.b16 %v3028, %v3026
        %v3159 = vpack.c.b16 %v3031, %v3029
        %v3160 = vpack.c.b16 %v3032, %v3030
        %v3161 = vpack.c.b16 %v3035, %v3033
        %v3162 = vpack.c.b16 %v3036, %v3034
        %v3163 = vpack.c.b16 %v3039, %v3037
        %v3164 = vpack.c.b16 %v3040, %v3038
        %v3165 = vpack.c.b16 %v3043, %v3041
        %v3166 = vpack.c.b16 %v3044, %v3042
        %v3167 = vpack.c.b16 %v3047, %v3045
        %v3168 = vpack.c.b16 %v3048, %v3046
        %v3169 = vpack.c.b16 %v3051, %v3049
        %v3170 = vpack.c.b16 %v3052, %v3050
        %v3171 = vpack.c.b16 %v3055, %v3053
        %v3172 = vpack.c.b16 %v3056, %v3054
        %v3173 = vpack.c.b16 %v3059, %v3057
        %v3174 = vpack.c.b16 %v3060, %v3058
        %v3175 = vpack.c.b16 %v3063, %v3061
        %v3176 = vpack.c.b16 %v3064, %v3062
        %v3177 = vpack.c.b16 %v3067, %v3065
        %v3178 = vpack.c.b16 %v3068, %v3066
        %v3179 = vpack.c.b16 %v3071, %v3069
        %v3180 = vpack.c.b16 %v3072, %v3070
        %v3181 = vpack.c.b16 %v3075, %v3073
        %v3182 = vpack.c.b16 %v3076, %v3074
        %v3183 = vpack.c.b16 %v3079, %v3077
        %v3184 = vpack.c.b16 %v3080, %v3078
        %v3185 = vpack.c.b16 %v3083, %v3081
        %v3186 = vpack.c.b16 %v3084, %v3082
        %v3187 = vpack.c.b16 %v3087, %v3085
        %v3188 = vpack.c.b16 %v3088, %v3086
        %v3189 = vpack.c.b16 %v3091, %v3089
        %v3190 = vpack.c.b16 %v3092, %v3090
        %v3191 = vpack.c.b16 %v3095, %v3093
        %v3192 = vpack.c.b16 %v3096, %v3094
        %3289 = vmatprep.subr.bf16.mxu0 %v3098
        %3290 = vmatpush1.bf16.msra.mxu0 %v3097
        %3291 = vmatprep.subr.bf16.mxu0 %v3100
        %3292 = vmatpush1.bf16.msra.mxu0 %v3099
        %3293 = vmatprep.subr.bf16.mxu0 %v3102
        %3294 = vmatpush1.bf16.msra.mxu0 %v3101
        %3295 = vmatprep.subr.bf16.mxu0 %v3104
        %3296 = vmatpush1.bf16.msra.mxu0 %v3103
        %3297 = vmatprep.subr.bf16.mxu0 %v3106
        %3298 = vmatpush1.bf16.msra.mxu0 %v3105
        %3299 = vmatprep.subr.bf16.mxu0 %v3108
        %3300 = vmatpush1.bf16.msra.mxu0 %v3107
        %3301 = vmatprep.subr.bf16.mxu0 %v3110
        %3302 = vmatpush1.bf16.msra.mxu0 %v3109
        %3303 = vmatprep.subr.bf16.mxu0 %v3112
        %3304 = vmatpush1.bf16.msra.mxu0 %v3111
        %3305 = vmatprep.subr.bf16.mxu0 %v3114
        %3306 = vmatpush1.bf16.msra.mxu0 %v3113
        %3307 = vmatprep.subr.bf16.mxu0 %v3116
        %3308 = vmatpush1.bf16.msra.mxu0 %v3115
        %3309 = vmatprep.subr.bf16.mxu0 %v3118
        %3310 = vmatpush1.bf16.msra.mxu0 %v3117
        %3311 = vmatprep.subr.bf16.mxu0 %v3120
        %3312 = vmatpush1.bf16.msra.mxu0 %v3119
        %3313 = vmatprep.subr.bf16.mxu0 %v3122
        %3314 = vmatpush1.bf16.msra.mxu0 %v3121
        %3315 = vmatprep.subr.bf16.mxu0 %v3124
        %3316 = vmatpush1.bf16.msra.mxu0 %v3123
        %3317 = vmatprep.subr.bf16.mxu0 %v3126
        %3318 = vmatpush1.bf16.msra.mxu0 %v3125
        %3319 = vmatprep.subr.bf16.mxu0 %v3128
        %3320 = vmatpush1.bf16.msra.mxu0 %v3127
        %3321 = vmatprep.mubr.bf16.mxu0 %v2762
        %3322 = vmatmul.mubr.bf16.gmra.mrb[0].mxu0 %v2761
        %v3323 = vpop.f32.mrb[0].mxu0
        %v3324 = vadd.f32 %v2723, %v3323
        %v3325 = vpop.f32.mrb[0].mxu0
        %v3326 = vadd.f32 %v2725, %v3325
        %v3327 = vpop.f32.mrb[0].mxu0
        %v3328 = vadd.f32 %v2727, %v3327
        %v3329 = vpop.f32.mrb[0].mxu0
        %v3330 = vadd.f32 %v2729, %v3329
        %3331 = vmatprep.mubr.bf16.mxu0 %v2768
        %3332 = vmatmul.mubr.bf16.gmra.mrb[0].mxu0 %v2767
        %v3333 = vpop.f32.mrb[0].mxu0
        %v3334 = vadd.f32 %v2733, %v3333
        %v3335 = vpop.f32.mrb[0].mxu0
        %v3336 = vadd.f32 %v2735, %v3335
        %v3337 = vpop.f32.mrb[0].mxu0
        %v3338 = vadd.f32 %v2737, %v3337
        %v3339 = vpop.f32.mrb[0].mxu0
        %v3340 = vadd.f32 %v2739, %v3339
        %3341 = vmatprep.mubr.bf16.mxu0 %v2774
        %3342 = vmatmul.mubr.bf16.gmra.mrb[0].mxu0 %v2773
        %v3343 = vpop.f32.mrb[0].mxu0
        %v3344 = vadd.f32 %v2743, %v3343
        %v3345 = vpop.f32.mrb[0].mxu0
        %v3346 = vadd.f32 %v2745, %v3345
        %v3347 = vpop.f32.mrb[0].mxu0
        %v3348 = vadd.f32 %v2747, %v3347
        %v3349 = vpop.f32.mrb[0].mxu0
        %v3350 = vadd.f32 %v2749, %v3349
        %3351 = vmatprep.mubr.bf16.mxu0 %v2780
        %3352 = vmatmul.mubr.bf16.gmra.mrb[0].mxu0 %v2779
        %v3353 = vpop.f32.mrb[0].mxu0
        %v3354 = vadd.f32 %v2753, %v3353
        %v3355 = vpop.f32.mrb[0].mxu0
        %v3356 = vadd.f32 %v2755, %v3355
        %v3357 = vpop.f32.mrb[0].mxu0
        %v3358 = vadd.f32 %v2757, %v3357
        %v3359 = vpop.f32.mrb[0].mxu0
        %v3360 = vadd.f32 %v2759, %v3359
        %3361 = vdwg.mxu0
        %3362 = vmatprep.subr.bf16.mxu0 %v3130
        %3363 = vmatpush1.bf16.msra.mxu0 %v3129
        %3364 = vmatprep.subr.bf16.mxu0 %v3132
        %3365 = vmatpush1.bf16.msra.mxu0 %v3131
        %3366 = vmatprep.subr.bf16.mxu0 %v3134
        %3367 = vmatpush1.bf16.msra.mxu0 %v3133
        %3368 = vmatprep.subr.bf16.mxu0 %v3136
        %3369 = vmatpush1.bf16.msra.mxu0 %v3135
        %3370 = vmatprep.subr.bf16.mxu0 %v3138
        %3371 = vmatpush1.bf16.msra.mxu0 %v3137
        %3372 = vmatprep.subr.bf16.mxu0 %v3140
        %3373 = vmatpush1.bf16.msra.mxu0 %v3139
        %3374 = vmatprep.subr.bf16.mxu0 %v3142
        %3375 = vmatpush1.bf16.msra.mxu0 %v3141
        %3376 = vmatprep.subr.bf16.mxu0 %v3144
        %3377 = vmatpush1.bf16.msra.mxu0 %v3143
        %3378 = vmatprep.subr.bf16.mxu0 %v3146
        %3379 = vmatpush1.bf16.msra.mxu0 %v3145
        %3380 = vmatprep.subr.bf16.mxu0 %v3148
        %3381 = vmatpush1.bf16.msra.mxu0 %v3147
        %3382 = vmatprep.subr.bf16.mxu0 %v3150
        %3383 = vmatpush1.bf16.msra.mxu0 %v3149
        %3384 = vmatprep.subr.bf16.mxu0 %v3152
        %3385 = vmatpush1.bf16.msra.mxu0 %v3151
        %3386 = vmatprep.subr.bf16.mxu0 %v3154
        %3387 = vmatpush1.bf16.msra.mxu0 %v3153
        %3388 = vmatprep.subr.bf16.mxu0 %v3156
        %3389 = vmatpush1.bf16.msra.mxu0 %v3155
        %3390 = vmatprep.subr.bf16.mxu0 %v3158
        %3391 = vmatpush1.bf16.msra.mxu0 %v3157
        %3392 = vmatprep.subr.bf16.mxu0 %v3160
        %3393 = vmatpush1.bf16.msra.mxu0 %v3159
        %3394 = vmatprep.mubr.bf16.mxu0 %v2764
        %3395 = vmatmul.mubr.bf16.gmra.mrb[0].mxu0 %v2763
        %v3396 = vpop.f32.mrb[0].mxu0
        %v3397 = vadd.f32 %v3324, %v3396
        %v3398 = vpop.f32.mrb[0].mxu0
        %v3399 = vadd.f32 %v3326, %v3398
        %v3400 = vpop.f32.mrb[0].mxu0
        %v3401 = vadd.f32 %v3328, %v3400
        %v3402 = vpop.f32.mrb[0].mxu0
        %v3403 = vadd.f32 %v3330, %v3402
        %3404 = vmatprep.mubr.bf16.mxu0 %v2770
        %3405 = vmatmul.mubr.bf16.gmra.mrb[0].mxu0 %v2769
        %v3406 = vpop.f32.mrb[0].mxu0
        %v3407 = vadd.f32 %v3334, %v3406
        %v3408 = vpop.f32.mrb[0].mxu0
        %v3409 = vadd.f32 %v3336, %v3408
        %v3410 = vpop.f32.mrb[0].mxu0
        %v3411 = vadd.f32 %v3338, %v3410
        %v3412 = vpop.f32.mrb[0].mxu0
        %v3413 = vadd.f32 %v3340, %v3412
        %3414 = vmatprep.mubr.bf16.mxu0 %v2776
        %3415 = vmatmul.mubr.bf16.gmra.mrb[0].mxu0 %v2775
        %v3416 = vpop.f32.mrb[0].mxu0
        %v3417 = vadd.f32 %v3344, %v3416
        %v3418 = vpop.f32.mrb[0].mxu0
        %v3419 = vadd.f32 %v3346, %v3418
        %v3420 = vpop.f32.mrb[0].mxu0
        %v3421 = vadd.f32 %v3348, %v3420
        %v3422 = vpop.f32.mrb[0].mxu0
        %v3423 = vadd.f32 %v3350, %v3422
        %3424 = vmatprep.mubr.bf16.mxu0 %v2782
        %3425 = vmatmul.mubr.bf16.gmra.mrb[0].mxu0 %v2781
        %v3426 = vpop.f32.mrb[0].mxu0
        %v3427 = vadd.f32 %v3354, %v3426
        %v3428 = vpop.f32.mrb[0].mxu0
        %v3429 = vadd.f32 %v3356, %v3428
        %v3430 = vpop.f32.mrb[0].mxu0
        %v3431 = vadd.f32 %v3358, %v3430
        %v3432 = vpop.f32.mrb[0].mxu0
        %v3433 = vadd.f32 %v3360, %v3432
        %3434 = vdwg.mxu0
        %3435 = vmatprep.subr.bf16.mxu0 %v3162
        %3436 = vmatpush1.bf16.msra.mxu0 %v3161
        %3437 = vmatprep.subr.bf16.mxu0 %v3164
        %3438 = vmatpush1.bf16.msra.mxu0 %v3163
        %3439 = vmatprep.subr.bf16.mxu0 %v3166
        %3440 = vmatpush1.bf16.msra.mxu0 %v3165
        %3441 = vmatprep.subr.bf16.mxu0 %v3168
        %3442 = vmatpush1.bf16.msra.mxu0 %v3167
        %3443 = vmatprep.subr.bf16.mxu0 %v3170
        %3444 = vmatpush1.bf16.msra.mxu0 %v3169
        %3445 = vmatprep.subr.bf16.mxu0 %v3172
        %3446 = vmatpush1.bf16.msra.mxu0 %v3171
        %3447 = vmatprep.subr.bf16.mxu0 %v3174
        %3448 = vmatpush1.bf16.msra.mxu0 %v3173
        %3449 = vmatprep.subr.bf16.mxu0 %v3176
        %3450 = vmatpush1.bf16.msra.mxu0 %v3175
        %3451 = vmatprep.subr.bf16.mxu0 %v3178
        %3452 = vmatpush1.bf16.msra.mxu0 %v3177
        %3453 = vmatprep.subr.bf16.mxu0 %v3180
        %3454 = vmatpush1.bf16.msra.mxu0 %v3179
        %3455 = vmatprep.subr.bf16.mxu0 %v3182
        %3456 = vmatpush1.bf16.msra.mxu0 %v3181
        %3457 = vmatprep.subr.bf16.mxu0 %v3184
        %3458 = vmatpush1.bf16.msra.mxu0 %v3183
        %3459 = vmatprep.subr.bf16.mxu0 %v3186
        %3460 = vmatpush1.bf16.msra.mxu0 %v3185
        %3461 = vmatprep.subr.bf16.mxu0 %v3188
        %3462 = vmatpush1.bf16.msra.mxu0 %v3187
        %3463 = vmatprep.subr.bf16.mxu0 %v3190
        %3464 = vmatpush1.bf16.msra.mxu0 %v3189
        %3465 = vmatprep.subr.bf16.mxu0 %v3192
        %3466 = vmatpush1.bf16.msra.mxu0 %v3191
        %3467 = vmatprep.mubr.bf16.mxu0 %v2766
        %3468 = vmatmul.mubr.bf16.gmra.mrb[0].mxu0 %v2765
        %v3469 = vpop.f32.mrb[0].mxu0
        %v3470 = vadd.f32 %v3397, %v3469
        %v3471 = vpop.f32.mrb[0].mxu0
        %v3472 = vadd.f32 %v3399, %v3471
        %v3473 = vpop.f32.mrb[0].mxu0
        %v3474 = vadd.f32 %v3401, %v3473
        %v3475 = vpop.f32.mrb[0].mxu0
        %v3476 = vadd.f32 %v3403, %v3475
        %3477 = vmatprep.mubr.bf16.mxu0 %v2772
        %3478 = vmatmul.mubr.bf16.gmra.mrb[0].mxu0 %v2771
        %v3479 = vpop.f32.mrb[0].mxu0
        %v3480 = vadd.f32 %v3407, %v3479
        %v3481 = vpop.f32.mrb[0].mxu0
        %v3482 = vadd.f32 %v3409, %v3481
        %v3483 = vpop.f32.mrb[0].mxu0
        %v3484 = vadd.f32 %v3411, %v3483
        %v3485 = vpop.f32.mrb[0].mxu0
        %v3486 = vadd.f32 %v3413, %v3485
        %3487 = vmatprep.mubr.bf16.mxu0 %v2778
        %3488 = vmatmul.mubr.bf16.gmra.mrb[0].mxu0 %v2777
        %v3489 = vpop.f32.mrb[0].mxu0
        %v3490 = vadd.f32 %v3417, %v3489
        %v3491 = vpop.f32.mrb[0].mxu0
        %v3492 = vadd.f32 %v3419, %v3491
        %v3493 = vpop.f32.mrb[0].mxu0
        %v3494 = vadd.f32 %v3421, %v3493
        %v3495 = vpop.f32.mrb[0].mxu0
        %v3496 = vadd.f32 %v3423, %v3495
        %3497 = vmatprep.mubr.bf16.mxu0 %v2784
        %3498 = vmatmul.mubr.bf16.gmra.mrb[0].mxu0 %v2783
        %v3499 = vpop.f32.mrb[0].mxu0
        %v3500 = vadd.f32 %v3427, %v3499
        %v3501 = vpop.f32.mrb[0].mxu0
        %v3502 = vadd.f32 %v3429, %v3501
        %v3503 = vpop.f32.mrb[0].mxu0
        %v3504 = vadd.f32 %v3431, %v3503
        %v3505 = vpop.f32.mrb[0].mxu0
        %v3506 = vadd.f32 %v3433, %v3505
        %3507 = vdwg.mxu0
        %v3512 = vunpack.c.l.b16 %v1422
        %v3513 = vunpack.c.l.b16 %v1423
        %v3514 = vunpack.c.l.b16 %v1505
        %v3515 = vunpack.c.l.b16 %v1506
        %s3516 = scalar_lea.vmem [#allocation4], 1536
        %v3517 = vld [vmem:[%s3516] sm:$0xff]
        %v3518 = vld [vmem:[%s3516 + $0x8] sm:$0xff]
        %v3519 = vld [vmem:[%s3516 + $0x10] sm:$0xff]
        %v3520 = vld [vmem:[%s3516 + $0x18] sm:$0xff]
        %v3521 = vld [vmem:[%s3516 + $0x20] sm:$0xff]
        %v3522 = vld [vmem:[%s3516 + $0x28] sm:$0xff]
        %v3523 = vld [vmem:[%s3516 + $0x30] sm:$0xff]
        %v3524 = vld [vmem:[%s3516 + $0x38] sm:$0xff]
        %v3525 = vld [vmem:[%s3516 + $0x40] sm:$0xff]
        %v3526 = vld [vmem:[%s3516 + $0x48] sm:$0xff]
        %v3527 = vld [vmem:[%s3516 + $0x50] sm:$0xff]
        %v3528 = vld [vmem:[%s3516 + $0x58] sm:$0xff]
        %v3529 = vld [vmem:[%s3516 + $0x60] sm:$0xff]
        %v3530 = vld [vmem:[%s3516 + $0x68] sm:$0xff]
        %v3531 = vld [vmem:[%s3516 + $0x70] sm:$0xff]
        %v3532 = vld [vmem:[%s3516 + $0x78] sm:$0xff]
        %v3533 = vld [vmem:[%s3516 + $0x80] sm:$0xff]
        %v3534 = vld [vmem:[%s3516 + $0x88] sm:$0xff]
        %v3535 = vld [vmem:[%s3516 + $0x90] sm:$0xff]
        %v3536 = vld [vmem:[%s3516 + $0x98] sm:$0xff]
        %v3537 = vld [vmem:[%s3516 + $0xa0] sm:$0xff]
        %v3538 = vld [vmem:[%s3516 + $0xa8] sm:$0xff]
        %v3539 = vld [vmem:[%s3516 + $0xb0] sm:$0xff]
        %v3540 = vld [vmem:[%s3516 + $0xb8] sm:$0xff]
        %v3541 = vld [vmem:[%s3516 + $0xc0] sm:$0xff]
        %v3542 = vld [vmem:[%s3516 + $0xc8] sm:$0xff]
        %v3543 = vld [vmem:[%s3516 + $0xd0] sm:$0xff]
        %v3544 = vld [vmem:[%s3516 + $0xd8] sm:$0xff]
        %v3545 = vld [vmem:[%s3516 + $0xe0] sm:$0xff]
        %v3546 = vld [vmem:[%s3516 + $0xe8] sm:$0xff]
        %v3547 = vld [vmem:[%s3516 + $0xf0] sm:$0xff]
        %v3548 = vld [vmem:[%s3516 + $0xf8] sm:$0xff]
        %v3549 = vld [vmem:[%s3516 + $0x100] sm:$0xff]
        %v3550 = vld [vmem:[%s3516 + $0x108] sm:$0xff]
        %v3551 = vld [vmem:[%s3516 + $0x110] sm:$0xff]
        %v3552 = vld [vmem:[%s3516 + $0x118] sm:$0xff]
        %v3553 = vld [vmem:[%s3516 + $0x120] sm:$0xff]
        %v3554 = vld [vmem:[%s3516 + $0x128] sm:$0xff]
        %v3555 = vld [vmem:[%s3516 + $0x130] sm:$0xff]
        %v3556 = vld [vmem:[%s3516 + $0x138] sm:$0xff]
        %v3557 = vld [vmem:[%s3516 + $0x140] sm:$0xff]
        %v3558 = vld [vmem:[%s3516 + $0x148] sm:$0xff]
        %v3559 = vld [vmem:[%s3516 + $0x150] sm:$0xff]
        %v3560 = vld [vmem:[%s3516 + $0x158] sm:$0xff]
        %v3561 = vld [vmem:[%s3516 + $0x160] sm:$0xff]
        %v3562 = vld [vmem:[%s3516 + $0x168] sm:$0xff]
        %v3563 = vld [vmem:[%s3516 + $0x170] sm:$0xff]
        %v3564 = vld [vmem:[%s3516 + $0x178] sm:$0xff]
        %v3565 = vld [vmem:[%s3516 + $0x180] sm:$0xff]
        %v3566 = vld [vmem:[%s3516 + $0x188] sm:$0xff]
        %v3567 = vld [vmem:[%s3516 + $0x190] sm:$0xff]
        %v3568 = vld [vmem:[%s3516 + $0x198] sm:$0xff]
        %v3569 = vld [vmem:[%s3516 + $0x1a0] sm:$0xff]
        %v3570 = vld [vmem:[%s3516 + $0x1a8] sm:$0xff]
        %v3571 = vld [vmem:[%s3516 + $0x1b0] sm:$0xff]
        %v3572 = vld [vmem:[%s3516 + $0x1b8] sm:$0xff]
        %v3573 = vld [vmem:[%s3516 + $0x1c0] sm:$0xff]
        %v3574 = vld [vmem:[%s3516 + $0x1c8] sm:$0xff]
        %v3575 = vld [vmem:[%s3516 + $0x1d0] sm:$0xff]
        %v3576 = vld [vmem:[%s3516 + $0x1d8] sm:$0xff]
        %v3577 = vld [vmem:[%s3516 + $0x1e0] sm:$0xff]
        %v3578 = vld [vmem:[%s3516 + $0x1e8] sm:$0xff]
        %v3579 = vld [vmem:[%s3516 + $0x1f0] sm:$0xff]
        %v3580 = vld [vmem:[%s3516 + $0x1f8] sm:$0xff]
        %v3581 = vld [vmem:[%s3516 + $0x200] sm:$0xff]
        %v3582 = vld [vmem:[%s3516 + $0x208] sm:$0xff]
        %v3583 = vld [vmem:[%s3516 + $0x210] sm:$0xff]
        %v3584 = vld [vmem:[%s3516 + $0x218] sm:$0xff]
        %v3585 = vld [vmem:[%s3516 + $0x220] sm:$0xff]
        %v3586 = vld [vmem:[%s3516 + $0x228] sm:$0xff]
        %v3587 = vld [vmem:[%s3516 + $0x230] sm:$0xff]
        %v3588 = vld [vmem:[%s3516 + $0x238] sm:$0xff]
        %v3589 = vld [vmem:[%s3516 + $0x240] sm:$0xff]
        %v3590 = vld [vmem:[%s3516 + $0x248] sm:$0xff]
        %v3591 = vld [vmem:[%s3516 + $0x250] sm:$0xff]
        %v3592 = vld [vmem:[%s3516 + $0x258] sm:$0xff]
        %v3593 = vld [vmem:[%s3516 + $0x260] sm:$0xff]
        %v3594 = vld [vmem:[%s3516 + $0x268] sm:$0xff]
        %v3595 = vld [vmem:[%s3516 + $0x270] sm:$0xff]
        %v3596 = vld [vmem:[%s3516 + $0x278] sm:$0xff]
        %v3597 = vld [vmem:[%s3516 + $0x280] sm:$0xff]
        %v3598 = vld [vmem:[%s3516 + $0x288] sm:$0xff]
        %v3599 = vld [vmem:[%s3516 + $0x290] sm:$0xff]
        %v3600 = vld [vmem:[%s3516 + $0x298] sm:$0xff]
        %v3601 = vld [vmem:[%s3516 + $0x2a0] sm:$0xff]
        %v3602 = vld [vmem:[%s3516 + $0x2a8] sm:$0xff]
        %v3603 = vld [vmem:[%s3516 + $0x2b0] sm:$0xff]
        %v3604 = vld [vmem:[%s3516 + $0x2b8] sm:$0xff]
        %v3605 = vld [vmem:[%s3516 + $0x2c0] sm:$0xff]
        %v3606 = vld [vmem:[%s3516 + $0x2c8] sm:$0xff]
        %v3607 = vld [vmem:[%s3516 + $0x2d0] sm:$0xff]
        %v3608 = vld [vmem:[%s3516 + $0x2d8] sm:$0xff]
        %v3609 = vld [vmem:[%s3516 + $0x2e0] sm:$0xff]
        %v3610 = vld [vmem:[%s3516 + $0x2e8] sm:$0xff]
        %v3611 = vld [vmem:[%s3516 + $0x2f0] sm:$0xff]
        %v3612 = vld [vmem:[%s3516 + $0x2f8] sm:$0xff]
        %v3613 = vpack.c.b16 %v3512, %v1913
        %v3614 = vpack.c.b16 %v3513, %v1914
        %v3615 = vpack.c.b16 %v1219, %v1217
        %v3616 = vpack.c.b16 %v1220, %v1218
        %v3617 = vpack.c.b16 %v3514, %v1915
        %v3618 = vpack.c.b16 %v3515, %v1916
        %v3721 = vunpack.c.l.b16 %v3517
        %v3722 = vunpack.c.h.b16 %v3517
        %v3723 = vunpack.c.l.b16 %v3518
        %v3724 = vunpack.c.h.b16 %v3518
        %v3725 = vunpack.c.l.b16 %v3519
        %v3726 = vunpack.c.h.b16 %v3519
        %v3727 = vunpack.c.l.b16 %v3520
        %v3728 = vunpack.c.h.b16 %v3520
        %v3729 = vunpack.c.l.b16 %v3521
        %v3730 = vunpack.c.h.b16 %v3521
        %v3731 = vunpack.c.l.b16 %v3522
        %v3732 = vunpack.c.h.b16 %v3522
        %v3733 = vunpack.c.l.b16 %v3523
        %v3734 = vunpack.c.h.b16 %v3523
        %v3735 = vunpack.c.l.b16 %v3524
        %v3736 = vunpack.c.h.b16 %v3524
        %v3737 = vunpack.c.l.b16 %v3525
        %v3738 = vunpack.c.h.b16 %v3525
        %v3739 = vunpack.c.l.b16 %v3526
        %v3740 = vunpack.c.h.b16 %v3526
        %v3741 = vunpack.c.l.b16 %v3527
        %v3742 = vunpack.c.h.b16 %v3527
        %v3743 = vunpack.c.l.b16 %v3528
        %v3744 = vunpack.c.h.b16 %v3528
        %v3745 = vunpack.c.l.b16 %v3529
        %v3746 = vunpack.c.h.b16 %v3529
        %v3747 = vunpack.c.l.b16 %v3530
        %v3748 = vunpack.c.h.b16 %v3530
        %v3749 = vunpack.c.l.b16 %v3531
        %v3750 = vunpack.c.h.b16 %v3531
        %v3751 = vunpack.c.l.b16 %v3532
        %v3752 = vunpack.c.h.b16 %v3532
        %v3753 = vunpack.c.l.b16 %v3533
        %v3754 = vunpack.c.h.b16 %v3533
        %v3755 = vunpack.c.l.b16 %v3534
        %v3756 = vunpack.c.h.b16 %v3534
        %v3757 = vunpack.c.l.b16 %v3535
        %v3758 = vunpack.c.h.b16 %v3535
        %v3759 = vunpack.c.l.b16 %v3536
        %v3760 = vunpack.c.h.b16 %v3536
        %v3761 = vunpack.c.l.b16 %v3537
        %v3762 = vunpack.c.h.b16 %v3537
        %v3763 = vunpack.c.l.b16 %v3538
        %v3764 = vunpack.c.h.b16 %v3538
        %v3765 = vunpack.c.l.b16 %v3539
        %v3766 = vunpack.c.h.b16 %v3539
        %v3767 = vunpack.c.l.b16 %v3540
        %v3768 = vunpack.c.h.b16 %v3540
        %v3769 = vunpack.c.l.b16 %v3541
        %v3770 = vunpack.c.h.b16 %v3541
        %v3771 = vunpack.c.l.b16 %v3542
        %v3772 = vunpack.c.h.b16 %v3542
        %v3773 = vunpack.c.l.b16 %v3543
        %v3774 = vunpack.c.h.b16 %v3543
        %v3775 = vunpack.c.l.b16 %v3544
        %v3776 = vunpack.c.h.b16 %v3544
        %v3777 = vunpack.c.l.b16 %v3545
        %v3778 = vunpack.c.h.b16 %v3545
        %v3779 = vunpack.c.l.b16 %v3546
        %v3780 = vunpack.c.h.b16 %v3546
        %v3781 = vunpack.c.l.b16 %v3547
        %v3782 = vunpack.c.h.b16 %v3547
        %v3783 = vunpack.c.l.b16 %v3548
        %v3784 = vunpack.c.h.b16 %v3548
        %v3785 = vunpack.c.l.b16 %v3549
        %v3786 = vunpack.c.h.b16 %v3549
        %v3787 = vunpack.c.l.b16 %v3550
        %v3788 = vunpack.c.h.b16 %v3550
        %v3789 = vunpack.c.l.b16 %v3551
        %v3790 = vunpack.c.h.b16 %v3551
        %v3791 = vunpack.c.l.b16 %v3552
        %v3792 = vunpack.c.h.b16 %v3552
        %v3793 = vunpack.c.l.b16 %v3553
        %v3794 = vunpack.c.h.b16 %v3553
        %v3795 = vunpack.c.l.b16 %v3554
        %v3796 = vunpack.c.h.b16 %v3554
        %v3797 = vunpack.c.l.b16 %v3555
        %v3798 = vunpack.c.h.b16 %v3555
        %v3799 = vunpack.c.l.b16 %v3556
        %v3800 = vunpack.c.h.b16 %v3556
        %v3801 = vunpack.c.l.b16 %v3557
        %v3802 = vunpack.c.h.b16 %v3557
        %v3803 = vunpack.c.l.b16 %v3558
        %v3804 = vunpack.c.h.b16 %v3558
        %v3805 = vunpack.c.l.b16 %v3559
        %v3806 = vunpack.c.h.b16 %v3559
        %v3807 = vunpack.c.l.b16 %v3560
        %v3808 = vunpack.c.h.b16 %v3560
        %v3809 = vunpack.c.l.b16 %v3561
        %v3810 = vunpack.c.h.b16 %v3561
        %v3811 = vunpack.c.l.b16 %v3562
        %v3812 = vunpack.c.h.b16 %v3562
        %v3813 = vunpack.c.l.b16 %v3563
        %v3814 = vunpack.c.h.b16 %v3563
        %v3815 = vunpack.c.l.b16 %v3564
        %v3816 = vunpack.c.h.b16 %v3564
        %v3817 = vunpack.c.l.b16 %v3565
        %v3818 = vunpack.c.h.b16 %v3565
        %v3819 = vunpack.c.l.b16 %v3566
        %v3820 = vunpack.c.h.b16 %v3566
        %v3821 = vunpack.c.l.b16 %v3567
        %v3822 = vunpack.c.h.b16 %v3567
        %v3823 = vunpack.c.l.b16 %v3568
        %v3824 = vunpack.c.h.b16 %v3568
        %v3825 = vunpack.c.l.b16 %v3569
        %v3826 = vunpack.c.h.b16 %v3569
        %v3827 = vunpack.c.l.b16 %v3570
        %v3828 = vunpack.c.h.b16 %v3570
        %v3829 = vunpack.c.l.b16 %v3571
        %v3830 = vunpack.c.h.b16 %v3571
        %v3831 = vunpack.c.l.b16 %v3572
        %v3832 = vunpack.c.h.b16 %v3572
        %v3833 = vunpack.c.l.b16 %v3573
        %v3834 = vunpack.c.h.b16 %v3573
        %v3835 = vunpack.c.l.b16 %v3574
        %v3836 = vunpack.c.h.b16 %v3574
        %v3837 = vunpack.c.l.b16 %v3575
        %v3838 = vunpack.c.h.b16 %v3575
        %v3839 = vunpack.c.l.b16 %v3576
        %v3840 = vunpack.c.h.b16 %v3576
        %v3841 = vunpack.c.l.b16 %v3577
        %v3842 = vunpack.c.h.b16 %v3577
        %v3843 = vunpack.c.l.b16 %v3578
        %v3844 = vunpack.c.h.b16 %v3578
        %v3845 = vunpack.c.l.b16 %v3579
        %v3846 = vunpack.c.h.b16 %v3579
        %v3847 = vunpack.c.l.b16 %v3580
        %v3848 = vunpack.c.h.b16 %v3580
        %v3849 = vunpack.c.l.b16 %v3581
        %v3850 = vunpack.c.h.b16 %v3581
        %v3851 = vunpack.c.l.b16 %v3582
        %v3852 = vunpack.c.h.b16 %v3582
        %v3853 = vunpack.c.l.b16 %v3583
        %v3854 = vunpack.c.h.b16 %v3583
        %v3855 = vunpack.c.l.b16 %v3584
        %v3856 = vunpack.c.h.b16 %v3584
        %v3857 = vunpack.c.l.b16 %v3585
        %v3858 = vunpack.c.h.b16 %v3585
        %v3859 = vunpack.c.l.b16 %v3586
        %v3860 = vunpack.c.h.b16 %v3586
        %v3861 = vunpack.c.l.b16 %v3587
        %v3862 = vunpack.c.h.b16 %v3587
        %v3863 = vunpack.c.l.b16 %v3588
        %v3864 = vunpack.c.h.b16 %v3588
        %v3865 = vunpack.c.l.b16 %v3589
        %v3866 = vunpack.c.h.b16 %v3589
        %v3867 = vunpack.c.l.b16 %v3590
        %v3868 = vunpack.c.h.b16 %v3590
        %v3869 = vunpack.c.l.b16 %v3591
        %v3870 = vunpack.c.h.b16 %v3591
        %v3871 = vunpack.c.l.b16 %v3592
        %v3872 = vunpack.c.h.b16 %v3592
        %v3873 = vunpack.c.l.b16 %v3593
        %v3874 = vunpack.c.h.b16 %v3593
        %v3875 = vunpack.c.l.b16 %v3594
        %v3876 = vunpack.c.h.b16 %v3594
        %v3877 = vunpack.c.l.b16 %v3595
        %v3878 = vunpack.c.h.b16 %v3595
        %v3879 = vunpack.c.l.b16 %v3596
        %v3880 = vunpack.c.h.b16 %v3596
        %v3881 = vunpack.c.l.b16 %v3597
        %v3882 = vunpack.c.h.b16 %v3597
        %v3883 = vunpack.c.l.b16 %v3598
        %v3884 = vunpack.c.h.b16 %v3598
        %v3885 = vunpack.c.l.b16 %v3599
        %v3886 = vunpack.c.h.b16 %v3599
        %v3887 = vunpack.c.l.b16 %v3600
        %v3888 = vunpack.c.h.b16 %v3600
        %v3889 = vunpack.c.l.b16 %v3601
        %v3890 = vunpack.c.h.b16 %v3601
        %v3891 = vunpack.c.l.b16 %v3602
        %v3892 = vunpack.c.h.b16 %v3602
        %v3893 = vunpack.c.l.b16 %v3603
        %v3894 = vunpack.c.h.b16 %v3603
        %v3895 = vunpack.c.l.b16 %v3604
        %v3896 = vunpack.c.h.b16 %v3604
        %v3897 = vunpack.c.l.b16 %v3605
        %v3898 = vunpack.c.h.b16 %v3605
        %v3899 = vunpack.c.l.b16 %v3606
        %v3900 = vunpack.c.h.b16 %v3606
        %v3901 = vunpack.c.l.b16 %v3607
        %v3902 = vunpack.c.h.b16 %v3607
        %v3903 = vunpack.c.l.b16 %v3608
        %v3904 = vunpack.c.h.b16 %v3608
        %v3905 = vunpack.c.l.b16 %v3609
        %v3906 = vunpack.c.h.b16 %v3609
        %v3907 = vunpack.c.l.b16 %v3610
        %v3908 = vunpack.c.h.b16 %v3610
        %v3909 = vunpack.c.l.b16 %v3611
        %v3910 = vunpack.c.h.b16 %v3611
        %v3911 = vunpack.c.l.b16 %v3612
        %v3912 = vunpack.c.h.b16 %v3612
        %v3913 = vpack.c.b16 %v3723, %v3721
        %v3914 = vpack.c.b16 %v3724, %v3722
        %v3915 = vpack.c.b16 %v3727, %v3725
        %v3916 = vpack.c.b16 %v3728, %v3726
        %v3917 = vpack.c.b16 %v3731, %v3729
        %v3918 = vpack.c.b16 %v3732, %v3730
        %v3919 = vpack.c.b16 %v3735, %v3733
        %v3920 = vpack.c.b16 %v3736, %v3734
        %v3921 = vpack.c.b16 %v3739, %v3737
        %v3922 = vpack.c.b16 %v3740, %v3738
        %v3923 = vpack.c.b16 %v3743, %v3741
        %v3924 = vpack.c.b16 %v3744, %v3742
        %v3925 = vpack.c.b16 %v3747, %v3745
        %v3926 = vpack.c.b16 %v3748, %v3746
        %v3927 = vpack.c.b16 %v3751, %v3749
        %v3928 = vpack.c.b16 %v3752, %v3750
        %v3929 = vpack.c.b16 %v3755, %v3753
        %v3930 = vpack.c.b16 %v3756, %v3754
        %v3931 = vpack.c.b16 %v3759, %v3757
        %v3932 = vpack.c.b16 %v3760, %v3758
        %v3933 = vpack.c.b16 %v3763, %v3761
        %v3934 = vpack.c.b16 %v3764, %v3762
        %v3935 = vpack.c.b16 %v3767, %v3765
        %v3936 = vpack.c.b16 %v3768, %v3766
        %v3937 = vpack.c.b16 %v3771, %v3769
        %v3938 = vpack.c.b16 %v3772, %v3770
        %v3939 = vpack.c.b16 %v3775, %v3773
        %v3940 = vpack.c.b16 %v3776, %v3774
        %v3941 = vpack.c.b16 %v3779, %v3777
        %v3942 = vpack.c.b16 %v3780, %v3778
        %v3943 = vpack.c.b16 %v3783, %v3781
        %v3944 = vpack.c.b16 %v3784, %v3782
        %v3945 = vpack.c.b16 %v3787, %v3785
        %v3946 = vpack.c.b16 %v3788, %v3786
        %v3947 = vpack.c.b16 %v3791, %v3789
        %v3948 = vpack.c.b16 %v3792, %v3790
        %v3949 = vpack.c.b16 %v3795, %v3793
        %v3950 = vpack.c.b16 %v3796, %v3794
        %v3951 = vpack.c.b16 %v3799, %v3797
        %v3952 = vpack.c.b16 %v3800, %v3798
        %v3953 = vpack.c.b16 %v3803, %v3801
        %v3954 = vpack.c.b16 %v3804, %v3802
        %v3955 = vpack.c.b16 %v3807, %v3805
        %v3956 = vpack.c.b16 %v3808, %v3806
        %v3957 = vpack.c.b16 %v3811, %v3809
        %v3958 = vpack.c.b16 %v3812, %v3810
        %v3959 = vpack.c.b16 %v3815, %v3813
        %v3960 = vpack.c.b16 %v3816, %v3814
        %v3961 = vpack.c.b16 %v3819, %v3817
        %v3962 = vpack.c.b16 %v3820, %v3818
        %v3963 = vpack.c.b16 %v3823, %v3821
        %v3964 = vpack.c.b16 %v3824, %v3822
        %v3965 = vpack.c.b16 %v3827, %v3825
        %v3966 = vpack.c.b16 %v3828, %v3826
        %v3967 = vpack.c.b16 %v3831, %v3829
        %v3968 = vpack.c.b16 %v3832, %v3830
        %v3969 = vpack.c.b16 %v3835, %v3833
        %v3970 = vpack.c.b16 %v3836, %v3834
        %v3971 = vpack.c.b16 %v3839, %v3837
        %v3972 = vpack.c.b16 %v3840, %v3838
        %v3973 = vpack.c.b16 %v3843, %v3841
        %v3974 = vpack.c.b16 %v3844, %v3842
        %v3975 = vpack.c.b16 %v3847, %v3845
        %v3976 = vpack.c.b16 %v3848, %v3846
        %v3977 = vpack.c.b16 %v3851, %v3849
        %v3978 = vpack.c.b16 %v3852, %v3850
        %v3979 = vpack.c.b16 %v3855, %v3853
        %v3980 = vpack.c.b16 %v3856, %v3854
        %v3981 = vpack.c.b16 %v3859, %v3857
        %v3982 = vpack.c.b16 %v3860, %v3858
        %v3983 = vpack.c.b16 %v3863, %v3861
        %v3984 = vpack.c.b16 %v3864, %v3862
        %v3985 = vpack.c.b16 %v3867, %v3865
        %v3986 = vpack.c.b16 %v3868, %v3866
        %v3987 = vpack.c.b16 %v3871, %v3869
        %v3988 = vpack.c.b16 %v3872, %v3870
        %v3989 = vpack.c.b16 %v3875, %v3873
        %v3990 = vpack.c.b16 %v3876, %v3874
        %v3991 = vpack.c.b16 %v3879, %v3877
        %v3992 = vpack.c.b16 %v3880, %v3878
        %v3993 = vpack.c.b16 %v3883, %v3881
        %v3994 = vpack.c.b16 %v3884, %v3882
        %v3995 = vpack.c.b16 %v3887, %v3885
        %v3996 = vpack.c.b16 %v3888, %v3886
        %v3997 = vpack.c.b16 %v3891, %v3889
        %v3998 = vpack.c.b16 %v3892, %v3890
        %v3999 = vpack.c.b16 %v3895, %v3893
        %v4000 = vpack.c.b16 %v3896, %v3894
        %v4001 = vpack.c.b16 %v3899, %v3897
        %v4002 = vpack.c.b16 %v3900, %v3898
        %v4003 = vpack.c.b16 %v3903, %v3901
        %v4004 = vpack.c.b16 %v3904, %v3902
        %v4005 = vpack.c.b16 %v3907, %v3905
        %v4006 = vpack.c.b16 %v3908, %v3906
        %v4007 = vpack.c.b16 %v3911, %v3909
        %v4008 = vpack.c.b16 %v3912, %v3910
        %4105 = vmatprep.subr.bf16.mxu0 %v3914
        %4106 = vmatpush1.bf16.msra.mxu0 %v3913
        %4107 = vmatprep.subr.bf16.mxu0 %v3916
        %4108 = vmatpush1.bf16.msra.mxu0 %v3915
        %4109 = vmatprep.subr.bf16.mxu0 %v3918
        %4110 = vmatpush1.bf16.msra.mxu0 %v3917
        %4111 = vmatprep.subr.bf16.mxu0 %v3920
        %4112 = vmatpush1.bf16.msra.mxu0 %v3919
        %4113 = vmatprep.subr.bf16.mxu0 %v3922
        %4114 = vmatpush1.bf16.msra.mxu0 %v3921
        %4115 = vmatprep.subr.bf16.mxu0 %v3924
        %4116 = vmatpush1.bf16.msra.mxu0 %v3923
        %4117 = vmatprep.subr.bf16.mxu0 %v3926
        %4118 = vmatpush1.bf16.msra.mxu0 %v3925
        %4119 = vmatprep.subr.bf16.mxu0 %v3928
        %4120 = vmatpush1.bf16.msra.mxu0 %v3927
        %4121 = vmatprep.subr.bf16.mxu0 %v3930
        %4122 = vmatpush1.bf16.msra.mxu0 %v3929
        %4123 = vmatprep.subr.bf16.mxu0 %v3932
        %4124 = vmatpush1.bf16.msra.mxu0 %v3931
        %4125 = vmatprep.subr.bf16.mxu0 %v3934
        %4126 = vmatpush1.bf16.msra.mxu0 %v3933
        %4127 = vmatprep.subr.bf16.mxu0 %v3936
        %4128 = vmatpush1.bf16.msra.mxu0 %v3935
        %4129 = vmatprep.subr.bf16.mxu0 %v3938
        %4130 = vmatpush1.bf16.msra.mxu0 %v3937
        %4131 = vmatprep.subr.bf16.mxu0 %v3940
        %4132 = vmatpush1.bf16.msra.mxu0 %v3939
        %4133 = vmatprep.subr.bf16.mxu0 %v3942
        %4134 = vmatpush1.bf16.msra.mxu0 %v3941
        %4135 = vmatprep.subr.bf16.mxu0 %v3944
        %4136 = vmatpush1.bf16.msra.mxu0 %v3943
        %4137 = vmatprep.mubr.bf16.mxu0 %v2768
        %4138 = vmatmul.mubr.bf16.gmra.mrb[0].mxu0 %v2767
        %v4139 = vpop.f32.mrb[0].mxu0
        %v4140 = vadd.f32 0.0, %v4139
        %v4141 = vpop.f32.mrb[0].mxu0
        %v4142 = vadd.f32 0.0, %v4141
        %v4143 = vpop.f32.mrb[0].mxu0
        %v4144 = vadd.f32 0.0, %v4143
        %v4145 = vpop.f32.mrb[0].mxu0
        %v4146 = vadd.f32 0.0, %v4145
        %4147 = vmatprep.mubr.bf16.mxu0 %v2774
        %4148 = vmatmul.mubr.bf16.gmra.mrb[0].mxu0 %v2773
        %v4149 = vpop.f32.mrb[0].mxu0
        %v4150 = vadd.f32 0.0, %v4149
        %v4151 = vpop.f32.mrb[0].mxu0
        %v4152 = vadd.f32 0.0, %v4151
        %v4153 = vpop.f32.mrb[0].mxu0
        %v4154 = vadd.f32 0.0, %v4153
        %v4155 = vpop.f32.mrb[0].mxu0
        %v4156 = vadd.f32 0.0, %v4155
        %4157 = vmatprep.mubr.bf16.mxu0 %v2780
        %4158 = vmatmul.mubr.bf16.gmra.mrb[0].mxu0 %v2779
        %v4159 = vpop.f32.mrb[0].mxu0
        %v4160 = vadd.f32 0.0, %v4159
        %v4161 = vpop.f32.mrb[0].mxu0
        %v4162 = vadd.f32 0.0, %v4161
        %v4163 = vpop.f32.mrb[0].mxu0
        %v4164 = vadd.f32 0.0, %v4163
        %v4165 = vpop.f32.mrb[0].mxu0
        %v4166 = vadd.f32 0.0, %v4165
        %4167 = vmatprep.mubr.bf16.mxu0 %v3614
        %4168 = vmatmul.mubr.bf16.gmra.mrb[0].mxu0 %v3613
        %v4169 = vpop.f32.mrb[0].mxu0
        %v4170 = vadd.f32 0.0, %v4169
        %v4171 = vpop.f32.mrb[0].mxu0
        %v4172 = vadd.f32 0.0, %v4171
        %v4173 = vpop.f32.mrb[0].mxu0
        %v4174 = vadd.f32 0.0, %v4173
        %v4175 = vpop.f32.mrb[0].mxu0
        %v4176 = vadd.f32 0.0, %v4175
        %4177 = vdwg.mxu0
        %4178 = vmatprep.subr.bf16.mxu0 %v3946
        %4179 = vmatpush1.bf16.msra.mxu0 %v3945
        %4180 = vmatprep.subr.bf16.mxu0 %v3948
        %4181 = vmatpush1.bf16.msra.mxu0 %v3947
        %4182 = vmatprep.subr.bf16.mxu0 %v3950
        %4183 = vmatpush1.bf16.msra.mxu0 %v3949
        %4184 = vmatprep.subr.bf16.mxu0 %v3952
        %4185 = vmatpush1.bf16.msra.mxu0 %v3951
        %4186 = vmatprep.subr.bf16.mxu0 %v3954
        %4187 = vmatpush1.bf16.msra.mxu0 %v3953
        %4188 = vmatprep.subr.bf16.mxu0 %v3956
        %4189 = vmatpush1.bf16.msra.mxu0 %v3955
        %4190 = vmatprep.subr.bf16.mxu0 %v3958
        %4191 = vmatpush1.bf16.msra.mxu0 %v3957
        %4192 = vmatprep.subr.bf16.mxu0 %v3960
        %4193 = vmatpush1.bf16.msra.mxu0 %v3959
        %4194 = vmatprep.subr.bf16.mxu0 %v3962
        %4195 = vmatpush1.bf16.msra.mxu0 %v3961
        %4196 = vmatprep.subr.bf16.mxu0 %v3964
        %4197 = vmatpush1.bf16.msra.mxu0 %v3963
        %4198 = vmatprep.subr.bf16.mxu0 %v3966
        %4199 = vmatpush1.bf16.msra.mxu0 %v3965
        %4200 = vmatprep.subr.bf16.mxu0 %v3968
        %4201 = vmatpush1.bf16.msra.mxu0 %v3967
        %4202 = vmatprep.subr.bf16.mxu0 %v3970
        %4203 = vmatpush1.bf16.msra.mxu0 %v3969
        %4204 = vmatprep.subr.bf16.mxu0 %v3972
        %4205 = vmatpush1.bf16.msra.mxu0 %v3971
        %4206 = vmatprep.subr.bf16.mxu0 %v3974
        %4207 = vmatpush1.bf16.msra.mxu0 %v3973
        %4208 = vmatprep.subr.bf16.mxu0 %v3976
        %4209 = vmatpush1.bf16.msra.mxu0 %v3975
        %4210 = vmatprep.mubr.bf16.mxu0 %v2770
        %4211 = vmatmul.mubr.bf16.gmra.mrb[0].mxu0 %v2769
        %v4212 = vpop.f32.mrb[0].mxu0
        %v4213 = vadd.f32 %v4140, %v4212
        %v4214 = vpop.f32.mrb[0].mxu0
        %v4215 = vadd.f32 %v4142, %v4214
        %v4216 = vpop.f32.mrb[0].mxu0
        %v4217 = vadd.f32 %v4144, %v4216
        %v4218 = vpop.f32.mrb[0].mxu0
        %v4219 = vadd.f32 %v4146, %v4218
        %4220 = vmatprep.mubr.bf16.mxu0 %v2776
        %4221 = vmatmul.mubr.bf16.gmra.mrb[0].mxu0 %v2775
        %v4222 = vpop.f32.mrb[0].mxu0
        %v4223 = vadd.f32 %v4150, %v4222
        %v4224 = vpop.f32.mrb[0].mxu0
        %v4225 = vadd.f32 %v4152, %v4224
        %v4226 = vpop.f32.mrb[0].mxu0
        %v4227 = vadd.f32 %v4154, %v4226
        %v4228 = vpop.f32.mrb[0].mxu0
        %v4229 = vadd.f32 %v4156, %v4228
        %4230 = vmatprep.mubr.bf16.mxu0 %v2782
        %4231 = vmatmul.mubr.bf16.gmra.mrb[0].mxu0 %v2781
        %v4232 = vpop.f32.mrb[0].mxu0
        %v4233 = vadd.f32 %v4160, %v4232
        %v4234 = vpop.f32.mrb[0].mxu0
        %v4235 = vadd.f32 %v4162, %v4234
        %v4236 = vpop.f32.mrb[0].mxu0
        %v4237 = vadd.f32 %v4164, %v4236
        %v4238 = vpop.f32.mrb[0].mxu0
        %v4239 = vadd.f32 %v4166, %v4238
        %4240 = vmatprep.mubr.bf16.mxu0 %v3616
        %4241 = vmatmul.mubr.bf16.gmra.mrb[0].mxu0 %v3615
        %v4242 = vpop.f32.mrb[0].mxu0
        %v4243 = vadd.f32 %v4170, %v4242
        %v4244 = vpop.f32.mrb[0].mxu0
        %v4245 = vadd.f32 %v4172, %v4244
        %v4246 = vpop.f32.mrb[0].mxu0
        %v4247 = vadd.f32 %v4174, %v4246
        %v4248 = vpop.f32.mrb[0].mxu0
        %v4249 = vadd.f32 %v4176, %v4248
        %4250 = vdwg.mxu0
        %4251 = vmatprep.subr.bf16.mxu0 %v3978
        %4252 = vmatpush1.bf16.msra.mxu0 %v3977
        %4253 = vmatprep.subr.bf16.mxu0 %v3980
        %4254 = vmatpush1.bf16.msra.mxu0 %v3979
        %4255 = vmatprep.subr.bf16.mxu0 %v3982
        %4256 = vmatpush1.bf16.msra.mxu0 %v3981
        %4257 = vmatprep.subr.bf16.mxu0 %v3984
        %4258 = vmatpush1.bf16.msra.mxu0 %v3983
        %4259 = vmatprep.subr.bf16.mxu0 %v3986
        %4260 = vmatpush1.bf16.msra.mxu0 %v3985
        %4261 = vmatprep.subr.bf16.mxu0 %v3988
        %4262 = vmatpush1.bf16.msra.mxu0 %v3987
        %4263 = vmatprep.subr.bf16.mxu0 %v3990
        %4264 = vmatpush1.bf16.msra.mxu0 %v3989
        %4265 = vmatprep.subr.bf16.mxu0 %v3992
        %4266 = vmatpush1.bf16.msra.mxu0 %v3991
        %4267 = vmatprep.subr.bf16.mxu0 %v3994
        %4268 = vmatpush1.bf16.msra.mxu0 %v3993
        %4269 = vmatprep.subr.bf16.mxu0 %v3996
        %4270 = vmatpush1.bf16.msra.mxu0 %v3995
        %4271 = vmatprep.subr.bf16.mxu0 %v3998
        %4272 = vmatpush1.bf16.msra.mxu0 %v3997
        %4273 = vmatprep.subr.bf16.mxu0 %v4000
        %4274 = vmatpush1.bf16.msra.mxu0 %v3999
        %4275 = vmatprep.subr.bf16.mxu0 %v4002
        %4276 = vmatpush1.bf16.msra.mxu0 %v4001
        %4277 = vmatprep.subr.bf16.mxu0 %v4004
        %4278 = vmatpush1.bf16.msra.mxu0 %v4003
        %4279 = vmatprep.subr.bf16.mxu0 %v4006
        %4280 = vmatpush1.bf16.msra.mxu0 %v4005
        %4281 = vmatprep.subr.bf16.mxu0 %v4008
        %4282 = vmatpush1.bf16.msra.mxu0 %v4007
        %4283 = vmatprep.mubr.bf16.mxu0 %v2772
        %4284 = vmatmul.mubr.bf16.gmra.mrb[0].mxu0 %v2771
        %v4285 = vpop.f32.mrb[0].mxu0
        %v4286 = vadd.f32 %v4213, %v4285
        %v4287 = vpop.f32.mrb[0].mxu0
        %v4288 = vadd.f32 %v4215, %v4287
        %v4289 = vpop.f32.mrb[0].mxu0
        %v4290 = vadd.f32 %v4217, %v4289
        %v4291 = vpop.f32.mrb[0].mxu0
        %v4292 = vadd.f32 %v4219, %v4291
        %4293 = vmatprep.mubr.bf16.mxu0 %v2778
        %4294 = vmatmul.mubr.bf16.gmra.mrb[0].mxu0 %v2777
        %v4295 = vpop.f32.mrb[0].mxu0
        %v4296 = vadd.f32 %v4223, %v4295
        %v4297 = vpop.f32.mrb[0].mxu0
        %v4298 = vadd.f32 %v4225, %v4297
        %v4299 = vpop.f32.mrb[0].mxu0
        %v4300 = vadd.f32 %v4227, %v4299
        %v4301 = vpop.f32.mrb[0].mxu0
        %v4302 = vadd.f32 %v4229, %v4301
        %4303 = vmatprep.mubr.bf16.mxu0 %v2784
        %4304 = vmatmul.mubr.bf16.gmra.mrb[0].mxu0 %v2783
        %v4305 = vpop.f32.mrb[0].mxu0
        %v4306 = vadd.f32 %v4233, %v4305
        %v4307 = vpop.f32.mrb[0].mxu0
        %v4308 = vadd.f32 %v4235, %v4307
        %v4309 = vpop.f32.mrb[0].mxu0
        %v4310 = vadd.f32 %v4237, %v4309
        %v4311 = vpop.f32.mrb[0].mxu0
        %v4312 = vadd.f32 %v4239, %v4311
        %4313 = vmatprep.mubr.bf16.mxu0 %v3618
        %4314 = vmatmul.mubr.bf16.gmra.mrb[0].mxu0 %v3617
        %v4315 = vpop.f32.mrb[0].mxu0
        %v4316 = vadd.f32 %v4243, %v4315
        %v4317 = vpop.f32.mrb[0].mxu0
        %v4318 = vadd.f32 %v4245, %v4317
        %v4319 = vpop.f32.mrb[0].mxu0
        %v4320 = vadd.f32 %v4247, %v4319
        %v4321 = vpop.f32.mrb[0].mxu0
        %v4322 = vadd.f32 %v4249, %v4321
        %4323 = vdwg.mxu0
        %v4324 = vadd.f32 %v3470, %v4286
        %v4325 = vadd.f32 %v3472, %v4288
        %v4326 = vadd.f32 %v3474, %v4290
        %v4327 = vadd.f32 %v3476, %v4292
        %v4328 = vadd.f32 %v3480, %v4296
        %v4329 = vadd.f32 %v3482, %v4298
        %v4330 = vadd.f32 %v3484, %v4300
        %v4331 = vadd.f32 %v3486, %v4302
        %v4332 = vadd.f32 %v3490, %v4306
        %v4333 = vadd.f32 %v3492, %v4308
        %v4334 = vadd.f32 %v3494, %v4310
        %v4335 = vadd.f32 %v3496, %v4312
        %v4336 = vadd.f32 %v3500, %v4316
        %v4337 = vadd.f32 %v3502, %v4318
        %v4338 = vadd.f32 %v3504, %v4320
        %v4339 = vadd.f32 %v3506, %v4322
        %v4348 = vunpack.c.l.b16 %v1730
        %v4349 = vunpack.c.l.b16 %v1678
        %v4350 = vunpack.c.l.b16 %v1732
        %v4351 = vunpack.c.l.b16 %v1680
        %v4352 = vunpack.c.l.b16 %v1734
        %v4353 = vunpack.c.l.b16 %v1682
        %v4354 = vunpack.c.l.b16 %v1736
        %v4355 = vunpack.c.l.b16 %v1684
        %v4356 = vunpack.c.l.b16 %v1738
        %v4357 = vunpack.c.l.b16 %v1686
        %v4358 = vunpack.c.l.b16 %v1740
        %v4359 = vunpack.c.l.b16 %v1688
        %v4360 = vunpack.c.l.b16 %v1742
        %v4361 = vunpack.c.l.b16 %v1690
        %v4362 = vunpack.c.l.b16 %v1744
        %v4363 = vunpack.c.l.b16 %v1692
        %v4364 = vld [vmem:[#allocation6] sm:$0xff]
        %v4365 = vld [vmem:[#allocation6 + $0x8] sm:$0xff]
        %v4366 = vld [vmem:[#allocation6 + $0x10] sm:$0xff]
        %v4367 = vld [vmem:[#allocation6 + $0x18] sm:$0xff]
        %v4368 = vld [vmem:[#allocation6 + $0x20] sm:$0xff]
        %v4369 = vld [vmem:[#allocation6 + $0x28] sm:$0xff]
        %v4370 = vld [vmem:[#allocation6 + $0x30] sm:$0xff]
        %v4371 = vld [vmem:[#allocation6 + $0x38] sm:$0xff]
        %v4372 = vld [vmem:[#allocation6 + $0x40] sm:$0xff]
        %v4373 = vld [vmem:[#allocation6 + $0x48] sm:$0xff]
        %v4374 = vld [vmem:[#allocation6 + $0x50] sm:$0xff]
        %v4375 = vld [vmem:[#allocation6 + $0x58] sm:$0xff]
        %v4376 = vld [vmem:[#allocation6 + $0x60] sm:$0xff]
        %v4377 = vld [vmem:[#allocation6 + $0x68] sm:$0xff]
        %v4378 = vld [vmem:[#allocation6 + $0x70] sm:$0xff]
        %v4379 = vld [vmem:[#allocation6 + $0x78] sm:$0xff]
        %v4380 = vld [vmem:[#allocation6 + $0x80] sm:$0xff]
        %v4381 = vld [vmem:[#allocation6 + $0x88] sm:$0xff]
        %v4382 = vpack.c.b16 %v4350, %v4348
        %v4383 = vpack.c.b16 %v4351, %v4349
        %v4384 = vpack.c.b16 %v4354, %v4352
        %v4385 = vpack.c.b16 %v4355, %v4353
        %v4386 = vpack.c.b16 %v4358, %v4356
        %v4387 = vpack.c.b16 %v4359, %v4357
        %v4388 = vpack.c.b16 %v4362, %v4360
        %v4389 = vpack.c.b16 %v4363, %v4361
        %v4412 = vunpack.c.l.b16 %v4364
        %v4413 = vunpack.c.h.b16 %v4364
        %v4414 = vunpack.c.l.b16 %v4365
        %v4415 = vunpack.c.h.b16 %v4365
        %v4416 = vunpack.c.l.b16 %v4366
        %v4417 = vunpack.c.h.b16 %v4366
        %v4418 = vunpack.c.l.b16 %v4367
        %v4419 = vunpack.c.h.b16 %v4367
        %v4420 = vunpack.c.l.b16 %v4368
        %v4421 = vunpack.c.h.b16 %v4368
        %v4422 = vunpack.c.l.b16 %v4369
        %v4423 = vunpack.c.h.b16 %v4369
        %v4424 = vunpack.c.l.b16 %v4370
        %v4425 = vunpack.c.h.b16 %v4370
        %v4426 = vunpack.c.l.b16 %v4371
        %v4427 = vunpack.c.h.b16 %v4371
        %v4428 = vunpack.c.l.b16 %v4372
        %v4429 = vunpack.c.h.b16 %v4372
        %v4430 = vunpack.c.l.b16 %v4373
        %v4431 = vunpack.c.h.b16 %v4373
        %v4432 = vunpack.c.l.b16 %v4374
        %v4433 = vunpack.c.h.b16 %v4374
        %v4434 = vunpack.c.l.b16 %v4375
        %v4435 = vunpack.c.h.b16 %v4375
        %v4436 = vunpack.c.l.b16 %v4376
        %v4437 = vunpack.c.h.b16 %v4376
        %v4438 = vunpack.c.l.b16 %v4377
        %v4439 = vunpack.c.h.b16 %v4377
        %v4440 = vunpack.c.l.b16 %v4378
        %v4441 = vunpack.c.h.b16 %v4378
        %v4442 = vunpack.c.l.b16 %v4379
        %v4443 = vunpack.c.h.b16 %v4379
        %v4444 = vunpack.c.l.b16 %v4380
        %v4445 = vunpack.c.h.b16 %v4380
        %v4446 = vunpack.c.l.b16 %v4381
        %v4447 = vunpack.c.h.b16 %v4381
        %v4448 = vpack.c.b16 %v4414, %v4412
        %v4449 = vpack.c.b16 %v4415, %v4413
        %v4450 = vpack.c.b16 %v4418, %v4416
        %v4451 = vpack.c.b16 %v4419, %v4417
        %v4452 = vpack.c.b16 %v4422, %v4420
        %v4453 = vpack.c.b16 %v4423, %v4421
        %v4454 = vpack.c.b16 %v4426, %v4424
        %v4455 = vpack.c.b16 %v4427, %v4425
        %v4456 = vpack.c.b16 %v4430, %v4428
        %v4457 = vpack.c.b16 %v4431, %v4429
        %v4458 = vpack.c.b16 %v4434, %v4432
        %v4459 = vpack.c.b16 %v4435, %v4433
        %v4460 = vpack.c.b16 %v4438, %v4436
        %v4461 = vpack.c.b16 %v4439, %v4437
        %v4462 = vpack.c.b16 %v4442, %v4440
        %v4463 = vpack.c.b16 %v4443, %v4441
        %v4464 = vpack.c.b16 %v4446, %v4444
        %v4465 = vpack.c.b16 %v4447, %v4445
        %vm4484 = vcmask 130048
        %v4486 = vsel %vm4484, %v4383, 0
        %v4489 = vsel %vm4484, %v4385, 0
        %v4492 = vsel %vm4484, %v4387, 0
        %v4495 = vsel %vm4484, %v4389, 0
        %4497 = vmatprep.subr.bf16.mxu0 %v4449
        %4498 = vmatpush1.bf16.msra.mxu0 %v4448
        %4499 = vmatprep.subr.bf16.mxu0 %v4451
        %4500 = vmatpush1.bf16.msra.mxu0 %v4450
        %4501 = vmatprep.subr.bf16.mxu0 %v4453
        %4502 = vmatpush1.bf16.msra.mxu0 %v4452
        %4503 = vmatprep.subr.bf16.mxu0 %v4455
        %4504 = vmatpush1.bf16.msra.mxu0 %v4454
        %4505 = vmatprep.subr.bf16.mxu0 %v4457
        %4506 = vmatpush1.bf16.msra.mxu0 %v4456
        %4507 = vmatprep.subr.bf16.mxu0 %v4459
        %4508 = vmatpush1.bf16.msra.mxu0 %v4458
        %4509 = vmatprep.subr.bf16.mxu0 %v4461
        %4510 = vmatpush1.bf16.msra.mxu0 %v4460
        %4511 = vmatprep.subr.bf16.mxu0 %v4463
        %4512 = vmatpush1.bf16.msra.mxu0 %v4462
        %4513 = vmatprep.subr.bf16.mxu0 %v4465
        %4514 = vmatpush1.bf16.msra.mxu0 %v4464
        %4515 = vmatprep.subr.bf16.mxu0 0
        %4516 = vmatpush1.bf16.msra.mxu0 0
        %4517 = vmatprep.subr.bf16.mxu0 0
        %4518 = vmatpush1.bf16.msra.mxu0 0
        %4519 = vmatprep.subr.bf16.mxu0 0
        %4520 = vmatpush1.bf16.msra.mxu0 0
        %4521 = vmatprep.subr.bf16.mxu0 0
        %4522 = vmatpush1.bf16.msra.mxu0 0
        %4523 = vmatprep.subr.bf16.mxu0 0
        %4524 = vmatpush1.bf16.msra.mxu0 0
        %4525 = vmatprep.subr.bf16.mxu0 0
        %4526 = vmatpush1.bf16.msra.mxu0 0
        %4527 = vmatprep.subr.bf16.mxu0 0
        %4528 = vmatpush1.bf16.msra.mxu0 0
        %4529 = vmatprep.mubr.bf16.mxu0 %v4486
        %4530 = vmatmul.mubr.bf16.gmra.mrb[0].mxu0 %v4382
        %v4531 = vpop.f32.mrb[0].mxu0
        %v4532 = vadd.f32 0.0, %v4531
        %v4533 = vpop.f32.mrb[0].mxu0
        %v4534 = vadd.f32 0.0, %v4533
        %v4535 = vpop.f32.mrb[0].mxu0
        %v4536 = vadd.f32 0.0, %v4535
        %v4537 = vpop.f32.mrb[0].mxu0
        %v4538 = vadd.f32 0.0, %v4537
        %4539 = vmatprep.mubr.bf16.mxu0 %v4489
        %4540 = vmatmul.mubr.bf16.gmra.mrb[0].mxu0 %v4384
        %v4541 = vpop.f32.mrb[0].mxu0
        %v4542 = vadd.f32 0.0, %v4541
        %v4543 = vpop.f32.mrb[0].mxu0
        %v4544 = vadd.f32 0.0, %v4543
        %v4545 = vpop.f32.mrb[0].mxu0
        %v4546 = vadd.f32 0.0, %v4545
        %v4547 = vpop.f32.mrb[0].mxu0
        %v4548 = vadd.f32 0.0, %v4547
        %4549 = vmatprep.mubr.bf16.mxu0 %v4492
        %4550 = vmatmul.mubr.bf16.gmra.mrb[0].mxu0 %v4386
        %v4551 = vpop.f32.mrb[0].mxu0
        %v4552 = vadd.f32 0.0, %v4551
        %v4553 = vpop.f32.mrb[0].mxu0
        %v4554 = vadd.f32 0.0, %v4553
        %v4555 = vpop.f32.mrb[0].mxu0
        %v4556 = vadd.f32 0.0, %v4555
        %v4557 = vpop.f32.mrb[0].mxu0
        %v4558 = vadd.f32 0.0, %v4557
        %4559 = vmatprep.mubr.bf16.mxu0 %v4495
        %4560 = vmatmul.mubr.bf16.gmra.mrb[0].mxu0 %v4388
        %v4561 = vpop.f32.mrb[0].mxu0
        %v4562 = vadd.f32 0.0, %v4561
        %v4563 = vpop.f32.mrb[0].mxu0
        %v4564 = vadd.f32 0.0, %v4563
        %v4565 = vpop.f32.mrb[0].mxu0
        %v4566 = vadd.f32 0.0, %v4565
        %v4567 = vpop.f32.mrb[0].mxu0
        %v4568 = vadd.f32 0.0, %v4567
        %4569 = vdwg.mxu0
        %v4570 = vadd.f32 %v4324, %v4532
        %v4571 = vadd.f32 %v4325, %v4534
        %v4572 = vadd.f32 %v4326, %v4536
        %v4573 = vadd.f32 %v4327, %v4538
        %v4574 = vadd.f32 %v4328, %v4542
        %v4575 = vadd.f32 %v4329, %v4544
        %v4576 = vadd.f32 %v4330, %v4546
        %v4577 = vadd.f32 %v4331, %v4548
        %v4578 = vadd.f32 %v4332, %v4552
        %v4579 = vadd.f32 %v4333, %v4554
        %v4580 = vadd.f32 %v4334, %v4556
        %v4581 = vadd.f32 %v4335, %v4558
        %v4582 = vadd.f32 %v4336, %v4562
        %v4583 = vadd.f32 %v4337, %v4564
        %v4584 = vadd.f32 %v4338, %v4566
        %v4585 = vadd.f32 %v4339, %v4568
        %v4587 = vunpack.c.l.b16 %v1746
        %v4588 = vunpack.c.l.b16 %v1694
        %s4589 = scalar_lea.vmem [#allocation6], 144
        %v4590 = vld [vmem:[%s4589] sm:$0xff]
        %v4591 = vld [vmem:[%s4589 + $0x8] sm:$0xff]
        %v4592 = vld [vmem:[%s4589 + $0x10] sm:$0xff]
        %v4593 = vld [vmem:[%s4589 + $0x18] sm:$0xff]
        %v4594 = vld [vmem:[%s4589 + $0x20] sm:$0xff]
        %v4595 = vld [vmem:[%s4589 + $0x28] sm:$0xff]
        %v4596 = vld [vmem:[%s4589 + $0x30] sm:$0xff]
        %v4597 = vld [vmem:[%s4589 + $0x38] sm:$0xff]
        %v4598 = vld [vmem:[%s4589 + $0x40] sm:$0xff]
        %v4599 = vld [vmem:[%s4589 + $0x48] sm:$0xff]
        %v4600 = vld [vmem:[%s4589 + $0x50] sm:$0xff]
        %v4601 = vld [vmem:[%s4589 + $0x58] sm:$0xff]
        %v4602 = vld [vmem:[%s4589 + $0x60] sm:$0xff]
        %v4603 = vld [vmem:[%s4589 + $0x68] sm:$0xff]
        %v4604 = vld [vmem:[%s4589 + $0x70] sm:$0xff]
        %v4605 = vld [vmem:[%s4589 + $0x78] sm:$0xff]
        %v4606 = vld [vmem:[%s4589 + $0x80] sm:$0xff]
        %v4607 = vld [vmem:[%s4589 + $0x88] sm:$0xff]
        %v4608 = vpack.c.b16 %v4352, %v4350
        %v4609 = vpack.c.b16 %v4353, %v4351
        %v4610 = vpack.c.b16 %v4356, %v4354
        %v4611 = vpack.c.b16 %v4357, %v4355
        %v4612 = vpack.c.b16 %v4360, %v4358
        %v4613 = vpack.c.b16 %v4361, %v4359
        %v4614 = vpack.c.b16 %v4587, %v4362
        %v4615 = vpack.c.b16 %v4588, %v4363
        %v4638 = vunpack.c.l.b16 %v4590
        %v4639 = vunpack.c.h.b16 %v4590
        %v4640 = vunpack.c.l.b16 %v4591
        %v4641 = vunpack.c.h.b16 %v4591
        %v4642 = vunpack.c.l.b16 %v4592
        %v4643 = vunpack.c.h.b16 %v4592
        %v4644 = vunpack.c.l.b16 %v4593
        %v4645 = vunpack.c.h.b16 %v4593
        %v4646 = vunpack.c.l.b16 %v4594
        %v4647 = vunpack.c.h.b16 %v4594
        %v4648 = vunpack.c.l.b16 %v4595
        %v4649 = vunpack.c.h.b16 %v4595
        %v4650 = vunpack.c.l.b16 %v4596
        %v4651 = vunpack.c.h.b16 %v4596
        %v4652 = vunpack.c.l.b16 %v4597
        %v4653 = vunpack.c.h.b16 %v4597
        %v4654 = vunpack.c.l.b16 %v4598
        %v4655 = vunpack.c.h.b16 %v4598
        %v4656 = vunpack.c.l.b16 %v4599
        %v4657 = vunpack.c.h.b16 %v4599
        %v4658 = vunpack.c.l.b16 %v4600
        %v4659 = vunpack.c.h.b16 %v4600
        %v4660 = vunpack.c.l.b16 %v4601
        %v4661 = vunpack.c.h.b16 %v4601
        %v4662 = vunpack.c.l.b16 %v4602
        %v4663 = vunpack.c.h.b16 %v4602
        %v4664 = vunpack.c.l.b16 %v4603
        %v4665 = vunpack.c.h.b16 %v4603
        %v4666 = vunpack.c.l.b16 %v4604
        %v4667 = vunpack.c.h.b16 %v4604
        %v4668 = vunpack.c.l.b16 %v4605
        %v4669 = vunpack.c.h.b16 %v4605
        %v4670 = vunpack.c.l.b16 %v4606
        %v4671 = vunpack.c.h.b16 %v4606
        %v4672 = vunpack.c.l.b16 %v4607
        %v4673 = vunpack.c.h.b16 %v4607
        %v4674 = vpack.c.b16 %v4640, %v4638
        %v4675 = vpack.c.b16 %v4641, %v4639
        %v4676 = vpack.c.b16 %v4644, %v4642
        %v4677 = vpack.c.b16 %v4645, %v4643
        %v4678 = vpack.c.b16 %v4648, %v4646
        %v4679 = vpack.c.b16 %v4649, %v4647
        %v4680 = vpack.c.b16 %v4652, %v4650
        %v4681 = vpack.c.b16 %v4653, %v4651
        %v4682 = vpack.c.b16 %v4656, %v4654
        %v4683 = vpack.c.b16 %v4657, %v4655
        %v4684 = vpack.c.b16 %v4660, %v4658
        %v4685 = vpack.c.b16 %v4661, %v4659
        %v4686 = vpack.c.b16 %v4664, %v4662
        %v4687 = vpack.c.b16 %v4665, %v4663
        %v4688 = vpack.c.b16 %v4668, %v4666
        %v4689 = vpack.c.b16 %v4669, %v4667
        %v4690 = vpack.c.b16 %v4672, %v4670
        %v4691 = vpack.c.b16 %v4673, %v4671
        %v4711 = vsel %vm4484, %v4609, 0
        %v4714 = vsel %vm4484, %v4611, 0
        %v4717 = vsel %vm4484, %v4613, 0
        %v4720 = vsel %vm4484, %v4615, 0
        %4722 = vmatprep.subr.bf16.mxu0 %v4675
        %4723 = vmatpush1.bf16.msra.mxu0 %v4674
        %4724 = vmatprep.subr.bf16.mxu0 %v4677
        %4725 = vmatpush1.bf16.msra.mxu0 %v4676
        %4726 = vmatprep.subr.bf16.mxu0 %v4679
        %4727 = vmatpush1.bf16.msra.mxu0 %v4678
        %4728 = vmatprep.subr.bf16.mxu0 %v4681
        %4729 = vmatpush1.bf16.msra.mxu0 %v4680
        %4730 = vmatprep.subr.bf16.mxu0 %v4683
        %4731 = vmatpush1.bf16.msra.mxu0 %v4682
        %4732 = vmatprep.subr.bf16.mxu0 %v4685
        %4733 = vmatpush1.bf16.msra.mxu0 %v4684
        %4734 = vmatprep.subr.bf16.mxu0 %v4687
        %4735 = vmatpush1.bf16.msra.mxu0 %v4686
        %4736 = vmatprep.subr.bf16.mxu0 %v4689
        %4737 = vmatpush1.bf16.msra.mxu0 %v4688
        %4738 = vmatprep.subr.bf16.mxu0 %v4691
        %4739 = vmatpush1.bf16.msra.mxu0 %v4690
        %4740 = vmatprep.subr.bf16.mxu0 0
        %4741 = vmatpush1.bf16.msra.mxu0 0
        %4742 = vmatprep.subr.bf16.mxu0 0
        %4743 = vmatpush1.bf16.msra.mxu0 0
        %4744 = vmatprep.subr.bf16.mxu0 0
        %4745 = vmatpush1.bf16.msra.mxu0 0
        %4746 = vmatprep.subr.bf16.mxu0 0
        %4747 = vmatpush1.bf16.msra.mxu0 0
        %4748 = vmatprep.subr.bf16.mxu0 0
        %4749 = vmatpush1.bf16.msra.mxu0 0
        %4750 = vmatprep.subr.bf16.mxu0 0
        %4751 = vmatpush1.bf16.msra.mxu0 0
        %4752 = vmatprep.subr.bf16.mxu0 0
        %4753 = vmatpush1.bf16.msra.mxu0 0
        %4754 = vmatprep.mubr.bf16.mxu0 %v4711
        %4755 = vmatmul.mubr.bf16.gmra.mrb[0].mxu0 %v4608
        %v4756 = vpop.f32.mrb[0].mxu0
        %v4757 = vadd.f32 0.0, %v4756
        %v4758 = vpop.f32.mrb[0].mxu0
        %v4759 = vadd.f32 0.0, %v4758
        %v4760 = vpop.f32.mrb[0].mxu0
        %v4761 = vadd.f32 0.0, %v4760
        %v4762 = vpop.f32.mrb[0].mxu0
        %v4763 = vadd.f32 0.0, %v4762
        %4764 = vmatprep.mubr.bf16.mxu0 %v4714
        %4765 = vmatmul.mubr.bf16.gmra.mrb[0].mxu0 %v4610
        %v4766 = vpop.f32.mrb[0].mxu0
        %v4767 = vadd.f32 0.0, %v4766
        %v4768 = vpop.f32.mrb[0].mxu0
        %v4769 = vadd.f32 0.0, %v4768
        %v4770 = vpop.f32.mrb[0].mxu0
        %v4771 = vadd.f32 0.0, %v4770
        %v4772 = vpop.f32.mrb[0].mxu0
        %v4773 = vadd.f32 0.0, %v4772
        %4774 = vmatprep.mubr.bf16.mxu0 %v4717
        %4775 = vmatmul.mubr.bf16.gmra.mrb[0].mxu0 %v4612
        %v4776 = vpop.f32.mrb[0].mxu0
        %v4777 = vadd.f32 0.0, %v4776
        %v4778 = vpop.f32.mrb[0].mxu0
        %v4779 = vadd.f32 0.0, %v4778
        %v4780 = vpop.f32.mrb[0].mxu0
        %v4781 = vadd.f32 0.0, %v4780
        %v4782 = vpop.f32.mrb[0].mxu0
        %v4783 = vadd.f32 0.0, %v4782
        %4784 = vmatprep.mubr.bf16.mxu0 %v4720
        %4785 = vmatmul.mubr.bf16.gmra.mrb[0].mxu0 %v4614
        %v4786 = vpop.f32.mrb[0].mxu0
        %v4787 = vadd.f32 0.0, %v4786
        %v4788 = vpop.f32.mrb[0].mxu0
        %v4789 = vadd.f32 0.0, %v4788
        %v4790 = vpop.f32.mrb[0].mxu0
        %v4791 = vadd.f32 0.0, %v4790
        %v4792 = vpop.f32.mrb[0].mxu0
        %v4793 = vadd.f32 0.0, %v4792
        %4794 = vdwg.mxu0
        %v4795 = vadd.f32 %v4570, %v4757
        %v4796 = vadd.f32 %v4571, %v4759
        %v4797 = vadd.f32 %v4572, %v4761
        %v4798 = vadd.f32 %v4573, %v4763
        %v4799 = vadd.f32 %v4574, %v4767
        %v4800 = vadd.f32 %v4575, %v4769
        %v4801 = vadd.f32 %v4576, %v4771
        %v4802 = vadd.f32 %v4577, %v4773
        %v4803 = vadd.f32 %v4578, %v4777
        %v4804 = vadd.f32 %v4579, %v4779
        %v4805 = vadd.f32 %v4580, %v4781
        %v4806 = vadd.f32 %v4581, %v4783
        %v4807 = vadd.f32 %v4582, %v4787
        %v4808 = vadd.f32 %v4583, %v4789
        %v4809 = vadd.f32 %v4584, %v4791
        %v4810 = vadd.f32 %v4585, %v4793
        %v4812 = vunpack.c.l.b16 %v1748
        %v4813 = vunpack.c.l.b16 %v1696
        %s4814 = scalar_lea.vmem [#allocation6], 288
        %v4815 = vld [vmem:[%s4814] sm:$0xff]
        %v4816 = vld [vmem:[%s4814 + $0x8] sm:$0xff]
        %v4817 = vld [vmem:[%s4814 + $0x10] sm:$0xff]
        %v4818 = vld [vmem:[%s4814 + $0x18] sm:$0xff]
        %v4819 = vld [vmem:[%s4814 + $0x20] sm:$0xff]
        %v4820 = vld [vmem:[%s4814 + $0x28] sm:$0xff]
        %v4821 = vld [vmem:[%s4814 + $0x30] sm:$0xff]
        %v4822 = vld [vmem:[%s4814 + $0x38] sm:$0xff]
        %v4823 = vld [vmem:[%s4814 + $0x40] sm:$0xff]
        %v4824 = vld [vmem:[%s4814 + $0x48] sm:$0xff]
        %v4825 = vld [vmem:[%s4814 + $0x50] sm:$0xff]
        %v4826 = vld [vmem:[%s4814 + $0x58] sm:$0xff]
        %v4827 = vld [vmem:[%s4814 + $0x60] sm:$0xff]
        %v4828 = vld [vmem:[%s4814 + $0x68] sm:$0xff]
        %v4829 = vld [vmem:[%s4814 + $0x70] sm:$0xff]
        %v4830 = vld [vmem:[%s4814 + $0x78] sm:$0xff]
        %v4831 = vld [vmem:[%s4814 + $0x80] sm:$0xff]
        %v4832 = vld [vmem:[%s4814 + $0x88] sm:$0xff]
        %v4833 = vpack.c.b16 %v4812, %v4587
        %v4834 = vpack.c.b16 %v4813, %v4588
        %v4854 = vunpack.c.l.b16 %v4815
        %v4855 = vunpack.c.h.b16 %v4815
        %v4856 = vunpack.c.l.b16 %v4816
        %v4857 = vunpack.c.h.b16 %v4816
        %v4858 = vunpack.c.l.b16 %v4817
        %v4859 = vunpack.c.h.b16 %v4817
        %v4860 = vunpack.c.l.b16 %v4818
        %v4861 = vunpack.c.h.b16 %v4818
        %v4862 = vunpack.c.l.b16 %v4819
        %v4863 = vunpack.c.h.b16 %v4819
        %v4864 = vunpack.c.l.b16 %v4820
        %v4865 = vunpack.c.h.b16 %v4820
        %v4866 = vunpack.c.l.b16 %v4821
        %v4867 = vunpack.c.h.b16 %v4821
        %v4868 = vunpack.c.l.b16 %v4822
        %v4869 = vunpack.c.h.b16 %v4822
        %v4870 = vunpack.c.l.b16 %v4823
        %v4871 = vunpack.c.h.b16 %v4823
        %v4872 = vunpack.c.l.b16 %v4824
        %v4873 = vunpack.c.h.b16 %v4824
        %v4874 = vunpack.c.l.b16 %v4825
        %v4875 = vunpack.c.h.b16 %v4825
        %v4876 = vunpack.c.l.b16 %v4826
        %v4877 = vunpack.c.h.b16 %v4826
        %v4878 = vunpack.c.l.b16 %v4827
        %v4879 = vunpack.c.h.b16 %v4827
        %v4880 = vunpack.c.l.b16 %v4828
        %v4881 = vunpack.c.h.b16 %v4828
        %v4882 = vunpack.c.l.b16 %v4829
        %v4883 = vunpack.c.h.b16 %v4829
        %v4884 = vunpack.c.l.b16 %v4830
        %v4885 = vunpack.c.h.b16 %v4830
        %v4886 = vunpack.c.l.b16 %v4831
        %v4887 = vunpack.c.h.b16 %v4831
        %v4888 = vunpack.c.l.b16 %v4832
        %v4889 = vunpack.c.h.b16 %v4832
        %v4890 = vpack.c.b16 %v4856, %v4854
        %v4891 = vpack.c.b16 %v4857, %v4855
        %v4892 = vpack.c.b16 %v4860, %v4858
        %v4893 = vpack.c.b16 %v4861, %v4859
        %v4894 = vpack.c.b16 %v4864, %v4862
        %v4895 = vpack.c.b16 %v4865, %v4863
        %v4896 = vpack.c.b16 %v4868, %v4866
        %v4897 = vpack.c.b16 %v4869, %v4867
        %v4898 = vpack.c.b16 %v4872, %v4870
        %v4899 = vpack.c.b16 %v4873, %v4871
        %v4900 = vpack.c.b16 %v4876, %v4874
        %v4901 = vpack.c.b16 %v4877, %v4875
        %v4902 = vpack.c.b16 %v4880, %v4878
        %v4903 = vpack.c.b16 %v4881, %v4879
        %v4904 = vpack.c.b16 %v4884, %v4882
        %v4905 = vpack.c.b16 %v4885, %v4883
        %v4906 = vpack.c.b16 %v4888, %v4886
        %v4907 = vpack.c.b16 %v4889, %v4887
        %v4927 = vsel %vm4484, %v4834, 0
        %4929 = vmatprep.subr.bf16.mxu0 %v4891
        %4930 = vmatpush1.bf16.msra.mxu0 %v4890
        %4931 = vmatprep.subr.bf16.mxu0 %v4893
        %4932 = vmatpush1.bf16.msra.mxu0 %v4892
        %4933 = vmatprep.subr.bf16.mxu0 %v4895
        %4934 = vmatpush1.bf16.msra.mxu0 %v4894
        %4935 = vmatprep.subr.bf16.mxu0 %v4897
        %4936 = vmatpush1.bf16.msra.mxu0 %v4896
        %4937 = vmatprep.subr.bf16.mxu0 %v4899
        %4938 = vmatpush1.bf16.msra.mxu0 %v4898
        %4939 = vmatprep.subr.bf16.mxu0 %v4901
        %4940 = vmatpush1.bf16.msra.mxu0 %v4900
        %4941 = vmatprep.subr.bf16.mxu0 %v4903
        %4942 = vmatpush1.bf16.msra.mxu0 %v4902
        %4943 = vmatprep.subr.bf16.mxu0 %v4905
        %4944 = vmatpush1.bf16.msra.mxu0 %v4904
        %4945 = vmatprep.subr.bf16.mxu0 %v4907
        %4946 = vmatpush1.bf16.msra.mxu0 %v4906
        %4947 = vmatprep.subr.bf16.mxu0 0
        %4948 = vmatpush1.bf16.msra.mxu0 0
        %4949 = vmatprep.subr.bf16.mxu0 0
        %4950 = vmatpush1.bf16.msra.mxu0 0
        %4951 = vmatprep.subr.bf16.mxu0 0
        %4952 = vmatpush1.bf16.msra.mxu0 0
        %4953 = vmatprep.subr.bf16.mxu0 0
        %4954 = vmatpush1.bf16.msra.mxu0 0
        %4955 = vmatprep.subr.bf16.mxu0 0
        %4956 = vmatpush1.bf16.msra.mxu0 0
        %4957 = vmatprep.subr.bf16.mxu0 0
        %4958 = vmatpush1.bf16.msra.mxu0 0
        %4959 = vmatprep.subr.bf16.mxu0 0
        %4960 = vmatpush1.bf16.msra.mxu0 0
        %4961 = vmatprep.mubr.bf16.mxu0 %v4489
        %4962 = vmatmul.mubr.bf16.gmra.mrb[0].mxu0 %v4384
        %v4963 = vpop.f32.mrb[0].mxu0
        %v4964 = vadd.f32 0.0, %v4963
        %v4965 = vpop.f32.mrb[0].mxu0
        %v4966 = vadd.f32 0.0, %v4965
        %v4967 = vpop.f32.mrb[0].mxu0
        %v4968 = vadd.f32 0.0, %v4967
        %v4969 = vpop.f32.mrb[0].mxu0
        %v4970 = vadd.f32 0.0, %v4969
        %4971 = vmatprep.mubr.bf16.mxu0 %v4492
        %4972 = vmatmul.mubr.bf16.gmra.mrb[0].mxu0 %v4386
        %v4973 = vpop.f32.mrb[0].mxu0
        %v4974 = vadd.f32 0.0, %v4973
        %v4975 = vpop.f32.mrb[0].mxu0
        %v4976 = vadd.f32 0.0, %v4975
        %v4977 = vpop.f32.mrb[0].mxu0
        %v4978 = vadd.f32 0.0, %v4977
        %v4979 = vpop.f32.mrb[0].mxu0
        %v4980 = vadd.f32 0.0, %v4979
        %4981 = vmatprep.mubr.bf16.mxu0 %v4495
        %4982 = vmatmul.mubr.bf16.gmra.mrb[0].mxu0 %v4388
        %v4983 = vpop.f32.mrb[0].mxu0
        %v4984 = vadd.f32 0.0, %v4983
        %v4985 = vpop.f32.mrb[0].mxu0
        %v4986 = vadd.f32 0.0, %v4985
        %v4987 = vpop.f32.mrb[0].mxu0
        %v4988 = vadd.f32 0.0, %v4987
        %v4989 = vpop.f32.mrb[0].mxu0
        %v4990 = vadd.f32 0.0, %v4989
        %4991 = vmatprep.mubr.bf16.mxu0 %v4927
        %4992 = vmatmul.mubr.bf16.gmra.mrb[0].mxu0 %v4833
        %v4993 = vpop.f32.mrb[0].mxu0
        %v4994 = vadd.f32 0.0, %v4993
        %v4995 = vpop.f32.mrb[0].mxu0
        %v4996 = vadd.f32 0.0, %v4995
        %v4997 = vpop.f32.mrb[0].mxu0
        %v4998 = vadd.f32 0.0, %v4997
        %v4999 = vpop.f32.mrb[0].mxu0
        %v5000 = vadd.f32 0.0, %v4999
        %5001 = vdwg.mxu0
        %v5002 = vadd.f32 %v4795, %v4964
        %v5003 = vadd.f32 %v4796, %v4966
        %v5004 = vadd.f32 %v4797, %v4968
        %v5005 = vadd.f32 %v4798, %v4970
        %v5006 = vadd.f32 %v4799, %v4974
        %v5007 = vadd.f32 %v4800, %v4976
        %v5008 = vadd.f32 %v4801, %v4978
        %v5009 = vadd.f32 %v4802, %v4980
        %v5010 = vadd.f32 %v4803, %v4984
        %v5011 = vadd.f32 %v4804, %v4986
        %v5012 = vadd.f32 %v4805, %v4988
        %v5013 = vadd.f32 %v4806, %v4990
        %v5014 = vadd.f32 %v4807, %v4994
        %v5015 = vadd.f32 %v4808, %v4996
        %v5016 = vadd.f32 %v4809, %v4998
        %v5017 = vadd.f32 %v4810, %v5000
        %v5018 = vld [vmem:[#allocation7] sm:$0x3]
        %v5020 = vlaneseq
        %v5021 = vshrl.u32 %v5020, 7
        %v5022 = vsub.s32 0, %v5021
        %v5023 = vrot.slane %v5018, %v5022
        %v5024 = vlaneseq
        %v5025 = vshrl.u32 %v5024, 7
        %v5026 = vsub.s32 1, %v5025
        %v5027 = vrot.slane %v5018, %v5026
        %v5030 = vadd.f32 %v5002, %v5023
        %v5031 = vadd.f32 %v5003, %v5027
        %v5032 = vadd.f32 %v5004, %v5023
        %v5033 = vadd.f32 %v5005, %v5027
        %v5034 = vadd.f32 %v5006, %v5023
        %v5035 = vadd.f32 %v5007, %v5027
        %v5036 = vadd.f32 %v5008, %v5023
        %v5037 = vadd.f32 %v5009, %v5027
        %v5038 = vadd.f32 %v5010, %v5023
        %v5039 = vadd.f32 %v5011, %v5027
        %v5040 = vadd.f32 %v5012, %v5023
        %v5041 = vadd.f32 %v5013, %v5027
        %v5042 = vadd.f32 %v5014, %v5023
        %v5043 = vadd.f32 %v5015, %v5027
        %v5044 = vadd.f32 %v5016, %v5023
        %v5045 = vadd.f32 %v5017, %v5027
        %v5046 = vmax.f32 %v5030, 0.0
        %v5047 = vmax.f32 %v5031, 0.0
        %v5048 = vmax.f32 %v5032, 0.0
        %v5049 = vmax.f32 %v5033, 0.0
        %v5050 = vmax.f32 %v5034, 0.0
        %v5051 = vmax.f32 %v5035, 0.0
        %v5052 = vmax.f32 %v5036, 0.0
        %v5053 = vmax.f32 %v5037, 0.0
        %v5054 = vmax.f32 %v5038, 0.0
        %v5055 = vmax.f32 %v5039, 0.0
        %v5056 = vmax.f32 %v5040, 0.0
        %v5057 = vmax.f32 %v5041, 0.0
        %v5058 = vmax.f32 %v5042, 0.0
        %v5059 = vmax.f32 %v5043, 0.0
        %v5060 = vmax.f32 %v5044, 0.0
        %v5061 = vmax.f32 %v5045, 0.0
        %v5062 = vpack.c.bf16 %v5046, %v5046
        %v5063 = vpack.c.bf16 %v5047, %v5047
        %v5064 = vpack.c.bf16 %v5048, %v5048
        %v5065 = vpack.c.bf16 %v5049, %v5049
        %v5066 = vpack.c.bf16 %v5050, %v5050
        %v5067 = vpack.c.bf16 %v5051, %v5051
        %v5068 = vpack.c.bf16 %v5052, %v5052
        %v5069 = vpack.c.bf16 %v5053, %v5053
        %v5070 = vpack.c.bf16 %v5054, %v5054
        %v5071 = vpack.c.bf16 %v5055, %v5055
        %v5072 = vpack.c.bf16 %v5056, %v5056
        %v5073 = vpack.c.bf16 %v5057, %v5057
        %v5074 = vpack.c.bf16 %v5058, %v5058
        %v5075 = vpack.c.bf16 %v5059, %v5059
        %v5076 = vpack.c.bf16 %v5060, %v5060
        %v5077 = vpack.c.bf16 %v5061, %v5061
        %v5094 = vunpack.c.l.b16 %v5062
        %v5095 = vunpack.c.l.b16 %v5063
        %v5096 = vunpack.c.l.b16 %v5064
        %v5097 = vunpack.c.l.b16 %v5065
        %v5098 = vunpack.c.l.b16 %v5066
        %v5099 = vunpack.c.l.b16 %v5067
        %v5100 = vunpack.c.l.b16 %v5068
        %v5101 = vunpack.c.l.b16 %v5069
        %v5102 = vunpack.c.l.b16 %v5070
        %v5103 = vunpack.c.l.b16 %v5071
        %v5104 = vunpack.c.l.b16 %v5072
        %v5105 = vunpack.c.l.b16 %v5073
        %v5106 = vunpack.c.l.b16 %v5074
        %v5107 = vunpack.c.l.b16 %v5075
        %v5108 = vunpack.c.l.b16 %v5076
        %v5109 = vunpack.c.l.b16 %v5077
        %v5110 = vpack.c.b16 %v5095, %v5094
        %v5111 = vpack.c.b16 %v5097, %v5096
        %v5112 = vpack.c.b16 %v5099, %v5098
        %v5113 = vpack.c.b16 %v5101, %v5100
        %v5114 = vpack.c.b16 %v5103, %v5102
        %v5115 = vpack.c.b16 %v5105, %v5104
        %v5116 = vpack.c.b16 %v5107, %v5106
        %v5117 = vpack.c.b16 %v5109, %v5108
        %5126 = vst [vmem:[%s771] sm:$0xff] %v5110
        %5127 = vst [vmem:[%s771 + $0x8] sm:$0xff] %v5111
        %5128 = vst [vmem:[%s771 + $0x10] sm:$0xff] %v5112
        %5129 = vst [vmem:[%s771 + $0x18] sm:$0xff] %v5113
        %5130 = vst [vmem:[%s771 + $0x20] sm:$0xff] %v5114
        %5131 = vst [vmem:[%s771 + $0x28] sm:$0xff] %v5115
        %5132 = vst [vmem:[%s771 + $0x30] sm:$0xff] %v5116
        %5133 = vst [vmem:[%s771 + $0x38] sm:$0xff] %v5117
        %s5134 = smul.u32 8, %s30
        %p5135 = scmp.lt.s32.totalorder %s29, 1
        %s5136 = scalar_select %p5135, %s29, 1
        %p5137 = scmp.lt.s32.totalorder %s5134, 7
        %s5138 = scalar_select %p5137, %s5134, 7
        %s5139 = smul.addr %s5138, 2
        %s5140 = smul.addr %s5136, 16
        %s5141 = sadd.s32 %s5139, %s5140
        %s5142 = smul.addr %s5141, 4
        %s5143 = scalar_lea.vmem %s11, %s5142
        // Predicated region
        $region81: #{decoder_forward.2} parent=63 // pred_check
          %p5144 = pneg %p362
        $region82: #{decoder_forward.2} parent=63 // pred_check_branch
          %5146 = sbr.rel (%p5144) target = $region84
        $region83: #{decoder_forward.2} parent=63 // pred_region
          %s5147 = smul.u32 8, %s30
        $region84: #{decoder_forward.2} parent=63 // pred_fallthru
          _
      $region64: #{decoder_forward.2} parent=5 // pred_fallthru
        _
      %p5148 = scmp.le.s32.totalorder 2, %s20
      // Predicated region
      $region85: #{decoder_forward.2} parent=5 // pred_check
        %p5149 = pneg %p5148
      $region86: #{decoder_forward.2} parent=5 // pred_check_branch
        %5151 = sbr.rel (%p5149) target = $region88
      $region87: #{decoder_forward.2} parent=5 // pred_region
        %s5152 = ssub.s32 %s20, 2
        // Predicated region
        $region89: #{decoder_forward.2} parent=87 // pred_check
          %p5153 = pneg %p368
        $region90: #{decoder_forward.2} parent=87 // pred_check_branch
          %5155 = sbr.rel (%p5153) target = $region92
        $region91: #{decoder_forward.2} parent=87 // pred_region
          %s5156 = smul.u32 8, %s32
          %p5157 = scmp.lt.s32.totalorder %s31, 1
          %s5158 = scalar_select %p5157, %s31, 1
          %p5159 = scmp.lt.s32.totalorder %s5156, 7
          %s5160 = scalar_select %p5159, %s5156, 7
          %s5161 = smul.addr %s5160, 2
          %s5162 = smul.addr %s5158, 16
          %s5163 = sadd.s32 %s5161, %s5162
          %s5164 = smul.addr %s5163, 4
          %s5165 = scalar_lea.vmem %s11, %s5164
        $region92: #{decoder_forward.2} parent=87 // pred_fallthru
          _
      $region88: #{decoder_forward.2} parent=5 // pred_fallthru
        _
    $region6: #{decoder_forward.2} parent=1 // loop_footer
      %s24 = sadd.s32 1, %s20
    $region7: #{decoder_forward.2} parent=1 // loop_footer_branch
      %19 = sbr.rel target = $region3
    $region8: #{decoder_forward.2} parent=1 // loop_exit
      _
    %5166 = vsyncpa [#allocation3], 1
    %s5167 = scalar_lea.sflag [#allocation3], 1
    %5168 = vsyncpa %s5167, 1
    %5169 = vsyncpa [#allocation5], 1
    %5170 = vsyncpa [#allocation8], 1

</llo_original>
